<compile_context>
chip_gen: v7x
topology: tpu7x:2x2x1
jax: 0.10.0
libtpu: 0.0.40
codegen_flags: <defaults>
</compile_context>

<pallas_src>
import jax
import jax.numpy as jnp
from jax.experimental import pallas as pl
from jax.experimental.pallas import tpu as pltpu

HIDDEN = 64
LANES = 128
# Set to jnp.bfloat16 on v6e/v7x only after re-validating numerical parity (see note 6).
MATMUL_DTYPE = jnp.float32


def _make_fused_kernel(Bb, H, W, Cin, Cpad):
    """Fused EmbeddedBlock kernel processing a (Bb, H, W, *) block per grid step."""
    Ch = HIDDEN
    M = Bb * H * W

    def prelu(v, a):
        return jnp.where(v > 0, v, v * a)

    def make_patch(pad_ref):
        # dx taps folded into the contraction dim; ONE lane concat per layer (hoisted
        # out of the dy loop).  Result: (Bb, H+2, W, 3*C) with dy not yet applied.
        p = pad_ref[...]
        return jnp.concatenate(
            [p[:, :, 0:W, :], p[:, :, 1:W + 1, :], p[:, :, 2:W + 2, :]], axis=-1)

    def tap_dot(patch, dy, w_dy):
        # dy slice is along a leading, tile-aligned dim -> near-free; the reshape only
        # collapses tile-aligned leading dims.
        k = patch.shape[-1]
        rows = patch[:, dy:dy + H, :, :].reshape(M, k).astype(MATMUL_DTYPE)
        return jnp.dot(rows, w_dy, preferred_element_type=jnp.float32)

    def conv3x3(pad_ref, w_ref):
        # Register accumulation: no zero-fill, no VMEM accumulator round trips.
        patch = make_patch(pad_ref)
        acc = tap_dot(patch, 0, w_ref[0])
        acc = acc + tap_dot(patch, 1, w_ref[1])
        acc = acc + tap_dot(patch, 2, w_ref[2])
        return acc                                    # f32 (M, Cout_layer)

    def kernel(x_ref,
               w1_ref, b1_ref, a1_ref,
               w2_ref, b2_ref, a2_ref,
               w3_ref, b3_ref, a3_ref,
               w4_ref, b4_ref,
               o_ref,
               pad0_ref, padh_ref):
        # ---- in-kernel zero halo (scratch is per-core and persistent, so refill
        #      every step; see header note on why ring-only zeroing was not used) ----
        pad0_ref[...] = jnp.zeros_like(pad0_ref)
        padh_ref[...] = jnp.zeros_like(padh_ref)
        pad0_ref[:, 1:H + 1, 1:W + 1, :] = x_ref[...]

        # ---- layer 1: conv1 + bias + PReLU ----
        p1 = prelu(conv3x3(pad0_ref, w1_ref) + b1_ref[0], a1_ref[0])     # (M, 64) f32
        padh_ref[:, 1:H + 1, 1:W + 1, :] = p1.reshape(Bb, H, W, Ch)

        # ---- layer 2: conv2 + bias + PReLU; residual carried as a flat value,
        #      never re-read from the halo buffer ----
        p2 = prelu(conv3x3(padh_ref, w2_ref) + b2_ref[0], a2_ref[0])
        add2 = p1 + p2
        padh_ref[:, 1:H + 1, 1:W + 1, :] = add2.reshape(Bb, H, W, Ch)

        # ---- layer 3: conv3 + bias + PReLU; add3 = add2 + prelu3 ----
        p3 = prelu(conv3x3(padh_ref, w3_ref) + b3_ref[0], a3_ref[0])
        add3 = add2 + p3
        padh_ref[:, 1:H + 1, 1:W + 1, :] = add3.reshape(Bb, H, W, Ch)

        # ---- layer 4: conv4 + bias (no activation).  Cout is zero-padded to a full
        #      128 lanes; accumulate directly into the lane-dense f32 output block ----
        patch = make_patch(padh_ref)
        d0 = tap_dot(patch, 0, w4_ref[0]) + b4_ref[0]
        o_ref[...] = d0.reshape(Bb, H, W, Cpad)
        o_ref[...] += tap_dot(patch, 1, w4_ref[1]).reshape(Bb, H, W, Cpad)
        o_ref[...] += tap_dot(patch, 2, w4_ref[2]).reshape(Bb, H, W, Cpad)

    return kernel


def _multi_tensorcore_chip():
    """True for chips with >1 TensorCore per Pallas device (v7x); False for v5e/v6e."""
    try:
        kind = jax.devices()[0].device_kind.lower()
    except Exception:
        return False
    return ("v7" in kind) or ("7x" in kind)


def init_embedded_block_params(key, in_c, out_c, hidden=HIDDEN):
    """Deterministic synthetic parameters matching EmbeddedBlock.__init__ shapes."""
    def conv_w(k, cin, cout):
        # stored in tap-major kernel layout (9, Cin, Cout), taps ordered dy*3+dx
        return 0.05 * jax.random.normal(k, (9, cin, cout), jnp.float32)

    ks = jax.random.split(key, 8)
    return {
        "w1": conv_w(ks[0], in_c, hidden),   "b1": 0.01 * jax.random.normal(ks[1], (hidden,)),
        "a1": jnp.full((hidden,), 0.25, jnp.float32),
        "w2": conv_w(ks[2], hidden, hidden), "b2": 0.01 * jax.random.normal(ks[3], (hidden,)),
        "a2": jnp.full((hidden,), 0.25, jnp.float32),
        "w3": conv_w(ks[4], hidden, hidden), "b3": 0.01 * jax.random.normal(ks[5], (hidden,)),
        "a3": jnp.full((hidden,), 0.25, jnp.float32),
        "w4": conv_w(ks[6], hidden, out_c),  "b4": 0.01 * jax.random.normal(ks[7], (out_c,)),
    }


@jax.jit
def embedded_block_forward(x_nchw, params):
    """NCHW in -> NCHW out.  One fused Pallas kernel."""
    x = jnp.transpose(x_nchw, (0, 2, 3, 1)).astype(jnp.float32)   # NHWC for the kernel
    B, H, W, Cin = x.shape
    Ch = HIDDEN
    Cout = params["w4"].shape[-1]
    Cpad = max(LANES, -(-Cout // LANES) * LANES)                  # lane-dense output

    # Single-TC (v5e/v6e): fold the whole batch into one grid step (M = B*H*W).
    # Multi-TC (v7x): one batch element per step, parallel grid -> both cores busy.
    if _multi_tensorcore_chip() and B > 1:
        Bb, grid, dims = 1, (B,), ("parallel",)
    else:
        Bb, grid, dims = B, (1,), ("arbitrary",)

    def fold(w):
        # (9, C, Co) tap-major (dy*3+dx) -> (3, 3*C, Co); K index = dx*C + c
        return w.reshape(3, 3 * w.shape[1], w.shape[2]).astype(MATMUL_DTYPE)

    def row(v):
        return v.reshape(1, -1).astype(jnp.float32)

    w4p = jnp.pad(params["w4"], ((0, 0), (0, 0), (0, Cpad - Cout)))
    b4p = jnp.pad(params["b4"], ((0, Cpad - Cout),))

    full3 = lambda i: (0, 0, 0)
    full2 = lambda i: (0, 0)

    ins = [
        x,
        fold(params["w1"]), row(params["b1"]), row(params["a1"]),
        fold(params["w2"]), row(params["b2"]), row(params["a2"]),
        fold(params["w3"]), row(params["b3"]), row(params["a3"]),
        fold(w4p), row(b4p),
    ]
    in_specs = [
        pl.BlockSpec((Bb, H, W, Cin), lambda i: (i, 0, 0, 0)),
        pl.BlockSpec((3, 3 * Cin, Ch), full3), pl.BlockSpec((1, Ch), full2), pl.BlockSpec((1, Ch), full2),
        pl.BlockSpec((3, 3 * Ch, Ch), full3),  pl.BlockSpec((1, Ch), full2), pl.BlockSpec((1, Ch), full2),
        pl.BlockSpec((3, 3 * Ch, Ch), full3),  pl.BlockSpec((1, Ch), full2), pl.BlockSpec((1, Ch), full2),
        pl.BlockSpec((3, 3 * Ch, Cpad), full3), pl.BlockSpec((1, Cpad), full2),
    ]

    kernel = _make_fused_kernel(Bb, H, W, Cin, Cpad)

    out_pad = pl.pallas_call(
        kernel,
        out_shape=jax.ShapeDtypeStruct((B, H, W, Cpad), jnp.float32),
        grid=grid,
        in_specs=in_specs,
        out_specs=pl.BlockSpec((Bb, H, W, Cpad), lambda i: (i, 0, 0, 0)),
        scratch_shapes=[
            pltpu.VMEM((Bb, H + 2, W + 2, Cin), jnp.float32),   # zero-padded layer-1 input
            pltpu.VMEM((Bb, H + 2, W + 2, Ch), jnp.float32),    # zero-padded hidden activation
        ],
        compiler_params=pltpu.CompilerParams(dimension_semantics=dims),
    )(*ins)

    out = out_pad[..., :Cout]                      # drop the lane-padding channels
    return jnp.transpose(out, (0, 3, 1, 2))        # back to NCHW


# ---------------- pure-JAX reference (for correctness check) ----------------
def _ref_conv(x_nhwc, w, b):
    wk = w.reshape(3, 3, w.shape[1], w.shape[2])   # (3,3,Cin,Cout) HWIO
    y = jax.lax.conv_general_dilated(
        x_nhwc, wk, window_strides=(1, 1), padding="SAME",
        dimension_numbers=("NHWC", "HWIO", "NHWC"))
    return y + b


def _ref_forward(x_nchw, p):
    x = jnp.transpose(x_nchw, (0, 2, 3, 1)).astype(jnp.float32)

    def prelu(v, a):
        return jnp.where(v > 0, v, v * a)

    p1 = prelu(_ref_conv(x, p["w1"], p["b1"]), p["a1"])
    p2 = prelu(_ref_conv(p1, p["w2"], p["b2"]), p["a2"])
    add2 = p1 + p2
    p3 = prelu(_ref_conv(add2, p["w3"], p["b3"]), p["a3"])
    add3 = add2 + p3
    out = _ref_conv(add3, p["w4"], p["b4"])
    return jnp.transpose(out, (0, 3, 1, 2))


if __name__ == "__main__":
    B, IN_C, OUT_C, H, W = 2, 4, 4, 16, 16

    key = jax.random.PRNGKey(0)
    k_x, k_p = jax.random.split(key)
    x = jax.random.normal(k_x, (B, IN_C, H, W), jnp.float32)
    params = init_embedded_block_params(k_p, IN_C, OUT_C)

    out = jax.block_until_ready(embedded_block_forward(x, params))
    ref = jax.block_until_ready(_ref_forward(x, params))

    assert out.shape == (B, OUT_C, H, W), out.shape
    assert jnp.allclose(out, ref, rtol=1e-3, atol=1e-3), float(jnp.max(jnp.abs(out - ref)))

    print("KERNEL_OK")
</pallas_src>

<mosaic_0001>
module attributes {stable_mosaic.version = 11 : i64} {
  func.func @kernel(%arg0: i32, %arg1: memref<2x16x16x4xf32, #tpu.memory_space<vmem>>, %arg2: memref<3x12x64xf32, #tpu.memory_space<vmem>>, %arg3: memref<1x64xf32, #tpu.memory_space<vmem>>, %arg4: memref<1x64xf32, #tpu.memory_space<vmem>>, %arg5: memref<3x192x64xf32, #tpu.memory_space<vmem>>, %arg6: memref<1x64xf32, #tpu.memory_space<vmem>>, %arg7: memref<1x64xf32, #tpu.memory_space<vmem>>, %arg8: memref<3x192x64xf32, #tpu.memory_space<vmem>>, %arg9: memref<1x64xf32, #tpu.memory_space<vmem>>, %arg10: memref<1x64xf32, #tpu.memory_space<vmem>>, %arg11: memref<3x192x128xf32, #tpu.memory_space<vmem>>, %arg12: memref<1x128xf32, #tpu.memory_space<vmem>>, %arg13: memref<2x16x16x128xf32, #tpu.memory_space<vmem>>, %arg14: memref<2x18x18x4xf32, #tpu.memory_space<vmem>>, %arg15: memref<2x18x18x64xf32, #tpu.memory_space<vmem>>) attributes {dimension_semantics = [#tpu.dimension_semantics<arbitrary>], iteration_bounds = array<i64: 1>, scalar_prefetch = 0 : i64, scratch_operands = 2 : i64, tpu.core_type = #tpu.core_type<tc>, window_params = [{transform_indices = @transform_0, window_bounds = array<i64: 2, 16, 16, 4>}, {pipeline_mode = #tpu.pipeline_mode<synchronous>, transform_indices = @transform_1, window_bounds = array<i64: 3, 12, 64>}, {pipeline_mode = #tpu.pipeline_mode<synchronous>, transform_indices = @transform_2, window_bounds = array<i64: 1, 64>}, {pipeline_mode = #tpu.pipeline_mode<synchronous>, transform_indices = @transform_3, window_bounds = array<i64: 1, 64>}, {pipeline_mode = #tpu.pipeline_mode<synchronous>, transform_indices = @transform_4, window_bounds = array<i64: 3, 192, 64>}, {pipeline_mode = #tpu.pipeline_mode<synchronous>, transform_indices = @transform_5, window_bounds = array<i64: 1, 64>}, {pipeline_mode = #tpu.pipeline_mode<synchronous>, transform_indices = @transform_6, window_bounds = array<i64: 1, 64>}, {pipeline_mode = #tpu.pipeline_mode<synchronous>, transform_indices = @transform_7, window_bounds = array<i64: 3, 192, 64>}, {pipeline_mode = #tpu.pipeline_mode<synchronous>, transform_indices = @transform_8, window_bounds = array<i64: 1, 64>}, {pipeline_mode = #tpu.pipeline_mode<synchronous>, transform_indices = @transform_9, window_bounds = array<i64: 1, 64>}, {pipeline_mode = #tpu.pipeline_mode<synchronous>, transform_indices = @transform_10, window_bounds = array<i64: 3, 192, 128>}, {pipeline_mode = #tpu.pipeline_mode<synchronous>, transform_indices = @transform_11, window_bounds = array<i64: 1, 128>}, {transform_indices = @transform_12, window_bounds = array<i64: 2, 16, 16, 128>}]} {
    %cst = arith.constant 0.000000e+00 : f32
    %0 = vector.broadcast %cst : f32 to vector<2x18x18x4xf32>
    %c0 = arith.constant 0 : index
    %c0_0 = arith.constant 0 : index
    %c0_1 = arith.constant 0 : index
    %c0_2 = arith.constant 0 : index
    %1 = vector.load %arg14[%c0, %c0_0, %c0_1, %c0_2] : memref<2x18x18x4xf32, #tpu.memory_space<vmem>>, vector<2x18x18x4xf32>
    tpu.vector_store %arg14[%c0, %c0_0, %c0_1, %c0_2], %0 {strides = array<i32>} : memref<2x18x18x4xf32, #tpu.memory_space<vmem>>, vector<2x18x18x4xf32>,
    %cst_3 = arith.constant 0.000000e+00 : f32
    %2 = vector.broadcast %cst_3 : f32 to vector<2x18x18x64xf32>
    %c0_4 = arith.constant 0 : index
    %c0_5 = arith.constant 0 : index
    %c0_6 = arith.constant 0 : index
    %c0_7 = arith.constant 0 : index
    %3 = vector.load %arg15[%c0_4, %c0_5, %c0_6, %c0_7] : memref<2x18x18x64xf32, #tpu.memory_space<vmem>>, vector<2x18x18x64xf32>
    tpu.vector_store %arg15[%c0_4, %c0_5, %c0_6, %c0_7], %2 {strides = array<i32>} : memref<2x18x18x64xf32, #tpu.memory_space<vmem>>, vector<2x18x18x64xf32>,
    %c0_8 = arith.constant 0 : index
    %c0_9 = arith.constant 0 : index
    %c0_10 = arith.constant 0 : index
    %c0_11 = arith.constant 0 : index
    %4 = vector.load %arg1[%c0_8, %c0_9, %c0_10, %c0_11] : memref<2x16x16x4xf32, #tpu.memory_space<vmem>>, vector<2x16x16x4xf32>
    %c0_12 = arith.constant 0 : index
    %c1 = arith.constant 1 : index
    %c1_13 = arith.constant 1 : index
    %c0_14 = arith.constant 0 : index
    %5 = vector.load %arg14[%c0_12, %c1, %c1_13, %c0_14] : memref<2x18x18x4xf32, #tpu.memory_space<vmem>>, vector<2x16x16x4xf32>
    tpu.vector_store %arg14[%c0_12, %c1, %c1_13, %c0_14], %4 {strides = array<i32>} : memref<2x18x18x4xf32, #tpu.memory_space<vmem>>, vector<2x16x16x4xf32>,
    %c0_15 = arith.constant 0 : index
    %c0_16 = arith.constant 0 : index
    %c0_17 = arith.constant 0 : index
    %c0_18 = arith.constant 0 : index
    %6 = vector.load %arg14[%c0_15, %c0_16, %c0_17, %c0_18] : memref<2x18x18x4xf32, #tpu.memory_space<vmem>>, vector<2x18x18x4xf32>
    %7 = vector.extract_strided_slice %6 {offsets = [0, 0, 0, 0], sizes = [2, 18, 16, 4], strides = [1, 1, 1, 1]} : vector<2x18x18x4xf32> to vector<2x18x16x4xf32>
    %8 = vector.extract_strided_slice %6 {offsets = [0, 0, 1, 0], sizes = [2, 18, 16, 4], strides = [1, 1, 1, 1]} : vector<2x18x18x4xf32> to vector<2x18x16x4xf32>
    %9 = vector.extract_strided_slice %6 {offsets = [0, 0, 2, 0], sizes = [2, 18, 16, 4], strides = [1, 1, 1, 1]} : vector<2x18x18x4xf32> to vector<2x18x16x4xf32>
    %10 = tpu.concatenate %7, %8, %9 in 3 : vector<2x18x16x4xf32>, vector<2x18x16x4xf32>, vector<2x18x16x4xf32> -> vector<2x18x16x12xf32>
    %c0_19 = arith.constant 0 : index
    %c0_20 = arith.constant 0 : index
    %c0_21 = arith.constant 0 : index
    %11 = vector.load %arg2[%c0_19, %c0_20, %c0_21] : memref<3x12x64xf32, #tpu.memory_space<vmem>>, vector<1x12x64xf32>
    %12 = vector.shape_cast %11 : vector<1x12x64xf32> to vector<12x64xf32>
    %13 = vector.extract_strided_slice %10 {offsets = [0, 0, 0, 0], sizes = [2, 16, 16, 12], strides = [1, 1, 1, 1]} : vector<2x18x16x12xf32> to vector<2x16x16x12xf32>
    %14 = vector.shape_cast %13 : vector<2x16x16x12xf32> to vector<512x12xf32>
    %cst_22 = arith.constant dense<0.000000e+00> : vector<512x64xf32>
    %15 = tpu.matmul %14, %12, %cst_22 {dimension_numbers = #tpu.dot_dimension_numbers<[1], [0], [0], [1], [0, 0, 1, 1], [], []>} : vector<512x12xf32>, vector<12x64xf32>, vector<512x64xf32> -> vector<512x64xf32>
    %c1_23 = arith.constant 1 : index
    %c0_24 = arith.constant 0 : index
    %c0_25 = arith.constant 0 : index
    %16 = vector.load %arg2[%c1_23, %c0_24, %c0_25] : memref<3x12x64xf32, #tpu.memory_space<vmem>>, vector<1x12x64xf32>
    %17 = vector.shape_cast %16 : vector<1x12x64xf32> to vector<12x64xf32>
    %18 = vector.extract_strided_slice %10 {offsets = [0, 1, 0, 0], sizes = [2, 16, 16, 12], strides = [1, 1, 1, 1]} : vector<2x18x16x12xf32> to vector<2x16x16x12xf32>
    %19 = vector.shape_cast %18 : vector<2x16x16x12xf32> to vector<512x12xf32>
    %cst_26 = arith.constant dense<0.000000e+00> : vector<512x64xf32>
    %20 = tpu.matmul %19, %17, %cst_26 {dimension_numbers = #tpu.dot_dimension_numbers<[1], [0], [0], [1], [0, 0, 1, 1], [], []>} : vector<512x12xf32>, vector<12x64xf32>, vector<512x64xf32> -> vector<512x64xf32>
    %21 = arith.addf %15, %20 : vector<512x64xf32>
    %c2 = arith.constant 2 : index
    %c0_27 = arith.constant 0 : index
    %c0_28 = arith.constant 0 : index
    %22 = vector.load %arg2[%c2, %c0_27, %c0_28] : memref<3x12x64xf32, #tpu.memory_space<vmem>>, vector<1x12x64xf32>
    %23 = vector.shape_cast %22 : vector<1x12x64xf32> to vector<12x64xf32>
    %24 = vector.extract_strided_slice %10 {offsets = [0, 2, 0, 0], sizes = [2, 16, 16, 12], strides = [1, 1, 1, 1]} : vector<2x18x16x12xf32> to vector<2x16x16x12xf32>
    %25 = vector.shape_cast %24 : vector<2x16x16x12xf32> to vector<512x12xf32>
    %cst_29 = arith.constant dense<0.000000e+00> : vector<512x64xf32>
    %26 = tpu.matmul %25, %23, %cst_29 {dimension_numbers = #tpu.dot_dimension_numbers<[1], [0], [0], [1], [0, 0, 1, 1], [], []>} : vector<512x12xf32>, vector<12x64xf32>, vector<512x64xf32> -> vector<512x64xf32>
    %27 = arith.addf %21, %26 : vector<512x64xf32>
    %c0_30 = arith.constant 0 : index
    %c0_31 = arith.constant 0 : index
    %28 = vector.load %arg3[%c0_30, %c0_31] : memref<1x64xf32, #tpu.memory_space<vmem>>, vector<1x64xf32>
    %29 = vector.shape_cast %28 : vector<1x64xf32> to vector<64xf32>
    %30 = vector.shape_cast %29 : vector<64xf32> to vector<1x64xf32>
    %31 = vector.broadcast %30 : vector<1x64xf32> to vector<512x64xf32>
    %32 = arith.addf %27, %31 : vector<512x64xf32>
    %c0_32 = arith.constant 0 : index
    %c0_33 = arith.constant 0 : index
    %33 = vector.load %arg4[%c0_32, %c0_33] : memref<1x64xf32, #tpu.memory_space<vmem>>, vector<1x64xf32>
    %34 = vector.shape_cast %33 : vector<1x64xf32> to vector<64xf32>
    %cst_34 = arith.constant 0.000000e+00 : f32
    %35 = vector.broadcast %cst_34 : f32 to vector<512x64xf32>
    %36 = arith.cmpf ogt, %32, %35 : vector<512x64xf32>
    %37 = vector.shape_cast %34 : vector<64xf32> to vector<1x64xf32>
    %38 = vector.broadcast %37 : vector<1x64xf32> to vector<512x64xf32>
    %39 = arith.mulf %32, %38 : vector<512x64xf32>
    %40 = arith.select %36, %32, %39 : vector<512x64xi1>, vector<512x64xf32>
    %41 = vector.shape_cast %40 : vector<512x64xf32> to vector<2x16x16x64xf32>
    %c0_35 = arith.constant 0 : index
    %c1_36 = arith.constant 1 : index
    %c1_37 = arith.constant 1 : index
    %c0_38 = arith.constant 0 : index
    %42 = vector.load %arg15[%c0_35, %c1_36, %c1_37, %c0_38] : memref<2x18x18x64xf32, #tpu.memory_space<vmem>>, vector<2x16x16x64xf32>
    tpu.vector_store %arg15[%c0_35, %c1_36, %c1_37, %c0_38], %41 {strides = array<i32>} : memref<2x18x18x64xf32, #tpu.memory_space<vmem>>, vector<2x16x16x64xf32>,
    %c0_39 = arith.constant 0 : index
    %c0_40 = arith.constant 0 : index
    %c0_41 = arith.constant 0 : index
    %c0_42 = arith.constant 0 : index
    %43 = vector.load %arg15[%c0_39, %c0_40, %c0_41, %c0_42] : memref<2x18x18x64xf32, #tpu.memory_space<vmem>>, vector<2x18x18x64xf32>
    %44 = vector.extract_strided_slice %43 {offsets = [0, 0, 0, 0], sizes = [2, 18, 16, 64], strides = [1, 1, 1, 1]} : vector<2x18x18x64xf32> to vector<2x18x16x64xf32>
    %45 = vector.extract_strided_slice %43 {offsets = [0, 0, 1, 0], sizes = [2, 18, 16, 64], strides = [1, 1, 1, 1]} : vector<2x18x18x64xf32> to vector<2x18x16x64xf32>
    %46 = vector.extract_strided_slice %43 {offsets = [0, 0, 2, 0], sizes = [2, 18, 16, 64], strides = [1, 1, 1, 1]} : vector<2x18x18x64xf32> to vector<2x18x16x64xf32>
    %47 = tpu.concatenate %44, %45, %46 in 3 : vector<2x18x16x64xf32>, vector<2x18x16x64xf32>, vector<2x18x16x64xf32> -> vector<2x18x16x192xf32>
    %c0_43 = arith.constant 0 : index
    %c0_44 = arith.constant 0 : index
    %c0_45 = arith.constant 0 : index
    %48 = vector.load %arg5[%c0_43, %c0_44, %c0_45] : memref<3x192x64xf32, #tpu.memory_space<vmem>>, vector<1x192x64xf32>
    %49 = vector.shape_cast %48 : vector<1x192x64xf32> to vector<192x64xf32>
    %50 = vector.extract_strided_slice %47 {offsets = [0, 0, 0, 0], sizes = [2, 16, 16, 192], strides = [1, 1, 1, 1]} : vector<2x18x16x192xf32> to vector<2x16x16x192xf32>
    %51 = vector.shape_cast %50 : vector<2x16x16x192xf32> to vector<512x192xf32>
    %cst_46 = arith.constant dense<0.000000e+00> : vector<512x64xf32>
    %52 = tpu.matmul %51, %49, %cst_46 {dimension_numbers = #tpu.dot_dimension_numbers<[1], [0], [0], [1], [0, 0, 1, 1], [], []>} : vector<512x192xf32>, vector<192x64xf32>, vector<512x64xf32> -> vector<512x64xf32>
    %c1_47 = arith.constant 1 : index
    %c0_48 = arith.constant 0 : index
    %c0_49 = arith.constant 0 : index
    %53 = vector.load %arg5[%c1_47, %c0_48, %c0_49] : memref<3x192x64xf32, #tpu.memory_space<vmem>>, vector<1x192x64xf32>
    %54 = vector.shape_cast %53 : vector<1x192x64xf32> to vector<192x64xf32>
    %55 = vector.extract_strided_slice %47 {offsets = [0, 1, 0, 0], sizes = [2, 16, 16, 192], strides = [1, 1, 1, 1]} : vector<2x18x16x192xf32> to vector<2x16x16x192xf32>
    %56 = vector.shape_cast %55 : vector<2x16x16x192xf32> to vector<512x192xf32>
    %cst_50 = arith.constant dense<0.000000e+00> : vector<512x64xf32>
    %57 = tpu.matmul %56, %54, %cst_50 {dimension_numbers = #tpu.dot_dimension_numbers<[1], [0], [0], [1], [0, 0, 1, 1], [], []>} : vector<512x192xf32>, vector<192x64xf32>, vector<512x64xf32> -> vector<512x64xf32>
    %58 = arith.addf %52, %57 : vector<512x64xf32>
    %c2_51 = arith.constant 2 : index
    %c0_52 = arith.constant 0 : index
    %c0_53 = arith.constant 0 : index
    %59 = vector.load %arg5[%c2_51, %c0_52, %c0_53] : memref<3x192x64xf32, #tpu.memory_space<vmem>>, vector<1x192x64xf32>
    %60 = vector.shape_cast %59 : vector<1x192x64xf32> to vector<192x64xf32>
    %61 = vector.extract_strided_slice %47 {offsets = [0, 2, 0, 0], sizes = [2, 16, 16, 192], strides = [1, 1, 1, 1]} : vector<2x18x16x192xf32> to vector<2x16x16x192xf32>
    %62 = vector.shape_cast %61 : vector<2x16x16x192xf32> to vector<512x192xf32>
    %cst_54 = arith.constant dense<0.000000e+00> : vector<512x64xf32>
    %63 = tpu.matmul %62, %60, %cst_54 {dimension_numbers = #tpu.dot_dimension_numbers<[1], [0], [0], [1], [0, 0, 1, 1], [], []>} : vector<512x192xf32>, vector<192x64xf32>, vector<512x64xf32> -> vector<512x64xf32>
    %64 = arith.addf %58, %63 : vector<512x64xf32>
    %c0_55 = arith.constant 0 : index
    %c0_56 = arith.constant 0 : index
    %65 = vector.load %arg6[%c0_55, %c0_56] : memref<1x64xf32, #tpu.memory_space<vmem>>, vector<1x64xf32>
    %66 = vector.shape_cast %65 : vector<1x64xf32> to vector<64xf32>
    %67 = vector.shape_cast %66 : vector<64xf32> to vector<1x64xf32>
    %68 = vector.broadcast %67 : vector<1x64xf32> to vector<512x64xf32>
    %69 = arith.addf %64, %68 : vector<512x64xf32>
    %c0_57 = arith.constant 0 : index
    %c0_58 = arith.constant 0 : index
    %70 = vector.load %arg7[%c0_57, %c0_58] : memref<1x64xf32, #tpu.memory_space<vmem>>, vector<1x64xf32>
    %71 = vector.shape_cast %70 : vector<1x64xf32> to vector<64xf32>
    %cst_59 = arith.constant 0.000000e+00 : f32
    %72 = vector.broadcast %cst_59 : f32 to vector<512x64xf32>
    %73 = arith.cmpf ogt, %69, %72 : vector<512x64xf32>
    %74 = vector.shape_cast %71 : vector<64xf32> to vector<1x64xf32>
    %75 = vector.broadcast %74 : vector<1x64xf32> to vector<512x64xf32>
    %76 = arith.mulf %69, %75 : vector<512x64xf32>
    %77 = arith.select %73, %69, %76 : vector<512x64xi1>, vector<512x64xf32>
    %78 = arith.addf %40, %77 : vector<512x64xf32>
    %79 = vector.shape_cast %78 : vector<512x64xf32> to vector<2x16x16x64xf32>
    %c0_60 = arith.constant 0 : index
    %c1_61 = arith.constant 1 : index
    %c1_62 = arith.constant 1 : index
    %c0_63 = arith.constant 0 : index
    %80 = vector.load %arg15[%c0_60, %c1_61, %c1_62, %c0_63] : memref<2x18x18x64xf32, #tpu.memory_space<vmem>>, vector<2x16x16x64xf32>
    tpu.vector_store %arg15[%c0_60, %c1_61, %c1_62, %c0_63], %79 {strides = array<i32>} : memref<2x18x18x64xf32, #tpu.memory_space<vmem>>, vector<2x16x16x64xf32>,
    %c0_64 = arith.constant 0 : index
    %c0_65 = arith.constant 0 : index
    %c0_66 = arith.constant 0 : index
    %c0_67 = arith.constant 0 : index
    %81 = vector.load %arg15[%c0_64, %c0_65, %c0_66, %c0_67] : memref<2x18x18x64xf32, #tpu.memory_space<vmem>>, vector<2x18x18x64xf32>
    %82 = vector.extract_strided_slice %81 {offsets = [0, 0, 0, 0], sizes = [2, 18, 16, 64], strides = [1, 1, 1, 1]} : vector<2x18x18x64xf32> to vector<2x18x16x64xf32>
    %83 = vector.extract_strided_slice %81 {offsets = [0, 0, 1, 0], sizes = [2, 18, 16, 64], strides = [1, 1, 1, 1]} : vector<2x18x18x64xf32> to vector<2x18x16x64xf32>
    %84 = vector.extract_strided_slice %81 {offsets = [0, 0, 2, 0], sizes = [2, 18, 16, 64], strides = [1, 1, 1, 1]} : vector<2x18x18x64xf32> to vector<2x18x16x64xf32>
    %85 = tpu.concatenate %82, %83, %84 in 3 : vector<2x18x16x64xf32>, vector<2x18x16x64xf32>, vector<2x18x16x64xf32> -> vector<2x18x16x192xf32>
    %c0_68 = arith.constant 0 : index
    %c0_69 = arith.constant 0 : index
    %c0_70 = arith.constant 0 : index
    %86 = vector.load %arg8[%c0_68, %c0_69, %c0_70] : memref<3x192x64xf32, #tpu.memory_space<vmem>>, vector<1x192x64xf32>
    %87 = vector.shape_cast %86 : vector<1x192x64xf32> to vector<192x64xf32>
    %88 = vector.extract_strided_slice %85 {offsets = [0, 0, 0, 0], sizes = [2, 16, 16, 192], strides = [1, 1, 1, 1]} : vector<2x18x16x192xf32> to vector<2x16x16x192xf32>
    %89 = vector.shape_cast %88 : vector<2x16x16x192xf32> to vector<512x192xf32>
    %cst_71 = arith.constant dense<0.000000e+00> : vector<512x64xf32>
    %90 = tpu.matmul %89, %87, %cst_71 {dimension_numbers = #tpu.dot_dimension_numbers<[1], [0], [0], [1], [0, 0, 1, 1], [], []>} : vector<512x192xf32>, vector<192x64xf32>, vector<512x64xf32> -> vector<512x64xf32>
    %c1_72 = arith.constant 1 : index
    %c0_73 = arith.constant 0 : index
    %c0_74 = arith.constant 0 : index
    %91 = vector.load %arg8[%c1_72, %c0_73, %c0_74] : memref<3x192x64xf32, #tpu.memory_space<vmem>>, vector<1x192x64xf32>
    %92 = vector.shape_cast %91 : vector<1x192x64xf32> to vector<192x64xf32>
    %93 = vector.extract_strided_slice %85 {offsets = [0, 1, 0, 0], sizes = [2, 16, 16, 192], strides = [1, 1, 1, 1]} : vector<2x18x16x192xf32> to vector<2x16x16x192xf32>
    %94 = vector.shape_cast %93 : vector<2x16x16x192xf32> to vector<512x192xf32>
    %cst_75 = arith.constant dense<0.000000e+00> : vector<512x64xf32>
    %95 = tpu.matmul %94, %92, %cst_75 {dimension_numbers = #tpu.dot_dimension_numbers<[1], [0], [0], [1], [0, 0, 1, 1], [], []>} : vector<512x192xf32>, vector<192x64xf32>, vector<512x64xf32> -> vector<512x64xf32>
    %96 = arith.addf %90, %95 : vector<512x64xf32>
    %c2_76 = arith.constant 2 : index
    %c0_77 = arith.constant 0 : index
    %c0_78 = arith.constant 0 : index
    %97 = vector.load %arg8[%c2_76, %c0_77, %c0_78] : memref<3x192x64xf32, #tpu.memory_space<vmem>>, vector<1x192x64xf32>
    %98 = vector.shape_cast %97 : vector<1x192x64xf32> to vector<192x64xf32>
    %99 = vector.extract_strided_slice %85 {offsets = [0, 2, 0, 0], sizes = [2, 16, 16, 192], strides = [1, 1, 1, 1]} : vector<2x18x16x192xf32> to vector<2x16x16x192xf32>
    %100 = vector.shape_cast %99 : vector<2x16x16x192xf32> to vector<512x192xf32>
    %cst_79 = arith.constant dense<0.000000e+00> : vector<512x64xf32>
    %101 = tpu.matmul %100, %98, %cst_79 {dimension_numbers = #tpu.dot_dimension_numbers<[1], [0], [0], [1], [0, 0, 1, 1], [], []>} : vector<512x192xf32>, vector<192x64xf32>, vector<512x64xf32> -> vector<512x64xf32>
    %102 = arith.addf %96, %101 : vector<512x64xf32>
    %c0_80 = arith.constant 0 : index
    %c0_81 = arith.constant 0 : index
    %103 = vector.load %arg9[%c0_80, %c0_81] : memref<1x64xf32, #tpu.memory_space<vmem>>, vector<1x64xf32>
    %104 = vector.shape_cast %103 : vector<1x64xf32> to vector<64xf32>
    %105 = vector.shape_cast %104 : vector<64xf32> to vector<1x64xf32>
    %106 = vector.broadcast %105 : vector<1x64xf32> to vector<512x64xf32>
    %107 = arith.addf %102, %106 : vector<512x64xf32>
    %c0_82 = arith.constant 0 : index
    %c0_83 = arith.constant 0 : index
    %108 = vector.load %arg10[%c0_82, %c0_83] : memref<1x64xf32, #tpu.memory_space<vmem>>, vector<1x64xf32>
    %109 = vector.shape_cast %108 : vector<1x64xf32> to vector<64xf32>
    %cst_84 = arith.constant 0.000000e+00 : f32
    %110 = vector.broadcast %cst_84 : f32 to vector<512x64xf32>
    %111 = arith.cmpf ogt, %107, %110 : vector<512x64xf32>
    %112 = vector.shape_cast %109 : vector<64xf32> to vector<1x64xf32>
    %113 = vector.broadcast %112 : vector<1x64xf32> to vector<512x64xf32>
    %114 = arith.mulf %107, %113 : vector<512x64xf32>
    %115 = arith.select %111, %107, %114 : vector<512x64xi1>, vector<512x64xf32>
    %116 = arith.addf %78, %115 : vector<512x64xf32>
    %117 = vector.shape_cast %116 : vector<512x64xf32> to vector<2x16x16x64xf32>
    %c0_85 = arith.constant 0 : index
    %c1_86 = arith.constant 1 : index
    %c1_87 = arith.constant 1 : index
    %c0_88 = arith.constant 0 : index
    %118 = vector.load %arg15[%c0_85, %c1_86, %c1_87, %c0_88] : memref<2x18x18x64xf32, #tpu.memory_space<vmem>>, vector<2x16x16x64xf32>
    tpu.vector_store %arg15[%c0_85, %c1_86, %c1_87, %c0_88], %117 {strides = array<i32>} : memref<2x18x18x64xf32, #tpu.memory_space<vmem>>, vector<2x16x16x64xf32>,
    %c0_89 = arith.constant 0 : index
    %c0_90 = arith.constant 0 : index
    %c0_91 = arith.constant 0 : index
    %c0_92 = arith.constant 0 : index
    %119 = vector.load %arg15[%c0_89, %c0_90, %c0_91, %c0_92] : memref<2x18x18x64xf32, #tpu.memory_space<vmem>>, vector<2x18x18x64xf32>
    %120 = vector.extract_strided_slice %119 {offsets = [0, 0, 0, 0], sizes = [2, 18, 16, 64], strides = [1, 1, 1, 1]} : vector<2x18x18x64xf32> to vector<2x18x16x64xf32>
    %121 = vector.extract_strided_slice %119 {offsets = [0, 0, 1, 0], sizes = [2, 18, 16, 64], strides = [1, 1, 1, 1]} : vector<2x18x18x64xf32> to vector<2x18x16x64xf32>
    %122 = vector.extract_strided_slice %119 {offsets = [0, 0, 2, 0], sizes = [2, 18, 16, 64], strides = [1, 1, 1, 1]} : vector<2x18x18x64xf32> to vector<2x18x16x64xf32>
    %123 = tpu.concatenate %120, %121, %122 in 3 : vector<2x18x16x64xf32>, vector<2x18x16x64xf32>, vector<2x18x16x64xf32> -> vector<2x18x16x192xf32>
    %c0_93 = arith.constant 0 : index
    %c0_94 = arith.constant 0 : index
    %c0_95 = arith.constant 0 : index
    %124 = vector.load %arg11[%c0_93, %c0_94, %c0_95] : memref<3x192x128xf32, #tpu.memory_space<vmem>>, vector<1x192x128xf32>
    %125 = vector.shape_cast %124 : vector<1x192x128xf32> to vector<192x128xf32>
    %126 = vector.extract_strided_slice %123 {offsets = [0, 0, 0, 0], sizes = [2, 16, 16, 192], strides = [1, 1, 1, 1]} : vector<2x18x16x192xf32> to vector<2x16x16x192xf32>
    %127 = vector.shape_cast %126 : vector<2x16x16x192xf32> to vector<512x192xf32>
    %cst_96 = arith.constant dense<0.000000e+00> : vector<512x128xf32>
    %128 = tpu.matmul %127, %125, %cst_96 {dimension_numbers = #tpu.dot_dimension_numbers<[1], [0], [0], [1], [0, 0, 1, 1], [], []>} : vector<512x192xf32>, vector<192x128xf32>, vector<512x128xf32> -> vector<512x128xf32>
    %c0_97 = arith.constant 0 : index
    %c0_98 = arith.constant 0 : index
    %129 = vector.load %arg12[%c0_97, %c0_98] : memref<1x128xf32, #tpu.memory_space<vmem>>, vector<1x128xf32>
    %130 = vector.shape_cast %129 : vector<1x128xf32> to vector<128xf32>
    %131 = vector.shape_cast %130 : vector<128xf32> to vector<1x128xf32>
    %132 = vector.broadcast %131 : vector<1x128xf32> to vector<512x128xf32>
    %133 = arith.addf %128, %132 : vector<512x128xf32>
    %134 = vector.shape_cast %133 : vector<512x128xf32> to vector<2x16x16x128xf32>
    %c0_99 = arith.constant 0 : index
    %c0_100 = arith.constant 0 : index
    %c0_101 = arith.constant 0 : index
    %c0_102 = arith.constant 0 : index
    %135 = vector.load %arg13[%c0_99, %c0_100, %c0_101, %c0_102] : memref<2x16x16x128xf32, #tpu.memory_space<vmem>>, vector<2x16x16x128xf32>
    tpu.vector_store %arg13[%c0_99, %c0_100, %c0_101, %c0_102], %134 {strides = array<i32>} : memref<2x16x16x128xf32, #tpu.memory_space<vmem>>, vector<2x16x16x128xf32>,
    %c0_103 = arith.constant 0 : index
    %c0_104 = arith.constant 0 : index
    %c0_105 = arith.constant 0 : index
    %c0_106 = arith.constant 0 : index
    %136 = vector.load %arg13[%c0_103, %c0_104, %c0_105, %c0_106] : memref<2x16x16x128xf32, #tpu.memory_space<vmem>>, vector<2x16x16x128xf32>
    %c1_107 = arith.constant 1 : index
    %c0_108 = arith.constant 0 : index
    %c0_109 = arith.constant 0 : index
    %137 = vector.load %arg11[%c1_107, %c0_108, %c0_109] : memref<3x192x128xf32, #tpu.memory_space<vmem>>, vector<1x192x128xf32>
    %138 = vector.shape_cast %137 : vector<1x192x128xf32> to vector<192x128xf32>
    %139 = vector.extract_strided_slice %123 {offsets = [0, 1, 0, 0], sizes = [2, 16, 16, 192], strides = [1, 1, 1, 1]} : vector<2x18x16x192xf32> to vector<2x16x16x192xf32>
    %140 = vector.shape_cast %139 : vector<2x16x16x192xf32> to vector<512x192xf32>
    %cst_110 = arith.constant dense<0.000000e+00> : vector<512x128xf32>
    %141 = tpu.matmul %140, %138, %cst_110 {dimension_numbers = #tpu.dot_dimension_numbers<[1], [0], [0], [1], [0, 0, 1, 1], [], []>} : vector<512x192xf32>, vector<192x128xf32>, vector<512x128xf32> -> vector<512x128xf32>
    %142 = vector.shape_cast %141 : vector<512x128xf32> to vector<2x16x16x128xf32>
    %143 = arith.addf %136, %142 : vector<2x16x16x128xf32>
    %c0_111 = arith.constant 0 : index
    %c0_112 = arith.constant 0 : index
    %c0_113 = arith.constant 0 : index
    %c0_114 = arith.constant 0 : index
    %144 = vector.load %arg13[%c0_111, %c0_112, %c0_113, %c0_114] : memref<2x16x16x128xf32, #tpu.memory_space<vmem>>, vector<2x16x16x128xf32>
    tpu.vector_store %arg13[%c0_111, %c0_112, %c0_113, %c0_114], %143 {strides = array<i32>} : memref<2x16x16x128xf32, #tpu.memory_space<vmem>>, vector<2x16x16x128xf32>,
    %c0_115 = arith.constant 0 : index
    %c0_116 = arith.constant 0 : index
    %c0_117 = arith.constant 0 : index
    %c0_118 = arith.constant 0 : index
    %145 = vector.load %arg13[%c0_115, %c0_116, %c0_117, %c0_118] : memref<2x16x16x128xf32, #tpu.memory_space<vmem>>, vector<2x16x16x128xf32>
    %c2_119 = arith.constant 2 : index
    %c0_120 = arith.constant 0 : index
    %c0_121 = arith.constant 0 : index
    %146 = vector.load %arg11[%c2_119, %c0_120, %c0_121] : memref<3x192x128xf32, #tpu.memory_space<vmem>>, vector<1x192x128xf32>
    %147 = vector.shape_cast %146 : vector<1x192x128xf32> to vector<192x128xf32>
    %148 = vector.extract_strided_slice %123 {offsets = [0, 2, 0, 0], sizes = [2, 16, 16, 192], strides = [1, 1, 1, 1]} : vector<2x18x16x192xf32> to vector<2x16x16x192xf32>
    %149 = vector.shape_cast %148 : vector<2x16x16x192xf32> to vector<512x192xf32>
    %cst_122 = arith.constant dense<0.000000e+00> : vector<512x128xf32>
    %150 = tpu.matmul %149, %147, %cst_122 {dimension_numbers = #tpu.dot_dimension_numbers<[1], [0], [0], [1], [0, 0, 1, 1], [], []>} : vector<512x192xf32>, vector<192x128xf32>, vector<512x128xf32> -> vector<512x128xf32>
    %151 = vector.shape_cast %150 : vector<512x128xf32> to vector<2x16x16x128xf32>
    %152 = arith.addf %145, %151 : vector<2x16x16x128xf32>
    %c0_123 = arith.constant 0 : index
    %c0_124 = arith.constant 0 : index
    %c0_125 = arith.constant 0 : index
    %c0_126 = arith.constant 0 : index
    %153 = vector.load %arg13[%c0_123, %c0_124, %c0_125, %c0_126] : memref<2x16x16x128xf32, #tpu.memory_space<vmem>>, vector<2x16x16x128xf32>
    tpu.vector_store %arg13[%c0_123, %c0_124, %c0_125, %c0_126], %152 {strides = array<i32>} : memref<2x16x16x128xf32, #tpu.memory_space<vmem>>, vector<2x16x16x128xf32>,
    return
  }
  func.func @transform_0(%arg0: i32) -> (i32, i32, i32, i32) {
    %c0_i32 = arith.constant 0 : i32
    %c0_i32_0 = arith.constant 0 : i32
    %c0_i32_1 = arith.constant 0 : i32
    %c0_i32_2 = arith.constant 0 : i32
    return %arg0, %c0_i32, %c0_i32_0, %c0_i32_1 : i32, i32, i32, i32
  }
  func.func @transform_1(%arg0: i32) -> (i32, i32, i32) {
    %c0_i32 = arith.constant 0 : i32
    %c0_i32_0 = arith.constant 0 : i32
    %c0_i32_1 = arith.constant 0 : i32
    %c0_i32_2 = arith.constant 0 : i32
    return %c0_i32, %c0_i32_0, %c0_i32_1 : i32, i32, i32
  }
  func.func @transform_2(%arg0: i32) -> (i32, i32) {
    %c0_i32 = arith.constant 0 : i32
    %c0_i32_0 = arith.constant 0 : i32
    %c0_i32_1 = arith.constant 0 : i32
    return %c0_i32, %c0_i32_0 : i32, i32
  }
  func.func @transform_3(%arg0: i32) -> (i32, i32) {
    %c0_i32 = arith.constant 0 : i32
    %c0_i32_0 = arith.constant 0 : i32
    %c0_i32_1 = arith.constant 0 : i32
    return %c0_i32, %c0_i32_0 : i32, i32
  }
  func.func @transform_4(%arg0: i32) -> (i32, i32, i32) {
    %c0_i32 = arith.constant 0 : i32
    %c0_i32_0 = arith.constant 0 : i32
    %c0_i32_1 = arith.constant 0 : i32
    %c0_i32_2 = arith.constant 0 : i32
    return %c0_i32, %c0_i32_0, %c0_i32_1 : i32, i32, i32
  }
  func.func @transform_5(%arg0: i32) -> (i32, i32) {
    %c0_i32 = arith.constant 0 : i32
    %c0_i32_0 = arith.constant 0 : i32
    %c0_i32_1 = arith.constant 0 : i32
    return %c0_i32, %c0_i32_0 : i32, i32
  }
  func.func @transform_6(%arg0: i32) -> (i32, i32) {
    %c0_i32 = arith.constant 0 : i32
    %c0_i32_0 = arith.constant 0 : i32
    %c0_i32_1 = arith.constant 0 : i32
    return %c0_i32, %c0_i32_0 : i32, i32
  }
  func.func @transform_7(%arg0: i32) -> (i32, i32, i32) {
    %c0_i32 = arith.constant 0 : i32
    %c0_i32_0 = arith.constant 0 : i32
    %c0_i32_1 = arith.constant 0 : i32
    %c0_i32_2 = arith.constant 0 : i32
    return %c0_i32, %c0_i32_0, %c0_i32_1 : i32, i32, i32
  }
  func.func @transform_8(%arg0: i32) -> (i32, i32) {
    %c0_i32 = arith.constant 0 : i32
    %c0_i32_0 = arith.constant 0 : i32
    %c0_i32_1 = arith.constant 0 : i32
    return %c0_i32, %c0_i32_0 : i32, i32
  }
  func.func @transform_9(%arg0: i32) -> (i32, i32) {
    %c0_i32 = arith.constant 0 : i32
    %c0_i32_0 = arith.constant 0 : i32
    %c0_i32_1 = arith.constant 0 : i32
    return %c0_i32, %c0_i32_0 : i32, i32
  }
  func.func @transform_10(%arg0: i32) -> (i32, i32, i32) {
    %c0_i32 = arith.constant 0 : i32
    %c0_i32_0 = arith.constant 0 : i32
    %c0_i32_1 = arith.constant 0 : i32
    %c0_i32_2 = arith.constant 0 : i32
    return %c0_i32, %c0_i32_0, %c0_i32_1 : i32, i32, i32
  }
  func.func @transform_11(%arg0: i32) -> (i32, i32) {
    %c0_i32 = arith.constant 0 : i32
    %c0_i32_0 = arith.constant 0 : i32
    %c0_i32_1 = arith.constant 0 : i32
    return %c0_i32, %c0_i32_0 : i32, i32
  }
  func.func @transform_12(%arg0: i32) -> (i32, i32, i32, i32) {
    %c0_i32 = arith.constant 0 : i32
    %c0_i32_0 = arith.constant 0 : i32
    %c0_i32_1 = arith.constant 0 : i32
    %c0_i32_2 = arith.constant 0 : i32
    return %arg0, %c0_i32, %c0_i32_0, %c0_i32_1 : i32, i32, i32, i32
  }
}

</mosaic_0001>

<llo_original>
// kernel: embedded_block_forward.1
$region0: #{embedded_block_forward.1}
  #allocation0 [shape = 'u32[]', space=smem, size = 0x4, offset = 0x4, fixed_abs, tag = 'smem constant byte address 0x4 - core index']
  #allocation1 [shape = 'u32[144,128]{1,0:T(1,128)}', space=vmem, size = 0x12000, scoped, tag = 'internal scratch']
  #allocation2 [shape = 'f32[2,18,18,4]{3,2,1,0:T(8,128)}', space=vmem, size = 0x6c000, scoped, tag = 'scratch operand']
  #allocation3 [shape = 'f32[2,18,18,64]{3,2,1,0:T(8,128)}', space=vmem, size = 0x6c000, scoped, tag = 'scratch operand']
  %s0 = inlined_call_operand.vmem [shape: f32[2,16,16,4], index: 0, kind: input, shape index: {}]
  %s1 = inlined_call_operand.vmem [shape: f32[3,12,64], index: 1, kind: input, shape index: {}]
  %s2 = inlined_call_operand.vmem [shape: f32[1,64], index: 2, kind: input, shape index: {}]
  %s3 = inlined_call_operand.vmem [shape: f32[1,64], index: 3, kind: input, shape index: {}]
  %s4 = inlined_call_operand.vmem [shape: f32[3,192,64], index: 4, kind: input, shape index: {}]
  %s5 = inlined_call_operand.vmem [shape: f32[1,64], index: 5, kind: input, shape index: {}]
  %s6 = inlined_call_operand.vmem [shape: f32[1,64], index: 6, kind: input, shape index: {}]
  %s7 = inlined_call_operand.vmem [shape: f32[3,192,64], index: 7, kind: input, shape index: {}]
  %s8 = inlined_call_operand.vmem [shape: f32[1,64], index: 8, kind: input, shape index: {}]
  %s9 = inlined_call_operand.vmem [shape: f32[1,64], index: 9, kind: input, shape index: {}]
  %s10 = inlined_call_operand.vmem [shape: f32[3,192,128], index: 10, kind: input, shape index: {}]
  %s11 = inlined_call_operand.vmem [shape: f32[1,128], index: 11, kind: input, shape index: {}]
  %s12 = inlined_call_operand.vmem [shape: f32[2,16,16,128], index: 12, kind: output, shape index: {}]
  %s13 = sld [smem:[#allocation0]]
  $region58: #{embedded_block_forward.1} parent=0
    _
  %s15 = ssub.s32 1, %s13
  %s16 = scalar_select 0, %s15, %s13
  // Predicated region
  $region2: #{embedded_block_forward.1} parent=0 // pred_check
    _
  $region3: #{embedded_block_forward.1} parent=0 // pred_check_branch
    %18 = sbr.rel (0) target = $region5
  $region4: #{embedded_block_forward.1} parent=0 // pred_region
    _
  $region5: #{embedded_block_forward.1} parent=0 // pred_fallthru
    _
  // Predicated region
  $region6: #{embedded_block_forward.1} parent=0 // pred_check
    _
  $region7: #{embedded_block_forward.1} parent=0 // pred_check_branch
    %20 = sbr.rel (0) target = $region9
  $region8: #{embedded_block_forward.1} parent=0 // pred_region
    _
  $region9: #{embedded_block_forward.1} parent=0 // pred_fallthru
    _
  // Predicated region
  $region10: #{embedded_block_forward.1} parent=0 // pred_check
    _
  $region11: #{embedded_block_forward.1} parent=0 // pred_check_branch
    %22 = sbr.rel (0) target = $region13
  $region12: #{embedded_block_forward.1} parent=0 // pred_region
    _
  $region13: #{embedded_block_forward.1} parent=0 // pred_fallthru
    _
  // Predicated region
  $region14: #{embedded_block_forward.1} parent=0 // pred_check
    _
  $region15: #{embedded_block_forward.1} parent=0 // pred_check_branch
    %24 = sbr.rel (0) target = $region17
  $region16: #{embedded_block_forward.1} parent=0 // pred_region
    _
  $region17: #{embedded_block_forward.1} parent=0 // pred_fallthru
    _
  // Predicated region
  $region18: #{embedded_block_forward.1} parent=0 // pred_check
    _
  $region19: #{embedded_block_forward.1} parent=0 // pred_check_branch
    %26 = sbr.rel (0) target = $region21
  $region20: #{embedded_block_forward.1} parent=0 // pred_region
    _
  $region21: #{embedded_block_forward.1} parent=0 // pred_fallthru
    _
  // Predicated region
  $region22: #{embedded_block_forward.1} parent=0 // pred_check
    _
  $region23: #{embedded_block_forward.1} parent=0 // pred_check_branch
    %28 = sbr.rel (0) target = $region25
  $region24: #{embedded_block_forward.1} parent=0 // pred_region
    _
  $region25: #{embedded_block_forward.1} parent=0 // pred_fallthru
    _
  // Predicated region
  $region26: #{embedded_block_forward.1} parent=0 // pred_check
    _
  $region27: #{embedded_block_forward.1} parent=0 // pred_check_branch
    %30 = sbr.rel (0) target = $region29
  $region28: #{embedded_block_forward.1} parent=0 // pred_region
    _
  $region29: #{embedded_block_forward.1} parent=0 // pred_fallthru
    _
  // Predicated region
  $region30: #{embedded_block_forward.1} parent=0 // pred_check
    _
  $region31: #{embedded_block_forward.1} parent=0 // pred_check_branch
    %32 = sbr.rel (0) target = $region33
  $region32: #{embedded_block_forward.1} parent=0 // pred_region
    _
  $region33: #{embedded_block_forward.1} parent=0 // pred_fallthru
    _
  // Predicated region
  $region34: #{embedded_block_forward.1} parent=0 // pred_check
    _
  $region35: #{embedded_block_forward.1} parent=0 // pred_check_branch
    %34 = sbr.rel (0) target = $region37
  $region36: #{embedded_block_forward.1} parent=0 // pred_region
    _
  $region37: #{embedded_block_forward.1} parent=0 // pred_fallthru
    _
  // Predicated region
  $region38: #{embedded_block_forward.1} parent=0 // pred_check
    _
  $region39: #{embedded_block_forward.1} parent=0 // pred_check_branch
    %36 = sbr.rel (0) target = $region41
  $region40: #{embedded_block_forward.1} parent=0 // pred_region
    _
  $region41: #{embedded_block_forward.1} parent=0 // pred_fallthru
    _
  // Predicated region
  $region42: #{embedded_block_forward.1} parent=0 // pred_check
    _
  $region43: #{embedded_block_forward.1} parent=0 // pred_check_branch
    %38 = sbr.rel (0) target = $region45
  $region44: #{embedded_block_forward.1} parent=0 // pred_region
    _
  $region45: #{embedded_block_forward.1} parent=0 // pred_fallthru
    _
  // Predicated region
  $region46: #{embedded_block_forward.1} parent=0 // pred_check
    _
  $region47: #{embedded_block_forward.1} parent=0 // pred_check_branch
    %40 = sbr.rel (0) target = $region49
  $region48: #{embedded_block_forward.1} parent=0 // pred_region
    _
  $region49: #{embedded_block_forward.1} parent=0 // pred_fallthru
    _
  %vm41 = vcmask 31744
  %42 = vst.msk [vmem:[#allocation2] sm:$0xff] %vm41, 0.0
  %43 = vst.msk [vmem:[#allocation2 + $0x8] sm:$0xff] %vm41, 0.0
  %vm44 = vcmask 25600
  %45 = vst.msk [vmem:[#allocation2 + $0x10] sm:$0x3] %vm44, 0.0
  %46 = vst.msk [vmem:[#allocation2 + $0x18] sm:$0xff] %vm41, 0.0
  %47 = vst.msk [vmem:[#allocation2 + $0x20] sm:$0xff] %vm41, 0.0
  %48 = vst.msk [vmem:[#allocation2 + $0x28] sm:$0x3] %vm44, 0.0
  %49 = vst.msk [vmem:[#allocation2 + $0x30] sm:$0xff] %vm41, 0.0
  %50 = vst.msk [vmem:[#allocation2 + $0x38] sm:$0xff] %vm41, 0.0
  %51 = vst.msk [vmem:[#allocation2 + $0x40] sm:$0x3] %vm44, 0.0
  %52 = vst.msk [vmem:[#allocation2 + $0x48] sm:$0xff] %vm41, 0.0
  %53 = vst.msk [vmem:[#allocation2 + $0x50] sm:$0xff] %vm41, 0.0
  %54 = vst.msk [vmem:[#allocation2 + $0x58] sm:$0x3] %vm44, 0.0
  %55 = vst.msk [vmem:[#allocation2 + $0x60] sm:$0xff] %vm41, 0.0
  %56 = vst.msk [vmem:[#allocation2 + $0x68] sm:$0xff] %vm41, 0.0
  %57 = vst.msk [vmem:[#allocation2 + $0x70] sm:$0x3] %vm44, 0.0
  %58 = vst.msk [vmem:[#allocation2 + $0x78] sm:$0xff] %vm41, 0.0
  %59 = vst.msk [vmem:[#allocation2 + $0x80] sm:$0xff] %vm41, 0.0
  %60 = vst.msk [vmem:[#allocation2 + $0x88] sm:$0x3] %vm44, 0.0
  %61 = vst.msk [vmem:[#allocation2 + $0x90] sm:$0xff] %vm41, 0.0
  %62 = vst.msk [vmem:[#allocation2 + $0x98] sm:$0xff] %vm41, 0.0
  %63 = vst.msk [vmem:[#allocation2 + $0xa0] sm:$0x3] %vm44, 0.0
  %64 = vst.msk [vmem:[#allocation2 + $0xa8] sm:$0xff] %vm41, 0.0
  %65 = vst.msk [vmem:[#allocation2 + $0xb0] sm:$0xff] %vm41, 0.0
  %66 = vst.msk [vmem:[#allocation2 + $0xb8] sm:$0x3] %vm44, 0.0
  %67 = vst.msk [vmem:[#allocation2 + $0xc0] sm:$0xff] %vm41, 0.0
  %68 = vst.msk [vmem:[#allocation2 + $0xc8] sm:$0xff] %vm41, 0.0
  %69 = vst.msk [vmem:[#allocation2 + $0xd0] sm:$0x3] %vm44, 0.0
  %70 = vst.msk [vmem:[#allocation2 + $0xd8] sm:$0xff] %vm41, 0.0
  %71 = vst.msk [vmem:[#allocation2 + $0xe0] sm:$0xff] %vm41, 0.0
  %72 = vst.msk [vmem:[#allocation2 + $0xe8] sm:$0x3] %vm44, 0.0
  %73 = vst.msk [vmem:[#allocation2 + $0xf0] sm:$0xff] %vm41, 0.0
  %74 = vst.msk [vmem:[#allocation2 + $0xf8] sm:$0xff] %vm41, 0.0
  %75 = vst.msk [vmem:[#allocation2 + $0x100] sm:$0x3] %vm44, 0.0
  %76 = vst.msk [vmem:[#allocation2 + $0x108] sm:$0xff] %vm41, 0.0
  %77 = vst.msk [vmem:[#allocation2 + $0x110] sm:$0xff] %vm41, 0.0
  %78 = vst.msk [vmem:[#allocation2 + $0x118] sm:$0x3] %vm44, 0.0
  %79 = vst.msk [vmem:[#allocation2 + $0x120] sm:$0xff] %vm41, 0.0
  %80 = vst.msk [vmem:[#allocation2 + $0x128] sm:$0xff] %vm41, 0.0
  %81 = vst.msk [vmem:[#allocation2 + $0x130] sm:$0x3] %vm44, 0.0
  %82 = vst.msk [vmem:[#allocation2 + $0x138] sm:$0xff] %vm41, 0.0
  %83 = vst.msk [vmem:[#allocation2 + $0x140] sm:$0xff] %vm41, 0.0
  %84 = vst.msk [vmem:[#allocation2 + $0x148] sm:$0x3] %vm44, 0.0
  %85 = vst.msk [vmem:[#allocation2 + $0x150] sm:$0xff] %vm41, 0.0
  %86 = vst.msk [vmem:[#allocation2 + $0x158] sm:$0xff] %vm41, 0.0
  %87 = vst.msk [vmem:[#allocation2 + $0x160] sm:$0x3] %vm44, 0.0
  %88 = vst.msk [vmem:[#allocation2 + $0x168] sm:$0xff] %vm41, 0.0
  %89 = vst.msk [vmem:[#allocation2 + $0x170] sm:$0xff] %vm41, 0.0
  %90 = vst.msk [vmem:[#allocation2 + $0x178] sm:$0x3] %vm44, 0.0
  %91 = vst.msk [vmem:[#allocation2 + $0x180] sm:$0xff] %vm41, 0.0
  %92 = vst.msk [vmem:[#allocation2 + $0x188] sm:$0xff] %vm41, 0.0
  %93 = vst.msk [vmem:[#allocation2 + $0x190] sm:$0x3] %vm44, 0.0
  %94 = vst.msk [vmem:[#allocation2 + $0x198] sm:$0xff] %vm41, 0.0
  %95 = vst.msk [vmem:[#allocation2 + $0x1a0] sm:$0xff] %vm41, 0.0
  %96 = vst.msk [vmem:[#allocation2 + $0x1a8] sm:$0x3] %vm44, 0.0
  %97 = vst.msk [vmem:[#allocation2 + $0x1b0] sm:$0xff] %vm41, 0.0
  %98 = vst.msk [vmem:[#allocation2 + $0x1b8] sm:$0xff] %vm41, 0.0
  %99 = vst.msk [vmem:[#allocation2 + $0x1c0] sm:$0x3] %vm44, 0.0
  %100 = vst.msk [vmem:[#allocation2 + $0x1c8] sm:$0xff] %vm41, 0.0
  %101 = vst.msk [vmem:[#allocation2 + $0x1d0] sm:$0xff] %vm41, 0.0
  %102 = vst.msk [vmem:[#allocation2 + $0x1d8] sm:$0x3] %vm44, 0.0
  %103 = vst.msk [vmem:[#allocation2 + $0x1e0] sm:$0xff] %vm41, 0.0
  %104 = vst.msk [vmem:[#allocation2 + $0x1e8] sm:$0xff] %vm41, 0.0
  %105 = vst.msk [vmem:[#allocation2 + $0x1f0] sm:$0x3] %vm44, 0.0
  %106 = vst.msk [vmem:[#allocation2 + $0x1f8] sm:$0xff] %vm41, 0.0
  %107 = vst.msk [vmem:[#allocation2 + $0x200] sm:$0xff] %vm41, 0.0
  %108 = vst.msk [vmem:[#allocation2 + $0x208] sm:$0x3] %vm44, 0.0
  %109 = vst.msk [vmem:[#allocation2 + $0x210] sm:$0xff] %vm41, 0.0
  %110 = vst.msk [vmem:[#allocation2 + $0x218] sm:$0xff] %vm41, 0.0
  %111 = vst.msk [vmem:[#allocation2 + $0x220] sm:$0x3] %vm44, 0.0
  %112 = vst.msk [vmem:[#allocation2 + $0x228] sm:$0xff] %vm41, 0.0
  %113 = vst.msk [vmem:[#allocation2 + $0x230] sm:$0xff] %vm41, 0.0
  %114 = vst.msk [vmem:[#allocation2 + $0x238] sm:$0x3] %vm44, 0.0
  %115 = vst.msk [vmem:[#allocation2 + $0x240] sm:$0xff] %vm41, 0.0
  %116 = vst.msk [vmem:[#allocation2 + $0x248] sm:$0xff] %vm41, 0.0
  %117 = vst.msk [vmem:[#allocation2 + $0x250] sm:$0x3] %vm44, 0.0
  %118 = vst.msk [vmem:[#allocation2 + $0x258] sm:$0xff] %vm41, 0.0
  %119 = vst.msk [vmem:[#allocation2 + $0x260] sm:$0xff] %vm41, 0.0
  %120 = vst.msk [vmem:[#allocation2 + $0x268] sm:$0x3] %vm44, 0.0
  %121 = vst.msk [vmem:[#allocation2 + $0x270] sm:$0xff] %vm41, 0.0
  %122 = vst.msk [vmem:[#allocation2 + $0x278] sm:$0xff] %vm41, 0.0
  %123 = vst.msk [vmem:[#allocation2 + $0x280] sm:$0x3] %vm44, 0.0
  %124 = vst.msk [vmem:[#allocation2 + $0x288] sm:$0xff] %vm41, 0.0
  %125 = vst.msk [vmem:[#allocation2 + $0x290] sm:$0xff] %vm41, 0.0
  %126 = vst.msk [vmem:[#allocation2 + $0x298] sm:$0x3] %vm44, 0.0
  %127 = vst.msk [vmem:[#allocation2 + $0x2a0] sm:$0xff] %vm41, 0.0
  %128 = vst.msk [vmem:[#allocation2 + $0x2a8] sm:$0xff] %vm41, 0.0
  %129 = vst.msk [vmem:[#allocation2 + $0x2b0] sm:$0x3] %vm44, 0.0
  %130 = vst.msk [vmem:[#allocation2 + $0x2b8] sm:$0xff] %vm41, 0.0
  %131 = vst.msk [vmem:[#allocation2 + $0x2c0] sm:$0xff] %vm41, 0.0
  %132 = vst.msk [vmem:[#allocation2 + $0x2c8] sm:$0x3] %vm44, 0.0
  %133 = vst.msk [vmem:[#allocation2 + $0x2d0] sm:$0xff] %vm41, 0.0
  %134 = vst.msk [vmem:[#allocation2 + $0x2d8] sm:$0xff] %vm41, 0.0
  %135 = vst.msk [vmem:[#allocation2 + $0x2e0] sm:$0x3] %vm44, 0.0
  %136 = vst.msk [vmem:[#allocation2 + $0x2e8] sm:$0xff] %vm41, 0.0
  %137 = vst.msk [vmem:[#allocation2 + $0x2f0] sm:$0xff] %vm41, 0.0
  %138 = vst.msk [vmem:[#allocation2 + $0x2f8] sm:$0x3] %vm44, 0.0
  %139 = vst.msk [vmem:[#allocation2 + $0x300] sm:$0xff] %vm41, 0.0
  %140 = vst.msk [vmem:[#allocation2 + $0x308] sm:$0xff] %vm41, 0.0
  %141 = vst.msk [vmem:[#allocation2 + $0x310] sm:$0x3] %vm44, 0.0
  %142 = vst.msk [vmem:[#allocation2 + $0x318] sm:$0xff] %vm41, 0.0
  %143 = vst.msk [vmem:[#allocation2 + $0x320] sm:$0xff] %vm41, 0.0
  %144 = vst.msk [vmem:[#allocation2 + $0x328] sm:$0x3] %vm44, 0.0
  %145 = vst.msk [vmem:[#allocation2 + $0x330] sm:$0xff] %vm41, 0.0
  %146 = vst.msk [vmem:[#allocation2 + $0x338] sm:$0xff] %vm41, 0.0
  %147 = vst.msk [vmem:[#allocation2 + $0x340] sm:$0x3] %vm44, 0.0
  %148 = vst.msk [vmem:[#allocation2 + $0x348] sm:$0xff] %vm41, 0.0
  %149 = vst.msk [vmem:[#allocation2 + $0x350] sm:$0xff] %vm41, 0.0
  %150 = vst.msk [vmem:[#allocation2 + $0x358] sm:$0x3] %vm44, 0.0
  %vm151 = vcmask 523264
  %152 = vst.msk [vmem:[#allocation3] sm:$0xff] %vm151, 0.0
  %153 = vst.msk [vmem:[#allocation3 + $0x8] sm:$0xff] %vm151, 0.0
  %vm154 = vcmask 517120
  %155 = vst.msk [vmem:[#allocation3 + $0x10] sm:$0x3] %vm154, 0.0
  %156 = vst.msk [vmem:[#allocation3 + $0x18] sm:$0xff] %vm151, 0.0
  %157 = vst.msk [vmem:[#allocation3 + $0x20] sm:$0xff] %vm151, 0.0
  %158 = vst.msk [vmem:[#allocation3 + $0x28] sm:$0x3] %vm154, 0.0
  %159 = vst.msk [vmem:[#allocation3 + $0x30] sm:$0xff] %vm151, 0.0
  %160 = vst.msk [vmem:[#allocation3 + $0x38] sm:$0xff] %vm151, 0.0
  %161 = vst.msk [vmem:[#allocation3 + $0x40] sm:$0x3] %vm154, 0.0
  %162 = vst.msk [vmem:[#allocation3 + $0x48] sm:$0xff] %vm151, 0.0
  %163 = vst.msk [vmem:[#allocation3 + $0x50] sm:$0xff] %vm151, 0.0
  %164 = vst.msk [vmem:[#allocation3 + $0x58] sm:$0x3] %vm154, 0.0
  %165 = vst.msk [vmem:[#allocation3 + $0x60] sm:$0xff] %vm151, 0.0
  %166 = vst.msk [vmem:[#allocation3 + $0x68] sm:$0xff] %vm151, 0.0
  %167 = vst.msk [vmem:[#allocation3 + $0x70] sm:$0x3] %vm154, 0.0
  %168 = vst.msk [vmem:[#allocation3 + $0x78] sm:$0xff] %vm151, 0.0
  %169 = vst.msk [vmem:[#allocation3 + $0x80] sm:$0xff] %vm151, 0.0
  %170 = vst.msk [vmem:[#allocation3 + $0x88] sm:$0x3] %vm154, 0.0
  %171 = vst.msk [vmem:[#allocation3 + $0x90] sm:$0xff] %vm151, 0.0
  %172 = vst.msk [vmem:[#allocation3 + $0x98] sm:$0xff] %vm151, 0.0
  %173 = vst.msk [vmem:[#allocation3 + $0xa0] sm:$0x3] %vm154, 0.0
  %174 = vst.msk [vmem:[#allocation3 + $0xa8] sm:$0xff] %vm151, 0.0
  %175 = vst.msk [vmem:[#allocation3 + $0xb0] sm:$0xff] %vm151, 0.0
  %176 = vst.msk [vmem:[#allocation3 + $0xb8] sm:$0x3] %vm154, 0.0
  %177 = vst.msk [vmem:[#allocation3 + $0xc0] sm:$0xff] %vm151, 0.0
  %178 = vst.msk [vmem:[#allocation3 + $0xc8] sm:$0xff] %vm151, 0.0
  %179 = vst.msk [vmem:[#allocation3 + $0xd0] sm:$0x3] %vm154, 0.0
  %180 = vst.msk [vmem:[#allocation3 + $0xd8] sm:$0xff] %vm151, 0.0
  %181 = vst.msk [vmem:[#allocation3 + $0xe0] sm:$0xff] %vm151, 0.0
  %182 = vst.msk [vmem:[#allocation3 + $0xe8] sm:$0x3] %vm154, 0.0
  %183 = vst.msk [vmem:[#allocation3 + $0xf0] sm:$0xff] %vm151, 0.0
  %184 = vst.msk [vmem:[#allocation3 + $0xf8] sm:$0xff] %vm151, 0.0
  %185 = vst.msk [vmem:[#allocation3 + $0x100] sm:$0x3] %vm154, 0.0
  %186 = vst.msk [vmem:[#allocation3 + $0x108] sm:$0xff] %vm151, 0.0
  %187 = vst.msk [vmem:[#allocation3 + $0x110] sm:$0xff] %vm151, 0.0
  %188 = vst.msk [vmem:[#allocation3 + $0x118] sm:$0x3] %vm154, 0.0
  %189 = vst.msk [vmem:[#allocation3 + $0x120] sm:$0xff] %vm151, 0.0
  %190 = vst.msk [vmem:[#allocation3 + $0x128] sm:$0xff] %vm151, 0.0
  %191 = vst.msk [vmem:[#allocation3 + $0x130] sm:$0x3] %vm154, 0.0
  %192 = vst.msk [vmem:[#allocation3 + $0x138] sm:$0xff] %vm151, 0.0
  %193 = vst.msk [vmem:[#allocation3 + $0x140] sm:$0xff] %vm151, 0.0
  %194 = vst.msk [vmem:[#allocation3 + $0x148] sm:$0x3] %vm154, 0.0
  %195 = vst.msk [vmem:[#allocation3 + $0x150] sm:$0xff] %vm151, 0.0
  %196 = vst.msk [vmem:[#allocation3 + $0x158] sm:$0xff] %vm151, 0.0
  %197 = vst.msk [vmem:[#allocation3 + $0x160] sm:$0x3] %vm154, 0.0
  %198 = vst.msk [vmem:[#allocation3 + $0x168] sm:$0xff] %vm151, 0.0
  %199 = vst.msk [vmem:[#allocation3 + $0x170] sm:$0xff] %vm151, 0.0
  %200 = vst.msk [vmem:[#allocation3 + $0x178] sm:$0x3] %vm154, 0.0
  %201 = vst.msk [vmem:[#allocation3 + $0x180] sm:$0xff] %vm151, 0.0
  %202 = vst.msk [vmem:[#allocation3 + $0x188] sm:$0xff] %vm151, 0.0
  %203 = vst.msk [vmem:[#allocation3 + $0x190] sm:$0x3] %vm154, 0.0
  %204 = vst.msk [vmem:[#allocation3 + $0x198] sm:$0xff] %vm151, 0.0
  %205 = vst.msk [vmem:[#allocation3 + $0x1a0] sm:$0xff] %vm151, 0.0
  %206 = vst.msk [vmem:[#allocation3 + $0x1a8] sm:$0x3] %vm154, 0.0
  %207 = vst.msk [vmem:[#allocation3 + $0x1b0] sm:$0xff] %vm151, 0.0
  %208 = vst.msk [vmem:[#allocation3 + $0x1b8] sm:$0xff] %vm151, 0.0
  %209 = vst.msk [vmem:[#allocation3 + $0x1c0] sm:$0x3] %vm154, 0.0
  %210 = vst.msk [vmem:[#allocation3 + $0x1c8] sm:$0xff] %vm151, 0.0
  %211 = vst.msk [vmem:[#allocation3 + $0x1d0] sm:$0xff] %vm151, 0.0
  %212 = vst.msk [vmem:[#allocation3 + $0x1d8] sm:$0x3] %vm154, 0.0
  %213 = vst.msk [vmem:[#allocation3 + $0x1e0] sm:$0xff] %vm151, 0.0
  %214 = vst.msk [vmem:[#allocation3 + $0x1e8] sm:$0xff] %vm151, 0.0
  %215 = vst.msk [vmem:[#allocation3 + $0x1f0] sm:$0x3] %vm154, 0.0
  %216 = vst.msk [vmem:[#allocation3 + $0x1f8] sm:$0xff] %vm151, 0.0
  %217 = vst.msk [vmem:[#allocation3 + $0x200] sm:$0xff] %vm151, 0.0
  %218 = vst.msk [vmem:[#allocation3 + $0x208] sm:$0x3] %vm154, 0.0
  %219 = vst.msk [vmem:[#allocation3 + $0x210] sm:$0xff] %vm151, 0.0
  %220 = vst.msk [vmem:[#allocation3 + $0x218] sm:$0xff] %vm151, 0.0
  %221 = vst.msk [vmem:[#allocation3 + $0x220] sm:$0x3] %vm154, 0.0
  %222 = vst.msk [vmem:[#allocation3 + $0x228] sm:$0xff] %vm151, 0.0
  %223 = vst.msk [vmem:[#allocation3 + $0x230] sm:$0xff] %vm151, 0.0
  %224 = vst.msk [vmem:[#allocation3 + $0x238] sm:$0x3] %vm154, 0.0
  %225 = vst.msk [vmem:[#allocation3 + $0x240] sm:$0xff] %vm151, 0.0
  %226 = vst.msk [vmem:[#allocation3 + $0x248] sm:$0xff] %vm151, 0.0
  %227 = vst.msk [vmem:[#allocation3 + $0x250] sm:$0x3] %vm154, 0.0
  %228 = vst.msk [vmem:[#allocation3 + $0x258] sm:$0xff] %vm151, 0.0
  %229 = vst.msk [vmem:[#allocation3 + $0x260] sm:$0xff] %vm151, 0.0
  %230 = vst.msk [vmem:[#allocation3 + $0x268] sm:$0x3] %vm154, 0.0
  %231 = vst.msk [vmem:[#allocation3 + $0x270] sm:$0xff] %vm151, 0.0
  %232 = vst.msk [vmem:[#allocation3 + $0x278] sm:$0xff] %vm151, 0.0
  %233 = vst.msk [vmem:[#allocation3 + $0x280] sm:$0x3] %vm154, 0.0
  %234 = vst.msk [vmem:[#allocation3 + $0x288] sm:$0xff] %vm151, 0.0
  %235 = vst.msk [vmem:[#allocation3 + $0x290] sm:$0xff] %vm151, 0.0
  %236 = vst.msk [vmem:[#allocation3 + $0x298] sm:$0x3] %vm154, 0.0
  %237 = vst.msk [vmem:[#allocation3 + $0x2a0] sm:$0xff] %vm151, 0.0
  %238 = vst.msk [vmem:[#allocation3 + $0x2a8] sm:$0xff] %vm151, 0.0
  %239 = vst.msk [vmem:[#allocation3 + $0x2b0] sm:$0x3] %vm154, 0.0
  %240 = vst.msk [vmem:[#allocation3 + $0x2b8] sm:$0xff] %vm151, 0.0
  %241 = vst.msk [vmem:[#allocation3 + $0x2c0] sm:$0xff] %vm151, 0.0
  %242 = vst.msk [vmem:[#allocation3 + $0x2c8] sm:$0x3] %vm154, 0.0
  %243 = vst.msk [vmem:[#allocation3 + $0x2d0] sm:$0xff] %vm151, 0.0
  %244 = vst.msk [vmem:[#allocation3 + $0x2d8] sm:$0xff] %vm151, 0.0
  %245 = vst.msk [vmem:[#allocation3 + $0x2e0] sm:$0x3] %vm154, 0.0
  %246 = vst.msk [vmem:[#allocation3 + $0x2e8] sm:$0xff] %vm151, 0.0
  %247 = vst.msk [vmem:[#allocation3 + $0x2f0] sm:$0xff] %vm151, 0.0
  %248 = vst.msk [vmem:[#allocation3 + $0x2f8] sm:$0x3] %vm154, 0.0
  %249 = vst.msk [vmem:[#allocation3 + $0x300] sm:$0xff] %vm151, 0.0
  %250 = vst.msk [vmem:[#allocation3 + $0x308] sm:$0xff] %vm151, 0.0
  %251 = vst.msk [vmem:[#allocation3 + $0x310] sm:$0x3] %vm154, 0.0
  %252 = vst.msk [vmem:[#allocation3 + $0x318] sm:$0xff] %vm151, 0.0
  %253 = vst.msk [vmem:[#allocation3 + $0x320] sm:$0xff] %vm151, 0.0
  %254 = vst.msk [vmem:[#allocation3 + $0x328] sm:$0x3] %vm154, 0.0
  %255 = vst.msk [vmem:[#allocation3 + $0x330] sm:$0xff] %vm151, 0.0
  %256 = vst.msk [vmem:[#allocation3 + $0x338] sm:$0xff] %vm151, 0.0
  %257 = vst.msk [vmem:[#allocation3 + $0x340] sm:$0x3] %vm154, 0.0
  %258 = vst.msk [vmem:[#allocation3 + $0x348] sm:$0xff] %vm151, 0.0
  %259 = vst.msk [vmem:[#allocation3 + $0x350] sm:$0xff] %vm151, 0.0
  %260 = vst.msk [vmem:[#allocation3 + $0x358] sm:$0x3] %vm154, 0.0
  %v261 = vld [vmem:[%s0] sm:$0xff]
  %v262 = vld [vmem:[%s0 + $0x8] sm:$0xff]
  %v263 = vld [vmem:[%s0 + $0x10] sm:$0xff]
  %v264 = vld [vmem:[%s0 + $0x18] sm:$0xff]
  %v265 = vld [vmem:[%s0 + $0x20] sm:$0xff]
  %v266 = vld [vmem:[%s0 + $0x28] sm:$0xff]
  %v267 = vld [vmem:[%s0 + $0x30] sm:$0xff]
  %v268 = vld [vmem:[%s0 + $0x38] sm:$0xff]
  %v269 = vld [vmem:[%s0 + $0x40] sm:$0xff]
  %v270 = vld [vmem:[%s0 + $0x48] sm:$0xff]
  %v271 = vld [vmem:[%s0 + $0x50] sm:$0xff]
  %v272 = vld [vmem:[%s0 + $0x58] sm:$0xff]
  %v273 = vld [vmem:[%s0 + $0x60] sm:$0xff]
  %v274 = vld [vmem:[%s0 + $0x68] sm:$0xff]
  %v275 = vld [vmem:[%s0 + $0x70] sm:$0xff]
  %v276 = vld [vmem:[%s0 + $0x78] sm:$0xff]
  %v277 = vld [vmem:[%s0 + $0x80] sm:$0xff]
  %v278 = vld [vmem:[%s0 + $0x88] sm:$0xff]
  %v279 = vld [vmem:[%s0 + $0x90] sm:$0xff]
  %v280 = vld [vmem:[%s0 + $0x98] sm:$0xff]
  %v281 = vld [vmem:[%s0 + $0xa0] sm:$0xff]
  %v282 = vld [vmem:[%s0 + $0xa8] sm:$0xff]
  %v283 = vld [vmem:[%s0 + $0xb0] sm:$0xff]
  %v284 = vld [vmem:[%s0 + $0xb8] sm:$0xff]
  %v285 = vld [vmem:[%s0 + $0xc0] sm:$0xff]
  %v286 = vld [vmem:[%s0 + $0xc8] sm:$0xff]
  %v287 = vld [vmem:[%s0 + $0xd0] sm:$0xff]
  %v288 = vld [vmem:[%s0 + $0xd8] sm:$0xff]
  %v289 = vld [vmem:[%s0 + $0xe0] sm:$0xff]
  %v290 = vld [vmem:[%s0 + $0xe8] sm:$0xff]
  %v291 = vld [vmem:[%s0 + $0xf0] sm:$0xff]
  %v292 = vld [vmem:[%s0 + $0xf8] sm:$0xff]
  %v293 = vld [vmem:[%s0 + $0x100] sm:$0xff]
  %v294 = vld [vmem:[%s0 + $0x108] sm:$0xff]
  %v295 = vld [vmem:[%s0 + $0x110] sm:$0xff]
  %v296 = vld [vmem:[%s0 + $0x118] sm:$0xff]
  %v297 = vld [vmem:[%s0 + $0x120] sm:$0xff]
  %v298 = vld [vmem:[%s0 + $0x128] sm:$0xff]
  %v299 = vld [vmem:[%s0 + $0x130] sm:$0xff]
  %v300 = vld [vmem:[%s0 + $0x138] sm:$0xff]
  %v301 = vld [vmem:[%s0 + $0x140] sm:$0xff]
  %v302 = vld [vmem:[%s0 + $0x148] sm:$0xff]
  %v303 = vld [vmem:[%s0 + $0x150] sm:$0xff]
  %v304 = vld [vmem:[%s0 + $0x158] sm:$0xff]
  %v305 = vld [vmem:[%s0 + $0x160] sm:$0xff]
  %v306 = vld [vmem:[%s0 + $0x168] sm:$0xff]
  %v307 = vld [vmem:[%s0 + $0x170] sm:$0xff]
  %v308 = vld [vmem:[%s0 + $0x178] sm:$0xff]
  %v309 = vld [vmem:[%s0 + $0x180] sm:$0xff]
  %v310 = vld [vmem:[%s0 + $0x188] sm:$0xff]
  %v311 = vld [vmem:[%s0 + $0x190] sm:$0xff]
  %v312 = vld [vmem:[%s0 + $0x198] sm:$0xff]
  %v313 = vld [vmem:[%s0 + $0x1a0] sm:$0xff]
  %v314 = vld [vmem:[%s0 + $0x1a8] sm:$0xff]
  %v315 = vld [vmem:[%s0 + $0x1b0] sm:$0xff]
  %v316 = vld [vmem:[%s0 + $0x1b8] sm:$0xff]
  %v317 = vld [vmem:[%s0 + $0x1c0] sm:$0xff]
  %v318 = vld [vmem:[%s0 + $0x1c8] sm:$0xff]
  %v319 = vld [vmem:[%s0 + $0x1d0] sm:$0xff]
  %v320 = vld [vmem:[%s0 + $0x1d8] sm:$0xff]
  %v321 = vld [vmem:[%s0 + $0x1e0] sm:$0xff]
  %v322 = vld [vmem:[%s0 + $0x1e8] sm:$0xff]
  %v323 = vld [vmem:[%s0 + $0x1f0] sm:$0xff]
  %v324 = vld [vmem:[%s0 + $0x1f8] sm:$0xff]
  %s325 = scalar_lea.vmem [#allocation2], 24
  %326 = vst.msk [vmem:[%s325 + $0x1] sm:$0xff] %vm41, %v261
  %327 = vst.msk [vmem:[%s325 + $0x9] sm:$0xff] %vm41, %v262
  %328 = vst.msk [vmem:[%s325 + $0x19] sm:$0xff] %vm41, %v263
  %329 = vst.msk [vmem:[%s325 + $0x21] sm:$0xff] %vm41, %v264
  %330 = vst.msk [vmem:[%s325 + $0x31] sm:$0xff] %vm41, %v265
  %331 = vst.msk [vmem:[%s325 + $0x39] sm:$0xff] %vm41, %v266
  %332 = vst.msk [vmem:[%s325 + $0x49] sm:$0xff] %vm41, %v267
  %333 = vst.msk [vmem:[%s325 + $0x51] sm:$0xff] %vm41, %v268
  %334 = vst.msk [vmem:[%s325 + $0x61] sm:$0xff] %vm41, %v269
  %335 = vst.msk [vmem:[%s325 + $0x69] sm:$0xff] %vm41, %v270
  %336 = vst.msk [vmem:[%s325 + $0x79] sm:$0xff] %vm41, %v271
  %337 = vst.msk [vmem:[%s325 + $0x81] sm:$0xff] %vm41, %v272
  %338 = vst.msk [vmem:[%s325 + $0x91] sm:$0xff] %vm41, %v273
  %339 = vst.msk [vmem:[%s325 + $0x99] sm:$0xff] %vm41, %v274
  %340 = vst.msk [vmem:[%s325 + $0xa9] sm:$0xff] %vm41, %v275
  %341 = vst.msk [vmem:[%s325 + $0xb1] sm:$0xff] %vm41, %v276
  %342 = vst.msk [vmem:[%s325 + $0xc1] sm:$0xff] %vm41, %v277
  %343 = vst.msk [vmem:[%s325 + $0xc9] sm:$0xff] %vm41, %v278
  %344 = vst.msk [vmem:[%s325 + $0xd9] sm:$0xff] %vm41, %v279
  %345 = vst.msk [vmem:[%s325 + $0xe1] sm:$0xff] %vm41, %v280
  %346 = vst.msk [vmem:[%s325 + $0xf1] sm:$0xff] %vm41, %v281
  %347 = vst.msk [vmem:[%s325 + $0xf9] sm:$0xff] %vm41, %v282
  %348 = vst.msk [vmem:[%s325 + $0x109] sm:$0xff] %vm41, %v283
  %349 = vst.msk [vmem:[%s325 + $0x111] sm:$0xff] %vm41, %v284
  %350 = vst.msk [vmem:[%s325 + $0x121] sm:$0xff] %vm41, %v285
  %351 = vst.msk [vmem:[%s325 + $0x129] sm:$0xff] %vm41, %v286
  %352 = vst.msk [vmem:[%s325 + $0x139] sm:$0xff] %vm41, %v287
  %353 = vst.msk [vmem:[%s325 + $0x141] sm:$0xff] %vm41, %v288
  %354 = vst.msk [vmem:[%s325 + $0x151] sm:$0xff] %vm41, %v289
  %355 = vst.msk [vmem:[%s325 + $0x159] sm:$0xff] %vm41, %v290
  %356 = vst.msk [vmem:[%s325 + $0x169] sm:$0xff] %vm41, %v291
  %357 = vst.msk [vmem:[%s325 + $0x171] sm:$0xff] %vm41, %v292
  %358 = vst.msk [vmem:[%s325 + $0x1b1] sm:$0xff] %vm41, %v293
  %359 = vst.msk [vmem:[%s325 + $0x1b9] sm:$0xff] %vm41, %v294
  %360 = vst.msk [vmem:[%s325 + $0x1c9] sm:$0xff] %vm41, %v295
  %361 = vst.msk [vmem:[%s325 + $0x1d1] sm:$0xff] %vm41, %v296
  %362 = vst.msk [vmem:[%s325 + $0x1e1] sm:$0xff] %vm41, %v297
  %363 = vst.msk [vmem:[%s325 + $0x1e9] sm:$0xff] %vm41, %v298
  %364 = vst.msk [vmem:[%s325 + $0x1f9] sm:$0xff] %vm41, %v299
  %365 = vst.msk [vmem:[%s325 + $0x201] sm:$0xff] %vm41, %v300
  %366 = vst.msk [vmem:[%s325 + $0x211] sm:$0xff] %vm41, %v301
  %367 = vst.msk [vmem:[%s325 + $0x219] sm:$0xff] %vm41, %v302
  %368 = vst.msk [vmem:[%s325 + $0x229] sm:$0xff] %vm41, %v303
  %369 = vst.msk [vmem:[%s325 + $0x231] sm:$0xff] %vm41, %v304
  %370 = vst.msk [vmem:[%s325 + $0x241] sm:$0xff] %vm41, %v305
  %371 = vst.msk [vmem:[%s325 + $0x249] sm:$0xff] %vm41, %v306
  %372 = vst.msk [vmem:[%s325 + $0x259] sm:$0xff] %vm41, %v307
  %373 = vst.msk [vmem:[%s325 + $0x261] sm:$0xff] %vm41, %v308
  %374 = vst.msk [vmem:[%s325 + $0x271] sm:$0xff] %vm41, %v309
  %375 = vst.msk [vmem:[%s325 + $0x279] sm:$0xff] %vm41, %v310
  %376 = vst.msk [vmem:[%s325 + $0x289] sm:$0xff] %vm41, %v311
  %377 = vst.msk [vmem:[%s325 + $0x291] sm:$0xff] %vm41, %v312
  %378 = vst.msk [vmem:[%s325 + $0x2a1] sm:$0xff] %vm41, %v313
  %379 = vst.msk [vmem:[%s325 + $0x2a9] sm:$0xff] %vm41, %v314
  %380 = vst.msk [vmem:[%s325 + $0x2b9] sm:$0xff] %vm41, %v315
  %381 = vst.msk [vmem:[%s325 + $0x2c1] sm:$0xff] %vm41, %v316
  %382 = vst.msk [vmem:[%s325 + $0x2d1] sm:$0xff] %vm41, %v317
  %383 = vst.msk [vmem:[%s325 + $0x2d9] sm:$0xff] %vm41, %v318
  %384 = vst.msk [vmem:[%s325 + $0x2e9] sm:$0xff] %vm41, %v319
  %385 = vst.msk [vmem:[%s325 + $0x2f1] sm:$0xff] %vm41, %v320
  %386 = vst.msk [vmem:[%s325 + $0x301] sm:$0xff] %vm41, %v321
  %387 = vst.msk [vmem:[%s325 + $0x309] sm:$0xff] %vm41, %v322
  %388 = vst.msk [vmem:[%s325 + $0x319] sm:$0xff] %vm41, %v323
  %389 = vst.msk [vmem:[%s325 + $0x321] sm:$0xff] %vm41, %v324
  %v390 = vld [vmem:[#allocation2] sm:$0xff]
  %v391 = vld [vmem:[#allocation2 + $0x8] sm:$0xff]
  %v392 = vld [vmem:[#allocation2 + $0x10] sm:$0x3]
  %v393 = vld [vmem:[#allocation2 + $0x18] sm:$0xff]
  %v394 = vld [vmem:[#allocation2 + $0x20] sm:$0xff]
  %v395 = vld [vmem:[#allocation2 + $0x28] sm:$0x3]
  %v396 = vld [vmem:[#allocation2 + $0x30] sm:$0xff]
  %v397 = vld [vmem:[#allocation2 + $0x38] sm:$0xff]
  %v398 = vld [vmem:[#allocation2 + $0x40] sm:$0x3]
  %v399 = vld [vmem:[#allocation2 + $0x48] sm:$0xff]
  %v400 = vld [vmem:[#allocation2 + $0x50] sm:$0xff]
  %v401 = vld [vmem:[#allocation2 + $0x58] sm:$0x3]
  %v402 = vld [vmem:[#allocation2 + $0x60] sm:$0xff]
  %v403 = vld [vmem:[#allocation2 + $0x68] sm:$0xff]
  %v404 = vld [vmem:[#allocation2 + $0x70] sm:$0x3]
  %v405 = vld [vmem:[#allocation2 + $0x78] sm:$0xff]
  %v406 = vld [vmem:[#allocation2 + $0x80] sm:$0xff]
  %v407 = vld [vmem:[#allocation2 + $0x88] sm:$0x3]
  %v408 = vld [vmem:[#allocation2 + $0x90] sm:$0xff]
  %v409 = vld [vmem:[#allocation2 + $0x98] sm:$0xff]
  %v410 = vld [vmem:[#allocation2 + $0xa0] sm:$0x3]
  %v411 = vld [vmem:[#allocation2 + $0xa8] sm:$0xff]
  %v412 = vld [vmem:[#allocation2 + $0xb0] sm:$0xff]
  %v413 = vld [vmem:[#allocation2 + $0xb8] sm:$0x3]
  %v414 = vld [vmem:[#allocation2 + $0xc0] sm:$0xff]
  %v415 = vld [vmem:[#allocation2 + $0xc8] sm:$0xff]
  %v416 = vld [vmem:[#allocation2 + $0xd0] sm:$0x3]
  %v417 = vld [vmem:[#allocation2 + $0xd8] sm:$0xff]
  %v418 = vld [vmem:[#allocation2 + $0xe0] sm:$0xff]
  %v419 = vld [vmem:[#allocation2 + $0xe8] sm:$0x3]
  %v420 = vld [vmem:[#allocation2 + $0xf0] sm:$0xff]
  %v421 = vld [vmem:[#allocation2 + $0xf8] sm:$0xff]
  %v422 = vld [vmem:[#allocation2 + $0x100] sm:$0x3]
  %v423 = vld [vmem:[#allocation2 + $0x108] sm:$0xff]
  %v424 = vld [vmem:[#allocation2 + $0x110] sm:$0xff]
  %v425 = vld [vmem:[#allocation2 + $0x118] sm:$0x3]
  %v426 = vld [vmem:[#allocation2 + $0x120] sm:$0xff]
  %v427 = vld [vmem:[#allocation2 + $0x128] sm:$0xff]
  %v428 = vld [vmem:[#allocation2 + $0x130] sm:$0x3]
  %v429 = vld [vmem:[#allocation2 + $0x138] sm:$0xff]
  %v430 = vld [vmem:[#allocation2 + $0x140] sm:$0xff]
  %v431 = vld [vmem:[#allocation2 + $0x148] sm:$0x3]
  %v432 = vld [vmem:[#allocation2 + $0x150] sm:$0xff]
  %v433 = vld [vmem:[#allocation2 + $0x158] sm:$0xff]
  %v434 = vld [vmem:[#allocation2 + $0x160] sm:$0x3]
  %v435 = vld [vmem:[#allocation2 + $0x168] sm:$0xff]
  %v436 = vld [vmem:[#allocation2 + $0x170] sm:$0xff]
  %v437 = vld [vmem:[#allocation2 + $0x178] sm:$0x3]
  %v438 = vld [vmem:[#allocation2 + $0x180] sm:$0xff]
  %v439 = vld [vmem:[#allocation2 + $0x188] sm:$0xff]
  %v440 = vld [vmem:[#allocation2 + $0x190] sm:$0x3]
  %v441 = vld [vmem:[#allocation2 + $0x198] sm:$0xff]
  %v442 = vld [vmem:[#allocation2 + $0x1a0] sm:$0xff]
  %v443 = vld [vmem:[#allocation2 + $0x1a8] sm:$0x3]
  %v444 = vld [vmem:[#allocation2 + $0x1b0] sm:$0xff]
  %v445 = vld [vmem:[#allocation2 + $0x1b8] sm:$0xff]
  %v446 = vld [vmem:[#allocation2 + $0x1c0] sm:$0x3]
  %v447 = vld [vmem:[#allocation2 + $0x1c8] sm:$0xff]
  %v448 = vld [vmem:[#allocation2 + $0x1d0] sm:$0xff]
  %v449 = vld [vmem:[#allocation2 + $0x1d8] sm:$0x3]
  %v450 = vld [vmem:[#allocation2 + $0x1e0] sm:$0xff]
  %v451 = vld [vmem:[#allocation2 + $0x1e8] sm:$0xff]
  %v452 = vld [vmem:[#allocation2 + $0x1f0] sm:$0x3]
  %v453 = vld [vmem:[#allocation2 + $0x1f8] sm:$0xff]
  %v454 = vld [vmem:[#allocation2 + $0x200] sm:$0xff]
  %v455 = vld [vmem:[#allocation2 + $0x208] sm:$0x3]
  %v456 = vld [vmem:[#allocation2 + $0x210] sm:$0xff]
  %v457 = vld [vmem:[#allocation2 + $0x218] sm:$0xff]
  %v458 = vld [vmem:[#allocation2 + $0x220] sm:$0x3]
  %v459 = vld [vmem:[#allocation2 + $0x228] sm:$0xff]
  %v460 = vld [vmem:[#allocation2 + $0x230] sm:$0xff]
  %v461 = vld [vmem:[#allocation2 + $0x238] sm:$0x3]
  %v462 = vld [vmem:[#allocation2 + $0x240] sm:$0xff]
  %v463 = vld [vmem:[#allocation2 + $0x248] sm:$0xff]
  %v464 = vld [vmem:[#allocation2 + $0x250] sm:$0x3]
  %v465 = vld [vmem:[#allocation2 + $0x258] sm:$0xff]
  %v466 = vld [vmem:[#allocation2 + $0x260] sm:$0xff]
  %v467 = vld [vmem:[#allocation2 + $0x268] sm:$0x3]
  %v468 = vld [vmem:[#allocation2 + $0x270] sm:$0xff]
  %v469 = vld [vmem:[#allocation2 + $0x278] sm:$0xff]
  %v470 = vld [vmem:[#allocation2 + $0x280] sm:$0x3]
  %v471 = vld [vmem:[#allocation2 + $0x288] sm:$0xff]
  %v472 = vld [vmem:[#allocation2 + $0x290] sm:$0xff]
  %v473 = vld [vmem:[#allocation2 + $0x298] sm:$0x3]
  %v474 = vld [vmem:[#allocation2 + $0x2a0] sm:$0xff]
  %v475 = vld [vmem:[#allocation2 + $0x2a8] sm:$0xff]
  %v476 = vld [vmem:[#allocation2 + $0x2b0] sm:$0x3]
  %v477 = vld [vmem:[#allocation2 + $0x2b8] sm:$0xff]
  %v478 = vld [vmem:[#allocation2 + $0x2c0] sm:$0xff]
  %v479 = vld [vmem:[#allocation2 + $0x2c8] sm:$0x3]
  %v480 = vld [vmem:[#allocation2 + $0x2d0] sm:$0xff]
  %v481 = vld [vmem:[#allocation2 + $0x2d8] sm:$0xff]
  %v482 = vld [vmem:[#allocation2 + $0x2e0] sm:$0x3]
  %v483 = vld [vmem:[#allocation2 + $0x2e8] sm:$0xff]
  %v484 = vld [vmem:[#allocation2 + $0x2f0] sm:$0xff]
  %v485 = vld [vmem:[#allocation2 + $0x2f8] sm:$0x3]
  %v486 = vld [vmem:[#allocation2 + $0x300] sm:$0xff]
  %v487 = vld [vmem:[#allocation2 + $0x308] sm:$0xff]
  %v488 = vld [vmem:[#allocation2 + $0x310] sm:$0x3]
  %v489 = vld [vmem:[#allocation2 + $0x318] sm:$0xff]
  %v490 = vld [vmem:[#allocation2 + $0x320] sm:$0xff]
  %v491 = vld [vmem:[#allocation2 + $0x328] sm:$0x3]
  %v492 = vld [vmem:[#allocation2 + $0x330] sm:$0xff]
  %v493 = vld [vmem:[#allocation2 + $0x338] sm:$0xff]
  %v494 = vld [vmem:[#allocation2 + $0x340] sm:$0x3]
  %v495 = vld [vmem:[#allocation2 + $0x348] sm:$0xff]
  %v496 = vld [vmem:[#allocation2 + $0x350] sm:$0xff]
  %v497 = vld [vmem:[#allocation2 + $0x358] sm:$0x3]
  %vm606 = vcmask 1046528
  %v607 = vrot.slane %v390, 1
  %v608 = vrot.slane %v391, 1
  %v609 = vsel %vm606, %v607, %v608
  %v610 = vrot.slane %v392, 1
  %v611 = vsel %vm606, %v608, %v610
  %v612 = vrot.slane %v393, 1
  %v613 = vrot.slane %v394, 1
  %v614 = vsel %vm606, %v612, %v613
  %v615 = vrot.slane %v395, 1
  %v616 = vsel %vm606, %v613, %v615
  %v617 = vrot.slane %v396, 1
  %v618 = vrot.slane %v397, 1
  %v619 = vsel %vm606, %v617, %v618
  %v620 = vrot.slane %v398, 1
  %v621 = vsel %vm606, %v618, %v620
  %v622 = vrot.slane %v399, 1
  %v623 = vrot.slane %v400, 1
  %v624 = vsel %vm606, %v622, %v623
  %v625 = vrot.slane %v401, 1
  %v626 = vsel %vm606, %v623, %v625
  %v627 = vrot.slane %v402, 1
  %v628 = vrot.slane %v403, 1
  %v629 = vsel %vm606, %v627, %v628
  %v630 = vrot.slane %v404, 1
  %v631 = vsel %vm606, %v628, %v630
  %v632 = vrot.slane %v405, 1
  %v633 = vrot.slane %v406, 1
  %v634 = vsel %vm606, %v632, %v633
  %v635 = vrot.slane %v407, 1
  %v636 = vsel %vm606, %v633, %v635
  %v637 = vrot.slane %v408, 1
  %v638 = vrot.slane %v409, 1
  %v639 = vsel %vm606, %v637, %v638
  %v640 = vrot.slane %v410, 1
  %v641 = vsel %vm606, %v638, %v640
  %v642 = vrot.slane %v411, 1
  %v643 = vrot.slane %v412, 1
  %v644 = vsel %vm606, %v642, %v643
  %v645 = vrot.slane %v413, 1
  %v646 = vsel %vm606, %v643, %v645
  %v647 = vrot.slane %v414, 1
  %v648 = vrot.slane %v415, 1
  %v649 = vsel %vm606, %v647, %v648
  %v650 = vrot.slane %v416, 1
  %v651 = vsel %vm606, %v648, %v650
  %v652 = vrot.slane %v417, 1
  %v653 = vrot.slane %v418, 1
  %v654 = vsel %vm606, %v652, %v653
  %v655 = vrot.slane %v419, 1
  %v656 = vsel %vm606, %v653, %v655
  %v657 = vrot.slane %v420, 1
  %v658 = vrot.slane %v421, 1
  %v659 = vsel %vm606, %v657, %v658
  %v660 = vrot.slane %v422, 1
  %v661 = vsel %vm606, %v658, %v660
  %v662 = vrot.slane %v423, 1
  %v663 = vrot.slane %v424, 1
  %v664 = vsel %vm606, %v662, %v663
  %v665 = vrot.slane %v425, 1
  %v666 = vsel %vm606, %v663, %v665
  %v667 = vrot.slane %v426, 1
  %v668 = vrot.slane %v427, 1
  %v669 = vsel %vm606, %v667, %v668
  %v670 = vrot.slane %v428, 1
  %v671 = vsel %vm606, %v668, %v670
  %v672 = vrot.slane %v429, 1
  %v673 = vrot.slane %v430, 1
  %v674 = vsel %vm606, %v672, %v673
  %v675 = vrot.slane %v431, 1
  %v676 = vsel %vm606, %v673, %v675
  %v677 = vrot.slane %v432, 1
  %v678 = vrot.slane %v433, 1
  %v679 = vsel %vm606, %v677, %v678
  %v680 = vrot.slane %v434, 1
  %v681 = vsel %vm606, %v678, %v680
  %v682 = vrot.slane %v435, 1
  %v683 = vrot.slane %v436, 1
  %v684 = vsel %vm606, %v682, %v683
  %v685 = vrot.slane %v437, 1
  %v686 = vsel %vm606, %v683, %v685
  %v687 = vrot.slane %v438, 1
  %v688 = vrot.slane %v439, 1
  %v689 = vsel %vm606, %v687, %v688
  %v690 = vrot.slane %v440, 1
  %v691 = vsel %vm606, %v688, %v690
  %v692 = vrot.slane %v441, 1
  %v693 = vrot.slane %v442, 1
  %v694 = vsel %vm606, %v692, %v693
  %v695 = vrot.slane %v443, 1
  %v696 = vsel %vm606, %v693, %v695
  %v697 = vrot.slane %v444, 1
  %v698 = vrot.slane %v445, 1
  %v699 = vsel %vm606, %v697, %v698
  %v700 = vrot.slane %v446, 1
  %v701 = vsel %vm606, %v698, %v700
  %v702 = vrot.slane %v447, 1
  %v703 = vrot.slane %v448, 1
  %v704 = vsel %vm606, %v702, %v703
  %v705 = vrot.slane %v449, 1
  %v706 = vsel %vm606, %v703, %v705
  %v707 = vrot.slane %v450, 1
  %v708 = vrot.slane %v451, 1
  %v709 = vsel %vm606, %v707, %v708
  %v710 = vrot.slane %v452, 1
  %v711 = vsel %vm606, %v708, %v710
  %v712 = vrot.slane %v453, 1
  %v713 = vrot.slane %v454, 1
  %v714 = vsel %vm606, %v712, %v713
  %v715 = vrot.slane %v455, 1
  %v716 = vsel %vm606, %v713, %v715
  %v717 = vrot.slane %v456, 1
  %v718 = vrot.slane %v457, 1
  %v719 = vsel %vm606, %v717, %v718
  %v720 = vrot.slane %v458, 1
  %v721 = vsel %vm606, %v718, %v720
  %v722 = vrot.slane %v459, 1
  %v723 = vrot.slane %v460, 1
  %v724 = vsel %vm606, %v722, %v723
  %v725 = vrot.slane %v461, 1
  %v726 = vsel %vm606, %v723, %v725
  %v727 = vrot.slane %v462, 1
  %v728 = vrot.slane %v463, 1
  %v729 = vsel %vm606, %v727, %v728
  %v730 = vrot.slane %v464, 1
  %v731 = vsel %vm606, %v728, %v730
  %v732 = vrot.slane %v465, 1
  %v733 = vrot.slane %v466, 1
  %v734 = vsel %vm606, %v732, %v733
  %v735 = vrot.slane %v467, 1
  %v736 = vsel %vm606, %v733, %v735
  %v737 = vrot.slane %v468, 1
  %v738 = vrot.slane %v469, 1
  %v739 = vsel %vm606, %v737, %v738
  %v740 = vrot.slane %v470, 1
  %v741 = vsel %vm606, %v738, %v740
  %v742 = vrot.slane %v471, 1
  %v743 = vrot.slane %v472, 1
  %v744 = vsel %vm606, %v742, %v743
  %v745 = vrot.slane %v473, 1
  %v746 = vsel %vm606, %v743, %v745
  %v747 = vrot.slane %v474, 1
  %v748 = vrot.slane %v475, 1
  %v749 = vsel %vm606, %v747, %v748
  %v750 = vrot.slane %v476, 1
  %v751 = vsel %vm606, %v748, %v750
  %v752 = vrot.slane %v477, 1
  %v753 = vrot.slane %v478, 1
  %v754 = vsel %vm606, %v752, %v753
  %v755 = vrot.slane %v479, 1
  %v756 = vsel %vm606, %v753, %v755
  %v757 = vrot.slane %v480, 1
  %v758 = vrot.slane %v481, 1
  %v759 = vsel %vm606, %v757, %v758
  %v760 = vrot.slane %v482, 1
  %v761 = vsel %vm606, %v758, %v760
  %v762 = vrot.slane %v483, 1
  %v763 = vrot.slane %v484, 1
  %v764 = vsel %vm606, %v762, %v763
  %v765 = vrot.slane %v485, 1
  %v766 = vsel %vm606, %v763, %v765
  %v767 = vrot.slane %v486, 1
  %v768 = vrot.slane %v487, 1
  %v769 = vsel %vm606, %v767, %v768
  %v770 = vrot.slane %v488, 1
  %v771 = vsel %vm606, %v768, %v770
  %v772 = vrot.slane %v489, 1
  %v773 = vrot.slane %v490, 1
  %v774 = vsel %vm606, %v772, %v773
  %v775 = vrot.slane %v491, 1
  %v776 = vsel %vm606, %v773, %v775
  %v777 = vrot.slane %v492, 1
  %v778 = vrot.slane %v493, 1
  %v779 = vsel %vm606, %v777, %v778
  %v780 = vrot.slane %v494, 1
  %v781 = vsel %vm606, %v778, %v780
  %v782 = vrot.slane %v495, 1
  %v783 = vrot.slane %v496, 1
  %v784 = vsel %vm606, %v782, %v783
  %v785 = vrot.slane %v497, 1
  %v786 = vsel %vm606, %v783, %v785
  %787 = vrot.lane.b32.xlu0 %v609, 4
  %v788 = vpop.permute.xlu0 %787
  %789 = vrot.lane.b32.xlu0 %v611, 4
  %v790 = vpop.permute.xlu0 %789
  %791 = vrot.lane.b32.xlu0 %v614, 4
  %v792 = vpop.permute.xlu0 %791
  %793 = vrot.lane.b32.xlu0 %v616, 4
  %v794 = vpop.permute.xlu0 %793
  %795 = vrot.lane.b32.xlu0 %v619, 4
  %v796 = vpop.permute.xlu0 %795
  %797 = vrot.lane.b32.xlu0 %v621, 4
  %v798 = vpop.permute.xlu0 %797
  %799 = vrot.lane.b32.xlu0 %v624, 4
  %v800 = vpop.permute.xlu0 %799
  %801 = vrot.lane.b32.xlu0 %v626, 4
  %v802 = vpop.permute.xlu0 %801
  %803 = vrot.lane.b32.xlu0 %v629, 4
  %v804 = vpop.permute.xlu0 %803
  %805 = vrot.lane.b32.xlu0 %v631, 4
  %v806 = vpop.permute.xlu0 %805
  %807 = vrot.lane.b32.xlu0 %v634, 4
  %v808 = vpop.permute.xlu0 %807
  %809 = vrot.lane.b32.xlu0 %v636, 4
  %v810 = vpop.permute.xlu0 %809
  %811 = vrot.lane.b32.xlu0 %v639, 4
  %v812 = vpop.permute.xlu0 %811
  %813 = vrot.lane.b32.xlu0 %v641, 4
  %v814 = vpop.permute.xlu0 %813
  %815 = vrot.lane.b32.xlu0 %v644, 4
  %v816 = vpop.permute.xlu0 %815
  %817 = vrot.lane.b32.xlu0 %v646, 4
  %v818 = vpop.permute.xlu0 %817
  %819 = vrot.lane.b32.xlu0 %v649, 4
  %v820 = vpop.permute.xlu0 %819
  %821 = vrot.lane.b32.xlu0 %v651, 4
  %v822 = vpop.permute.xlu0 %821
  %823 = vrot.lane.b32.xlu0 %v654, 4
  %v824 = vpop.permute.xlu0 %823
  %825 = vrot.lane.b32.xlu0 %v656, 4
  %v826 = vpop.permute.xlu0 %825
  %827 = vrot.lane.b32.xlu0 %v659, 4
  %v828 = vpop.permute.xlu0 %827
  %829 = vrot.lane.b32.xlu0 %v661, 4
  %v830 = vpop.permute.xlu0 %829
  %831 = vrot.lane.b32.xlu0 %v664, 4
  %v832 = vpop.permute.xlu0 %831
  %833 = vrot.lane.b32.xlu0 %v666, 4
  %v834 = vpop.permute.xlu0 %833
  %835 = vrot.lane.b32.xlu0 %v669, 4
  %v836 = vpop.permute.xlu0 %835
  %837 = vrot.lane.b32.xlu0 %v671, 4
  %v838 = vpop.permute.xlu0 %837
  %839 = vrot.lane.b32.xlu0 %v674, 4
  %v840 = vpop.permute.xlu0 %839
  %841 = vrot.lane.b32.xlu0 %v676, 4
  %v842 = vpop.permute.xlu0 %841
  %843 = vrot.lane.b32.xlu0 %v679, 4
  %v844 = vpop.permute.xlu0 %843
  %845 = vrot.lane.b32.xlu0 %v681, 4
  %v846 = vpop.permute.xlu0 %845
  %847 = vrot.lane.b32.xlu0 %v684, 4
  %v848 = vpop.permute.xlu0 %847
  %849 = vrot.lane.b32.xlu0 %v686, 4
  %v850 = vpop.permute.xlu0 %849
  %851 = vrot.lane.b32.xlu0 %v689, 4
  %v852 = vpop.permute.xlu0 %851
  %853 = vrot.lane.b32.xlu0 %v691, 4
  %v854 = vpop.permute.xlu0 %853
  %855 = vrot.lane.b32.xlu0 %v694, 4
  %v856 = vpop.permute.xlu0 %855
  %857 = vrot.lane.b32.xlu0 %v696, 4
  %v858 = vpop.permute.xlu0 %857
  %859 = vrot.lane.b32.xlu0 %v699, 4
  %v860 = vpop.permute.xlu0 %859
  %861 = vrot.lane.b32.xlu0 %v701, 4
  %v862 = vpop.permute.xlu0 %861
  %863 = vrot.lane.b32.xlu0 %v704, 4
  %v864 = vpop.permute.xlu0 %863
  %865 = vrot.lane.b32.xlu0 %v706, 4
  %v866 = vpop.permute.xlu0 %865
  %867 = vrot.lane.b32.xlu0 %v709, 4
  %v868 = vpop.permute.xlu0 %867
  %869 = vrot.lane.b32.xlu0 %v711, 4
  %v870 = vpop.permute.xlu0 %869
  %871 = vrot.lane.b32.xlu0 %v714, 4
  %v872 = vpop.permute.xlu0 %871
  %873 = vrot.lane.b32.xlu0 %v716, 4
  %v874 = vpop.permute.xlu0 %873
  %875 = vrot.lane.b32.xlu0 %v719, 4
  %v876 = vpop.permute.xlu0 %875
  %877 = vrot.lane.b32.xlu0 %v721, 4
  %v878 = vpop.permute.xlu0 %877
  %879 = vrot.lane.b32.xlu0 %v724, 4
  %v880 = vpop.permute.xlu0 %879
  %881 = vrot.lane.b32.xlu0 %v726, 4
  %v882 = vpop.permute.xlu0 %881
  %883 = vrot.lane.b32.xlu0 %v729, 4
  %v884 = vpop.permute.xlu0 %883
  %885 = vrot.lane.b32.xlu0 %v731, 4
  %v886 = vpop.permute.xlu0 %885
  %887 = vrot.lane.b32.xlu0 %v734, 4
  %v888 = vpop.permute.xlu0 %887
  %889 = vrot.lane.b32.xlu0 %v736, 4
  %v890 = vpop.permute.xlu0 %889
  %891 = vrot.lane.b32.xlu0 %v739, 4
  %v892 = vpop.permute.xlu0 %891
  %893 = vrot.lane.b32.xlu0 %v741, 4
  %v894 = vpop.permute.xlu0 %893
  %895 = vrot.lane.b32.xlu0 %v744, 4
  %v896 = vpop.permute.xlu0 %895
  %897 = vrot.lane.b32.xlu0 %v746, 4
  %v898 = vpop.permute.xlu0 %897
  %899 = vrot.lane.b32.xlu0 %v749, 4
  %v900 = vpop.permute.xlu0 %899
  %901 = vrot.lane.b32.xlu0 %v751, 4
  %v902 = vpop.permute.xlu0 %901
  %903 = vrot.lane.b32.xlu0 %v754, 4
  %v904 = vpop.permute.xlu0 %903
  %905 = vrot.lane.b32.xlu0 %v756, 4
  %v906 = vpop.permute.xlu0 %905
  %907 = vrot.lane.b32.xlu0 %v759, 4
  %v908 = vpop.permute.xlu0 %907
  %909 = vrot.lane.b32.xlu0 %v761, 4
  %v910 = vpop.permute.xlu0 %909
  %911 = vrot.lane.b32.xlu0 %v764, 4
  %v912 = vpop.permute.xlu0 %911
  %913 = vrot.lane.b32.xlu0 %v766, 4
  %v914 = vpop.permute.xlu0 %913
  %915 = vrot.lane.b32.xlu0 %v769, 4
  %v916 = vpop.permute.xlu0 %915
  %917 = vrot.lane.b32.xlu0 %v771, 4
  %v918 = vpop.permute.xlu0 %917
  %919 = vrot.lane.b32.xlu0 %v774, 4
  %v920 = vpop.permute.xlu0 %919
  %921 = vrot.lane.b32.xlu0 %v776, 4
  %v922 = vpop.permute.xlu0 %921
  %923 = vrot.lane.b32.xlu0 %v779, 4
  %v924 = vpop.permute.xlu0 %923
  %925 = vrot.lane.b32.xlu0 %v781, 4
  %v926 = vpop.permute.xlu0 %925
  %927 = vrot.lane.b32.xlu0 %v784, 4
  %v928 = vpop.permute.xlu0 %927
  %929 = vrot.lane.b32.xlu0 %v786, 4
  %v930 = vpop.permute.xlu0 %929
  %vm1003 = vcmask 1045504
  %v1004 = vrot.slane %v390, 2
  %v1005 = vrot.slane %v391, 2
  %v1006 = vsel %vm1003, %v1004, %v1005
  %v1007 = vrot.slane %v392, 2
  %v1008 = vsel %vm1003, %v1005, %v1007
  %v1009 = vrot.slane %v393, 2
  %v1010 = vrot.slane %v394, 2
  %v1011 = vsel %vm1003, %v1009, %v1010
  %v1012 = vrot.slane %v395, 2
  %v1013 = vsel %vm1003, %v1010, %v1012
  %v1014 = vrot.slane %v396, 2
  %v1015 = vrot.slane %v397, 2
  %v1016 = vsel %vm1003, %v1014, %v1015
  %v1017 = vrot.slane %v398, 2
  %v1018 = vsel %vm1003, %v1015, %v1017
  %v1019 = vrot.slane %v399, 2
  %v1020 = vrot.slane %v400, 2
  %v1021 = vsel %vm1003, %v1019, %v1020
  %v1022 = vrot.slane %v401, 2
  %v1023 = vsel %vm1003, %v1020, %v1022
  %v1024 = vrot.slane %v402, 2
  %v1025 = vrot.slane %v403, 2
  %v1026 = vsel %vm1003, %v1024, %v1025
  %v1027 = vrot.slane %v404, 2
  %v1028 = vsel %vm1003, %v1025, %v1027
  %v1029 = vrot.slane %v405, 2
  %v1030 = vrot.slane %v406, 2
  %v1031 = vsel %vm1003, %v1029, %v1030
  %v1032 = vrot.slane %v407, 2
  %v1033 = vsel %vm1003, %v1030, %v1032
  %v1034 = vrot.slane %v408, 2
  %v1035 = vrot.slane %v409, 2
  %v1036 = vsel %vm1003, %v1034, %v1035
  %v1037 = vrot.slane %v410, 2
  %v1038 = vsel %vm1003, %v1035, %v1037
  %v1039 = vrot.slane %v411, 2
  %v1040 = vrot.slane %v412, 2
  %v1041 = vsel %vm1003, %v1039, %v1040
  %v1042 = vrot.slane %v413, 2
  %v1043 = vsel %vm1003, %v1040, %v1042
  %v1044 = vrot.slane %v414, 2
  %v1045 = vrot.slane %v415, 2
  %v1046 = vsel %vm1003, %v1044, %v1045
  %v1047 = vrot.slane %v416, 2
  %v1048 = vsel %vm1003, %v1045, %v1047
  %v1049 = vrot.slane %v417, 2
  %v1050 = vrot.slane %v418, 2
  %v1051 = vsel %vm1003, %v1049, %v1050
  %v1052 = vrot.slane %v419, 2
  %v1053 = vsel %vm1003, %v1050, %v1052
  %v1054 = vrot.slane %v420, 2
  %v1055 = vrot.slane %v421, 2
  %v1056 = vsel %vm1003, %v1054, %v1055
  %v1057 = vrot.slane %v422, 2
  %v1058 = vsel %vm1003, %v1055, %v1057
  %v1059 = vrot.slane %v423, 2
  %v1060 = vrot.slane %v424, 2
  %v1061 = vsel %vm1003, %v1059, %v1060
  %v1062 = vrot.slane %v425, 2
  %v1063 = vsel %vm1003, %v1060, %v1062
  %v1064 = vrot.slane %v426, 2
  %v1065 = vrot.slane %v427, 2
  %v1066 = vsel %vm1003, %v1064, %v1065
  %v1067 = vrot.slane %v428, 2
  %v1068 = vsel %vm1003, %v1065, %v1067
  %v1069 = vrot.slane %v429, 2
  %v1070 = vrot.slane %v430, 2
  %v1071 = vsel %vm1003, %v1069, %v1070
  %v1072 = vrot.slane %v431, 2
  %v1073 = vsel %vm1003, %v1070, %v1072
  %v1074 = vrot.slane %v432, 2
  %v1075 = vrot.slane %v433, 2
  %v1076 = vsel %vm1003, %v1074, %v1075
  %v1077 = vrot.slane %v434, 2
  %v1078 = vsel %vm1003, %v1075, %v1077
  %v1079 = vrot.slane %v435, 2
  %v1080 = vrot.slane %v436, 2
  %v1081 = vsel %vm1003, %v1079, %v1080
  %v1082 = vrot.slane %v437, 2
  %v1083 = vsel %vm1003, %v1080, %v1082
  %v1084 = vrot.slane %v438, 2
  %v1085 = vrot.slane %v439, 2
  %v1086 = vsel %vm1003, %v1084, %v1085
  %v1087 = vrot.slane %v440, 2
  %v1088 = vsel %vm1003, %v1085, %v1087
  %v1089 = vrot.slane %v441, 2
  %v1090 = vrot.slane %v442, 2
  %v1091 = vsel %vm1003, %v1089, %v1090
  %v1092 = vrot.slane %v443, 2
  %v1093 = vsel %vm1003, %v1090, %v1092
  %v1094 = vrot.slane %v444, 2
  %v1095 = vrot.slane %v445, 2
  %v1096 = vsel %vm1003, %v1094, %v1095
  %v1097 = vrot.slane %v446, 2
  %v1098 = vsel %vm1003, %v1095, %v1097
  %v1099 = vrot.slane %v447, 2
  %v1100 = vrot.slane %v448, 2
  %v1101 = vsel %vm1003, %v1099, %v1100
  %v1102 = vrot.slane %v449, 2
  %v1103 = vsel %vm1003, %v1100, %v1102
  %v1104 = vrot.slane %v450, 2
  %v1105 = vrot.slane %v451, 2
  %v1106 = vsel %vm1003, %v1104, %v1105
  %v1107 = vrot.slane %v452, 2
  %v1108 = vsel %vm1003, %v1105, %v1107
  %v1109 = vrot.slane %v453, 2
  %v1110 = vrot.slane %v454, 2
  %v1111 = vsel %vm1003, %v1109, %v1110
  %v1112 = vrot.slane %v455, 2
  %v1113 = vsel %vm1003, %v1110, %v1112
  %v1114 = vrot.slane %v456, 2
  %v1115 = vrot.slane %v457, 2
  %v1116 = vsel %vm1003, %v1114, %v1115
  %v1117 = vrot.slane %v458, 2
  %v1118 = vsel %vm1003, %v1115, %v1117
  %v1119 = vrot.slane %v459, 2
  %v1120 = vrot.slane %v460, 2
  %v1121 = vsel %vm1003, %v1119, %v1120
  %v1122 = vrot.slane %v461, 2
  %v1123 = vsel %vm1003, %v1120, %v1122
  %v1124 = vrot.slane %v462, 2
  %v1125 = vrot.slane %v463, 2
  %v1126 = vsel %vm1003, %v1124, %v1125
  %v1127 = vrot.slane %v464, 2
  %v1128 = vsel %vm1003, %v1125, %v1127
  %v1129 = vrot.slane %v465, 2
  %v1130 = vrot.slane %v466, 2
  %v1131 = vsel %vm1003, %v1129, %v1130
  %v1132 = vrot.slane %v467, 2
  %v1133 = vsel %vm1003, %v1130, %v1132
  %v1134 = vrot.slane %v468, 2
  %v1135 = vrot.slane %v469, 2
  %v1136 = vsel %vm1003, %v1134, %v1135
  %v1137 = vrot.slane %v470, 2
  %v1138 = vsel %vm1003, %v1135, %v1137
  %v1139 = vrot.slane %v471, 2
  %v1140 = vrot.slane %v472, 2
  %v1141 = vsel %vm1003, %v1139, %v1140
  %v1142 = vrot.slane %v473, 2
  %v1143 = vsel %vm1003, %v1140, %v1142
  %v1144 = vrot.slane %v474, 2
  %v1145 = vrot.slane %v475, 2
  %v1146 = vsel %vm1003, %v1144, %v1145
  %v1147 = vrot.slane %v476, 2
  %v1148 = vsel %vm1003, %v1145, %v1147
  %v1149 = vrot.slane %v477, 2
  %v1150 = vrot.slane %v478, 2
  %v1151 = vsel %vm1003, %v1149, %v1150
  %v1152 = vrot.slane %v479, 2
  %v1153 = vsel %vm1003, %v1150, %v1152
  %v1154 = vrot.slane %v480, 2
  %v1155 = vrot.slane %v481, 2
  %v1156 = vsel %vm1003, %v1154, %v1155
  %v1157 = vrot.slane %v482, 2
  %v1158 = vsel %vm1003, %v1155, %v1157
  %v1159 = vrot.slane %v483, 2
  %v1160 = vrot.slane %v484, 2
  %v1161 = vsel %vm1003, %v1159, %v1160
  %v1162 = vrot.slane %v485, 2
  %v1163 = vsel %vm1003, %v1160, %v1162
  %v1164 = vrot.slane %v486, 2
  %v1165 = vrot.slane %v487, 2
  %v1166 = vsel %vm1003, %v1164, %v1165
  %v1167 = vrot.slane %v488, 2
  %v1168 = vsel %vm1003, %v1165, %v1167
  %v1169 = vrot.slane %v489, 2
  %v1170 = vrot.slane %v490, 2
  %v1171 = vsel %vm1003, %v1169, %v1170
  %v1172 = vrot.slane %v491, 2
  %v1173 = vsel %vm1003, %v1170, %v1172
  %v1174 = vrot.slane %v492, 2
  %v1175 = vrot.slane %v493, 2
  %v1176 = vsel %vm1003, %v1174, %v1175
  %v1177 = vrot.slane %v494, 2
  %v1178 = vsel %vm1003, %v1175, %v1177
  %v1179 = vrot.slane %v495, 2
  %v1180 = vrot.slane %v496, 2
  %v1181 = vsel %vm1003, %v1179, %v1180
  %v1182 = vrot.slane %v497, 2
  %v1183 = vsel %vm1003, %v1180, %v1182
  %1184 = vrot.lane.b32.xlu0 %v1006, 8
  %v1185 = vpop.permute.xlu0 %1184
  %1186 = vrot.lane.b32.xlu0 %v1008, 8
  %v1187 = vpop.permute.xlu0 %1186
  %1188 = vrot.lane.b32.xlu0 %v1011, 8
  %v1189 = vpop.permute.xlu0 %1188
  %1190 = vrot.lane.b32.xlu0 %v1013, 8
  %v1191 = vpop.permute.xlu0 %1190
  %1192 = vrot.lane.b32.xlu0 %v1016, 8
  %v1193 = vpop.permute.xlu0 %1192
  %1194 = vrot.lane.b32.xlu0 %v1018, 8
  %v1195 = vpop.permute.xlu0 %1194
  %1196 = vrot.lane.b32.xlu0 %v1021, 8
  %v1197 = vpop.permute.xlu0 %1196
  %1198 = vrot.lane.b32.xlu0 %v1023, 8
  %v1199 = vpop.permute.xlu0 %1198
  %1200 = vrot.lane.b32.xlu0 %v1026, 8
  %v1201 = vpop.permute.xlu0 %1200
  %1202 = vrot.lane.b32.xlu0 %v1028, 8
  %v1203 = vpop.permute.xlu0 %1202
  %1204 = vrot.lane.b32.xlu0 %v1031, 8
  %v1205 = vpop.permute.xlu0 %1204
  %1206 = vrot.lane.b32.xlu0 %v1033, 8
  %v1207 = vpop.permute.xlu0 %1206
  %1208 = vrot.lane.b32.xlu0 %v1036, 8
  %v1209 = vpop.permute.xlu0 %1208
  %1210 = vrot.lane.b32.xlu0 %v1038, 8
  %v1211 = vpop.permute.xlu0 %1210
  %1212 = vrot.lane.b32.xlu0 %v1041, 8
  %v1213 = vpop.permute.xlu0 %1212
  %1214 = vrot.lane.b32.xlu0 %v1043, 8
  %v1215 = vpop.permute.xlu0 %1214
  %1216 = vrot.lane.b32.xlu0 %v1046, 8
  %v1217 = vpop.permute.xlu0 %1216
  %1218 = vrot.lane.b32.xlu0 %v1048, 8
  %v1219 = vpop.permute.xlu0 %1218
  %1220 = vrot.lane.b32.xlu0 %v1051, 8
  %v1221 = vpop.permute.xlu0 %1220
  %1222 = vrot.lane.b32.xlu0 %v1053, 8
  %v1223 = vpop.permute.xlu0 %1222
  %1224 = vrot.lane.b32.xlu0 %v1056, 8
  %v1225 = vpop.permute.xlu0 %1224
  %1226 = vrot.lane.b32.xlu0 %v1058, 8
  %v1227 = vpop.permute.xlu0 %1226
  %1228 = vrot.lane.b32.xlu0 %v1061, 8
  %v1229 = vpop.permute.xlu0 %1228
  %1230 = vrot.lane.b32.xlu0 %v1063, 8
  %v1231 = vpop.permute.xlu0 %1230
  %1232 = vrot.lane.b32.xlu0 %v1066, 8
  %v1233 = vpop.permute.xlu0 %1232
  %1234 = vrot.lane.b32.xlu0 %v1068, 8
  %v1235 = vpop.permute.xlu0 %1234
  %1236 = vrot.lane.b32.xlu0 %v1071, 8
  %v1237 = vpop.permute.xlu0 %1236
  %1238 = vrot.lane.b32.xlu0 %v1073, 8
  %v1239 = vpop.permute.xlu0 %1238
  %1240 = vrot.lane.b32.xlu0 %v1076, 8
  %v1241 = vpop.permute.xlu0 %1240
  %1242 = vrot.lane.b32.xlu0 %v1078, 8
  %v1243 = vpop.permute.xlu0 %1242
  %1244 = vrot.lane.b32.xlu0 %v1081, 8
  %v1245 = vpop.permute.xlu0 %1244
  %1246 = vrot.lane.b32.xlu0 %v1083, 8
  %v1247 = vpop.permute.xlu0 %1246
  %1248 = vrot.lane.b32.xlu0 %v1086, 8
  %v1249 = vpop.permute.xlu0 %1248
  %1250 = vrot.lane.b32.xlu0 %v1088, 8
  %v1251 = vpop.permute.xlu0 %1250
  %1252 = vrot.lane.b32.xlu0 %v1091, 8
  %v1253 = vpop.permute.xlu0 %1252
  %1254 = vrot.lane.b32.xlu0 %v1093, 8
  %v1255 = vpop.permute.xlu0 %1254
  %1256 = vrot.lane.b32.xlu0 %v1096, 8
  %v1257 = vpop.permute.xlu0 %1256
  %1258 = vrot.lane.b32.xlu0 %v1098, 8
  %v1259 = vpop.permute.xlu0 %1258
  %1260 = vrot.lane.b32.xlu0 %v1101, 8
  %v1261 = vpop.permute.xlu0 %1260
  %1262 = vrot.lane.b32.xlu0 %v1103, 8
  %v1263 = vpop.permute.xlu0 %1262
  %1264 = vrot.lane.b32.xlu0 %v1106, 8
  %v1265 = vpop.permute.xlu0 %1264
  %1266 = vrot.lane.b32.xlu0 %v1108, 8
  %v1267 = vpop.permute.xlu0 %1266
  %1268 = vrot.lane.b32.xlu0 %v1111, 8
  %v1269 = vpop.permute.xlu0 %1268
  %1270 = vrot.lane.b32.xlu0 %v1113, 8
  %v1271 = vpop.permute.xlu0 %1270
  %1272 = vrot.lane.b32.xlu0 %v1116, 8
  %v1273 = vpop.permute.xlu0 %1272
  %1274 = vrot.lane.b32.xlu0 %v1118, 8
  %v1275 = vpop.permute.xlu0 %1274
  %1276 = vrot.lane.b32.xlu0 %v1121, 8
  %v1277 = vpop.permute.xlu0 %1276
  %1278 = vrot.lane.b32.xlu0 %v1123, 8
  %v1279 = vpop.permute.xlu0 %1278
  %1280 = vrot.lane.b32.xlu0 %v1126, 8
  %v1281 = vpop.permute.xlu0 %1280
  %1282 = vrot.lane.b32.xlu0 %v1128, 8
  %v1283 = vpop.permute.xlu0 %1282
  %1284 = vrot.lane.b32.xlu0 %v1131, 8
  %v1285 = vpop.permute.xlu0 %1284
  %1286 = vrot.lane.b32.xlu0 %v1133, 8
  %v1287 = vpop.permute.xlu0 %1286
  %1288 = vrot.lane.b32.xlu0 %v1136, 8
  %v1289 = vpop.permute.xlu0 %1288
  %1290 = vrot.lane.b32.xlu0 %v1138, 8
  %v1291 = vpop.permute.xlu0 %1290
  %1292 = vrot.lane.b32.xlu0 %v1141, 8
  %v1293 = vpop.permute.xlu0 %1292
  %1294 = vrot.lane.b32.xlu0 %v1143, 8
  %v1295 = vpop.permute.xlu0 %1294
  %1296 = vrot.lane.b32.xlu0 %v1146, 8
  %v1297 = vpop.permute.xlu0 %1296
  %1298 = vrot.lane.b32.xlu0 %v1148, 8
  %v1299 = vpop.permute.xlu0 %1298
  %1300 = vrot.lane.b32.xlu0 %v1151, 8
  %v1301 = vpop.permute.xlu0 %1300
  %1302 = vrot.lane.b32.xlu0 %v1153, 8
  %v1303 = vpop.permute.xlu0 %1302
  %1304 = vrot.lane.b32.xlu0 %v1156, 8
  %v1305 = vpop.permute.xlu0 %1304
  %1306 = vrot.lane.b32.xlu0 %v1158, 8
  %v1307 = vpop.permute.xlu0 %1306
  %1308 = vrot.lane.b32.xlu0 %v1161, 8
  %v1309 = vpop.permute.xlu0 %1308
  %1310 = vrot.lane.b32.xlu0 %v1163, 8
  %v1311 = vpop.permute.xlu0 %1310
  %1312 = vrot.lane.b32.xlu0 %v1166, 8
  %v1313 = vpop.permute.xlu0 %1312
  %1314 = vrot.lane.b32.xlu0 %v1168, 8
  %v1315 = vpop.permute.xlu0 %1314
  %1316 = vrot.lane.b32.xlu0 %v1171, 8
  %v1317 = vpop.permute.xlu0 %1316
  %1318 = vrot.lane.b32.xlu0 %v1173, 8
  %v1319 = vpop.permute.xlu0 %1318
  %1320 = vrot.lane.b32.xlu0 %v1176, 8
  %v1321 = vpop.permute.xlu0 %1320
  %1322 = vrot.lane.b32.xlu0 %v1178, 8
  %v1323 = vpop.permute.xlu0 %1322
  %1324 = vrot.lane.b32.xlu0 %v1181, 8
  %v1325 = vpop.permute.xlu0 %1324
  %1326 = vrot.lane.b32.xlu0 %v1183, 8
  %v1327 = vpop.permute.xlu0 %1326
  %v1400 = vsel %vm41, %v390, %v788
  %v1401 = vsel %vm41, %v391, %v790
  %v1402 = vsel %vm41, %v393, %v792
  %v1403 = vsel %vm41, %v394, %v794
  %v1404 = vsel %vm41, %v396, %v796
  %v1405 = vsel %vm41, %v397, %v798
  %v1406 = vsel %vm41, %v399, %v800
  %v1407 = vsel %vm41, %v400, %v802
  %v1408 = vsel %vm41, %v402, %v804
  %v1409 = vsel %vm41, %v403, %v806
  %v1410 = vsel %vm41, %v405, %v808
  %v1411 = vsel %vm41, %v406, %v810
  %v1412 = vsel %vm41, %v408, %v812
  %v1413 = vsel %vm41, %v409, %v814
  %v1414 = vsel %vm41, %v411, %v816
  %v1415 = vsel %vm41, %v412, %v818
  %v1416 = vsel %vm41, %v414, %v820
  %v1417 = vsel %vm41, %v415, %v822
  %v1418 = vsel %vm41, %v417, %v824
  %v1419 = vsel %vm41, %v418, %v826
  %v1420 = vsel %vm41, %v420, %v828
  %v1421 = vsel %vm41, %v421, %v830
  %v1422 = vsel %vm41, %v423, %v832
  %v1423 = vsel %vm41, %v424, %v834
  %v1424 = vsel %vm41, %v426, %v836
  %v1425 = vsel %vm41, %v427, %v838
  %v1426 = vsel %vm41, %v429, %v840
  %v1427 = vsel %vm41, %v430, %v842
  %v1428 = vsel %vm41, %v432, %v844
  %v1429 = vsel %vm41, %v433, %v846
  %v1430 = vsel %vm41, %v435, %v848
  %v1431 = vsel %vm41, %v436, %v850
  %v1432 = vsel %vm41, %v438, %v852
  %v1433 = vsel %vm41, %v439, %v854
  %v1434 = vsel %vm41, %v441, %v856
  %v1435 = vsel %vm41, %v442, %v858
  %v1436 = vsel %vm41, %v444, %v860
  %v1437 = vsel %vm41, %v445, %v862
  %v1438 = vsel %vm41, %v447, %v864
  %v1439 = vsel %vm41, %v448, %v866
  %v1440 = vsel %vm41, %v450, %v868
  %v1441 = vsel %vm41, %v451, %v870
  %v1442 = vsel %vm41, %v453, %v872
  %v1443 = vsel %vm41, %v454, %v874
  %v1444 = vsel %vm41, %v456, %v876
  %v1445 = vsel %vm41, %v457, %v878
  %v1446 = vsel %vm41, %v459, %v880
  %v1447 = vsel %vm41, %v460, %v882
  %v1448 = vsel %vm41, %v462, %v884
  %v1449 = vsel %vm41, %v463, %v886
  %v1450 = vsel %vm41, %v465, %v888
  %v1451 = vsel %vm41, %v466, %v890
  %v1452 = vsel %vm41, %v468, %v892
  %v1453 = vsel %vm41, %v469, %v894
  %v1454 = vsel %vm41, %v471, %v896
  %v1455 = vsel %vm41, %v472, %v898
  %v1456 = vsel %vm41, %v474, %v900
  %v1457 = vsel %vm41, %v475, %v902
  %v1458 = vsel %vm41, %v477, %v904
  %v1459 = vsel %vm41, %v478, %v906
  %v1460 = vsel %vm41, %v480, %v908
  %v1461 = vsel %vm41, %v481, %v910
  %v1462 = vsel %vm41, %v483, %v912
  %v1463 = vsel %vm41, %v484, %v914
  %v1464 = vsel %vm41, %v486, %v916
  %v1465 = vsel %vm41, %v487, %v918
  %v1466 = vsel %vm41, %v489, %v920
  %v1467 = vsel %vm41, %v490, %v922
  %v1468 = vsel %vm41, %v492, %v924
  %v1469 = vsel %vm41, %v493, %v926
  %v1470 = vsel %vm41, %v495, %v928
  %v1471 = vsel %vm41, %v496, %v930
  %vm1472 = vcmask 64512
  %v1473 = vsel %vm1472, %v1400, %v1185
  %v1474 = vsel %vm1472, %v1401, %v1187
  %v1475 = vsel %vm1472, %v1402, %v1189
  %v1476 = vsel %vm1472, %v1403, %v1191
  %v1477 = vsel %vm1472, %v1404, %v1193
  %v1478 = vsel %vm1472, %v1405, %v1195
  %v1479 = vsel %vm1472, %v1406, %v1197
  %v1480 = vsel %vm1472, %v1407, %v1199
  %v1481 = vsel %vm1472, %v1408, %v1201
  %v1482 = vsel %vm1472, %v1409, %v1203
  %v1483 = vsel %vm1472, %v1410, %v1205
  %v1484 = vsel %vm1472, %v1411, %v1207
  %v1485 = vsel %vm1472, %v1412, %v1209
  %v1486 = vsel %vm1472, %v1413, %v1211
  %v1487 = vsel %vm1472, %v1414, %v1213
  %v1488 = vsel %vm1472, %v1415, %v1215
  %v1489 = vsel %vm1472, %v1416, %v1217
  %v1490 = vsel %vm1472, %v1417, %v1219
  %v1491 = vsel %vm1472, %v1418, %v1221
  %v1492 = vsel %vm1472, %v1419, %v1223
  %v1493 = vsel %vm1472, %v1420, %v1225
  %v1494 = vsel %vm1472, %v1421, %v1227
  %v1495 = vsel %vm1472, %v1422, %v1229
  %v1496 = vsel %vm1472, %v1423, %v1231
  %v1497 = vsel %vm1472, %v1424, %v1233
  %v1498 = vsel %vm1472, %v1425, %v1235
  %v1499 = vsel %vm1472, %v1426, %v1237
  %v1500 = vsel %vm1472, %v1427, %v1239
  %v1501 = vsel %vm1472, %v1428, %v1241
  %v1502 = vsel %vm1472, %v1429, %v1243
  %v1503 = vsel %vm1472, %v1430, %v1245
  %v1504 = vsel %vm1472, %v1431, %v1247
  %v1505 = vsel %vm1472, %v1432, %v1249
  %v1506 = vsel %vm1472, %v1433, %v1251
  %v1507 = vsel %vm1472, %v1434, %v1253
  %v1508 = vsel %vm1472, %v1435, %v1255
  %v1509 = vsel %vm1472, %v1436, %v1257
  %v1510 = vsel %vm1472, %v1437, %v1259
  %v1511 = vsel %vm1472, %v1438, %v1261
  %v1512 = vsel %vm1472, %v1439, %v1263
  %v1513 = vsel %vm1472, %v1440, %v1265
  %v1514 = vsel %vm1472, %v1441, %v1267
  %v1515 = vsel %vm1472, %v1442, %v1269
  %v1516 = vsel %vm1472, %v1443, %v1271
  %v1517 = vsel %vm1472, %v1444, %v1273
  %v1518 = vsel %vm1472, %v1445, %v1275
  %v1519 = vsel %vm1472, %v1446, %v1277
  %v1520 = vsel %vm1472, %v1447, %v1279
  %v1521 = vsel %vm1472, %v1448, %v1281
  %v1522 = vsel %vm1472, %v1449, %v1283
  %v1523 = vsel %vm1472, %v1450, %v1285
  %v1524 = vsel %vm1472, %v1451, %v1287
  %v1525 = vsel %vm1472, %v1452, %v1289
  %v1526 = vsel %vm1472, %v1453, %v1291
  %v1527 = vsel %vm1472, %v1454, %v1293
  %v1528 = vsel %vm1472, %v1455, %v1295
  %v1529 = vsel %vm1472, %v1456, %v1297
  %v1530 = vsel %vm1472, %v1457, %v1299
  %v1531 = vsel %vm1472, %v1458, %v1301
  %v1532 = vsel %vm1472, %v1459, %v1303
  %v1533 = vsel %vm1472, %v1460, %v1305
  %v1534 = vsel %vm1472, %v1461, %v1307
  %v1535 = vsel %vm1472, %v1462, %v1309
  %v1536 = vsel %vm1472, %v1463, %v1311
  %v1537 = vsel %vm1472, %v1464, %v1313
  %v1538 = vsel %vm1472, %v1465, %v1315
  %v1539 = vsel %vm1472, %v1466, %v1317
  %v1540 = vsel %vm1472, %v1467, %v1319
  %v1541 = vsel %vm1472, %v1468, %v1321
  %v1542 = vsel %vm1472, %v1469, %v1323
  %v1543 = vsel %vm1472, %v1470, %v1325
  %v1544 = vsel %vm1472, %v1471, %v1327
  %v1545 = vld [vmem:[%s1] sm:$0xff]
  %v1546 = vld [vmem:[%s1 + $0x8] sm:$0xf]
  %s1547 = scalar_lea.vmem %s1, 16
  %v1548 = vld [vmem:[%s1547] sm:$0xff]
  %v1549 = vld [vmem:[%s1547 + $0x8] sm:$0xf]
  %vm1550 = vcmask 97280
  %v1552 = vsel %vm1550, %v1475, 0
  %v1555 = vsel %vm1550, %v1476, 0
  %v1558 = vsel %vm1550, %v1477, 0
  %v1561 = vsel %vm1550, %v1478, 0
  %v1564 = vsel %vm1550, %v1479, 0
  %v1567 = vsel %vm1550, %v1480, 0
  %v1570 = vsel %vm1550, %v1481, 0
  %v1573 = vsel %vm1550, %v1482, 0
  %v1576 = vsel %vm1550, %v1483, 0
  %v1579 = vsel %vm1550, %v1484, 0
  %v1582 = vsel %vm1550, %v1485, 0
  %v1585 = vsel %vm1550, %v1486, 0
  %v1588 = vsel %vm1550, %v1487, 0
  %v1591 = vsel %vm1550, %v1488, 0
  %v1594 = vsel %vm1550, %v1489, 0
  %v1597 = vsel %vm1550, %v1490, 0
  %v1600 = vsel %vm1550, %v1491, 0
  %v1603 = vsel %vm1550, %v1492, 0
  %v1606 = vsel %vm1550, %v1493, 0
  %v1609 = vsel %vm1550, %v1494, 0
  %v1612 = vsel %vm1550, %v1495, 0
  %v1615 = vsel %vm1550, %v1496, 0
  %v1618 = vsel %vm1550, %v1497, 0
  %v1621 = vsel %vm1550, %v1498, 0
  %v1624 = vsel %vm1550, %v1499, 0
  %v1627 = vsel %vm1550, %v1500, 0
  %v1630 = vsel %vm1550, %v1501, 0
  %v1633 = vsel %vm1550, %v1502, 0
  %v1636 = vsel %vm1550, %v1503, 0
  %v1639 = vsel %vm1550, %v1504, 0
  %v1642 = vsel %vm1550, %v1505, 0
  %v1645 = vsel %vm1550, %v1506, 0
  %v1648 = vsel %vm1550, %v1511, 0
  %v1651 = vsel %vm1550, %v1512, 0
  %v1654 = vsel %vm1550, %v1513, 0
  %v1657 = vsel %vm1550, %v1514, 0
  %v1660 = vsel %vm1550, %v1515, 0
  %v1663 = vsel %vm1550, %v1516, 0
  %v1666 = vsel %vm1550, %v1517, 0
  %v1669 = vsel %vm1550, %v1518, 0
  %v1672 = vsel %vm1550, %v1519, 0
  %v1675 = vsel %vm1550, %v1520, 0
  %v1678 = vsel %vm1550, %v1521, 0
  %v1681 = vsel %vm1550, %v1522, 0
  %v1684 = vsel %vm1550, %v1523, 0
  %v1687 = vsel %vm1550, %v1524, 0
  %v1690 = vsel %vm1550, %v1525, 0
  %v1693 = vsel %vm1550, %v1526, 0
  %v1696 = vsel %vm1550, %v1527, 0
  %v1699 = vsel %vm1550, %v1528, 0
  %v1702 = vsel %vm1550, %v1529, 0
  %v1705 = vsel %vm1550, %v1530, 0
  %v1708 = vsel %vm1550, %v1531, 0
  %v1711 = vsel %vm1550, %v1532, 0
  %v1714 = vsel %vm1550, %v1533, 0
  %v1717 = vsel %vm1550, %v1534, 0
  %v1720 = vsel %vm1550, %v1535, 0
  %v1723 = vsel %vm1550, %v1536, 0
  %v1726 = vsel %vm1550, %v1537, 0
  %v1729 = vsel %vm1550, %v1538, 0
  %v1732 = vsel %vm1550, %v1539, 0
  %v1735 = vsel %vm1550, %v1540, 0
  %v1738 = vsel %vm1550, %v1541, 0
  %v1741 = vsel %vm1550, %v1542, 0
  %vm1743 = vcmask 1043456
  %v1745 = vsel %vm1743, %v1549, 0
  %1747 = vmatprep.subr.mxu0 0.0
  %1748 = vmatpush1.msra.mxu0 %v1548
  %1749 = vmatprep.subr.mxu0 0.0
  %1750 = vmatpush1.msra.mxu0 %v1745
  %1751 = vmatprep.subr.mxu0 0.0
  %1752 = vmatpush1.msra.mxu0 0.0
  %1753 = vmatprep.subr.mxu0 0.0
  %1754 = vmatpush1.msra.mxu0 0.0
  %1755 = vmatprep.subr.mxu0 0.0
  %1756 = vmatpush1.msra.mxu0 0.0
  %1757 = vmatprep.subr.mxu0 0.0
  %1758 = vmatpush1.msra.mxu0 0.0
  %1759 = vmatprep.subr.mxu0 0.0
  %1760 = vmatpush1.msra.mxu0 0.0
  %1761 = vmatprep.subr.mxu0 0.0
  %1762 = vmatpush1.msra.mxu0 0.0
  %1763 = vmatprep.subr.mxu0 0.0
  %1764 = vmatpush1.msra.mxu0 0.0
  %1765 = vmatprep.subr.mxu0 0.0
  %1766 = vmatpush1.msra.mxu0 0.0
  %1767 = vmatprep.subr.mxu0 0.0
  %1768 = vmatpush1.msra.mxu0 0.0
  %1769 = vmatprep.subr.mxu0 0.0
  %1770 = vmatpush1.msra.mxu0 0.0
  %1771 = vmatprep.subr.mxu0 0.0
  %1772 = vmatpush1.msra.mxu0 0.0
  %1773 = vmatprep.subr.mxu0 0.0
  %1774 = vmatpush1.msra.mxu0 0.0
  %1775 = vmatprep.subr.mxu0 0.0
  %1776 = vmatpush1.msra.mxu0 0.0
  %1777 = vmatprep.subr.mxu0 0.0
  %1778 = vmatpush1.msra.mxu0 0.0
  %1779 = vmatprep.subr.mxu0 0.0
  %1780 = vmatpush1.msra.mxu0 0.0
  %1781 = vmatprep.subr.mxu0 0.0
  %1782 = vmatpush1.msra.mxu0 0.0
  %1783 = vmatprep.subr.mxu0 0.0
  %1784 = vmatpush1.msra.mxu0 0.0
  %1785 = vmatprep.subr.mxu0 0.0
  %1786 = vmatpush1.msra.mxu0 0.0
  %1787 = vmatprep.subr.mxu0 0.0
  %1788 = vmatpush1.msra.mxu0 0.0
  %1789 = vmatprep.subr.mxu0 0.0
  %1790 = vmatpush1.msra.mxu0 0.0
  %1791 = vmatprep.subr.mxu0 0.0
  %1792 = vmatpush1.msra.mxu0 0.0
  %1793 = vmatprep.subr.mxu0 0.0
  %1794 = vmatpush1.msra.mxu0 0.0
  %1795 = vmatprep.subr.mxu0 0.0
  %1796 = vmatpush1.msra.mxu0 0.0
  %1797 = vmatprep.subr.mxu0 0.0
  %1798 = vmatpush1.msra.mxu0 0.0
  %1799 = vmatprep.subr.mxu0 0.0
  %1800 = vmatpush1.msra.mxu0 0.0
  %1801 = vmatprep.subr.mxu0 0.0
  %1802 = vmatpush1.msra.mxu0 0.0
  %1803 = vmatprep.subr.mxu0 0.0
  %1804 = vmatpush1.msra.mxu0 0.0
  %1805 = vmatprep.subr.mxu0 0.0
  %1806 = vmatpush1.msra.mxu0 0.0
  %1807 = vmatprep.subr.mxu0 0.0
  %1808 = vmatpush1.msra.mxu0 0.0
  %1809 = vmatprep.subr.mxu0 0.0
  %1810 = vmatpush1.msra.mxu0 0.0
  %1811 = vmatprep.mubr.f32.mxu0 0.0
  %1812 = vmatmul.mubr.f32.gmra.mrb[0].mxu0 %v1552
  %v1813 = vpop.f32.mrb[0].mxu0
  %v1814 = vadd.f32 0.0, %v1813
  %v1815 = vpop.f32.mrb[0].mxu0
  %1816 = vmatprep.mubr.f32.mxu0 0.0
  %1817 = vmatmul.mubr.f32.gmra.mrb[0].mxu0 %v1555
  %v1818 = vpop.f32.mrb[0].mxu0
  %v1819 = vadd.f32 0.0, %v1818
  %v1820 = vpop.f32.mrb[0].mxu0
  %1821 = vmatprep.mubr.f32.mxu0 0.0
  %1822 = vmatmul.mubr.f32.gmra.mrb[0].mxu0 %v1558
  %v1823 = vpop.f32.mrb[0].mxu0
  %v1824 = vadd.f32 0.0, %v1823
  %v1825 = vpop.f32.mrb[0].mxu0
  %1826 = vmatprep.mubr.f32.mxu0 0.0
  %1827 = vmatmul.mubr.f32.gmra.mrb[0].mxu0 %v1561
  %v1828 = vpop.f32.mrb[0].mxu0
  %v1829 = vadd.f32 0.0, %v1828
  %v1830 = vpop.f32.mrb[0].mxu0
  %1831 = vmatprep.mubr.f32.mxu0 0.0
  %1832 = vmatmul.mubr.f32.gmra.mrb[0].mxu0 %v1564
  %v1833 = vpop.f32.mrb[0].mxu0
  %v1834 = vadd.f32 0.0, %v1833
  %v1835 = vpop.f32.mrb[0].mxu0
  %1836 = vmatprep.mubr.f32.mxu0 0.0
  %1837 = vmatmul.mubr.f32.gmra.mrb[0].mxu0 %v1567
  %v1838 = vpop.f32.mrb[0].mxu0
  %v1839 = vadd.f32 0.0, %v1838
  %v1840 = vpop.f32.mrb[0].mxu0
  %1841 = vmatprep.mubr.f32.mxu0 0.0
  %1842 = vmatmul.mubr.f32.gmra.mrb[0].mxu0 %v1570
  %v1843 = vpop.f32.mrb[0].mxu0
  %v1844 = vadd.f32 0.0, %v1843
  %v1845 = vpop.f32.mrb[0].mxu0
  %1846 = vmatprep.mubr.f32.mxu0 0.0
  %1847 = vmatmul.mubr.f32.gmra.mrb[0].mxu0 %v1573
  %v1848 = vpop.f32.mrb[0].mxu0
  %v1849 = vadd.f32 0.0, %v1848
  %v1850 = vpop.f32.mrb[0].mxu0
  %1851 = vmatprep.mubr.f32.mxu0 0.0
  %1852 = vmatmul.mubr.f32.gmra.mrb[0].mxu0 %v1576
  %v1853 = vpop.f32.mrb[0].mxu0
  %v1854 = vadd.f32 0.0, %v1853
  %v1855 = vpop.f32.mrb[0].mxu0
  %1856 = vmatprep.mubr.f32.mxu0 0.0
  %1857 = vmatmul.mubr.f32.gmra.mrb[0].mxu0 %v1579
  %v1858 = vpop.f32.mrb[0].mxu0
  %v1859 = vadd.f32 0.0, %v1858
  %v1860 = vpop.f32.mrb[0].mxu0
  %1861 = vmatprep.mubr.f32.mxu0 0.0
  %1862 = vmatmul.mubr.f32.gmra.mrb[0].mxu0 %v1582
  %v1863 = vpop.f32.mrb[0].mxu0
  %v1864 = vadd.f32 0.0, %v1863
  %v1865 = vpop.f32.mrb[0].mxu0
  %1866 = vmatprep.mubr.f32.mxu0 0.0
  %1867 = vmatmul.mubr.f32.gmra.mrb[0].mxu0 %v1585
  %v1868 = vpop.f32.mrb[0].mxu0
  %v1869 = vadd.f32 0.0, %v1868
  %v1870 = vpop.f32.mrb[0].mxu0
  %1871 = vmatprep.mubr.f32.mxu0 0.0
  %1872 = vmatmul.mubr.f32.gmra.mrb[0].mxu0 %v1588
  %v1873 = vpop.f32.mrb[0].mxu0
  %v1874 = vadd.f32 0.0, %v1873
  %v1875 = vpop.f32.mrb[0].mxu0
  %1876 = vmatprep.mubr.f32.mxu0 0.0
  %1877 = vmatmul.mubr.f32.gmra.mrb[0].mxu0 %v1591
  %v1878 = vpop.f32.mrb[0].mxu0
  %v1879 = vadd.f32 0.0, %v1878
  %v1880 = vpop.f32.mrb[0].mxu0
  %1881 = vmatprep.mubr.f32.mxu0 0.0
  %1882 = vmatmul.mubr.f32.gmra.mrb[0].mxu0 %v1594
  %v1883 = vpop.f32.mrb[0].mxu0
  %v1884 = vadd.f32 0.0, %v1883
  %v1885 = vpop.f32.mrb[0].mxu0
  %1886 = vmatprep.mubr.f32.mxu0 0.0
  %1887 = vmatmul.mubr.f32.gmra.mrb[0].mxu0 %v1597
  %v1888 = vpop.f32.mrb[0].mxu0
  %v1889 = vadd.f32 0.0, %v1888
  %v1890 = vpop.f32.mrb[0].mxu0
  %1891 = vmatprep.mubr.f32.mxu0 0.0
  %1892 = vmatmul.mubr.f32.gmra.mrb[0].mxu0 %v1600
  %v1893 = vpop.f32.mrb[0].mxu0
  %v1894 = vadd.f32 0.0, %v1893
  %v1895 = vpop.f32.mrb[0].mxu0
  %1896 = vmatprep.mubr.f32.mxu0 0.0
  %1897 = vmatmul.mubr.f32.gmra.mrb[0].mxu0 %v1603
  %v1898 = vpop.f32.mrb[0].mxu0
  %v1899 = vadd.f32 0.0, %v1898
  %v1900 = vpop.f32.mrb[0].mxu0
  %1901 = vmatprep.mubr.f32.mxu0 0.0
  %1902 = vmatmul.mubr.f32.gmra.mrb[0].mxu0 %v1606
  %v1903 = vpop.f32.mrb[0].mxu0
  %v1904 = vadd.f32 0.0, %v1903
  %v1905 = vpop.f32.mrb[0].mxu0
  %1906 = vmatprep.mubr.f32.mxu0 0.0
  %1907 = vmatmul.mubr.f32.gmra.mrb[0].mxu0 %v1609
  %v1908 = vpop.f32.mrb[0].mxu0
  %v1909 = vadd.f32 0.0, %v1908
  %v1910 = vpop.f32.mrb[0].mxu0
  %1911 = vmatprep.mubr.f32.mxu0 0.0
  %1912 = vmatmul.mubr.f32.gmra.mrb[0].mxu0 %v1612
  %v1913 = vpop.f32.mrb[0].mxu0
  %v1914 = vadd.f32 0.0, %v1913
  %v1915 = vpop.f32.mrb[0].mxu0
  %1916 = vmatprep.mubr.f32.mxu0 0.0
  %1917 = vmatmul.mubr.f32.gmra.mrb[0].mxu0 %v1615
  %v1918 = vpop.f32.mrb[0].mxu0
  %v1919 = vadd.f32 0.0, %v1918
  %v1920 = vpop.f32.mrb[0].mxu0
  %1921 = vmatprep.mubr.f32.mxu0 0.0
  %1922 = vmatmul.mubr.f32.gmra.mrb[0].mxu0 %v1618
  %v1923 = vpop.f32.mrb[0].mxu0
  %v1924 = vadd.f32 0.0, %v1923
  %v1925 = vpop.f32.mrb[0].mxu0
  %1926 = vmatprep.mubr.f32.mxu0 0.0
  %1927 = vmatmul.mubr.f32.gmra.mrb[0].mxu0 %v1621
  %v1928 = vpop.f32.mrb[0].mxu0
  %v1929 = vadd.f32 0.0, %v1928
  %v1930 = vpop.f32.mrb[0].mxu0
  %1931 = vmatprep.mubr.f32.mxu0 0.0
  %1932 = vmatmul.mubr.f32.gmra.mrb[0].mxu0 %v1624
  %v1933 = vpop.f32.mrb[0].mxu0
  %v1934 = vadd.f32 0.0, %v1933
  %v1935 = vpop.f32.mrb[0].mxu0
  %1936 = vmatprep.mubr.f32.mxu0 0.0
  %1937 = vmatmul.mubr.f32.gmra.mrb[0].mxu0 %v1627
  %v1938 = vpop.f32.mrb[0].mxu0
  %v1939 = vadd.f32 0.0, %v1938
  %v1940 = vpop.f32.mrb[0].mxu0
  %1941 = vmatprep.mubr.f32.mxu0 0.0
  %1942 = vmatmul.mubr.f32.gmra.mrb[0].mxu0 %v1630
  %v1943 = vpop.f32.mrb[0].mxu0
  %v1944 = vadd.f32 0.0, %v1943
  %v1945 = vpop.f32.mrb[0].mxu0
  %1946 = vmatprep.mubr.f32.mxu0 0.0
  %1947 = vmatmul.mubr.f32.gmra.mrb[0].mxu0 %v1633
  %v1948 = vpop.f32.mrb[0].mxu0
  %v1949 = vadd.f32 0.0, %v1948
  %v1950 = vpop.f32.mrb[0].mxu0
  %1951 = vmatprep.mubr.f32.mxu0 0.0
  %1952 = vmatmul.mubr.f32.gmra.mrb[0].mxu0 %v1636
  %v1953 = vpop.f32.mrb[0].mxu0
  %v1954 = vadd.f32 0.0, %v1953
  %v1955 = vpop.f32.mrb[0].mxu0
  %1956 = vmatprep.mubr.f32.mxu0 0.0
  %1957 = vmatmul.mubr.f32.gmra.mrb[0].mxu0 %v1639
  %v1958 = vpop.f32.mrb[0].mxu0
  %v1959 = vadd.f32 0.0, %v1958
  %v1960 = vpop.f32.mrb[0].mxu0
  %1961 = vmatprep.mubr.f32.mxu0 0.0
  %1962 = vmatmul.mubr.f32.gmra.mrb[0].mxu0 %v1642
  %v1963 = vpop.f32.mrb[0].mxu0
  %v1964 = vadd.f32 0.0, %v1963
  %v1965 = vpop.f32.mrb[0].mxu0
  %1966 = vmatprep.mubr.f32.mxu0 0.0
  %1967 = vmatmul.mubr.f32.gmra.mrb[0].mxu0 %v1645
  %v1968 = vpop.f32.mrb[0].mxu0
  %v1969 = vadd.f32 0.0, %v1968
  %v1970 = vpop.f32.mrb[0].mxu0
  %1971 = vmatprep.mubr.f32.mxu0 0.0
  %1972 = vmatmul.mubr.f32.gmra.mrb[0].mxu0 %v1648
  %v1973 = vpop.f32.mrb[0].mxu0
  %v1974 = vadd.f32 0.0, %v1973
  %v1975 = vpop.f32.mrb[0].mxu0
  %1976 = vmatprep.mubr.f32.mxu0 0.0
  %1977 = vmatmul.mubr.f32.gmra.mrb[0].mxu0 %v1651
  %v1978 = vpop.f32.mrb[0].mxu0
  %v1979 = vadd.f32 0.0, %v1978
  %v1980 = vpop.f32.mrb[0].mxu0
  %1981 = vmatprep.mubr.f32.mxu0 0.0
  %1982 = vmatmul.mubr.f32.gmra.mrb[0].mxu0 %v1654
  %v1983 = vpop.f32.mrb[0].mxu0
  %v1984 = vadd.f32 0.0, %v1983
  %v1985 = vpop.f32.mrb[0].mxu0
  %1986 = vmatprep.mubr.f32.mxu0 0.0
  %1987 = vmatmul.mubr.f32.gmra.mrb[0].mxu0 %v1657
  %v1988 = vpop.f32.mrb[0].mxu0
  %v1989 = vadd.f32 0.0, %v1988
  %v1990 = vpop.f32.mrb[0].mxu0
  %1991 = vmatprep.mubr.f32.mxu0 0.0
  %1992 = vmatmul.mubr.f32.gmra.mrb[0].mxu0 %v1660
  %v1993 = vpop.f32.mrb[0].mxu0
  %v1994 = vadd.f32 0.0, %v1993
  %v1995 = vpop.f32.mrb[0].mxu0
  %1996 = vmatprep.mubr.f32.mxu0 0.0
  %1997 = vmatmul.mubr.f32.gmra.mrb[0].mxu0 %v1663
  %v1998 = vpop.f32.mrb[0].mxu0
  %v1999 = vadd.f32 0.0, %v1998
  %v2000 = vpop.f32.mrb[0].mxu0
  %2001 = vmatprep.mubr.f32.mxu0 0.0
  %2002 = vmatmul.mubr.f32.gmra.mrb[0].mxu0 %v1666
  %v2003 = vpop.f32.mrb[0].mxu0
  %v2004 = vadd.f32 0.0, %v2003
  %v2005 = vpop.f32.mrb[0].mxu0
  %2006 = vmatprep.mubr.f32.mxu0 0.0
  %2007 = vmatmul.mubr.f32.gmra.mrb[0].mxu0 %v1669
  %v2008 = vpop.f32.mrb[0].mxu0
  %v2009 = vadd.f32 0.0, %v2008
  %v2010 = vpop.f32.mrb[0].mxu0
  %2011 = vmatprep.mubr.f32.mxu0 0.0
  %2012 = vmatmul.mubr.f32.gmra.mrb[0].mxu0 %v1672
  %v2013 = vpop.f32.mrb[0].mxu0
  %v2014 = vadd.f32 0.0, %v2013
  %v2015 = vpop.f32.mrb[0].mxu0
  %2016 = vmatprep.mubr.f32.mxu0 0.0
  %2017 = vmatmul.mubr.f32.gmra.mrb[0].mxu0 %v1675
  %v2018 = vpop.f32.mrb[0].mxu0
  %v2019 = vadd.f32 0.0, %v2018
  %v2020 = vpop.f32.mrb[0].mxu0
  %2021 = vmatprep.mubr.f32.mxu0 0.0
  %2022 = vmatmul.mubr.f32.gmra.mrb[0].mxu0 %v1678
  %v2023 = vpop.f32.mrb[0].mxu0
  %v2024 = vadd.f32 0.0, %v2023
  %v2025 = vpop.f32.mrb[0].mxu0
  %2026 = vmatprep.mubr.f32.mxu0 0.0
  %2027 = vmatmul.mubr.f32.gmra.mrb[0].mxu0 %v1681
  %v2028 = vpop.f32.mrb[0].mxu0
  %v2029 = vadd.f32 0.0, %v2028
  %v2030 = vpop.f32.mrb[0].mxu0
  %2031 = vmatprep.mubr.f32.mxu0 0.0
  %2032 = vmatmul.mubr.f32.gmra.mrb[0].mxu0 %v1684
  %v2033 = vpop.f32.mrb[0].mxu0
  %v2034 = vadd.f32 0.0, %v2033
  %v2035 = vpop.f32.mrb[0].mxu0
  %2036 = vmatprep.mubr.f32.mxu0 0.0
  %2037 = vmatmul.mubr.f32.gmra.mrb[0].mxu0 %v1687
  %v2038 = vpop.f32.mrb[0].mxu0
  %v2039 = vadd.f32 0.0, %v2038
  %v2040 = vpop.f32.mrb[0].mxu0
  %2041 = vmatprep.mubr.f32.mxu0 0.0
  %2042 = vmatmul.mubr.f32.gmra.mrb[0].mxu0 %v1690
  %v2043 = vpop.f32.mrb[0].mxu0
  %v2044 = vadd.f32 0.0, %v2043
  %v2045 = vpop.f32.mrb[0].mxu0
  %2046 = vmatprep.mubr.f32.mxu0 0.0
  %2047 = vmatmul.mubr.f32.gmra.mrb[0].mxu0 %v1693
  %v2048 = vpop.f32.mrb[0].mxu0
  %v2049 = vadd.f32 0.0, %v2048
  %v2050 = vpop.f32.mrb[0].mxu0
  %2051 = vmatprep.mubr.f32.mxu0 0.0
  %2052 = vmatmul.mubr.f32.gmra.mrb[0].mxu0 %v1696
  %v2053 = vpop.f32.mrb[0].mxu0
  %v2054 = vadd.f32 0.0, %v2053
  %v2055 = vpop.f32.mrb[0].mxu0
  %2056 = vmatprep.mubr.f32.mxu0 0.0
  %2057 = vmatmul.mubr.f32.gmra.mrb[0].mxu0 %v1699
  %v2058 = vpop.f32.mrb[0].mxu0
  %v2059 = vadd.f32 0.0, %v2058
  %v2060 = vpop.f32.mrb[0].mxu0
  %2061 = vmatprep.mubr.f32.mxu0 0.0
  %2062 = vmatmul.mubr.f32.gmra.mrb[0].mxu0 %v1702
  %v2063 = vpop.f32.mrb[0].mxu0
  %v2064 = vadd.f32 0.0, %v2063
  %v2065 = vpop.f32.mrb[0].mxu0
  %2066 = vmatprep.mubr.f32.mxu0 0.0
  %2067 = vmatmul.mubr.f32.gmra.mrb[0].mxu0 %v1705
  %v2068 = vpop.f32.mrb[0].mxu0
  %v2069 = vadd.f32 0.0, %v2068
  %v2070 = vpop.f32.mrb[0].mxu0
  %2071 = vmatprep.mubr.f32.mxu0 0.0
  %2072 = vmatmul.mubr.f32.gmra.mrb[0].mxu0 %v1708
  %v2073 = vpop.f32.mrb[0].mxu0
  %v2074 = vadd.f32 0.0, %v2073
  %v2075 = vpop.f32.mrb[0].mxu0
  %2076 = vmatprep.mubr.f32.mxu0 0.0
  %2077 = vmatmul.mubr.f32.gmra.mrb[0].mxu0 %v1711
  %v2078 = vpop.f32.mrb[0].mxu0
  %v2079 = vadd.f32 0.0, %v2078
  %v2080 = vpop.f32.mrb[0].mxu0
  %2081 = vmatprep.mubr.f32.mxu0 0.0
  %2082 = vmatmul.mubr.f32.gmra.mrb[0].mxu0 %v1714
  %v2083 = vpop.f32.mrb[0].mxu0
  %v2084 = vadd.f32 0.0, %v2083
  %v2085 = vpop.f32.mrb[0].mxu0
  %2086 = vmatprep.mubr.f32.mxu0 0.0
  %2087 = vmatmul.mubr.f32.gmra.mrb[0].mxu0 %v1717
  %v2088 = vpop.f32.mrb[0].mxu0
  %v2089 = vadd.f32 0.0, %v2088
  %v2090 = vpop.f32.mrb[0].mxu0
  %2091 = vmatprep.mubr.f32.mxu0 0.0
  %2092 = vmatmul.mubr.f32.gmra.mrb[0].mxu0 %v1720
  %v2093 = vpop.f32.mrb[0].mxu0
  %v2094 = vadd.f32 0.0, %v2093
  %v2095 = vpop.f32.mrb[0].mxu0
  %2096 = vmatprep.mubr.f32.mxu0 0.0
  %2097 = vmatmul.mubr.f32.gmra.mrb[0].mxu0 %v1723
  %v2098 = vpop.f32.mrb[0].mxu0
  %v2099 = vadd.f32 0.0, %v2098
  %v2100 = vpop.f32.mrb[0].mxu0
  %2101 = vmatprep.mubr.f32.mxu0 0.0
  %2102 = vmatmul.mubr.f32.gmra.mrb[0].mxu0 %v1726
  %v2103 = vpop.f32.mrb[0].mxu0
  %v2104 = vadd.f32 0.0, %v2103
  %v2105 = vpop.f32.mrb[0].mxu0
  %2106 = vmatprep.mubr.f32.mxu0 0.0
  %2107 = vmatmul.mubr.f32.gmra.mrb[0].mxu0 %v1729
  %v2108 = vpop.f32.mrb[0].mxu0
  %v2109 = vadd.f32 0.0, %v2108
  %v2110 = vpop.f32.mrb[0].mxu0
  %2111 = vmatprep.mubr.f32.mxu0 0.0
  %2112 = vmatmul.mubr.f32.gmra.mrb[0].mxu0 %v1732
  %v2113 = vpop.f32.mrb[0].mxu0
  %v2114 = vadd.f32 0.0, %v2113
  %v2115 = vpop.f32.mrb[0].mxu0
  %2116 = vmatprep.mubr.f32.mxu0 0.0
  %2117 = vmatmul.mubr.f32.gmra.mrb[0].mxu0 %v1735
  %v2118 = vpop.f32.mrb[0].mxu0
  %v2119 = vadd.f32 0.0, %v2118
  %v2120 = vpop.f32.mrb[0].mxu0
  %2121 = vmatprep.mubr.f32.mxu0 0.0
  %2122 = vmatmul.mubr.f32.gmra.mrb[0].mxu0 %v1738
  %v2123 = vpop.f32.mrb[0].mxu0
  %v2124 = vadd.f32 0.0, %v2123
  %v2125 = vpop.f32.mrb[0].mxu0
  %2126 = vmatprep.mubr.f32.mxu0 0.0
  %2127 = vmatmul.mubr.f32.gmra.mrb[0].mxu0 %v1741
  %v2128 = vpop.f32.mrb[0].mxu0
  %v2129 = vadd.f32 0.0, %v2128
  %v2130 = vpop.f32.mrb[0].mxu0
  %2131 = vdwg.mxu0
  %v2133 = vsel %vm1550, %v1473, 0
  %v2136 = vsel %vm1550, %v1474, 0
  %v2139 = vsel %vm1550, %v1509, 0
  %v2142 = vsel %vm1550, %v1510, 0
  %v2145 = vsel %vm1743, %v1546, 0
  %2147 = vmatprep.subr.mxu0 0.0
  %2148 = vmatpush1.msra.mxu0 %v1545
  %2149 = vmatprep.subr.mxu0 0.0
  %2150 = vmatpush1.msra.mxu0 %v2145
  %2151 = vmatprep.subr.mxu0 0.0
  %2152 = vmatpush1.msra.mxu0 0.0
  %2153 = vmatprep.subr.mxu0 0.0
  %2154 = vmatpush1.msra.mxu0 0.0
  %2155 = vmatprep.subr.mxu0 0.0
  %2156 = vmatpush1.msra.mxu0 0.0
  %2157 = vmatprep.subr.mxu0 0.0
  %2158 = vmatpush1.msra.mxu0 0.0
  %2159 = vmatprep.subr.mxu0 0.0
  %2160 = vmatpush1.msra.mxu0 0.0
  %2161 = vmatprep.subr.mxu0 0.0
  %2162 = vmatpush1.msra.mxu0 0.0
  %2163 = vmatprep.subr.mxu0 0.0
  %2164 = vmatpush1.msra.mxu0 0.0
  %2165 = vmatprep.subr.mxu0 0.0
  %2166 = vmatpush1.msra.mxu0 0.0
  %2167 = vmatprep.subr.mxu0 0.0
  %2168 = vmatpush1.msra.mxu0 0.0
  %2169 = vmatprep.subr.mxu0 0.0
  %2170 = vmatpush1.msra.mxu0 0.0
  %2171 = vmatprep.subr.mxu0 0.0
  %2172 = vmatpush1.msra.mxu0 0.0
  %2173 = vmatprep.subr.mxu0 0.0
  %2174 = vmatpush1.msra.mxu0 0.0
  %2175 = vmatprep.subr.mxu0 0.0
  %2176 = vmatpush1.msra.mxu0 0.0
  %2177 = vmatprep.subr.mxu0 0.0
  %2178 = vmatpush1.msra.mxu0 0.0
  %2179 = vmatprep.subr.mxu0 0.0
  %2180 = vmatpush1.msra.mxu0 0.0
  %2181 = vmatprep.subr.mxu0 0.0
  %2182 = vmatpush1.msra.mxu0 0.0
  %2183 = vmatprep.subr.mxu0 0.0
  %2184 = vmatpush1.msra.mxu0 0.0
  %2185 = vmatprep.subr.mxu0 0.0
  %2186 = vmatpush1.msra.mxu0 0.0
  %2187 = vmatprep.subr.mxu0 0.0
  %2188 = vmatpush1.msra.mxu0 0.0
  %2189 = vmatprep.subr.mxu0 0.0
  %2190 = vmatpush1.msra.mxu0 0.0
  %2191 = vmatprep.subr.mxu0 0.0
  %2192 = vmatpush1.msra.mxu0 0.0
  %2193 = vmatprep.subr.mxu0 0.0
  %2194 = vmatpush1.msra.mxu0 0.0
  %2195 = vmatprep.subr.mxu0 0.0
  %2196 = vmatpush1.msra.mxu0 0.0
  %2197 = vmatprep.subr.mxu0 0.0
  %2198 = vmatpush1.msra.mxu0 0.0
  %2199 = vmatprep.subr.mxu0 0.0
  %2200 = vmatpush1.msra.mxu0 0.0
  %2201 = vmatprep.subr.mxu0 0.0
  %2202 = vmatpush1.msra.mxu0 0.0
  %2203 = vmatprep.subr.mxu0 0.0
  %2204 = vmatpush1.msra.mxu0 0.0
  %2205 = vmatprep.subr.mxu0 0.0
  %2206 = vmatpush1.msra.mxu0 0.0
  %2207 = vmatprep.subr.mxu0 0.0
  %2208 = vmatpush1.msra.mxu0 0.0
  %2209 = vmatprep.subr.mxu0 0.0
  %2210 = vmatpush1.msra.mxu0 0.0
  %2211 = vmatprep.mubr.f32.mxu0 0.0
  %2212 = vmatmul.mubr.f32.gmra.mrb[0].mxu0 %v2133
  %v2213 = vpop.f32.mrb[0].mxu0
  %v2214 = vadd.f32 %v1814, %v2213
  %v2215 = vpop.f32.mrb[0].mxu0
  %2216 = vmatprep.mubr.f32.mxu0 0.0
  %2217 = vmatmul.mubr.f32.gmra.mrb[0].mxu0 %v2136
  %v2218 = vpop.f32.mrb[0].mxu0
  %v2219 = vadd.f32 %v1819, %v2218
  %v2220 = vpop.f32.mrb[0].mxu0
  %2221 = vmatprep.mubr.f32.mxu0 0.0
  %2222 = vmatmul.mubr.f32.gmra.mrb[0].mxu0 %v1552
  %v2223 = vpop.f32.mrb[0].mxu0
  %v2224 = vadd.f32 %v1824, %v2223
  %v2225 = vpop.f32.mrb[0].mxu0
  %2226 = vmatprep.mubr.f32.mxu0 0.0
  %2227 = vmatmul.mubr.f32.gmra.mrb[0].mxu0 %v1555
  %v2228 = vpop.f32.mrb[0].mxu0
  %v2229 = vadd.f32 %v1829, %v2228
  %v2230 = vpop.f32.mrb[0].mxu0
  %2231 = vmatprep.mubr.f32.mxu0 0.0
  %2232 = vmatmul.mubr.f32.gmra.mrb[0].mxu0 %v1558
  %v2233 = vpop.f32.mrb[0].mxu0
  %v2234 = vadd.f32 %v1834, %v2233
  %v2235 = vpop.f32.mrb[0].mxu0
  %2236 = vmatprep.mubr.f32.mxu0 0.0
  %2237 = vmatmul.mubr.f32.gmra.mrb[0].mxu0 %v1561
  %v2238 = vpop.f32.mrb[0].mxu0
  %v2239 = vadd.f32 %v1839, %v2238
  %v2240 = vpop.f32.mrb[0].mxu0
  %2241 = vmatprep.mubr.f32.mxu0 0.0
  %2242 = vmatmul.mubr.f32.gmra.mrb[0].mxu0 %v1564
  %v2243 = vpop.f32.mrb[0].mxu0
  %v2244 = vadd.f32 %v1844, %v2243
  %v2245 = vpop.f32.mrb[0].mxu0
  %2246 = vmatprep.mubr.f32.mxu0 0.0
  %2247 = vmatmul.mubr.f32.gmra.mrb[0].mxu0 %v1567
  %v2248 = vpop.f32.mrb[0].mxu0
  %v2249 = vadd.f32 %v1849, %v2248
  %v2250 = vpop.f32.mrb[0].mxu0
  %2251 = vmatprep.mubr.f32.mxu0 0.0
  %2252 = vmatmul.mubr.f32.gmra.mrb[0].mxu0 %v1570
  %v2253 = vpop.f32.mrb[0].mxu0
  %v2254 = vadd.f32 %v1854, %v2253
  %v2255 = vpop.f32.mrb[0].mxu0
  %2256 = vmatprep.mubr.f32.mxu0 0.0
  %2257 = vmatmul.mubr.f32.gmra.mrb[0].mxu0 %v1573
  %v2258 = vpop.f32.mrb[0].mxu0
  %v2259 = vadd.f32 %v1859, %v2258
  %v2260 = vpop.f32.mrb[0].mxu0
  %2261 = vmatprep.mubr.f32.mxu0 0.0
  %2262 = vmatmul.mubr.f32.gmra.mrb[0].mxu0 %v1576
  %v2263 = vpop.f32.mrb[0].mxu0
  %v2264 = vadd.f32 %v1864, %v2263
  %v2265 = vpop.f32.mrb[0].mxu0
  %2266 = vmatprep.mubr.f32.mxu0 0.0
  %2267 = vmatmul.mubr.f32.gmra.mrb[0].mxu0 %v1579
  %v2268 = vpop.f32.mrb[0].mxu0
  %v2269 = vadd.f32 %v1869, %v2268
  %v2270 = vpop.f32.mrb[0].mxu0
  %2271 = vmatprep.mubr.f32.mxu0 0.0
  %2272 = vmatmul.mubr.f32.gmra.mrb[0].mxu0 %v1582
  %v2273 = vpop.f32.mrb[0].mxu0
  %v2274 = vadd.f32 %v1874, %v2273
  %v2275 = vpop.f32.mrb[0].mxu0
  %2276 = vmatprep.mubr.f32.mxu0 0.0
  %2277 = vmatmul.mubr.f32.gmra.mrb[0].mxu0 %v1585
  %v2278 = vpop.f32.mrb[0].mxu0
  %v2279 = vadd.f32 %v1879, %v2278
  %v2280 = vpop.f32.mrb[0].mxu0
  %2281 = vmatprep.mubr.f32.mxu0 0.0
  %2282 = vmatmul.mubr.f32.gmra.mrb[0].mxu0 %v1588
  %v2283 = vpop.f32.mrb[0].mxu0
  %v2284 = vadd.f32 %v1884, %v2283
  %v2285 = vpop.f32.mrb[0].mxu0
  %2286 = vmatprep.mubr.f32.mxu0 0.0
  %2287 = vmatmul.mubr.f32.gmra.mrb[0].mxu0 %v1591
  %v2288 = vpop.f32.mrb[0].mxu0
  %v2289 = vadd.f32 %v1889, %v2288
  %v2290 = vpop.f32.mrb[0].mxu0
  %2291 = vmatprep.mubr.f32.mxu0 0.0
  %2292 = vmatmul.mubr.f32.gmra.mrb[0].mxu0 %v1594
  %v2293 = vpop.f32.mrb[0].mxu0
  %v2294 = vadd.f32 %v1894, %v2293
  %v2295 = vpop.f32.mrb[0].mxu0
  %2296 = vmatprep.mubr.f32.mxu0 0.0
  %2297 = vmatmul.mubr.f32.gmra.mrb[0].mxu0 %v1597
  %v2298 = vpop.f32.mrb[0].mxu0
  %v2299 = vadd.f32 %v1899, %v2298
  %v2300 = vpop.f32.mrb[0].mxu0
  %2301 = vmatprep.mubr.f32.mxu0 0.0
  %2302 = vmatmul.mubr.f32.gmra.mrb[0].mxu0 %v1600
  %v2303 = vpop.f32.mrb[0].mxu0
  %v2304 = vadd.f32 %v1904, %v2303
  %v2305 = vpop.f32.mrb[0].mxu0
  %2306 = vmatprep.mubr.f32.mxu0 0.0
  %2307 = vmatmul.mubr.f32.gmra.mrb[0].mxu0 %v1603
  %v2308 = vpop.f32.mrb[0].mxu0
  %v2309 = vadd.f32 %v1909, %v2308
  %v2310 = vpop.f32.mrb[0].mxu0
  %2311 = vmatprep.mubr.f32.mxu0 0.0
  %2312 = vmatmul.mubr.f32.gmra.mrb[0].mxu0 %v1606
  %v2313 = vpop.f32.mrb[0].mxu0
  %v2314 = vadd.f32 %v1914, %v2313
  %v2315 = vpop.f32.mrb[0].mxu0
  %2316 = vmatprep.mubr.f32.mxu0 0.0
  %2317 = vmatmul.mubr.f32.gmra.mrb[0].mxu0 %v1609
  %v2318 = vpop.f32.mrb[0].mxu0
  %v2319 = vadd.f32 %v1919, %v2318
  %v2320 = vpop.f32.mrb[0].mxu0
  %2321 = vmatprep.mubr.f32.mxu0 0.0
  %2322 = vmatmul.mubr.f32.gmra.mrb[0].mxu0 %v1612
  %v2323 = vpop.f32.mrb[0].mxu0
  %v2324 = vadd.f32 %v1924, %v2323
  %v2325 = vpop.f32.mrb[0].mxu0
  %2326 = vmatprep.mubr.f32.mxu0 0.0
  %2327 = vmatmul.mubr.f32.gmra.mrb[0].mxu0 %v1615
  %v2328 = vpop.f32.mrb[0].mxu0
  %v2329 = vadd.f32 %v1929, %v2328
  %v2330 = vpop.f32.mrb[0].mxu0
  %2331 = vmatprep.mubr.f32.mxu0 0.0
  %2332 = vmatmul.mubr.f32.gmra.mrb[0].mxu0 %v1618
  %v2333 = vpop.f32.mrb[0].mxu0
  %v2334 = vadd.f32 %v1934, %v2333
  %v2335 = vpop.f32.mrb[0].mxu0
  %2336 = vmatprep.mubr.f32.mxu0 0.0
  %2337 = vmatmul.mubr.f32.gmra.mrb[0].mxu0 %v1621
  %v2338 = vpop.f32.mrb[0].mxu0
  %v2339 = vadd.f32 %v1939, %v2338
  %v2340 = vpop.f32.mrb[0].mxu0
  %2341 = vmatprep.mubr.f32.mxu0 0.0
  %2342 = vmatmul.mubr.f32.gmra.mrb[0].mxu0 %v1624
  %v2343 = vpop.f32.mrb[0].mxu0
  %v2344 = vadd.f32 %v1944, %v2343
  %v2345 = vpop.f32.mrb[0].mxu0
  %2346 = vmatprep.mubr.f32.mxu0 0.0
  %2347 = vmatmul.mubr.f32.gmra.mrb[0].mxu0 %v1627
  %v2348 = vpop.f32.mrb[0].mxu0
  %v2349 = vadd.f32 %v1949, %v2348
  %v2350 = vpop.f32.mrb[0].mxu0
  %2351 = vmatprep.mubr.f32.mxu0 0.0
  %2352 = vmatmul.mubr.f32.gmra.mrb[0].mxu0 %v1630
  %v2353 = vpop.f32.mrb[0].mxu0
  %v2354 = vadd.f32 %v1954, %v2353
  %v2355 = vpop.f32.mrb[0].mxu0
  %2356 = vmatprep.mubr.f32.mxu0 0.0
  %2357 = vmatmul.mubr.f32.gmra.mrb[0].mxu0 %v1633
  %v2358 = vpop.f32.mrb[0].mxu0
  %v2359 = vadd.f32 %v1959, %v2358
  %v2360 = vpop.f32.mrb[0].mxu0
  %2361 = vmatprep.mubr.f32.mxu0 0.0
  %2362 = vmatmul.mubr.f32.gmra.mrb[0].mxu0 %v1636
  %v2363 = vpop.f32.mrb[0].mxu0
  %v2364 = vadd.f32 %v1964, %v2363
  %v2365 = vpop.f32.mrb[0].mxu0
  %2366 = vmatprep.mubr.f32.mxu0 0.0
  %2367 = vmatmul.mubr.f32.gmra.mrb[0].mxu0 %v1639
  %v2368 = vpop.f32.mrb[0].mxu0
  %v2369 = vadd.f32 %v1969, %v2368
  %v2370 = vpop.f32.mrb[0].mxu0
  %2371 = vmatprep.mubr.f32.mxu0 0.0
  %2372 = vmatmul.mubr.f32.gmra.mrb[0].mxu0 %v2139
  %v2373 = vpop.f32.mrb[0].mxu0
  %v2374 = vadd.f32 %v1974, %v2373
  %v2375 = vpop.f32.mrb[0].mxu0
  %2376 = vmatprep.mubr.f32.mxu0 0.0
  %2377 = vmatmul.mubr.f32.gmra.mrb[0].mxu0 %v2142
  %v2378 = vpop.f32.mrb[0].mxu0
  %v2379 = vadd.f32 %v1979, %v2378
  %v2380 = vpop.f32.mrb[0].mxu0
  %2381 = vmatprep.mubr.f32.mxu0 0.0
  %2382 = vmatmul.mubr.f32.gmra.mrb[0].mxu0 %v1648
  %v2383 = vpop.f32.mrb[0].mxu0
  %v2384 = vadd.f32 %v1984, %v2383
  %v2385 = vpop.f32.mrb[0].mxu0
  %2386 = vmatprep.mubr.f32.mxu0 0.0
  %2387 = vmatmul.mubr.f32.gmra.mrb[0].mxu0 %v1651
  %v2388 = vpop.f32.mrb[0].mxu0
  %v2389 = vadd.f32 %v1989, %v2388
  %v2390 = vpop.f32.mrb[0].mxu0
  %2391 = vmatprep.mubr.f32.mxu0 0.0
  %2392 = vmatmul.mubr.f32.gmra.mrb[0].mxu0 %v1654
  %v2393 = vpop.f32.mrb[0].mxu0
  %v2394 = vadd.f32 %v1994, %v2393
  %v2395 = vpop.f32.mrb[0].mxu0
  %2396 = vmatprep.mubr.f32.mxu0 0.0
  %2397 = vmatmul.mubr.f32.gmra.mrb[0].mxu0 %v1657
  %v2398 = vpop.f32.mrb[0].mxu0
  %v2399 = vadd.f32 %v1999, %v2398
  %v2400 = vpop.f32.mrb[0].mxu0
  %2401 = vmatprep.mubr.f32.mxu0 0.0
  %2402 = vmatmul.mubr.f32.gmra.mrb[0].mxu0 %v1660
  %v2403 = vpop.f32.mrb[0].mxu0
  %v2404 = vadd.f32 %v2004, %v2403
  %v2405 = vpop.f32.mrb[0].mxu0
  %2406 = vmatprep.mubr.f32.mxu0 0.0
  %2407 = vmatmul.mubr.f32.gmra.mrb[0].mxu0 %v1663
  %v2408 = vpop.f32.mrb[0].mxu0
  %v2409 = vadd.f32 %v2009, %v2408
  %v2410 = vpop.f32.mrb[0].mxu0
  %2411 = vmatprep.mubr.f32.mxu0 0.0
  %2412 = vmatmul.mubr.f32.gmra.mrb[0].mxu0 %v1666
  %v2413 = vpop.f32.mrb[0].mxu0
  %v2414 = vadd.f32 %v2014, %v2413
  %v2415 = vpop.f32.mrb[0].mxu0
  %2416 = vmatprep.mubr.f32.mxu0 0.0
  %2417 = vmatmul.mubr.f32.gmra.mrb[0].mxu0 %v1669
  %v2418 = vpop.f32.mrb[0].mxu0
  %v2419 = vadd.f32 %v2019, %v2418
  %v2420 = vpop.f32.mrb[0].mxu0
  %2421 = vmatprep.mubr.f32.mxu0 0.0
  %2422 = vmatmul.mubr.f32.gmra.mrb[0].mxu0 %v1672
  %v2423 = vpop.f32.mrb[0].mxu0
  %v2424 = vadd.f32 %v2024, %v2423
  %v2425 = vpop.f32.mrb[0].mxu0
  %2426 = vmatprep.mubr.f32.mxu0 0.0
  %2427 = vmatmul.mubr.f32.gmra.mrb[0].mxu0 %v1675
  %v2428 = vpop.f32.mrb[0].mxu0
  %v2429 = vadd.f32 %v2029, %v2428
  %v2430 = vpop.f32.mrb[0].mxu0
  %2431 = vmatprep.mubr.f32.mxu0 0.0
  %2432 = vmatmul.mubr.f32.gmra.mrb[0].mxu0 %v1678
  %v2433 = vpop.f32.mrb[0].mxu0
  %v2434 = vadd.f32 %v2034, %v2433
  %v2435 = vpop.f32.mrb[0].mxu0
  %2436 = vmatprep.mubr.f32.mxu0 0.0
  %2437 = vmatmul.mubr.f32.gmra.mrb[0].mxu0 %v1681
  %v2438 = vpop.f32.mrb[0].mxu0
  %v2439 = vadd.f32 %v2039, %v2438
  %v2440 = vpop.f32.mrb[0].mxu0
  %2441 = vmatprep.mubr.f32.mxu0 0.0
  %2442 = vmatmul.mubr.f32.gmra.mrb[0].mxu0 %v1684
  %v2443 = vpop.f32.mrb[0].mxu0
  %v2444 = vadd.f32 %v2044, %v2443
  %v2445 = vpop.f32.mrb[0].mxu0
  %2446 = vmatprep.mubr.f32.mxu0 0.0
  %2447 = vmatmul.mubr.f32.gmra.mrb[0].mxu0 %v1687
  %v2448 = vpop.f32.mrb[0].mxu0
  %v2449 = vadd.f32 %v2049, %v2448
  %v2450 = vpop.f32.mrb[0].mxu0
  %2451 = vmatprep.mubr.f32.mxu0 0.0
  %2452 = vmatmul.mubr.f32.gmra.mrb[0].mxu0 %v1690
  %v2453 = vpop.f32.mrb[0].mxu0
  %v2454 = vadd.f32 %v2054, %v2453
  %v2455 = vpop.f32.mrb[0].mxu0
  %2456 = vmatprep.mubr.f32.mxu0 0.0
  %2457 = vmatmul.mubr.f32.gmra.mrb[0].mxu0 %v1693
  %v2458 = vpop.f32.mrb[0].mxu0
  %v2459 = vadd.f32 %v2059, %v2458
  %v2460 = vpop.f32.mrb[0].mxu0
  %2461 = vmatprep.mubr.f32.mxu0 0.0
  %2462 = vmatmul.mubr.f32.gmra.mrb[0].mxu0 %v1696
  %v2463 = vpop.f32.mrb[0].mxu0
  %v2464 = vadd.f32 %v2064, %v2463
  %v2465 = vpop.f32.mrb[0].mxu0
  %2466 = vmatprep.mubr.f32.mxu0 0.0
  %2467 = vmatmul.mubr.f32.gmra.mrb[0].mxu0 %v1699
  %v2468 = vpop.f32.mrb[0].mxu0
  %v2469 = vadd.f32 %v2069, %v2468
  %v2470 = vpop.f32.mrb[0].mxu0
  %2471 = vmatprep.mubr.f32.mxu0 0.0
  %2472 = vmatmul.mubr.f32.gmra.mrb[0].mxu0 %v1702
  %v2473 = vpop.f32.mrb[0].mxu0
  %v2474 = vadd.f32 %v2074, %v2473
  %v2475 = vpop.f32.mrb[0].mxu0
  %2476 = vmatprep.mubr.f32.mxu0 0.0
  %2477 = vmatmul.mubr.f32.gmra.mrb[0].mxu0 %v1705
  %v2478 = vpop.f32.mrb[0].mxu0
  %v2479 = vadd.f32 %v2079, %v2478
  %v2480 = vpop.f32.mrb[0].mxu0
  %2481 = vmatprep.mubr.f32.mxu0 0.0
  %2482 = vmatmul.mubr.f32.gmra.mrb[0].mxu0 %v1708
  %v2483 = vpop.f32.mrb[0].mxu0
  %v2484 = vadd.f32 %v2084, %v2483
  %v2485 = vpop.f32.mrb[0].mxu0
  %2486 = vmatprep.mubr.f32.mxu0 0.0
  %2487 = vmatmul.mubr.f32.gmra.mrb[0].mxu0 %v1711
  %v2488 = vpop.f32.mrb[0].mxu0
  %v2489 = vadd.f32 %v2089, %v2488
  %v2490 = vpop.f32.mrb[0].mxu0
  %2491 = vmatprep.mubr.f32.mxu0 0.0
  %2492 = vmatmul.mubr.f32.gmra.mrb[0].mxu0 %v1714
  %v2493 = vpop.f32.mrb[0].mxu0
  %v2494 = vadd.f32 %v2094, %v2493
  %v2495 = vpop.f32.mrb[0].mxu0
  %2496 = vmatprep.mubr.f32.mxu0 0.0
  %2497 = vmatmul.mubr.f32.gmra.mrb[0].mxu0 %v1717
  %v2498 = vpop.f32.mrb[0].mxu0
  %v2499 = vadd.f32 %v2099, %v2498
  %v2500 = vpop.f32.mrb[0].mxu0
  %2501 = vmatprep.mubr.f32.mxu0 0.0
  %2502 = vmatmul.mubr.f32.gmra.mrb[0].mxu0 %v1720
  %v2503 = vpop.f32.mrb[0].mxu0
  %v2504 = vadd.f32 %v2104, %v2503
  %v2505 = vpop.f32.mrb[0].mxu0
  %2506 = vmatprep.mubr.f32.mxu0 0.0
  %2507 = vmatmul.mubr.f32.gmra.mrb[0].mxu0 %v1723
  %v2508 = vpop.f32.mrb[0].mxu0
  %v2509 = vadd.f32 %v2109, %v2508
  %v2510 = vpop.f32.mrb[0].mxu0
  %2511 = vmatprep.mubr.f32.mxu0 0.0
  %2512 = vmatmul.mubr.f32.gmra.mrb[0].mxu0 %v1726
  %v2513 = vpop.f32.mrb[0].mxu0
  %v2514 = vadd.f32 %v2114, %v2513
  %v2515 = vpop.f32.mrb[0].mxu0
  %2516 = vmatprep.mubr.f32.mxu0 0.0
  %2517 = vmatmul.mubr.f32.gmra.mrb[0].mxu0 %v1729
  %v2518 = vpop.f32.mrb[0].mxu0
  %v2519 = vadd.f32 %v2119, %v2518
  %v2520 = vpop.f32.mrb[0].mxu0
  %2521 = vmatprep.mubr.f32.mxu0 0.0
  %2522 = vmatmul.mubr.f32.gmra.mrb[0].mxu0 %v1732
  %v2523 = vpop.f32.mrb[0].mxu0
  %v2524 = vadd.f32 %v2124, %v2523
  %v2525 = vpop.f32.mrb[0].mxu0
  %2526 = vmatprep.mubr.f32.mxu0 0.0
  %2527 = vmatmul.mubr.f32.gmra.mrb[0].mxu0 %v1735
  %v2528 = vpop.f32.mrb[0].mxu0
  %v2529 = vadd.f32 %v2129, %v2528
  %v2530 = vpop.f32.mrb[0].mxu0
  %2531 = vdwg.mxu0
  %s2532 = scalar_lea.vmem %s1, 32
  %v2533 = vld [vmem:[%s2532] sm:$0xff]
  %v2534 = vld [vmem:[%s2532 + $0x8] sm:$0xf]
  %v2536 = vsel %vm1550, %v1507, 0
  %v2539 = vsel %vm1550, %v1508, 0
  %v2542 = vsel %vm1550, %v1543, 0
  %v2545 = vsel %vm1550, %v1544, 0
  %v2548 = vsel %vm1743, %v2534, 0
  %2550 = vmatprep.subr.mxu0 0.0
  %2551 = vmatpush1.msra.mxu0 %v2533
  %2552 = vmatprep.subr.mxu0 0.0
  %2553 = vmatpush1.msra.mxu0 %v2548
  %2554 = vmatprep.subr.mxu0 0.0
  %2555 = vmatpush1.msra.mxu0 0.0
  %2556 = vmatprep.subr.mxu0 0.0
  %2557 = vmatpush1.msra.mxu0 0.0
  %2558 = vmatprep.subr.mxu0 0.0
  %2559 = vmatpush1.msra.mxu0 0.0
  %2560 = vmatprep.subr.mxu0 0.0
  %2561 = vmatpush1.msra.mxu0 0.0
  %2562 = vmatprep.subr.mxu0 0.0
  %2563 = vmatpush1.msra.mxu0 0.0
  %2564 = vmatprep.subr.mxu0 0.0
  %2565 = vmatpush1.msra.mxu0 0.0
  %2566 = vmatprep.subr.mxu0 0.0
  %2567 = vmatpush1.msra.mxu0 0.0
  %2568 = vmatprep.subr.mxu0 0.0
  %2569 = vmatpush1.msra.mxu0 0.0
  %2570 = vmatprep.subr.mxu0 0.0
  %2571 = vmatpush1.msra.mxu0 0.0
  %2572 = vmatprep.subr.mxu0 0.0
  %2573 = vmatpush1.msra.mxu0 0.0
  %2574 = vmatprep.subr.mxu0 0.0
  %2575 = vmatpush1.msra.mxu0 0.0
  %2576 = vmatprep.subr.mxu0 0.0
  %2577 = vmatpush1.msra.mxu0 0.0
  %2578 = vmatprep.subr.mxu0 0.0
  %2579 = vmatpush1.msra.mxu0 0.0
  %2580 = vmatprep.subr.mxu0 0.0
  %2581 = vmatpush1.msra.mxu0 0.0
  %2582 = vmatprep.subr.mxu0 0.0
  %2583 = vmatpush1.msra.mxu0 0.0
  %2584 = vmatprep.subr.mxu0 0.0
  %2585 = vmatpush1.msra.mxu0 0.0
  %2586 = vmatprep.subr.mxu0 0.0
  %2587 = vmatpush1.msra.mxu0 0.0
  %2588 = vmatprep.subr.mxu0 0.0
  %2589 = vmatpush1.msra.mxu0 0.0
  %2590 = vmatprep.subr.mxu0 0.0
  %2591 = vmatpush1.msra.mxu0 0.0
  %2592 = vmatprep.subr.mxu0 0.0
  %2593 = vmatpush1.msra.mxu0 0.0
  %2594 = vmatprep.subr.mxu0 0.0
  %2595 = vmatpush1.msra.mxu0 0.0
  %2596 = vmatprep.subr.mxu0 0.0
  %2597 = vmatpush1.msra.mxu0 0.0
  %2598 = vmatprep.subr.mxu0 0.0
  %2599 = vmatpush1.msra.mxu0 0.0
  %2600 = vmatprep.subr.mxu0 0.0
  %2601 = vmatpush1.msra.mxu0 0.0
  %2602 = vmatprep.subr.mxu0 0.0
  %2603 = vmatpush1.msra.mxu0 0.0
  %2604 = vmatprep.subr.mxu0 0.0
  %2605 = vmatpush1.msra.mxu0 0.0
  %2606 = vmatprep.subr.mxu0 0.0
  %2607 = vmatpush1.msra.mxu0 0.0
  %2608 = vmatprep.subr.mxu0 0.0
  %2609 = vmatpush1.msra.mxu0 0.0
  %2610 = vmatprep.subr.mxu0 0.0
  %2611 = vmatpush1.msra.mxu0 0.0
  %2612 = vmatprep.subr.mxu0 0.0
  %2613 = vmatpush1.msra.mxu0 0.0
  %2614 = vmatprep.mubr.f32.mxu0 0.0
  %2615 = vmatmul.mubr.f32.gmra.mrb[0].mxu0 %v1558
  %v2616 = vpop.f32.mrb[0].mxu0
  %v2617 = vadd.f32 0.0, %v2616
  %v2618 = vpop.f32.mrb[0].mxu0
  %2619 = vmatprep.mubr.f32.mxu0 0.0
  %2620 = vmatmul.mubr.f32.gmra.mrb[0].mxu0 %v1561
  %v2621 = vpop.f32.mrb[0].mxu0
  %v2622 = vadd.f32 0.0, %v2621
  %v2623 = vpop.f32.mrb[0].mxu0
  %2624 = vmatprep.mubr.f32.mxu0 0.0
  %2625 = vmatmul.mubr.f32.gmra.mrb[0].mxu0 %v1564
  %v2626 = vpop.f32.mrb[0].mxu0
  %v2627 = vadd.f32 0.0, %v2626
  %v2628 = vpop.f32.mrb[0].mxu0
  %2629 = vmatprep.mubr.f32.mxu0 0.0
  %2630 = vmatmul.mubr.f32.gmra.mrb[0].mxu0 %v1567
  %v2631 = vpop.f32.mrb[0].mxu0
  %v2632 = vadd.f32 0.0, %v2631
  %v2633 = vpop.f32.mrb[0].mxu0
  %2634 = vmatprep.mubr.f32.mxu0 0.0
  %2635 = vmatmul.mubr.f32.gmra.mrb[0].mxu0 %v1570
  %v2636 = vpop.f32.mrb[0].mxu0
  %v2637 = vadd.f32 0.0, %v2636
  %v2638 = vpop.f32.mrb[0].mxu0
  %2639 = vmatprep.mubr.f32.mxu0 0.0
  %2640 = vmatmul.mubr.f32.gmra.mrb[0].mxu0 %v1573
  %v2641 = vpop.f32.mrb[0].mxu0
  %v2642 = vadd.f32 0.0, %v2641
  %v2643 = vpop.f32.mrb[0].mxu0
  %2644 = vmatprep.mubr.f32.mxu0 0.0
  %2645 = vmatmul.mubr.f32.gmra.mrb[0].mxu0 %v1576
  %v2646 = vpop.f32.mrb[0].mxu0
  %v2647 = vadd.f32 0.0, %v2646
  %v2648 = vpop.f32.mrb[0].mxu0
  %2649 = vmatprep.mubr.f32.mxu0 0.0
  %2650 = vmatmul.mubr.f32.gmra.mrb[0].mxu0 %v1579
  %v2651 = vpop.f32.mrb[0].mxu0
  %v2652 = vadd.f32 0.0, %v2651
  %v2653 = vpop.f32.mrb[0].mxu0
  %2654 = vmatprep.mubr.f32.mxu0 0.0
  %2655 = vmatmul.mubr.f32.gmra.mrb[0].mxu0 %v1582
  %v2656 = vpop.f32.mrb[0].mxu0
  %v2657 = vadd.f32 0.0, %v2656
  %v2658 = vpop.f32.mrb[0].mxu0
  %2659 = vmatprep.mubr.f32.mxu0 0.0
  %2660 = vmatmul.mubr.f32.gmra.mrb[0].mxu0 %v1585
  %v2661 = vpop.f32.mrb[0].mxu0
  %v2662 = vadd.f32 0.0, %v2661
  %v2663 = vpop.f32.mrb[0].mxu0
  %2664 = vmatprep.mubr.f32.mxu0 0.0
  %2665 = vmatmul.mubr.f32.gmra.mrb[0].mxu0 %v1588
  %v2666 = vpop.f32.mrb[0].mxu0
  %v2667 = vadd.f32 0.0, %v2666
  %v2668 = vpop.f32.mrb[0].mxu0
  %2669 = vmatprep.mubr.f32.mxu0 0.0
  %2670 = vmatmul.mubr.f32.gmra.mrb[0].mxu0 %v1591
  %v2671 = vpop.f32.mrb[0].mxu0
  %v2672 = vadd.f32 0.0, %v2671
  %v2673 = vpop.f32.mrb[0].mxu0
  %2674 = vmatprep.mubr.f32.mxu0 0.0
  %2675 = vmatmul.mubr.f32.gmra.mrb[0].mxu0 %v1594
  %v2676 = vpop.f32.mrb[0].mxu0
  %v2677 = vadd.f32 0.0, %v2676
  %v2678 = vpop.f32.mrb[0].mxu0
  %2679 = vmatprep.mubr.f32.mxu0 0.0
  %2680 = vmatmul.mubr.f32.gmra.mrb[0].mxu0 %v1597
  %v2681 = vpop.f32.mrb[0].mxu0
  %v2682 = vadd.f32 0.0, %v2681
  %v2683 = vpop.f32.mrb[0].mxu0
  %2684 = vmatprep.mubr.f32.mxu0 0.0
  %2685 = vmatmul.mubr.f32.gmra.mrb[0].mxu0 %v1600
  %v2686 = vpop.f32.mrb[0].mxu0
  %v2687 = vadd.f32 0.0, %v2686
  %v2688 = vpop.f32.mrb[0].mxu0
  %2689 = vmatprep.mubr.f32.mxu0 0.0
  %2690 = vmatmul.mubr.f32.gmra.mrb[0].mxu0 %v1603
  %v2691 = vpop.f32.mrb[0].mxu0
  %v2692 = vadd.f32 0.0, %v2691
  %v2693 = vpop.f32.mrb[0].mxu0
  %2694 = vmatprep.mubr.f32.mxu0 0.0
  %2695 = vmatmul.mubr.f32.gmra.mrb[0].mxu0 %v1606
  %v2696 = vpop.f32.mrb[0].mxu0
  %v2697 = vadd.f32 0.0, %v2696
  %v2698 = vpop.f32.mrb[0].mxu0
  %2699 = vmatprep.mubr.f32.mxu0 0.0
  %2700 = vmatmul.mubr.f32.gmra.mrb[0].mxu0 %v1609
  %v2701 = vpop.f32.mrb[0].mxu0
  %v2702 = vadd.f32 0.0, %v2701
  %v2703 = vpop.f32.mrb[0].mxu0
  %2704 = vmatprep.mubr.f32.mxu0 0.0
  %2705 = vmatmul.mubr.f32.gmra.mrb[0].mxu0 %v1612
  %v2706 = vpop.f32.mrb[0].mxu0
  %v2707 = vadd.f32 0.0, %v2706
  %v2708 = vpop.f32.mrb[0].mxu0
  %2709 = vmatprep.mubr.f32.mxu0 0.0
  %2710 = vmatmul.mubr.f32.gmra.mrb[0].mxu0 %v1615
  %v2711 = vpop.f32.mrb[0].mxu0
  %v2712 = vadd.f32 0.0, %v2711
  %v2713 = vpop.f32.mrb[0].mxu0
  %2714 = vmatprep.mubr.f32.mxu0 0.0
  %2715 = vmatmul.mubr.f32.gmra.mrb[0].mxu0 %v1618
  %v2716 = vpop.f32.mrb[0].mxu0
  %v2717 = vadd.f32 0.0, %v2716
  %v2718 = vpop.f32.mrb[0].mxu0
  %2719 = vmatprep.mubr.f32.mxu0 0.0
  %2720 = vmatmul.mubr.f32.gmra.mrb[0].mxu0 %v1621
  %v2721 = vpop.f32.mrb[0].mxu0
  %v2722 = vadd.f32 0.0, %v2721
  %v2723 = vpop.f32.mrb[0].mxu0
  %2724 = vmatprep.mubr.f32.mxu0 0.0
  %2725 = vmatmul.mubr.f32.gmra.mrb[0].mxu0 %v1624
  %v2726 = vpop.f32.mrb[0].mxu0
  %v2727 = vadd.f32 0.0, %v2726
  %v2728 = vpop.f32.mrb[0].mxu0
  %2729 = vmatprep.mubr.f32.mxu0 0.0
  %2730 = vmatmul.mubr.f32.gmra.mrb[0].mxu0 %v1627
  %v2731 = vpop.f32.mrb[0].mxu0
  %v2732 = vadd.f32 0.0, %v2731
  %v2733 = vpop.f32.mrb[0].mxu0
  %2734 = vmatprep.mubr.f32.mxu0 0.0
  %2735 = vmatmul.mubr.f32.gmra.mrb[0].mxu0 %v1630
  %v2736 = vpop.f32.mrb[0].mxu0
  %v2737 = vadd.f32 0.0, %v2736
  %v2738 = vpop.f32.mrb[0].mxu0
  %2739 = vmatprep.mubr.f32.mxu0 0.0
  %2740 = vmatmul.mubr.f32.gmra.mrb[0].mxu0 %v1633
  %v2741 = vpop.f32.mrb[0].mxu0
  %v2742 = vadd.f32 0.0, %v2741
  %v2743 = vpop.f32.mrb[0].mxu0
  %2744 = vmatprep.mubr.f32.mxu0 0.0
  %2745 = vmatmul.mubr.f32.gmra.mrb[0].mxu0 %v1636
  %v2746 = vpop.f32.mrb[0].mxu0
  %v2747 = vadd.f32 0.0, %v2746
  %v2748 = vpop.f32.mrb[0].mxu0
  %2749 = vmatprep.mubr.f32.mxu0 0.0
  %2750 = vmatmul.mubr.f32.gmra.mrb[0].mxu0 %v1639
  %v2751 = vpop.f32.mrb[0].mxu0
  %v2752 = vadd.f32 0.0, %v2751
  %v2753 = vpop.f32.mrb[0].mxu0
  %2754 = vmatprep.mubr.f32.mxu0 0.0
  %2755 = vmatmul.mubr.f32.gmra.mrb[0].mxu0 %v1642
  %v2756 = vpop.f32.mrb[0].mxu0
  %v2757 = vadd.f32 0.0, %v2756
  %v2758 = vpop.f32.mrb[0].mxu0
  %2759 = vmatprep.mubr.f32.mxu0 0.0
  %2760 = vmatmul.mubr.f32.gmra.mrb[0].mxu0 %v1645
  %v2761 = vpop.f32.mrb[0].mxu0
  %v2762 = vadd.f32 0.0, %v2761
  %v2763 = vpop.f32.mrb[0].mxu0
  %2764 = vmatprep.mubr.f32.mxu0 0.0
  %2765 = vmatmul.mubr.f32.gmra.mrb[0].mxu0 %v2536
  %v2766 = vpop.f32.mrb[0].mxu0
  %v2767 = vadd.f32 0.0, %v2766
  %v2768 = vpop.f32.mrb[0].mxu0
  %2769 = vmatprep.mubr.f32.mxu0 0.0
  %2770 = vmatmul.mubr.f32.gmra.mrb[0].mxu0 %v2539
  %v2771 = vpop.f32.mrb[0].mxu0
  %v2772 = vadd.f32 0.0, %v2771
  %v2773 = vpop.f32.mrb[0].mxu0
  %2774 = vmatprep.mubr.f32.mxu0 0.0
  %2775 = vmatmul.mubr.f32.gmra.mrb[0].mxu0 %v1654
  %v2776 = vpop.f32.mrb[0].mxu0
  %v2777 = vadd.f32 0.0, %v2776
  %v2778 = vpop.f32.mrb[0].mxu0
  %2779 = vmatprep.mubr.f32.mxu0 0.0
  %2780 = vmatmul.mubr.f32.gmra.mrb[0].mxu0 %v1657
  %v2781 = vpop.f32.mrb[0].mxu0
  %v2782 = vadd.f32 0.0, %v2781
  %v2783 = vpop.f32.mrb[0].mxu0
  %2784 = vmatprep.mubr.f32.mxu0 0.0
  %2785 = vmatmul.mubr.f32.gmra.mrb[0].mxu0 %v1660
  %v2786 = vpop.f32.mrb[0].mxu0
  %v2787 = vadd.f32 0.0, %v2786
  %v2788 = vpop.f32.mrb[0].mxu0
  %2789 = vmatprep.mubr.f32.mxu0 0.0
  %2790 = vmatmul.mubr.f32.gmra.mrb[0].mxu0 %v1663
  %v2791 = vpop.f32.mrb[0].mxu0
  %v2792 = vadd.f32 0.0, %v2791
  %v2793 = vpop.f32.mrb[0].mxu0
  %2794 = vmatprep.mubr.f32.mxu0 0.0
  %2795 = vmatmul.mubr.f32.gmra.mrb[0].mxu0 %v1666
  %v2796 = vpop.f32.mrb[0].mxu0
  %v2797 = vadd.f32 0.0, %v2796
  %v2798 = vpop.f32.mrb[0].mxu0
  %2799 = vmatprep.mubr.f32.mxu0 0.0
  %2800 = vmatmul.mubr.f32.gmra.mrb[0].mxu0 %v1669
  %v2801 = vpop.f32.mrb[0].mxu0
  %v2802 = vadd.f32 0.0, %v2801
  %v2803 = vpop.f32.mrb[0].mxu0
  %2804 = vmatprep.mubr.f32.mxu0 0.0
  %2805 = vmatmul.mubr.f32.gmra.mrb[0].mxu0 %v1672
  %v2806 = vpop.f32.mrb[0].mxu0
  %v2807 = vadd.f32 0.0, %v2806
  %v2808 = vpop.f32.mrb[0].mxu0
  %2809 = vmatprep.mubr.f32.mxu0 0.0
  %2810 = vmatmul.mubr.f32.gmra.mrb[0].mxu0 %v1675
  %v2811 = vpop.f32.mrb[0].mxu0
  %v2812 = vadd.f32 0.0, %v2811
  %v2813 = vpop.f32.mrb[0].mxu0
  %2814 = vmatprep.mubr.f32.mxu0 0.0
  %2815 = vmatmul.mubr.f32.gmra.mrb[0].mxu0 %v1678
  %v2816 = vpop.f32.mrb[0].mxu0
  %v2817 = vadd.f32 0.0, %v2816
  %v2818 = vpop.f32.mrb[0].mxu0
  %2819 = vmatprep.mubr.f32.mxu0 0.0
  %2820 = vmatmul.mubr.f32.gmra.mrb[0].mxu0 %v1681
  %v2821 = vpop.f32.mrb[0].mxu0
  %v2822 = vadd.f32 0.0, %v2821
  %v2823 = vpop.f32.mrb[0].mxu0
  %2824 = vmatprep.mubr.f32.mxu0 0.0
  %2825 = vmatmul.mubr.f32.gmra.mrb[0].mxu0 %v1684
  %v2826 = vpop.f32.mrb[0].mxu0
  %v2827 = vadd.f32 0.0, %v2826
  %v2828 = vpop.f32.mrb[0].mxu0
  %2829 = vmatprep.mubr.f32.mxu0 0.0
  %2830 = vmatmul.mubr.f32.gmra.mrb[0].mxu0 %v1687
  %v2831 = vpop.f32.mrb[0].mxu0
  %v2832 = vadd.f32 0.0, %v2831
  %v2833 = vpop.f32.mrb[0].mxu0
  %2834 = vmatprep.mubr.f32.mxu0 0.0
  %2835 = vmatmul.mubr.f32.gmra.mrb[0].mxu0 %v1690
  %v2836 = vpop.f32.mrb[0].mxu0
  %v2837 = vadd.f32 0.0, %v2836
  %v2838 = vpop.f32.mrb[0].mxu0
  %2839 = vmatprep.mubr.f32.mxu0 0.0
  %2840 = vmatmul.mubr.f32.gmra.mrb[0].mxu0 %v1693
  %v2841 = vpop.f32.mrb[0].mxu0
  %v2842 = vadd.f32 0.0, %v2841
  %v2843 = vpop.f32.mrb[0].mxu0
  %2844 = vmatprep.mubr.f32.mxu0 0.0
  %2845 = vmatmul.mubr.f32.gmra.mrb[0].mxu0 %v1696
  %v2846 = vpop.f32.mrb[0].mxu0
  %v2847 = vadd.f32 0.0, %v2846
  %v2848 = vpop.f32.mrb[0].mxu0
  %2849 = vmatprep.mubr.f32.mxu0 0.0
  %2850 = vmatmul.mubr.f32.gmra.mrb[0].mxu0 %v1699
  %v2851 = vpop.f32.mrb[0].mxu0
  %v2852 = vadd.f32 0.0, %v2851
  %v2853 = vpop.f32.mrb[0].mxu0
  %2854 = vmatprep.mubr.f32.mxu0 0.0
  %2855 = vmatmul.mubr.f32.gmra.mrb[0].mxu0 %v1702
  %v2856 = vpop.f32.mrb[0].mxu0
  %v2857 = vadd.f32 0.0, %v2856
  %v2858 = vpop.f32.mrb[0].mxu0
  %2859 = vmatprep.mubr.f32.mxu0 0.0
  %2860 = vmatmul.mubr.f32.gmra.mrb[0].mxu0 %v1705
  %v2861 = vpop.f32.mrb[0].mxu0
  %v2862 = vadd.f32 0.0, %v2861
  %v2863 = vpop.f32.mrb[0].mxu0
  %2864 = vmatprep.mubr.f32.mxu0 0.0
  %2865 = vmatmul.mubr.f32.gmra.mrb[0].mxu0 %v1708
  %v2866 = vpop.f32.mrb[0].mxu0
  %v2867 = vadd.f32 0.0, %v2866
  %v2868 = vpop.f32.mrb[0].mxu0
  %2869 = vmatprep.mubr.f32.mxu0 0.0
  %2870 = vmatmul.mubr.f32.gmra.mrb[0].mxu0 %v1711
  %v2871 = vpop.f32.mrb[0].mxu0
  %v2872 = vadd.f32 0.0, %v2871
  %v2873 = vpop.f32.mrb[0].mxu0
  %2874 = vmatprep.mubr.f32.mxu0 0.0
  %2875 = vmatmul.mubr.f32.gmra.mrb[0].mxu0 %v1714
  %v2876 = vpop.f32.mrb[0].mxu0
  %v2877 = vadd.f32 0.0, %v2876
  %v2878 = vpop.f32.mrb[0].mxu0
  %2879 = vmatprep.mubr.f32.mxu0 0.0
  %2880 = vmatmul.mubr.f32.gmra.mrb[0].mxu0 %v1717
  %v2881 = vpop.f32.mrb[0].mxu0
  %v2882 = vadd.f32 0.0, %v2881
  %v2883 = vpop.f32.mrb[0].mxu0
  %2884 = vmatprep.mubr.f32.mxu0 0.0
  %2885 = vmatmul.mubr.f32.gmra.mrb[0].mxu0 %v1720
  %v2886 = vpop.f32.mrb[0].mxu0
  %v2887 = vadd.f32 0.0, %v2886
  %v2888 = vpop.f32.mrb[0].mxu0
  %2889 = vmatprep.mubr.f32.mxu0 0.0
  %2890 = vmatmul.mubr.f32.gmra.mrb[0].mxu0 %v1723
  %v2891 = vpop.f32.mrb[0].mxu0
  %v2892 = vadd.f32 0.0, %v2891
  %v2893 = vpop.f32.mrb[0].mxu0
  %2894 = vmatprep.mubr.f32.mxu0 0.0
  %2895 = vmatmul.mubr.f32.gmra.mrb[0].mxu0 %v1726
  %v2896 = vpop.f32.mrb[0].mxu0
  %v2897 = vadd.f32 0.0, %v2896
  %v2898 = vpop.f32.mrb[0].mxu0
  %2899 = vmatprep.mubr.f32.mxu0 0.0
  %2900 = vmatmul.mubr.f32.gmra.mrb[0].mxu0 %v1729
  %v2901 = vpop.f32.mrb[0].mxu0
  %v2902 = vadd.f32 0.0, %v2901
  %v2903 = vpop.f32.mrb[0].mxu0
  %2904 = vmatprep.mubr.f32.mxu0 0.0
  %2905 = vmatmul.mubr.f32.gmra.mrb[0].mxu0 %v1732
  %v2906 = vpop.f32.mrb[0].mxu0
  %v2907 = vadd.f32 0.0, %v2906
  %v2908 = vpop.f32.mrb[0].mxu0
  %2909 = vmatprep.mubr.f32.mxu0 0.0
  %2910 = vmatmul.mubr.f32.gmra.mrb[0].mxu0 %v1735
  %v2911 = vpop.f32.mrb[0].mxu0
  %v2912 = vadd.f32 0.0, %v2911
  %v2913 = vpop.f32.mrb[0].mxu0
  %2914 = vmatprep.mubr.f32.mxu0 0.0
  %2915 = vmatmul.mubr.f32.gmra.mrb[0].mxu0 %v1738
  %v2916 = vpop.f32.mrb[0].mxu0
  %v2917 = vadd.f32 0.0, %v2916
  %v2918 = vpop.f32.mrb[0].mxu0
  %2919 = vmatprep.mubr.f32.mxu0 0.0
  %2920 = vmatmul.mubr.f32.gmra.mrb[0].mxu0 %v1741
  %v2921 = vpop.f32.mrb[0].mxu0
  %v2922 = vadd.f32 0.0, %v2921
  %v2923 = vpop.f32.mrb[0].mxu0
  %2924 = vmatprep.mubr.f32.mxu0 0.0
  %2925 = vmatmul.mubr.f32.gmra.mrb[0].mxu0 %v2542
  %v2926 = vpop.f32.mrb[0].mxu0
  %v2927 = vadd.f32 0.0, %v2926
  %v2928 = vpop.f32.mrb[0].mxu0
  %2929 = vmatprep.mubr.f32.mxu0 0.0
  %2930 = vmatmul.mubr.f32.gmra.mrb[0].mxu0 %v2545
  %v2931 = vpop.f32.mrb[0].mxu0
  %v2932 = vadd.f32 0.0, %v2931
  %v2933 = vpop.f32.mrb[0].mxu0
  %2934 = vdwg.mxu0
  %v2935 = vadd.f32 %v2214, %v2617
  %v2936 = vadd.f32 %v2219, %v2622
  %v2937 = vadd.f32 %v2224, %v2627
  %v2938 = vadd.f32 %v2229, %v2632
  %v2939 = vadd.f32 %v2234, %v2637
  %v2940 = vadd.f32 %v2239, %v2642
  %v2941 = vadd.f32 %v2244, %v2647
  %v2942 = vadd.f32 %v2249, %v2652
  %v2943 = vadd.f32 %v2254, %v2657
  %v2944 = vadd.f32 %v2259, %v2662
  %v2945 = vadd.f32 %v2264, %v2667
  %v2946 = vadd.f32 %v2269, %v2672
  %v2947 = vadd.f32 %v2274, %v2677
  %v2948 = vadd.f32 %v2279, %v2682
  %v2949 = vadd.f32 %v2284, %v2687
  %v2950 = vadd.f32 %v2289, %v2692
  %v2951 = vadd.f32 %v2294, %v2697
  %v2952 = vadd.f32 %v2299, %v2702
  %v2953 = vadd.f32 %v2304, %v2707
  %v2954 = vadd.f32 %v2309, %v2712
  %v2955 = vadd.f32 %v2314, %v2717
  %v2956 = vadd.f32 %v2319, %v2722
  %v2957 = vadd.f32 %v2324, %v2727
  %v2958 = vadd.f32 %v2329, %v2732
  %v2959 = vadd.f32 %v2334, %v2737
  %v2960 = vadd.f32 %v2339, %v2742
  %v2961 = vadd.f32 %v2344, %v2747
  %v2962 = vadd.f32 %v2349, %v2752
  %v2963 = vadd.f32 %v2354, %v2757
  %v2964 = vadd.f32 %v2359, %v2762
  %v2965 = vadd.f32 %v2364, %v2767
  %v2966 = vadd.f32 %v2369, %v2772
  %v2967 = vadd.f32 %v2374, %v2777
  %v2968 = vadd.f32 %v2379, %v2782
  %v2969 = vadd.f32 %v2384, %v2787
  %v2970 = vadd.f32 %v2389, %v2792
  %v2971 = vadd.f32 %v2394, %v2797
  %v2972 = vadd.f32 %v2399, %v2802
  %v2973 = vadd.f32 %v2404, %v2807
  %v2974 = vadd.f32 %v2409, %v2812
  %v2975 = vadd.f32 %v2414, %v2817
  %v2976 = vadd.f32 %v2419, %v2822
  %v2977 = vadd.f32 %v2424, %v2827
  %v2978 = vadd.f32 %v2429, %v2832
  %v2979 = vadd.f32 %v2434, %v2837
  %v2980 = vadd.f32 %v2439, %v2842
  %v2981 = vadd.f32 %v2444, %v2847
  %v2982 = vadd.f32 %v2449, %v2852
  %v2983 = vadd.f32 %v2454, %v2857
  %v2984 = vadd.f32 %v2459, %v2862
  %v2985 = vadd.f32 %v2464, %v2867
  %v2986 = vadd.f32 %v2469, %v2872
  %v2987 = vadd.f32 %v2474, %v2877
  %v2988 = vadd.f32 %v2479, %v2882
  %v2989 = vadd.f32 %v2484, %v2887
  %v2990 = vadd.f32 %v2489, %v2892
  %v2991 = vadd.f32 %v2494, %v2897
  %v2992 = vadd.f32 %v2499, %v2902
  %v2993 = vadd.f32 %v2504, %v2907
  %v2994 = vadd.f32 %v2509, %v2912
  %v2995 = vadd.f32 %v2514, %v2917
  %v2996 = vadd.f32 %v2519, %v2922
  %v2997 = vadd.f32 %v2524, %v2927
  %v2998 = vadd.f32 %v2529, %v2932
  %v2999 = vld [vmem:[%s2] sm:$0x1]
  %v3001 = vlaneseq
  %v3002 = vshrl.u32 %v3001, 7
  %v3003 = vsub.s32 0, %v3002
  %v3004 = vrot.slane %v2999, %v3003
  %v3006 = vadd.f32 %v2935, %v3004
  %v3007 = vadd.f32 %v2936, %v3004
  %v3008 = vadd.f32 %v2937, %v3004
  %v3009 = vadd.f32 %v2938, %v3004
  %v3010 = vadd.f32 %v2939, %v3004
  %v3011 = vadd.f32 %v2940, %v3004
  %v3012 = vadd.f32 %v2941, %v3004
  %v3013 = vadd.f32 %v2942, %v3004
  %v3014 = vadd.f32 %v2943, %v3004
  %v3015 = vadd.f32 %v2944, %v3004
  %v3016 = vadd.f32 %v2945, %v3004
  %v3017 = vadd.f32 %v2946, %v3004
  %v3018 = vadd.f32 %v2947, %v3004
  %v3019 = vadd.f32 %v2948, %v3004
  %v3020 = vadd.f32 %v2949, %v3004
  %v3021 = vadd.f32 %v2950, %v3004
  %v3022 = vadd.f32 %v2951, %v3004
  %v3023 = vadd.f32 %v2952, %v3004
  %v3024 = vadd.f32 %v2953, %v3004
  %v3025 = vadd.f32 %v2954, %v3004
  %v3026 = vadd.f32 %v2955, %v3004
  %v3027 = vadd.f32 %v2956, %v3004
  %v3028 = vadd.f32 %v2957, %v3004
  %v3029 = vadd.f32 %v2958, %v3004
  %v3030 = vadd.f32 %v2959, %v3004
  %v3031 = vadd.f32 %v2960, %v3004
  %v3032 = vadd.f32 %v2961, %v3004
  %v3033 = vadd.f32 %v2962, %v3004
  %v3034 = vadd.f32 %v2963, %v3004
  %v3035 = vadd.f32 %v2964, %v3004
  %v3036 = vadd.f32 %v2965, %v3004
  %v3037 = vadd.f32 %v2966, %v3004
  %v3038 = vadd.f32 %v2967, %v3004
  %v3039 = vadd.f32 %v2968, %v3004
  %v3040 = vadd.f32 %v2969, %v3004
  %v3041 = vadd.f32 %v2970, %v3004
  %v3042 = vadd.f32 %v2971, %v3004
  %v3043 = vadd.f32 %v2972, %v3004
  %v3044 = vadd.f32 %v2973, %v3004
  %v3045 = vadd.f32 %v2974, %v3004
  %v3046 = vadd.f32 %v2975, %v3004
  %v3047 = vadd.f32 %v2976, %v3004
  %v3048 = vadd.f32 %v2977, %v3004
  %v3049 = vadd.f32 %v2978, %v3004
  %v3050 = vadd.f32 %v2979, %v3004
  %v3051 = vadd.f32 %v2980, %v3004
  %v3052 = vadd.f32 %v2981, %v3004
  %v3053 = vadd.f32 %v2982, %v3004
  %v3054 = vadd.f32 %v2983, %v3004
  %v3055 = vadd.f32 %v2984, %v3004
  %v3056 = vadd.f32 %v2985, %v3004
  %v3057 = vadd.f32 %v2986, %v3004
  %v3058 = vadd.f32 %v2987, %v3004
  %v3059 = vadd.f32 %v2988, %v3004
  %v3060 = vadd.f32 %v2989, %v3004
  %v3061 = vadd.f32 %v2990, %v3004
  %v3062 = vadd.f32 %v2991, %v3004
  %v3063 = vadd.f32 %v2992, %v3004
  %v3064 = vadd.f32 %v2993, %v3004
  %v3065 = vadd.f32 %v2994, %v3004
  %v3066 = vadd.f32 %v2995, %v3004
  %v3067 = vadd.f32 %v2996, %v3004
  %v3068 = vadd.f32 %v2997, %v3004
  %v3069 = vadd.f32 %v2998, %v3004
  %v3070 = vld [vmem:[%s3] sm:$0x1]
  %vm3071 = vcmp.gt.f32.partialorder %v3006, 0.0
  %vm3072 = vcmp.gt.f32.partialorder %v3007, 0.0
  %vm3073 = vcmp.gt.f32.partialorder %v3008, 0.0
  %vm3074 = vcmp.gt.f32.partialorder %v3009, 0.0
  %vm3075 = vcmp.gt.f32.partialorder %v3010, 0.0
  %vm3076 = vcmp.gt.f32.partialorder %v3011, 0.0
  %vm3077 = vcmp.gt.f32.partialorder %v3012, 0.0
  %vm3078 = vcmp.gt.f32.partialorder %v3013, 0.0
  %vm3079 = vcmp.gt.f32.partialorder %v3014, 0.0
  %vm3080 = vcmp.gt.f32.partialorder %v3015, 0.0
  %vm3081 = vcmp.gt.f32.partialorder %v3016, 0.0
  %vm3082 = vcmp.gt.f32.partialorder %v3017, 0.0
  %vm3083 = vcmp.gt.f32.partialorder %v3018, 0.0
  %vm3084 = vcmp.gt.f32.partialorder %v3019, 0.0
  %vm3085 = vcmp.gt.f32.partialorder %v3020, 0.0
  %vm3086 = vcmp.gt.f32.partialorder %v3021, 0.0
  %vm3087 = vcmp.gt.f32.partialorder %v3022, 0.0
  %vm3088 = vcmp.gt.f32.partialorder %v3023, 0.0
  %vm3089 = vcmp.gt.f32.partialorder %v3024, 0.0
  %vm3090 = vcmp.gt.f32.partialorder %v3025, 0.0
  %vm3091 = vcmp.gt.f32.partialorder %v3026, 0.0
  %vm3092 = vcmp.gt.f32.partialorder %v3027, 0.0
  %vm3093 = vcmp.gt.f32.partialorder %v3028, 0.0
  %vm3094 = vcmp.gt.f32.partialorder %v3029, 0.0
  %vm3095 = vcmp.gt.f32.partialorder %v3030, 0.0
  %vm3096 = vcmp.gt.f32.partialorder %v3031, 0.0
  %vm3097 = vcmp.gt.f32.partialorder %v3032, 0.0
  %vm3098 = vcmp.gt.f32.partialorder %v3033, 0.0
  %vm3099 = vcmp.gt.f32.partialorder %v3034, 0.0
  %vm3100 = vcmp.gt.f32.partialorder %v3035, 0.0
  %vm3101 = vcmp.gt.f32.partialorder %v3036, 0.0
  %vm3102 = vcmp.gt.f32.partialorder %v3037, 0.0
  %vm3103 = vcmp.gt.f32.partialorder %v3038, 0.0
  %vm3104 = vcmp.gt.f32.partialorder %v3039, 0.0
  %vm3105 = vcmp.gt.f32.partialorder %v3040, 0.0
  %vm3106 = vcmp.gt.f32.partialorder %v3041, 0.0
  %vm3107 = vcmp.gt.f32.partialorder %v3042, 0.0
  %vm3108 = vcmp.gt.f32.partialorder %v3043, 0.0
  %vm3109 = vcmp.gt.f32.partialorder %v3044, 0.0
  %vm3110 = vcmp.gt.f32.partialorder %v3045, 0.0
  %vm3111 = vcmp.gt.f32.partialorder %v3046, 0.0
  %vm3112 = vcmp.gt.f32.partialorder %v3047, 0.0
  %vm3113 = vcmp.gt.f32.partialorder %v3048, 0.0
  %vm3114 = vcmp.gt.f32.partialorder %v3049, 0.0
  %vm3115 = vcmp.gt.f32.partialorder %v3050, 0.0
  %vm3116 = vcmp.gt.f32.partialorder %v3051, 0.0
  %vm3117 = vcmp.gt.f32.partialorder %v3052, 0.0
  %vm3118 = vcmp.gt.f32.partialorder %v3053, 0.0
  %vm3119 = vcmp.gt.f32.partialorder %v3054, 0.0
  %vm3120 = vcmp.gt.f32.partialorder %v3055, 0.0
  %vm3121 = vcmp.gt.f32.partialorder %v3056, 0.0
  %vm3122 = vcmp.gt.f32.partialorder %v3057, 0.0
  %vm3123 = vcmp.gt.f32.partialorder %v3058, 0.0
  %vm3124 = vcmp.gt.f32.partialorder %v3059, 0.0
  %vm3125 = vcmp.gt.f32.partialorder %v3060, 0.0
  %vm3126 = vcmp.gt.f32.partialorder %v3061, 0.0
  %vm3127 = vcmp.gt.f32.partialorder %v3062, 0.0
  %vm3128 = vcmp.gt.f32.partialorder %v3063, 0.0
  %vm3129 = vcmp.gt.f32.partialorder %v3064, 0.0
  %vm3130 = vcmp.gt.f32.partialorder %v3065, 0.0
  %vm3131 = vcmp.gt.f32.partialorder %v3066, 0.0
  %vm3132 = vcmp.gt.f32.partialorder %v3067, 0.0
  %vm3133 = vcmp.gt.f32.partialorder %v3068, 0.0
  %vm3134 = vcmp.gt.f32.partialorder %v3069, 0.0
  %v3136 = vlaneseq
  %v3137 = vshrl.u32 %v3136, 7
  %v3138 = vsub.s32 0, %v3137
  %v3139 = vrot.slane %v3070, %v3138
  %v3141 = vmul.f32 %v3006, %v3139
  %v3142 = vmul.f32 %v3007, %v3139
  %v3143 = vmul.f32 %v3008, %v3139
  %v3144 = vmul.f32 %v3009, %v3139
  %v3145 = vmul.f32 %v3010, %v3139
  %v3146 = vmul.f32 %v3011, %v3139
  %v3147 = vmul.f32 %v3012, %v3139
  %v3148 = vmul.f32 %v3013, %v3139
  %v3149 = vmul.f32 %v3014, %v3139
  %v3150 = vmul.f32 %v3015, %v3139
  %v3151 = vmul.f32 %v3016, %v3139
  %v3152 = vmul.f32 %v3017, %v3139
  %v3153 = vmul.f32 %v3018, %v3139
  %v3154 = vmul.f32 %v3019, %v3139
  %v3155 = vmul.f32 %v3020, %v3139
  %v3156 = vmul.f32 %v3021, %v3139
  %v3157 = vmul.f32 %v3022, %v3139
  %v3158 = vmul.f32 %v3023, %v3139
  %v3159 = vmul.f32 %v3024, %v3139
  %v3160 = vmul.f32 %v3025, %v3139
  %v3161 = vmul.f32 %v3026, %v3139
  %v3162 = vmul.f32 %v3027, %v3139
  %v3163 = vmul.f32 %v3028, %v3139
  %v3164 = vmul.f32 %v3029, %v3139
  %v3165 = vmul.f32 %v3030, %v3139
  %v3166 = vmul.f32 %v3031, %v3139
  %v3167 = vmul.f32 %v3032, %v3139
  %v3168 = vmul.f32 %v3033, %v3139
  %v3169 = vmul.f32 %v3034, %v3139
  %v3170 = vmul.f32 %v3035, %v3139
  %v3171 = vmul.f32 %v3036, %v3139
  %v3172 = vmul.f32 %v3037, %v3139
  %v3173 = vmul.f32 %v3038, %v3139
  %v3174 = vmul.f32 %v3039, %v3139
  %v3175 = vmul.f32 %v3040, %v3139
  %v3176 = vmul.f32 %v3041, %v3139
  %v3177 = vmul.f32 %v3042, %v3139
  %v3178 = vmul.f32 %v3043, %v3139
  %v3179 = vmul.f32 %v3044, %v3139
  %v3180 = vmul.f32 %v3045, %v3139
  %v3181 = vmul.f32 %v3046, %v3139
  %v3182 = vmul.f32 %v3047, %v3139
  %v3183 = vmul.f32 %v3048, %v3139
  %v3184 = vmul.f32 %v3049, %v3139
  %v3185 = vmul.f32 %v3050, %v3139
  %v3186 = vmul.f32 %v3051, %v3139
  %v3187 = vmul.f32 %v3052, %v3139
  %v3188 = vmul.f32 %v3053, %v3139
  %v3189 = vmul.f32 %v3054, %v3139
  %v3190 = vmul.f32 %v3055, %v3139
  %v3191 = vmul.f32 %v3056, %v3139
  %v3192 = vmul.f32 %v3057, %v3139
  %v3193 = vmul.f32 %v3058, %v3139
  %v3194 = vmul.f32 %v3059, %v3139
  %v3195 = vmul.f32 %v3060, %v3139
  %v3196 = vmul.f32 %v3061, %v3139
  %v3197 = vmul.f32 %v3062, %v3139
  %v3198 = vmul.f32 %v3063, %v3139
  %v3199 = vmul.f32 %v3064, %v3139
  %v3200 = vmul.f32 %v3065, %v3139
  %v3201 = vmul.f32 %v3066, %v3139
  %v3202 = vmul.f32 %v3067, %v3139
  %v3203 = vmul.f32 %v3068, %v3139
  %v3204 = vmul.f32 %v3069, %v3139
  %v3205 = vsel %vm3071, %v3006, %v3141
  %v3206 = vsel %vm3072, %v3007, %v3142
  %v3207 = vsel %vm3073, %v3008, %v3143
  %v3208 = vsel %vm3074, %v3009, %v3144
  %v3209 = vsel %vm3075, %v3010, %v3145
  %v3210 = vsel %vm3076, %v3011, %v3146
  %v3211 = vsel %vm3077, %v3012, %v3147
  %v3212 = vsel %vm3078, %v3013, %v3148
  %v3213 = vsel %vm3079, %v3014, %v3149
  %v3214 = vsel %vm3080, %v3015, %v3150
  %v3215 = vsel %vm3081, %v3016, %v3151
  %v3216 = vsel %vm3082, %v3017, %v3152
  %v3217 = vsel %vm3083, %v3018, %v3153
  %v3218 = vsel %vm3084, %v3019, %v3154
  %v3219 = vsel %vm3085, %v3020, %v3155
  %v3220 = vsel %vm3086, %v3021, %v3156
  %v3221 = vsel %vm3087, %v3022, %v3157
  %v3222 = vsel %vm3088, %v3023, %v3158
  %v3223 = vsel %vm3089, %v3024, %v3159
  %v3224 = vsel %vm3090, %v3025, %v3160
  %v3225 = vsel %vm3091, %v3026, %v3161
  %v3226 = vsel %vm3092, %v3027, %v3162
  %v3227 = vsel %vm3093, %v3028, %v3163
  %v3228 = vsel %vm3094, %v3029, %v3164
  %v3229 = vsel %vm3095, %v3030, %v3165
  %v3230 = vsel %vm3096, %v3031, %v3166
  %v3231 = vsel %vm3097, %v3032, %v3167
  %v3232 = vsel %vm3098, %v3033, %v3168
  %v3233 = vsel %vm3099, %v3034, %v3169
  %v3234 = vsel %vm3100, %v3035, %v3170
  %v3235 = vsel %vm3101, %v3036, %v3171
  %v3236 = vsel %vm3102, %v3037, %v3172
  %v3237 = vsel %vm3103, %v3038, %v3173
  %v3238 = vsel %vm3104, %v3039, %v3174
  %v3239 = vsel %vm3105, %v3040, %v3175
  %v3240 = vsel %vm3106, %v3041, %v3176
  %v3241 = vsel %vm3107, %v3042, %v3177
  %v3242 = vsel %vm3108, %v3043, %v3178
  %v3243 = vsel %vm3109, %v3044, %v3179
  %v3244 = vsel %vm3110, %v3045, %v3180
  %v3245 = vsel %vm3111, %v3046, %v3181
  %v3246 = vsel %vm3112, %v3047, %v3182
  %v3247 = vsel %vm3113, %v3048, %v3183
  %v3248 = vsel %vm3114, %v3049, %v3184
  %v3249 = vsel %vm3115, %v3050, %v3185
  %v3250 = vsel %vm3116, %v3051, %v3186
  %v3251 = vsel %vm3117, %v3052, %v3187
  %v3252 = vsel %vm3118, %v3053, %v3188
  %v3253 = vsel %vm3119, %v3054, %v3189
  %v3254 = vsel %vm3120, %v3055, %v3190
  %v3255 = vsel %vm3121, %v3056, %v3191
  %v3256 = vsel %vm3122, %v3057, %v3192
  %v3257 = vsel %vm3123, %v3058, %v3193
  %v3258 = vsel %vm3124, %v3059, %v3194
  %v3259 = vsel %vm3125, %v3060, %v3195
  %v3260 = vsel %vm3126, %v3061, %v3196
  %v3261 = vsel %vm3127, %v3062, %v3197
  %v3262 = vsel %vm3128, %v3063, %v3198
  %v3263 = vsel %vm3129, %v3064, %v3199
  %v3264 = vsel %vm3130, %v3065, %v3200
  %v3265 = vsel %vm3131, %v3066, %v3201
  %v3266 = vsel %vm3132, %v3067, %v3202
  %v3267 = vsel %vm3133, %v3068, %v3203
  %v3268 = vsel %vm3134, %v3069, %v3204
  %s3269 = scalar_lea.vmem [#allocation3], 24
  %3270 = vst.msk [vmem:[%s3269 + $0x1] sm:$0xff] %vm151, %v3205
  %3271 = vst.msk [vmem:[%s3269 + $0x9] sm:$0xff] %vm151, %v3206
  %3272 = vst.msk [vmem:[%s3269 + $0x19] sm:$0xff] %vm151, %v3207
  %3273 = vst.msk [vmem:[%s3269 + $0x21] sm:$0xff] %vm151, %v3208
  %3274 = vst.msk [vmem:[%s3269 + $0x31] sm:$0xff] %vm151, %v3209
  %3275 = vst.msk [vmem:[%s3269 + $0x39] sm:$0xff] %vm151, %v3210
  %3276 = vst.msk [vmem:[%s3269 + $0x49] sm:$0xff] %vm151, %v3211
  %3277 = vst.msk [vmem:[%s3269 + $0x51] sm:$0xff] %vm151, %v3212
  %3278 = vst.msk [vmem:[%s3269 + $0x61] sm:$0xff] %vm151, %v3213
  %3279 = vst.msk [vmem:[%s3269 + $0x69] sm:$0xff] %vm151, %v3214
  %3280 = vst.msk [vmem:[%s3269 + $0x79] sm:$0xff] %vm151, %v3215
  %3281 = vst.msk [vmem:[%s3269 + $0x81] sm:$0xff] %vm151, %v3216
  %3282 = vst.msk [vmem:[%s3269 + $0x91] sm:$0xff] %vm151, %v3217
  %3283 = vst.msk [vmem:[%s3269 + $0x99] sm:$0xff] %vm151, %v3218
  %3284 = vst.msk [vmem:[%s3269 + $0xa9] sm:$0xff] %vm151, %v3219
  %3285 = vst.msk [vmem:[%s3269 + $0xb1] sm:$0xff] %vm151, %v3220
  %3286 = vst.msk [vmem:[%s3269 + $0xc1] sm:$0xff] %vm151, %v3221
  %3287 = vst.msk [vmem:[%s3269 + $0xc9] sm:$0xff] %vm151, %v3222
  %3288 = vst.msk [vmem:[%s3269 + $0xd9] sm:$0xff] %vm151, %v3223
  %3289 = vst.msk [vmem:[%s3269 + $0xe1] sm:$0xff] %vm151, %v3224
  %3290 = vst.msk [vmem:[%s3269 + $0xf1] sm:$0xff] %vm151, %v3225
  %3291 = vst.msk [vmem:[%s3269 + $0xf9] sm:$0xff] %vm151, %v3226
  %3292 = vst.msk [vmem:[%s3269 + $0x109] sm:$0xff] %vm151, %v3227
  %3293 = vst.msk [vmem:[%s3269 + $0x111] sm:$0xff] %vm151, %v3228
  %3294 = vst.msk [vmem:[%s3269 + $0x121] sm:$0xff] %vm151, %v3229
  %3295 = vst.msk [vmem:[%s3269 + $0x129] sm:$0xff] %vm151, %v3230
  %3296 = vst.msk [vmem:[%s3269 + $0x139] sm:$0xff] %vm151, %v3231
  %3297 = vst.msk [vmem:[%s3269 + $0x141] sm:$0xff] %vm151, %v3232
  %3298 = vst.msk [vmem:[%s3269 + $0x151] sm:$0xff] %vm151, %v3233
  %3299 = vst.msk [vmem:[%s3269 + $0x159] sm:$0xff] %vm151, %v3234
  %3300 = vst.msk [vmem:[%s3269 + $0x169] sm:$0xff] %vm151, %v3235
  %3301 = vst.msk [vmem:[%s3269 + $0x171] sm:$0xff] %vm151, %v3236
  %3302 = vst.msk [vmem:[%s3269 + $0x1b1] sm:$0xff] %vm151, %v3237
  %3303 = vst.msk [vmem:[%s3269 + $0x1b9] sm:$0xff] %vm151, %v3238
  %3304 = vst.msk [vmem:[%s3269 + $0x1c9] sm:$0xff] %vm151, %v3239
  %3305 = vst.msk [vmem:[%s3269 + $0x1d1] sm:$0xff] %vm151, %v3240
  %3306 = vst.msk [vmem:[%s3269 + $0x1e1] sm:$0xff] %vm151, %v3241
  %3307 = vst.msk [vmem:[%s3269 + $0x1e9] sm:$0xff] %vm151, %v3242
  %3308 = vst.msk [vmem:[%s3269 + $0x1f9] sm:$0xff] %vm151, %v3243
  %3309 = vst.msk [vmem:[%s3269 + $0x201] sm:$0xff] %vm151, %v3244
  %3310 = vst.msk [vmem:[%s3269 + $0x211] sm:$0xff] %vm151, %v3245
  %3311 = vst.msk [vmem:[%s3269 + $0x219] sm:$0xff] %vm151, %v3246
  %3312 = vst.msk [vmem:[%s3269 + $0x229] sm:$0xff] %vm151, %v3247
  %3313 = vst.msk [vmem:[%s3269 + $0x231] sm:$0xff] %vm151, %v3248
  %3314 = vst.msk [vmem:[%s3269 + $0x241] sm:$0xff] %vm151, %v3249
  %3315 = vst.msk [vmem:[%s3269 + $0x249] sm:$0xff] %vm151, %v3250
  %3316 = vst.msk [vmem:[%s3269 + $0x259] sm:$0xff] %vm151, %v3251
  %3317 = vst.msk [vmem:[%s3269 + $0x261] sm:$0xff] %vm151, %v3252
  %3318 = vst.msk [vmem:[%s3269 + $0x271] sm:$0xff] %vm151, %v3253
  %3319 = vst.msk [vmem:[%s3269 + $0x279] sm:$0xff] %vm151, %v3254
  %3320 = vst.msk [vmem:[%s3269 + $0x289] sm:$0xff] %vm151, %v3255
  %3321 = vst.msk [vmem:[%s3269 + $0x291] sm:$0xff] %vm151, %v3256
  %3322 = vst.msk [vmem:[%s3269 + $0x2a1] sm:$0xff] %vm151, %v3257
  %3323 = vst.msk [vmem:[%s3269 + $0x2a9] sm:$0xff] %vm151, %v3258
  %3324 = vst.msk [vmem:[%s3269 + $0x2b9] sm:$0xff] %vm151, %v3259
  %3325 = vst.msk [vmem:[%s3269 + $0x2c1] sm:$0xff] %vm151, %v3260
  %3326 = vst.msk [vmem:[%s3269 + $0x2d1] sm:$0xff] %vm151, %v3261
  %3327 = vst.msk [vmem:[%s3269 + $0x2d9] sm:$0xff] %vm151, %v3262
  %3328 = vst.msk [vmem:[%s3269 + $0x2e9] sm:$0xff] %vm151, %v3263
  %3329 = vst.msk [vmem:[%s3269 + $0x2f1] sm:$0xff] %vm151, %v3264
  %3330 = vst.msk [vmem:[%s3269 + $0x301] sm:$0xff] %vm151, %v3265
  %3331 = vst.msk [vmem:[%s3269 + $0x309] sm:$0xff] %vm151, %v3266
  %3332 = vst.msk [vmem:[%s3269 + $0x319] sm:$0xff] %vm151, %v3267
  %3333 = vst.msk [vmem:[%s3269 + $0x321] sm:$0xff] %vm151, %v3268
  %v3334 = vld [vmem:[#allocation3] sm:$0xff]
  %v3335 = vld [vmem:[#allocation3 + $0x8] sm:$0xff]
  %v3336 = vld [vmem:[#allocation3 + $0x10] sm:$0x3]
  %v3337 = vld [vmem:[#allocation3 + $0x18] sm:$0xff]
  %v3338 = vld [vmem:[#allocation3 + $0x20] sm:$0xff]
  %v3339 = vld [vmem:[#allocation3 + $0x28] sm:$0x3]
  %v3340 = vld [vmem:[#allocation3 + $0x30] sm:$0xff]
  %v3341 = vld [vmem:[#allocation3 + $0x38] sm:$0xff]
  %v3342 = vld [vmem:[#allocation3 + $0x40] sm:$0x3]
  %v3343 = vld [vmem:[#allocation3 + $0x48] sm:$0xff]
  %v3344 = vld [vmem:[#allocation3 + $0x50] sm:$0xff]
  %v3345 = vld [vmem:[#allocation3 + $0x58] sm:$0x3]
  %v3346 = vld [vmem:[#allocation3 + $0x60] sm:$0xff]
  %v3347 = vld [vmem:[#allocation3 + $0x68] sm:$0xff]
  %v3348 = vld [vmem:[#allocation3 + $0x70] sm:$0x3]
  %v3349 = vld [vmem:[#allocation3 + $0x78] sm:$0xff]
  %v3350 = vld [vmem:[#allocation3 + $0x80] sm:$0xff]
  %v3351 = vld [vmem:[#allocation3 + $0x88] sm:$0x3]
  %v3352 = vld [vmem:[#allocation3 + $0x90] sm:$0xff]
  %v3353 = vld [vmem:[#allocation3 + $0x98] sm:$0xff]
  %v3354 = vld [vmem:[#allocation3 + $0xa0] sm:$0x3]
  %v3355 = vld [vmem:[#allocation3 + $0xa8] sm:$0xff]
  %v3356 = vld [vmem:[#allocation3 + $0xb0] sm:$0xff]
  %v3357 = vld [vmem:[#allocation3 + $0xb8] sm:$0x3]
  %v3358 = vld [vmem:[#allocation3 + $0xc0] sm:$0xff]
  %v3359 = vld [vmem:[#allocation3 + $0xc8] sm:$0xff]
  %v3360 = vld [vmem:[#allocation3 + $0xd0] sm:$0x3]
  %v3361 = vld [vmem:[#allocation3 + $0xd8] sm:$0xff]
  %v3362 = vld [vmem:[#allocation3 + $0xe0] sm:$0xff]
  %v3363 = vld [vmem:[#allocation3 + $0xe8] sm:$0x3]
  %v3364 = vld [vmem:[#allocation3 + $0xf0] sm:$0xff]
  %v3365 = vld [vmem:[#allocation3 + $0xf8] sm:$0xff]
  %v3366 = vld [vmem:[#allocation3 + $0x100] sm:$0x3]
  %v3367 = vld [vmem:[#allocation3 + $0x108] sm:$0xff]
  %v3368 = vld [vmem:[#allocation3 + $0x110] sm:$0xff]
  %v3369 = vld [vmem:[#allocation3 + $0x118] sm:$0x3]
  %v3370 = vld [vmem:[#allocation3 + $0x120] sm:$0xff]
  %v3371 = vld [vmem:[#allocation3 + $0x128] sm:$0xff]
  %v3372 = vld [vmem:[#allocation3 + $0x130] sm:$0x3]
  %v3373 = vld [vmem:[#allocation3 + $0x138] sm:$0xff]
  %v3374 = vld [vmem:[#allocation3 + $0x140] sm:$0xff]
  %v3375 = vld [vmem:[#allocation3 + $0x148] sm:$0x3]
  %v3376 = vld [vmem:[#allocation3 + $0x150] sm:$0xff]
  %v3377 = vld [vmem:[#allocation3 + $0x158] sm:$0xff]
  %v3378 = vld [vmem:[#allocation3 + $0x160] sm:$0x3]
  %v3379 = vld [vmem:[#allocation3 + $0x168] sm:$0xff]
  %v3380 = vld [vmem:[#allocation3 + $0x170] sm:$0xff]
  %v3381 = vld [vmem:[#allocation3 + $0x178] sm:$0x3]
  %v3382 = vld [vmem:[#allocation3 + $0x180] sm:$0xff]
  %v3383 = vld [vmem:[#allocation3 + $0x188] sm:$0xff]
  %v3384 = vld [vmem:[#allocation3 + $0x190] sm:$0x3]
  %v3385 = vld [vmem:[#allocation3 + $0x198] sm:$0xff]
  %v3386 = vld [vmem:[#allocation3 + $0x1a0] sm:$0xff]
  %v3387 = vld [vmem:[#allocation3 + $0x1a8] sm:$0x3]
  %v3388 = vld [vmem:[#allocation3 + $0x1b0] sm:$0xff]
  %v3389 = vld [vmem:[#allocation3 + $0x1b8] sm:$0xff]
  %v3390 = vld [vmem:[#allocation3 + $0x1c0] sm:$0x3]
  %v3391 = vld [vmem:[#allocation3 + $0x1c8] sm:$0xff]
  %v3392 = vld [vmem:[#allocation3 + $0x1d0] sm:$0xff]
  %v3393 = vld [vmem:[#allocation3 + $0x1d8] sm:$0x3]
  %v3394 = vld [vmem:[#allocation3 + $0x1e0] sm:$0xff]
  %v3395 = vld [vmem:[#allocation3 + $0x1e8] sm:$0xff]
  %v3396 = vld [vmem:[#allocation3 + $0x1f0] sm:$0x3]
  %v3397 = vld [vmem:[#allocation3 + $0x1f8] sm:$0xff]
  %v3398 = vld [vmem:[#allocation3 + $0x200] sm:$0xff]
  %v3399 = vld [vmem:[#allocation3 + $0x208] sm:$0x3]
  %v3400 = vld [vmem:[#allocation3 + $0x210] sm:$0xff]
  %v3401 = vld [vmem:[#allocation3 + $0x218] sm:$0xff]
  %v3402 = vld [vmem:[#allocation3 + $0x220] sm:$0x3]
  %v3403 = vld [vmem:[#allocation3 + $0x228] sm:$0xff]
  %v3404 = vld [vmem:[#allocation3 + $0x230] sm:$0xff]
  %v3405 = vld [vmem:[#allocation3 + $0x238] sm:$0x3]
  %v3406 = vld [vmem:[#allocation3 + $0x240] sm:$0xff]
  %v3407 = vld [vmem:[#allocation3 + $0x248] sm:$0xff]
  %v3408 = vld [vmem:[#allocation3 + $0x250] sm:$0x3]
  %v3409 = vld [vmem:[#allocation3 + $0x258] sm:$0xff]
  %v3410 = vld [vmem:[#allocation3 + $0x260] sm:$0xff]
  %v3411 = vld [vmem:[#allocation3 + $0x268] sm:$0x3]
  %v3412 = vld [vmem:[#allocation3 + $0x270] sm:$0xff]
  %v3413 = vld [vmem:[#allocation3 + $0x278] sm:$0xff]
  %v3414 = vld [vmem:[#allocation3 + $0x280] sm:$0x3]
  %v3415 = vld [vmem:[#allocation3 + $0x288] sm:$0xff]
  %v3416 = vld [vmem:[#allocation3 + $0x290] sm:$0xff]
  %v3417 = vld [vmem:[#allocation3 + $0x298] sm:$0x3]
  %v3418 = vld [vmem:[#allocation3 + $0x2a0] sm:$0xff]
  %v3419 = vld [vmem:[#allocation3 + $0x2a8] sm:$0xff]
  %v3420 = vld [vmem:[#allocation3 + $0x2b0] sm:$0x3]
  %v3421 = vld [vmem:[#allocation3 + $0x2b8] sm:$0xff]
  %v3422 = vld [vmem:[#allocation3 + $0x2c0] sm:$0xff]
  %v3423 = vld [vmem:[#allocation3 + $0x2c8] sm:$0x3]
  %v3424 = vld [vmem:[#allocation3 + $0x2d0] sm:$0xff]
  %v3425 = vld [vmem:[#allocation3 + $0x2d8] sm:$0xff]
  %v3426 = vld [vmem:[#allocation3 + $0x2e0] sm:$0x3]
  %v3427 = vld [vmem:[#allocation3 + $0x2e8] sm:$0xff]
  %v3428 = vld [vmem:[#allocation3 + $0x2f0] sm:$0xff]
  %v3429 = vld [vmem:[#allocation3 + $0x2f8] sm:$0x3]
  %v3430 = vld [vmem:[#allocation3 + $0x300] sm:$0xff]
  %v3431 = vld [vmem:[#allocation3 + $0x308] sm:$0xff]
  %v3432 = vld [vmem:[#allocation3 + $0x310] sm:$0x3]
  %v3433 = vld [vmem:[#allocation3 + $0x318] sm:$0xff]
  %v3434 = vld [vmem:[#allocation3 + $0x320] sm:$0xff]
  %v3435 = vld [vmem:[#allocation3 + $0x328] sm:$0x3]
  %v3436 = vld [vmem:[#allocation3 + $0x330] sm:$0xff]
  %v3437 = vld [vmem:[#allocation3 + $0x338] sm:$0xff]
  %v3438 = vld [vmem:[#allocation3 + $0x340] sm:$0x3]
  %v3439 = vld [vmem:[#allocation3 + $0x348] sm:$0xff]
  %v3440 = vld [vmem:[#allocation3 + $0x350] sm:$0xff]
  %v3441 = vld [vmem:[#allocation3 + $0x358] sm:$0x3]
  %v3550 = vrot.slane %v3334, 1
  %v3551 = vrot.slane %v3335, 1
  %v3552 = vsel %vm606, %v3550, %v3551
  %v3553 = vrot.slane %v3336, 1
  %v3554 = vsel %vm606, %v3551, %v3553
  %v3555 = vrot.slane %v3337, 1
  %v3556 = vrot.slane %v3338, 1
  %v3557 = vsel %vm606, %v3555, %v3556
  %v3558 = vrot.slane %v3339, 1
  %v3559 = vsel %vm606, %v3556, %v3558
  %v3560 = vrot.slane %v3340, 1
  %v3561 = vrot.slane %v3341, 1
  %v3562 = vsel %vm606, %v3560, %v3561
  %v3563 = vrot.slane %v3342, 1
  %v3564 = vsel %vm606, %v3561, %v3563
  %v3565 = vrot.slane %v3343, 1
  %v3566 = vrot.slane %v3344, 1
  %v3567 = vsel %vm606, %v3565, %v3566
  %v3568 = vrot.slane %v3345, 1
  %v3569 = vsel %vm606, %v3566, %v3568
  %v3570 = vrot.slane %v3346, 1
  %v3571 = vrot.slane %v3347, 1
  %v3572 = vsel %vm606, %v3570, %v3571
  %v3573 = vrot.slane %v3348, 1
  %v3574 = vsel %vm606, %v3571, %v3573
  %v3575 = vrot.slane %v3349, 1
  %v3576 = vrot.slane %v3350, 1
  %v3577 = vsel %vm606, %v3575, %v3576
  %v3578 = vrot.slane %v3351, 1
  %v3579 = vsel %vm606, %v3576, %v3578
  %v3580 = vrot.slane %v3352, 1
  %v3581 = vrot.slane %v3353, 1
  %v3582 = vsel %vm606, %v3580, %v3581
  %v3583 = vrot.slane %v3354, 1
  %v3584 = vsel %vm606, %v3581, %v3583
  %v3585 = vrot.slane %v3355, 1
  %v3586 = vrot.slane %v3356, 1
  %v3587 = vsel %vm606, %v3585, %v3586
  %v3588 = vrot.slane %v3357, 1
  %v3589 = vsel %vm606, %v3586, %v3588
  %v3590 = vrot.slane %v3358, 1
  %v3591 = vrot.slane %v3359, 1
  %v3592 = vsel %vm606, %v3590, %v3591
  %v3593 = vrot.slane %v3360, 1
  %v3594 = vsel %vm606, %v3591, %v3593
  %v3595 = vrot.slane %v3361, 1
  %v3596 = vrot.slane %v3362, 1
  %v3597 = vsel %vm606, %v3595, %v3596
  %v3598 = vrot.slane %v3363, 1
  %v3599 = vsel %vm606, %v3596, %v3598
  %v3600 = vrot.slane %v3364, 1
  %v3601 = vrot.slane %v3365, 1
  %v3602 = vsel %vm606, %v3600, %v3601
  %v3603 = vrot.slane %v3366, 1
  %v3604 = vsel %vm606, %v3601, %v3603
  %v3605 = vrot.slane %v3367, 1
  %v3606 = vrot.slane %v3368, 1
  %v3607 = vsel %vm606, %v3605, %v3606
  %v3608 = vrot.slane %v3369, 1
  %v3609 = vsel %vm606, %v3606, %v3608
  %v3610 = vrot.slane %v3370, 1
  %v3611 = vrot.slane %v3371, 1
  %v3612 = vsel %vm606, %v3610, %v3611
  %v3613 = vrot.slane %v3372, 1
  %v3614 = vsel %vm606, %v3611, %v3613
  %v3615 = vrot.slane %v3373, 1
  %v3616 = vrot.slane %v3374, 1
  %v3617 = vsel %vm606, %v3615, %v3616
  %v3618 = vrot.slane %v3375, 1
  %v3619 = vsel %vm606, %v3616, %v3618
  %v3620 = vrot.slane %v3376, 1
  %v3621 = vrot.slane %v3377, 1
  %v3622 = vsel %vm606, %v3620, %v3621
  %v3623 = vrot.slane %v3378, 1
  %v3624 = vsel %vm606, %v3621, %v3623
  %v3625 = vrot.slane %v3379, 1
  %v3626 = vrot.slane %v3380, 1
  %v3627 = vsel %vm606, %v3625, %v3626
  %v3628 = vrot.slane %v3381, 1
  %v3629 = vsel %vm606, %v3626, %v3628
  %v3630 = vrot.slane %v3382, 1
  %v3631 = vrot.slane %v3383, 1
  %v3632 = vsel %vm606, %v3630, %v3631
  %v3633 = vrot.slane %v3384, 1
  %v3634 = vsel %vm606, %v3631, %v3633
  %v3635 = vrot.slane %v3385, 1
  %v3636 = vrot.slane %v3386, 1
  %v3637 = vsel %vm606, %v3635, %v3636
  %v3638 = vrot.slane %v3387, 1
  %v3639 = vsel %vm606, %v3636, %v3638
  %v3640 = vrot.slane %v3388, 1
  %v3641 = vrot.slane %v3389, 1
  %v3642 = vsel %vm606, %v3640, %v3641
  %v3643 = vrot.slane %v3390, 1
  %v3644 = vsel %vm606, %v3641, %v3643
  %v3645 = vrot.slane %v3391, 1
  %v3646 = vrot.slane %v3392, 1
  %v3647 = vsel %vm606, %v3645, %v3646
  %v3648 = vrot.slane %v3393, 1
  %v3649 = vsel %vm606, %v3646, %v3648
  %v3650 = vrot.slane %v3394, 1
  %v3651 = vrot.slane %v3395, 1
  %v3652 = vsel %vm606, %v3650, %v3651
  %v3653 = vrot.slane %v3396, 1
  %v3654 = vsel %vm606, %v3651, %v3653
  %v3655 = vrot.slane %v3397, 1
  %v3656 = vrot.slane %v3398, 1
  %v3657 = vsel %vm606, %v3655, %v3656
  %v3658 = vrot.slane %v3399, 1
  %v3659 = vsel %vm606, %v3656, %v3658
  %v3660 = vrot.slane %v3400, 1
  %v3661 = vrot.slane %v3401, 1
  %v3662 = vsel %vm606, %v3660, %v3661
  %v3663 = vrot.slane %v3402, 1
  %v3664 = vsel %vm606, %v3661, %v3663
  %v3665 = vrot.slane %v3403, 1
  %v3666 = vrot.slane %v3404, 1
  %v3667 = vsel %vm606, %v3665, %v3666
  %v3668 = vrot.slane %v3405, 1
  %v3669 = vsel %vm606, %v3666, %v3668
  %v3670 = vrot.slane %v3406, 1
  %v3671 = vrot.slane %v3407, 1
  %v3672 = vsel %vm606, %v3670, %v3671
  %v3673 = vrot.slane %v3408, 1
  %v3674 = vsel %vm606, %v3671, %v3673
  %v3675 = vrot.slane %v3409, 1
  %v3676 = vrot.slane %v3410, 1
  %v3677 = vsel %vm606, %v3675, %v3676
  %v3678 = vrot.slane %v3411, 1
  %v3679 = vsel %vm606, %v3676, %v3678
  %v3680 = vrot.slane %v3412, 1
  %v3681 = vrot.slane %v3413, 1
  %v3682 = vsel %vm606, %v3680, %v3681
  %v3683 = vrot.slane %v3414, 1
  %v3684 = vsel %vm606, %v3681, %v3683
  %v3685 = vrot.slane %v3415, 1
  %v3686 = vrot.slane %v3416, 1
  %v3687 = vsel %vm606, %v3685, %v3686
  %v3688 = vrot.slane %v3417, 1
  %v3689 = vsel %vm606, %v3686, %v3688
  %v3690 = vrot.slane %v3418, 1
  %v3691 = vrot.slane %v3419, 1
  %v3692 = vsel %vm606, %v3690, %v3691
  %v3693 = vrot.slane %v3420, 1
  %v3694 = vsel %vm606, %v3691, %v3693
  %v3695 = vrot.slane %v3421, 1
  %v3696 = vrot.slane %v3422, 1
  %v3697 = vsel %vm606, %v3695, %v3696
  %v3698 = vrot.slane %v3423, 1
  %v3699 = vsel %vm606, %v3696, %v3698
  %v3700 = vrot.slane %v3424, 1
  %v3701 = vrot.slane %v3425, 1
  %v3702 = vsel %vm606, %v3700, %v3701
  %v3703 = vrot.slane %v3426, 1
  %v3704 = vsel %vm606, %v3701, %v3703
  %v3705 = vrot.slane %v3427, 1
  %v3706 = vrot.slane %v3428, 1
  %v3707 = vsel %vm606, %v3705, %v3706
  %v3708 = vrot.slane %v3429, 1
  %v3709 = vsel %vm606, %v3706, %v3708
  %v3710 = vrot.slane %v3430, 1
  %v3711 = vrot.slane %v3431, 1
  %v3712 = vsel %vm606, %v3710, %v3711
  %v3713 = vrot.slane %v3432, 1
  %v3714 = vsel %vm606, %v3711, %v3713
  %v3715 = vrot.slane %v3433, 1
  %v3716 = vrot.slane %v3434, 1
  %v3717 = vsel %vm606, %v3715, %v3716
  %v3718 = vrot.slane %v3435, 1
  %v3719 = vsel %vm606, %v3716, %v3718
  %v3720 = vrot.slane %v3436, 1
  %v3721 = vrot.slane %v3437, 1
  %v3722 = vsel %vm606, %v3720, %v3721
  %v3723 = vrot.slane %v3438, 1
  %v3724 = vsel %vm606, %v3721, %v3723
  %v3725 = vrot.slane %v3439, 1
  %v3726 = vrot.slane %v3440, 1
  %v3727 = vsel %vm606, %v3725, %v3726
  %v3728 = vrot.slane %v3441, 1
  %v3729 = vsel %vm606, %v3726, %v3728
  %3730 = vrot.lane.b32.xlu0 %v3552, 64
  %v3731 = vpop.permute.xlu0 %3730
  %3732 = vrot.lane.b32.xlu0 %v3554, 64
  %v3733 = vpop.permute.xlu0 %3732
  %3734 = vrot.lane.b32.xlu0 %v3557, 64
  %v3735 = vpop.permute.xlu0 %3734
  %3736 = vrot.lane.b32.xlu0 %v3559, 64
  %v3737 = vpop.permute.xlu0 %3736
  %3738 = vrot.lane.b32.xlu0 %v3562, 64
  %v3739 = vpop.permute.xlu0 %3738
  %3740 = vrot.lane.b32.xlu0 %v3564, 64
  %v3741 = vpop.permute.xlu0 %3740
  %3742 = vrot.lane.b32.xlu0 %v3567, 64
  %v3743 = vpop.permute.xlu0 %3742
  %3744 = vrot.lane.b32.xlu0 %v3569, 64
  %v3745 = vpop.permute.xlu0 %3744
  %3746 = vrot.lane.b32.xlu0 %v3572, 64
  %v3747 = vpop.permute.xlu0 %3746
  %3748 = vrot.lane.b32.xlu0 %v3574, 64
  %v3749 = vpop.permute.xlu0 %3748
  %3750 = vrot.lane.b32.xlu0 %v3577, 64
  %v3751 = vpop.permute.xlu0 %3750
  %3752 = vrot.lane.b32.xlu0 %v3579, 64
  %v3753 = vpop.permute.xlu0 %3752
  %3754 = vrot.lane.b32.xlu0 %v3582, 64
  %v3755 = vpop.permute.xlu0 %3754
  %3756 = vrot.lane.b32.xlu0 %v3584, 64
  %v3757 = vpop.permute.xlu0 %3756
  %3758 = vrot.lane.b32.xlu0 %v3587, 64
  %v3759 = vpop.permute.xlu0 %3758
  %3760 = vrot.lane.b32.xlu0 %v3589, 64
  %v3761 = vpop.permute.xlu0 %3760
  %3762 = vrot.lane.b32.xlu0 %v3592, 64
  %v3763 = vpop.permute.xlu0 %3762
  %3764 = vrot.lane.b32.xlu0 %v3594, 64
  %v3765 = vpop.permute.xlu0 %3764
  %3766 = vrot.lane.b32.xlu0 %v3597, 64
  %v3767 = vpop.permute.xlu0 %3766
  %3768 = vrot.lane.b32.xlu0 %v3599, 64
  %v3769 = vpop.permute.xlu0 %3768
  %3770 = vrot.lane.b32.xlu0 %v3602, 64
  %v3771 = vpop.permute.xlu0 %3770
  %3772 = vrot.lane.b32.xlu0 %v3604, 64
  %v3773 = vpop.permute.xlu0 %3772
  %3774 = vrot.lane.b32.xlu0 %v3607, 64
  %v3775 = vpop.permute.xlu0 %3774
  %3776 = vrot.lane.b32.xlu0 %v3609, 64
  %v3777 = vpop.permute.xlu0 %3776
  %3778 = vrot.lane.b32.xlu0 %v3612, 64
  %v3779 = vpop.permute.xlu0 %3778
  %3780 = vrot.lane.b32.xlu0 %v3614, 64
  %v3781 = vpop.permute.xlu0 %3780
  %3782 = vrot.lane.b32.xlu0 %v3617, 64
  %v3783 = vpop.permute.xlu0 %3782
  %3784 = vrot.lane.b32.xlu0 %v3619, 64
  %v3785 = vpop.permute.xlu0 %3784
  %3786 = vrot.lane.b32.xlu0 %v3622, 64
  %v3787 = vpop.permute.xlu0 %3786
  %3788 = vrot.lane.b32.xlu0 %v3624, 64
  %v3789 = vpop.permute.xlu0 %3788
  %3790 = vrot.lane.b32.xlu0 %v3627, 64
  %v3791 = vpop.permute.xlu0 %3790
  %3792 = vrot.lane.b32.xlu0 %v3629, 64
  %v3793 = vpop.permute.xlu0 %3792
  %3794 = vrot.lane.b32.xlu0 %v3632, 64
  %v3795 = vpop.permute.xlu0 %3794
  %3796 = vrot.lane.b32.xlu0 %v3634, 64
  %v3797 = vpop.permute.xlu0 %3796
  %3798 = vrot.lane.b32.xlu0 %v3637, 64
  %v3799 = vpop.permute.xlu0 %3798
  %3800 = vrot.lane.b32.xlu0 %v3639, 64
  %v3801 = vpop.permute.xlu0 %3800
  %3802 = vrot.lane.b32.xlu0 %v3642, 64
  %v3803 = vpop.permute.xlu0 %3802
  %3804 = vrot.lane.b32.xlu0 %v3644, 64
  %v3805 = vpop.permute.xlu0 %3804
  %3806 = vrot.lane.b32.xlu0 %v3647, 64
  %v3807 = vpop.permute.xlu0 %3806
  %3808 = vrot.lane.b32.xlu0 %v3649, 64
  %v3809 = vpop.permute.xlu0 %3808
  %3810 = vrot.lane.b32.xlu0 %v3652, 64
  %v3811 = vpop.permute.xlu0 %3810
  %3812 = vrot.lane.b32.xlu0 %v3654, 64
  %v3813 = vpop.permute.xlu0 %3812
  %3814 = vrot.lane.b32.xlu0 %v3657, 64
  %v3815 = vpop.permute.xlu0 %3814
  %3816 = vrot.lane.b32.xlu0 %v3659, 64
  %v3817 = vpop.permute.xlu0 %3816
  %3818 = vrot.lane.b32.xlu0 %v3662, 64
  %v3819 = vpop.permute.xlu0 %3818
  %3820 = vrot.lane.b32.xlu0 %v3664, 64
  %v3821 = vpop.permute.xlu0 %3820
  %3822 = vrot.lane.b32.xlu0 %v3667, 64
  %v3823 = vpop.permute.xlu0 %3822
  %3824 = vrot.lane.b32.xlu0 %v3669, 64
  %v3825 = vpop.permute.xlu0 %3824
  %3826 = vrot.lane.b32.xlu0 %v3672, 64
  %v3827 = vpop.permute.xlu0 %3826
  %3828 = vrot.lane.b32.xlu0 %v3674, 64
  %v3829 = vpop.permute.xlu0 %3828
  %3830 = vrot.lane.b32.xlu0 %v3677, 64
  %v3831 = vpop.permute.xlu0 %3830
  %3832 = vrot.lane.b32.xlu0 %v3679, 64
  %v3833 = vpop.permute.xlu0 %3832
  %3834 = vrot.lane.b32.xlu0 %v3682, 64
  %v3835 = vpop.permute.xlu0 %3834
  %3836 = vrot.lane.b32.xlu0 %v3684, 64
  %v3837 = vpop.permute.xlu0 %3836
  %3838 = vrot.lane.b32.xlu0 %v3687, 64
  %v3839 = vpop.permute.xlu0 %3838
  %3840 = vrot.lane.b32.xlu0 %v3689, 64
  %v3841 = vpop.permute.xlu0 %3840
  %3842 = vrot.lane.b32.xlu0 %v3692, 64
  %v3843 = vpop.permute.xlu0 %3842
  %3844 = vrot.lane.b32.xlu0 %v3694, 64
  %v3845 = vpop.permute.xlu0 %3844
  %3846 = vrot.lane.b32.xlu0 %v3697, 64
  %v3847 = vpop.permute.xlu0 %3846
  %3848 = vrot.lane.b32.xlu0 %v3699, 64
  %v3849 = vpop.permute.xlu0 %3848
  %3850 = vrot.lane.b32.xlu0 %v3702, 64
  %v3851 = vpop.permute.xlu0 %3850
  %3852 = vrot.lane.b32.xlu0 %v3704, 64
  %v3853 = vpop.permute.xlu0 %3852
  %3854 = vrot.lane.b32.xlu0 %v3707, 64
  %v3855 = vpop.permute.xlu0 %3854
  %3856 = vrot.lane.b32.xlu0 %v3709, 64
  %v3857 = vpop.permute.xlu0 %3856
  %3858 = vrot.lane.b32.xlu0 %v3712, 64
  %v3859 = vpop.permute.xlu0 %3858
  %3860 = vrot.lane.b32.xlu0 %v3714, 64
  %v3861 = vpop.permute.xlu0 %3860
  %3862 = vrot.lane.b32.xlu0 %v3717, 64
  %v3863 = vpop.permute.xlu0 %3862
  %3864 = vrot.lane.b32.xlu0 %v3719, 64
  %v3865 = vpop.permute.xlu0 %3864
  %3866 = vrot.lane.b32.xlu0 %v3722, 64
  %v3867 = vpop.permute.xlu0 %3866
  %3868 = vrot.lane.b32.xlu0 %v3724, 64
  %v3869 = vpop.permute.xlu0 %3868
  %3870 = vrot.lane.b32.xlu0 %v3727, 64
  %v3871 = vpop.permute.xlu0 %3870
  %3872 = vrot.lane.b32.xlu0 %v3729, 64
  %v3873 = vpop.permute.xlu0 %3872
  %v3946 = vrot.slane %v3334, 2
  %v3947 = vrot.slane %v3335, 2
  %v3948 = vsel %vm1003, %v3946, %v3947
  %v3949 = vrot.slane %v3336, 2
  %v3950 = vsel %vm1003, %v3947, %v3949
  %v3951 = vrot.slane %v3337, 2
  %v3952 = vrot.slane %v3338, 2
  %v3953 = vsel %vm1003, %v3951, %v3952
  %v3954 = vrot.slane %v3339, 2
  %v3955 = vsel %vm1003, %v3952, %v3954
  %v3956 = vrot.slane %v3340, 2
  %v3957 = vrot.slane %v3341, 2
  %v3958 = vsel %vm1003, %v3956, %v3957
  %v3959 = vrot.slane %v3342, 2
  %v3960 = vsel %vm1003, %v3957, %v3959
  %v3961 = vrot.slane %v3343, 2
  %v3962 = vrot.slane %v3344, 2
  %v3963 = vsel %vm1003, %v3961, %v3962
  %v3964 = vrot.slane %v3345, 2
  %v3965 = vsel %vm1003, %v3962, %v3964
  %v3966 = vrot.slane %v3346, 2
  %v3967 = vrot.slane %v3347, 2
  %v3968 = vsel %vm1003, %v3966, %v3967
  %v3969 = vrot.slane %v3348, 2
  %v3970 = vsel %vm1003, %v3967, %v3969
  %v3971 = vrot.slane %v3349, 2
  %v3972 = vrot.slane %v3350, 2
  %v3973 = vsel %vm1003, %v3971, %v3972
  %v3974 = vrot.slane %v3351, 2
  %v3975 = vsel %vm1003, %v3972, %v3974
  %v3976 = vrot.slane %v3352, 2
  %v3977 = vrot.slane %v3353, 2
  %v3978 = vsel %vm1003, %v3976, %v3977
  %v3979 = vrot.slane %v3354, 2
  %v3980 = vsel %vm1003, %v3977, %v3979
  %v3981 = vrot.slane %v3355, 2
  %v3982 = vrot.slane %v3356, 2
  %v3983 = vsel %vm1003, %v3981, %v3982
  %v3984 = vrot.slane %v3357, 2
  %v3985 = vsel %vm1003, %v3982, %v3984
  %v3986 = vrot.slane %v3358, 2
  %v3987 = vrot.slane %v3359, 2
  %v3988 = vsel %vm1003, %v3986, %v3987
  %v3989 = vrot.slane %v3360, 2
  %v3990 = vsel %vm1003, %v3987, %v3989
  %v3991 = vrot.slane %v3361, 2
  %v3992 = vrot.slane %v3362, 2
  %v3993 = vsel %vm1003, %v3991, %v3992
  %v3994 = vrot.slane %v3363, 2
  %v3995 = vsel %vm1003, %v3992, %v3994
  %v3996 = vrot.slane %v3364, 2
  %v3997 = vrot.slane %v3365, 2
  %v3998 = vsel %vm1003, %v3996, %v3997
  %v3999 = vrot.slane %v3366, 2
  %v4000 = vsel %vm1003, %v3997, %v3999
  %v4001 = vrot.slane %v3367, 2
  %v4002 = vrot.slane %v3368, 2
  %v4003 = vsel %vm1003, %v4001, %v4002
  %v4004 = vrot.slane %v3369, 2
  %v4005 = vsel %vm1003, %v4002, %v4004
  %v4006 = vrot.slane %v3370, 2
  %v4007 = vrot.slane %v3371, 2
  %v4008 = vsel %vm1003, %v4006, %v4007
  %v4009 = vrot.slane %v3372, 2
  %v4010 = vsel %vm1003, %v4007, %v4009
  %v4011 = vrot.slane %v3373, 2
  %v4012 = vrot.slane %v3374, 2
  %v4013 = vsel %vm1003, %v4011, %v4012
  %v4014 = vrot.slane %v3375, 2
  %v4015 = vsel %vm1003, %v4012, %v4014
  %v4016 = vrot.slane %v3376, 2
  %v4017 = vrot.slane %v3377, 2
  %v4018 = vsel %vm1003, %v4016, %v4017
  %v4019 = vrot.slane %v3378, 2
  %v4020 = vsel %vm1003, %v4017, %v4019
  %v4021 = vrot.slane %v3379, 2
  %v4022 = vrot.slane %v3380, 2
  %v4023 = vsel %vm1003, %v4021, %v4022
  %v4024 = vrot.slane %v3381, 2
  %v4025 = vsel %vm1003, %v4022, %v4024
  %v4026 = vrot.slane %v3382, 2
  %v4027 = vrot.slane %v3383, 2
  %v4028 = vsel %vm1003, %v4026, %v4027
  %v4029 = vrot.slane %v3384, 2
  %v4030 = vsel %vm1003, %v4027, %v4029
  %v4031 = vrot.slane %v3385, 2
  %v4032 = vrot.slane %v3386, 2
  %v4033 = vsel %vm1003, %v4031, %v4032
  %v4034 = vrot.slane %v3387, 2
  %v4035 = vsel %vm1003, %v4032, %v4034
  %v4036 = vrot.slane %v3388, 2
  %v4037 = vrot.slane %v3389, 2
  %v4038 = vsel %vm1003, %v4036, %v4037
  %v4039 = vrot.slane %v3390, 2
  %v4040 = vsel %vm1003, %v4037, %v4039
  %v4041 = vrot.slane %v3391, 2
  %v4042 = vrot.slane %v3392, 2
  %v4043 = vsel %vm1003, %v4041, %v4042
  %v4044 = vrot.slane %v3393, 2
  %v4045 = vsel %vm1003, %v4042, %v4044
  %v4046 = vrot.slane %v3394, 2
  %v4047 = vrot.slane %v3395, 2
  %v4048 = vsel %vm1003, %v4046, %v4047
  %v4049 = vrot.slane %v3396, 2
  %v4050 = vsel %vm1003, %v4047, %v4049
  %v4051 = vrot.slane %v3397, 2
  %v4052 = vrot.slane %v3398, 2
  %v4053 = vsel %vm1003, %v4051, %v4052
  %v4054 = vrot.slane %v3399, 2
  %v4055 = vsel %vm1003, %v4052, %v4054
  %v4056 = vrot.slane %v3400, 2
  %v4057 = vrot.slane %v3401, 2
  %v4058 = vsel %vm1003, %v4056, %v4057
  %v4059 = vrot.slane %v3402, 2
  %v4060 = vsel %vm1003, %v4057, %v4059
  %v4061 = vrot.slane %v3403, 2
  %v4062 = vrot.slane %v3404, 2
  %v4063 = vsel %vm1003, %v4061, %v4062
  %v4064 = vrot.slane %v3405, 2
  %v4065 = vsel %vm1003, %v4062, %v4064
  %v4066 = vrot.slane %v3406, 2
  %v4067 = vrot.slane %v3407, 2
  %v4068 = vsel %vm1003, %v4066, %v4067
  %v4069 = vrot.slane %v3408, 2
  %v4070 = vsel %vm1003, %v4067, %v4069
  %v4071 = vrot.slane %v3409, 2
  %v4072 = vrot.slane %v3410, 2
  %v4073 = vsel %vm1003, %v4071, %v4072
  %v4074 = vrot.slane %v3411, 2
  %v4075 = vsel %vm1003, %v4072, %v4074
  %v4076 = vrot.slane %v3412, 2
  %v4077 = vrot.slane %v3413, 2
  %v4078 = vsel %vm1003, %v4076, %v4077
  %v4079 = vrot.slane %v3414, 2
  %v4080 = vsel %vm1003, %v4077, %v4079
  %v4081 = vrot.slane %v3415, 2
  %v4082 = vrot.slane %v3416, 2
  %v4083 = vsel %vm1003, %v4081, %v4082
  %v4084 = vrot.slane %v3417, 2
  %v4085 = vsel %vm1003, %v4082, %v4084
  %v4086 = vrot.slane %v3418, 2
  %v4087 = vrot.slane %v3419, 2
  %v4088 = vsel %vm1003, %v4086, %v4087
  %v4089 = vrot.slane %v3420, 2
  %v4090 = vsel %vm1003, %v4087, %v4089
  %v4091 = vrot.slane %v3421, 2
  %v4092 = vrot.slane %v3422, 2
  %v4093 = vsel %vm1003, %v4091, %v4092
  %v4094 = vrot.slane %v3423, 2
  %v4095 = vsel %vm1003, %v4092, %v4094
  %v4096 = vrot.slane %v3424, 2
  %v4097 = vrot.slane %v3425, 2
  %v4098 = vsel %vm1003, %v4096, %v4097
  %v4099 = vrot.slane %v3426, 2
  %v4100 = vsel %vm1003, %v4097, %v4099
  %v4101 = vrot.slane %v3427, 2
  %v4102 = vrot.slane %v3428, 2
  %v4103 = vsel %vm1003, %v4101, %v4102
  %v4104 = vrot.slane %v3429, 2
  %v4105 = vsel %vm1003, %v4102, %v4104
  %v4106 = vrot.slane %v3430, 2
  %v4107 = vrot.slane %v3431, 2
  %v4108 = vsel %vm1003, %v4106, %v4107
  %v4109 = vrot.slane %v3432, 2
  %v4110 = vsel %vm1003, %v4107, %v4109
  %v4111 = vrot.slane %v3433, 2
  %v4112 = vrot.slane %v3434, 2
  %v4113 = vsel %vm1003, %v4111, %v4112
  %v4114 = vrot.slane %v3435, 2
  %v4115 = vsel %vm1003, %v4112, %v4114
  %v4116 = vrot.slane %v3436, 2
  %v4117 = vrot.slane %v3437, 2
  %v4118 = vsel %vm1003, %v4116, %v4117
  %v4119 = vrot.slane %v3438, 2
  %v4120 = vsel %vm1003, %v4117, %v4119
  %v4121 = vrot.slane %v3439, 2
  %v4122 = vrot.slane %v3440, 2
  %v4123 = vsel %vm1003, %v4121, %v4122
  %v4124 = vrot.slane %v3441, 2
  %v4125 = vsel %vm1003, %v4122, %v4124
  %v4126 = vsel %vm151, %v3334, %v3731
  %v4127 = vsel %vm151, %v3335, %v3733
  %v4128 = vsel %vm151, %v3337, %v3735
  %v4129 = vsel %vm151, %v3338, %v3737
  %v4130 = vsel %vm151, %v3340, %v3739
  %v4131 = vsel %vm151, %v3341, %v3741
  %v4132 = vsel %vm151, %v3343, %v3743
  %v4133 = vsel %vm151, %v3344, %v3745
  %v4134 = vsel %vm151, %v3346, %v3747
  %v4135 = vsel %vm151, %v3347, %v3749
  %v4136 = vsel %vm151, %v3349, %v3751
  %v4137 = vsel %vm151, %v3350, %v3753
  %v4138 = vsel %vm151, %v3352, %v3755
  %v4139 = vsel %vm151, %v3353, %v3757
  %v4140 = vsel %vm151, %v3355, %v3759
  %v4141 = vsel %vm151, %v3356, %v3761
  %v4142 = vsel %vm151, %v3358, %v3763
  %v4143 = vsel %vm151, %v3359, %v3765
  %v4144 = vsel %vm151, %v3361, %v3767
  %v4145 = vsel %vm151, %v3362, %v3769
  %v4146 = vsel %vm151, %v3364, %v3771
  %v4147 = vsel %vm151, %v3365, %v3773
  %v4148 = vsel %vm151, %v3367, %v3775
  %v4149 = vsel %vm151, %v3368, %v3777
  %v4150 = vsel %vm151, %v3370, %v3779
  %v4151 = vsel %vm151, %v3371, %v3781
  %v4152 = vsel %vm151, %v3373, %v3783
  %v4153 = vsel %vm151, %v3374, %v3785
  %v4154 = vsel %vm151, %v3376, %v3787
  %v4155 = vsel %vm151, %v3377, %v3789
  %v4156 = vsel %vm151, %v3379, %v3791
  %v4157 = vsel %vm151, %v3380, %v3793
  %v4158 = vsel %vm151, %v3382, %v3795
  %v4159 = vsel %vm151, %v3383, %v3797
  %v4160 = vsel %vm151, %v3385, %v3799
  %v4161 = vsel %vm151, %v3386, %v3801
  %v4162 = vsel %vm151, %v3388, %v3803
  %v4163 = vsel %vm151, %v3389, %v3805
  %v4164 = vsel %vm151, %v3391, %v3807
  %v4165 = vsel %vm151, %v3392, %v3809
  %v4166 = vsel %vm151, %v3394, %v3811
  %v4167 = vsel %vm151, %v3395, %v3813
  %v4168 = vsel %vm151, %v3397, %v3815
  %v4169 = vsel %vm151, %v3398, %v3817
  %v4170 = vsel %vm151, %v3400, %v3819
  %v4171 = vsel %vm151, %v3401, %v3821
  %v4172 = vsel %vm151, %v3403, %v3823
  %v4173 = vsel %vm151, %v3404, %v3825
  %v4174 = vsel %vm151, %v3406, %v3827
  %v4175 = vsel %vm151, %v3407, %v3829
  %v4176 = vsel %vm151, %v3409, %v3831
  %v4177 = vsel %vm151, %v3410, %v3833
  %v4178 = vsel %vm151, %v3412, %v3835
  %v4179 = vsel %vm151, %v3413, %v3837
  %v4180 = vsel %vm151, %v3415, %v3839
  %v4181 = vsel %vm151, %v3416, %v3841
  %v4182 = vsel %vm151, %v3418, %v3843
  %v4183 = vsel %vm151, %v3419, %v3845
  %v4184 = vsel %vm151, %v3421, %v3847
  %v4185 = vsel %vm151, %v3422, %v3849
  %v4186 = vsel %vm151, %v3424, %v3851
  %v4187 = vsel %vm151, %v3425, %v3853
  %v4188 = vsel %vm151, %v3427, %v3855
  %v4189 = vsel %vm151, %v3428, %v3857
  %v4190 = vsel %vm151, %v3430, %v3859
  %v4191 = vsel %vm151, %v3431, %v3861
  %v4192 = vsel %vm151, %v3433, %v3863
  %v4193 = vsel %vm151, %v3434, %v3865
  %v4194 = vsel %vm151, %v3436, %v3867
  %v4195 = vsel %vm151, %v3437, %v3869
  %v4196 = vsel %vm151, %v3439, %v3871
  %v4197 = vsel %vm151, %v3440, %v3873
  %v4198 = vld [vmem:[%s4] sm:$0xff]
  %v4199 = vld [vmem:[%s4 + $0x8] sm:$0xff]
  %v4200 = vld [vmem:[%s4 + $0x10] sm:$0xff]
  %v4201 = vld [vmem:[%s4 + $0x18] sm:$0xff]
  %v4202 = vld [vmem:[%s4 + $0x20] sm:$0xff]
  %v4203 = vld [vmem:[%s4 + $0x28] sm:$0xff]
  %v4204 = vld [vmem:[%s4 + $0x30] sm:$0xff]
  %v4205 = vld [vmem:[%s4 + $0x38] sm:$0xff]
  %v4206 = vld [vmem:[%s4 + $0x40] sm:$0xff]
  %v4207 = vld [vmem:[%s4 + $0x48] sm:$0xff]
  %v4208 = vld [vmem:[%s4 + $0x50] sm:$0xff]
  %v4209 = vld [vmem:[%s4 + $0x58] sm:$0xff]
  %v4210 = vld [vmem:[%s4 + $0x60] sm:$0xff]
  %v4211 = vld [vmem:[%s4 + $0x68] sm:$0xff]
  %v4212 = vld [vmem:[%s4 + $0x70] sm:$0xff]
  %v4213 = vld [vmem:[%s4 + $0x78] sm:$0xff]
  %v4214 = vld [vmem:[%s4 + $0x80] sm:$0xff]
  %v4215 = vld [vmem:[%s4 + $0x88] sm:$0xff]
  %v4216 = vld [vmem:[%s4 + $0x90] sm:$0xff]
  %v4217 = vld [vmem:[%s4 + $0x98] sm:$0xff]
  %v4218 = vld [vmem:[%s4 + $0xa0] sm:$0xff]
  %v4219 = vld [vmem:[%s4 + $0xa8] sm:$0xff]
  %v4220 = vld [vmem:[%s4 + $0xb0] sm:$0xff]
  %v4221 = vld [vmem:[%s4 + $0xb8] sm:$0xff]
  %s4222 = scalar_lea.vmem %s4, 192
  %v4223 = vld [vmem:[%s4222] sm:$0xff]
  %v4224 = vld [vmem:[%s4222 + $0x8] sm:$0xff]
  %v4225 = vld [vmem:[%s4222 + $0x10] sm:$0xff]
  %v4226 = vld [vmem:[%s4222 + $0x18] sm:$0xff]
  %v4227 = vld [vmem:[%s4222 + $0x20] sm:$0xff]
  %v4228 = vld [vmem:[%s4222 + $0x28] sm:$0xff]
  %v4229 = vld [vmem:[%s4222 + $0x30] sm:$0xff]
  %v4230 = vld [vmem:[%s4222 + $0x38] sm:$0xff]
  %v4231 = vld [vmem:[%s4222 + $0x40] sm:$0xff]
  %v4232 = vld [vmem:[%s4222 + $0x48] sm:$0xff]
  %v4233 = vld [vmem:[%s4222 + $0x50] sm:$0xff]
  %v4234 = vld [vmem:[%s4222 + $0x58] sm:$0xff]
  %v4235 = vld [vmem:[%s4222 + $0x60] sm:$0xff]
  %v4236 = vld [vmem:[%s4222 + $0x68] sm:$0xff]
  %v4237 = vld [vmem:[%s4222 + $0x70] sm:$0xff]
  %v4238 = vld [vmem:[%s4222 + $0x78] sm:$0xff]
  %v4239 = vld [vmem:[%s4222 + $0x80] sm:$0xff]
  %v4240 = vld [vmem:[%s4222 + $0x88] sm:$0xff]
  %v4241 = vld [vmem:[%s4222 + $0x90] sm:$0xff]
  %v4242 = vld [vmem:[%s4222 + $0x98] sm:$0xff]
  %v4243 = vld [vmem:[%s4222 + $0xa0] sm:$0xff]
  %v4244 = vld [vmem:[%s4222 + $0xa8] sm:$0xff]
  %v4245 = vld [vmem:[%s4222 + $0xb0] sm:$0xff]
  %v4246 = vld [vmem:[%s4222 + $0xb8] sm:$0xff]
  %v4247 = vsel %vm151, %v3953, 0
  %v4249 = vsel %vm151, %v3955, 0
  %v4251 = vsel %vm151, %v3958, 0
  %v4253 = vsel %vm151, %v3960, 0
  %v4255 = vsel %vm151, %v3963, 0
  %v4257 = vsel %vm151, %v3965, 0
  %v4259 = vsel %vm151, %v3968, 0
  %v4261 = vsel %vm151, %v3970, 0
  %v4263 = vsel %vm151, %v3973, 0
  %v4265 = vsel %vm151, %v3975, 0
  %v4267 = vsel %vm151, %v3978, 0
  %v4269 = vsel %vm151, %v3980, 0
  %v4271 = vsel %vm151, %v3983, 0
  %v4273 = vsel %vm151, %v3985, 0
  %v4275 = vsel %vm151, %v3988, 0
  %v4277 = vsel %vm151, %v3990, 0
  %v4279 = vsel %vm151, %v3993, 0
  %v4281 = vsel %vm151, %v3995, 0
  %v4283 = vsel %vm151, %v3998, 0
  %v4285 = vsel %vm151, %v4000, 0
  %v4287 = vsel %vm151, %v4003, 0
  %v4289 = vsel %vm151, %v4005, 0
  %v4291 = vsel %vm151, %v4008, 0
  %v4293 = vsel %vm151, %v4010, 0
  %v4295 = vsel %vm151, %v4013, 0
  %v4297 = vsel %vm151, %v4015, 0
  %v4299 = vsel %vm151, %v4018, 0
  %v4301 = vsel %vm151, %v4020, 0
  %v4303 = vsel %vm151, %v4023, 0
  %v4305 = vsel %vm151, %v4025, 0
  %v4307 = vsel %vm151, %v4028, 0
  %v4309 = vsel %vm151, %v4030, 0
  %v4311 = vsel %vm151, %v4043, 0
  %v4313 = vsel %vm151, %v4045, 0
  %v4315 = vsel %vm151, %v4048, 0
  %v4317 = vsel %vm151, %v4050, 0
  %v4319 = vsel %vm151, %v4053, 0
  %v4321 = vsel %vm151, %v4055, 0
  %v4323 = vsel %vm151, %v4058, 0
  %v4325 = vsel %vm151, %v4060, 0
  %v4327 = vsel %vm151, %v4063, 0
  %v4329 = vsel %vm151, %v4065, 0
  %v4331 = vsel %vm151, %v4068, 0
  %v4333 = vsel %vm151, %v4070, 0
  %v4335 = vsel %vm151, %v4073, 0
  %v4337 = vsel %vm151, %v4075, 0
  %v4339 = vsel %vm151, %v4078, 0
  %v4341 = vsel %vm151, %v4080, 0
  %v4343 = vsel %vm151, %v4083, 0
  %v4345 = vsel %vm151, %v4085, 0
  %v4347 = vsel %vm151, %v4088, 0
  %v4349 = vsel %vm151, %v4090, 0
  %v4351 = vsel %vm151, %v4093, 0
  %v4353 = vsel %vm151, %v4095, 0
  %v4355 = vsel %vm151, %v4098, 0
  %v4357 = vsel %vm151, %v4100, 0
  %v4359 = vsel %vm151, %v4103, 0
  %v4361 = vsel %vm151, %v4105, 0
  %v4363 = vsel %vm151, %v4108, 0
  %v4365 = vsel %vm151, %v4110, 0
  %v4367 = vsel %vm151, %v4113, 0
  %v4369 = vsel %vm151, %v4115, 0
  %v4371 = vsel %vm151, %v4118, 0
  %v4373 = vsel %vm151, %v4120, 0
  %4375 = vmatprep.subr.mxu0 0.0
  %4376 = vmatpush1.msra.mxu0 %v4223
  %4377 = vmatprep.subr.mxu0 0.0
  %4378 = vmatpush1.msra.mxu0 %v4224
  %4379 = vmatprep.subr.mxu0 0.0
  %4380 = vmatpush1.msra.mxu0 %v4225
  %4381 = vmatprep.subr.mxu0 0.0
  %4382 = vmatpush1.msra.mxu0 %v4226
  %4383 = vmatprep.subr.mxu0 0.0
  %4384 = vmatpush1.msra.mxu0 %v4227
  %4385 = vmatprep.subr.mxu0 0.0
  %4386 = vmatpush1.msra.mxu0 %v4228
  %4387 = vmatprep.subr.mxu0 0.0
  %4388 = vmatpush1.msra.mxu0 %v4229
  %4389 = vmatprep.subr.mxu0 0.0
  %4390 = vmatpush1.msra.mxu0 %v4230
  %4391 = vmatprep.subr.mxu0 0.0
  %4392 = vmatpush1.msra.mxu0 %v4231
  %4393 = vmatprep.subr.mxu0 0.0
  %4394 = vmatpush1.msra.mxu0 %v4232
  %4395 = vmatprep.subr.mxu0 0.0
  %4396 = vmatpush1.msra.mxu0 %v4233
  %4397 = vmatprep.subr.mxu0 0.0
  %4398 = vmatpush1.msra.mxu0 %v4234
  %4399 = vmatprep.subr.mxu0 0.0
  %4400 = vmatpush1.msra.mxu0 %v4235
  %4401 = vmatprep.subr.mxu0 0.0
  %4402 = vmatpush1.msra.mxu0 %v4236
  %4403 = vmatprep.subr.mxu0 0.0
  %4404 = vmatpush1.msra.mxu0 %v4237
  %4405 = vmatprep.subr.mxu0 0.0
  %4406 = vmatpush1.msra.mxu0 %v4238
  %4407 = vmatprep.subr.mxu0 0.0
  %4408 = vmatpush1.msra.mxu0 %v4239
  %4409 = vmatprep.subr.mxu0 0.0
  %4410 = vmatpush1.msra.mxu0 %v4240
  %4411 = vmatprep.subr.mxu0 0.0
  %4412 = vmatpush1.msra.mxu0 %v4241
  %4413 = vmatprep.subr.mxu0 0.0
  %4414 = vmatpush1.msra.mxu0 %v4242
  %4415 = vmatprep.subr.mxu0 0.0
  %4416 = vmatpush1.msra.mxu0 %v4243
  %4417 = vmatprep.subr.mxu0 0.0
  %4418 = vmatpush1.msra.mxu0 %v4244
  %4419 = vmatprep.subr.mxu0 0.0
  %4420 = vmatpush1.msra.mxu0 %v4245
  %4421 = vmatprep.subr.mxu0 0.0
  %4422 = vmatpush1.msra.mxu0 %v4246
  %4423 = vmatprep.subr.mxu0 0.0
  %4424 = vmatpush1.msra.mxu0 0.0
  %4425 = vmatprep.subr.mxu0 0.0
  %4426 = vmatpush1.msra.mxu0 0.0
  %4427 = vmatprep.subr.mxu0 0.0
  %4428 = vmatpush1.msra.mxu0 0.0
  %4429 = vmatprep.subr.mxu0 0.0
  %4430 = vmatpush1.msra.mxu0 0.0
  %4431 = vmatprep.subr.mxu0 0.0
  %4432 = vmatpush1.msra.mxu0 0.0
  %4433 = vmatprep.subr.mxu0 0.0
  %4434 = vmatpush1.msra.mxu0 0.0
  %4435 = vmatprep.subr.mxu0 0.0
  %4436 = vmatpush1.msra.mxu0 0.0
  %4437 = vmatprep.subr.mxu0 0.0
  %4438 = vmatpush1.msra.mxu0 0.0
  %4439 = vmatprep.mubr.f32.mxu0 %v4247
  %4440 = vmatmul.mubr.f32.gmra.mrb[0].mxu0 %v4128
  %v4441 = vpop.f32.mrb[0].mxu0
  %v4442 = vadd.f32 0.0, %v4441
  %v4443 = vpop.f32.mrb[0].mxu0
  %4444 = vmatprep.mubr.f32.mxu0 %v4249
  %4445 = vmatmul.mubr.f32.gmra.mrb[0].mxu0 %v4129
  %v4446 = vpop.f32.mrb[0].mxu0
  %v4447 = vadd.f32 0.0, %v4446
  %v4448 = vpop.f32.mrb[0].mxu0
  %4449 = vmatprep.mubr.f32.mxu0 %v4251
  %4450 = vmatmul.mubr.f32.gmra.mrb[0].mxu0 %v4130
  %v4451 = vpop.f32.mrb[0].mxu0
  %v4452 = vadd.f32 0.0, %v4451
  %v4453 = vpop.f32.mrb[0].mxu0
  %4454 = vmatprep.mubr.f32.mxu0 %v4253
  %4455 = vmatmul.mubr.f32.gmra.mrb[0].mxu0 %v4131
  %v4456 = vpop.f32.mrb[0].mxu0
  %v4457 = vadd.f32 0.0, %v4456
  %v4458 = vpop.f32.mrb[0].mxu0
  %4459 = vmatprep.mubr.f32.mxu0 %v4255
  %4460 = vmatmul.mubr.f32.gmra.mrb[0].mxu0 %v4132
  %v4461 = vpop.f32.mrb[0].mxu0
  %v4462 = vadd.f32 0.0, %v4461
  %v4463 = vpop.f32.mrb[0].mxu0
  %4464 = vmatprep.mubr.f32.mxu0 %v4257
  %4465 = vmatmul.mubr.f32.gmra.mrb[0].mxu0 %v4133
  %v4466 = vpop.f32.mrb[0].mxu0
  %v4467 = vadd.f32 0.0, %v4466
  %v4468 = vpop.f32.mrb[0].mxu0
  %4469 = vmatprep.mubr.f32.mxu0 %v4259
  %4470 = vmatmul.mubr.f32.gmra.mrb[0].mxu0 %v4134
  %v4471 = vpop.f32.mrb[0].mxu0
  %v4472 = vadd.f32 0.0, %v4471
  %v4473 = vpop.f32.mrb[0].mxu0
  %4474 = vmatprep.mubr.f32.mxu0 %v4261
  %4475 = vmatmul.mubr.f32.gmra.mrb[0].mxu0 %v4135
  %v4476 = vpop.f32.mrb[0].mxu0
  %v4477 = vadd.f32 0.0, %v4476
  %v4478 = vpop.f32.mrb[0].mxu0
  %4479 = vmatprep.mubr.f32.mxu0 %v4263
  %4480 = vmatmul.mubr.f32.gmra.mrb[0].mxu0 %v4136
  %v4481 = vpop.f32.mrb[0].mxu0
  %v4482 = vadd.f32 0.0, %v4481
  %v4483 = vpop.f32.mrb[0].mxu0
  %4484 = vmatprep.mubr.f32.mxu0 %v4265
  %4485 = vmatmul.mubr.f32.gmra.mrb[0].mxu0 %v4137
  %v4486 = vpop.f32.mrb[0].mxu0
  %v4487 = vadd.f32 0.0, %v4486
  %v4488 = vpop.f32.mrb[0].mxu0
  %4489 = vmatprep.mubr.f32.mxu0 %v4267
  %4490 = vmatmul.mubr.f32.gmra.mrb[0].mxu0 %v4138
  %v4491 = vpop.f32.mrb[0].mxu0
  %v4492 = vadd.f32 0.0, %v4491
  %v4493 = vpop.f32.mrb[0].mxu0
  %4494 = vmatprep.mubr.f32.mxu0 %v4269
  %4495 = vmatmul.mubr.f32.gmra.mrb[0].mxu0 %v4139
  %v4496 = vpop.f32.mrb[0].mxu0
  %v4497 = vadd.f32 0.0, %v4496
  %v4498 = vpop.f32.mrb[0].mxu0
  %4499 = vmatprep.mubr.f32.mxu0 %v4271
  %4500 = vmatmul.mubr.f32.gmra.mrb[0].mxu0 %v4140
  %v4501 = vpop.f32.mrb[0].mxu0
  %v4502 = vadd.f32 0.0, %v4501
  %v4503 = vpop.f32.mrb[0].mxu0
  %4504 = vmatprep.mubr.f32.mxu0 %v4273
  %4505 = vmatmul.mubr.f32.gmra.mrb[0].mxu0 %v4141
  %v4506 = vpop.f32.mrb[0].mxu0
  %v4507 = vadd.f32 0.0, %v4506
  %v4508 = vpop.f32.mrb[0].mxu0
  %4509 = vmatprep.mubr.f32.mxu0 %v4275
  %4510 = vmatmul.mubr.f32.gmra.mrb[0].mxu0 %v4142
  %v4511 = vpop.f32.mrb[0].mxu0
  %v4512 = vadd.f32 0.0, %v4511
  %v4513 = vpop.f32.mrb[0].mxu0
  %4514 = vmatprep.mubr.f32.mxu0 %v4277
  %4515 = vmatmul.mubr.f32.gmra.mrb[0].mxu0 %v4143
  %v4516 = vpop.f32.mrb[0].mxu0
  %v4517 = vadd.f32 0.0, %v4516
  %v4518 = vpop.f32.mrb[0].mxu0
  %4519 = vmatprep.mubr.f32.mxu0 %v4279
  %4520 = vmatmul.mubr.f32.gmra.mrb[0].mxu0 %v4144
  %v4521 = vpop.f32.mrb[0].mxu0
  %v4522 = vadd.f32 0.0, %v4521
  %v4523 = vpop.f32.mrb[0].mxu0
  %4524 = vmatprep.mubr.f32.mxu0 %v4281
  %4525 = vmatmul.mubr.f32.gmra.mrb[0].mxu0 %v4145
  %v4526 = vpop.f32.mrb[0].mxu0
  %v4527 = vadd.f32 0.0, %v4526
  %v4528 = vpop.f32.mrb[0].mxu0
  %4529 = vmatprep.mubr.f32.mxu0 %v4283
  %4530 = vmatmul.mubr.f32.gmra.mrb[0].mxu0 %v4146
  %v4531 = vpop.f32.mrb[0].mxu0
  %v4532 = vadd.f32 0.0, %v4531
  %v4533 = vpop.f32.mrb[0].mxu0
  %4534 = vmatprep.mubr.f32.mxu0 %v4285
  %4535 = vmatmul.mubr.f32.gmra.mrb[0].mxu0 %v4147
  %v4536 = vpop.f32.mrb[0].mxu0
  %v4537 = vadd.f32 0.0, %v4536
  %v4538 = vpop.f32.mrb[0].mxu0
  %4539 = vmatprep.mubr.f32.mxu0 %v4287
  %4540 = vmatmul.mubr.f32.gmra.mrb[0].mxu0 %v4148
  %v4541 = vpop.f32.mrb[0].mxu0
  %v4542 = vadd.f32 0.0, %v4541
  %v4543 = vpop.f32.mrb[0].mxu0
  %4544 = vmatprep.mubr.f32.mxu0 %v4289
  %4545 = vmatmul.mubr.f32.gmra.mrb[0].mxu0 %v4149
  %v4546 = vpop.f32.mrb[0].mxu0
  %v4547 = vadd.f32 0.0, %v4546
  %v4548 = vpop.f32.mrb[0].mxu0
  %4549 = vmatprep.mubr.f32.mxu0 %v4291
  %4550 = vmatmul.mubr.f32.gmra.mrb[0].mxu0 %v4150
  %v4551 = vpop.f32.mrb[0].mxu0
  %v4552 = vadd.f32 0.0, %v4551
  %v4553 = vpop.f32.mrb[0].mxu0
  %4554 = vmatprep.mubr.f32.mxu0 %v4293
  %4555 = vmatmul.mubr.f32.gmra.mrb[0].mxu0 %v4151
  %v4556 = vpop.f32.mrb[0].mxu0
  %v4557 = vadd.f32 0.0, %v4556
  %v4558 = vpop.f32.mrb[0].mxu0
  %4559 = vmatprep.mubr.f32.mxu0 %v4295
  %4560 = vmatmul.mubr.f32.gmra.mrb[0].mxu0 %v4152
  %v4561 = vpop.f32.mrb[0].mxu0
  %v4562 = vadd.f32 0.0, %v4561
  %v4563 = vpop.f32.mrb[0].mxu0
  %4564 = vmatprep.mubr.f32.mxu0 %v4297
  %4565 = vmatmul.mubr.f32.gmra.mrb[0].mxu0 %v4153
  %v4566 = vpop.f32.mrb[0].mxu0
  %v4567 = vadd.f32 0.0, %v4566
  %v4568 = vpop.f32.mrb[0].mxu0
  %4569 = vmatprep.mubr.f32.mxu0 %v4299
  %4570 = vmatmul.mubr.f32.gmra.mrb[0].mxu0 %v4154
  %v4571 = vpop.f32.mrb[0].mxu0
  %v4572 = vadd.f32 0.0, %v4571
  %v4573 = vpop.f32.mrb[0].mxu0
  %4574 = vmatprep.mubr.f32.mxu0 %v4301
  %4575 = vmatmul.mubr.f32.gmra.mrb[0].mxu0 %v4155
  %v4576 = vpop.f32.mrb[0].mxu0
  %v4577 = vadd.f32 0.0, %v4576
  %v4578 = vpop.f32.mrb[0].mxu0
  %4579 = vmatprep.mubr.f32.mxu0 %v4303
  %4580 = vmatmul.mubr.f32.gmra.mrb[0].mxu0 %v4156
  %v4581 = vpop.f32.mrb[0].mxu0
  %v4582 = vadd.f32 0.0, %v4581
  %v4583 = vpop.f32.mrb[0].mxu0
  %4584 = vmatprep.mubr.f32.mxu0 %v4305
  %4585 = vmatmul.mubr.f32.gmra.mrb[0].mxu0 %v4157
  %v4586 = vpop.f32.mrb[0].mxu0
  %v4587 = vadd.f32 0.0, %v4586
  %v4588 = vpop.f32.mrb[0].mxu0
  %4589 = vmatprep.mubr.f32.mxu0 %v4307
  %4590 = vmatmul.mubr.f32.gmra.mrb[0].mxu0 %v4158
  %v4591 = vpop.f32.mrb[0].mxu0
  %v4592 = vadd.f32 0.0, %v4591
  %v4593 = vpop.f32.mrb[0].mxu0
  %4594 = vmatprep.mubr.f32.mxu0 %v4309
  %4595 = vmatmul.mubr.f32.gmra.mrb[0].mxu0 %v4159
  %v4596 = vpop.f32.mrb[0].mxu0
  %v4597 = vadd.f32 0.0, %v4596
  %v4598 = vpop.f32.mrb[0].mxu0
  %4599 = vmatprep.mubr.f32.mxu0 %v4311
  %4600 = vmatmul.mubr.f32.gmra.mrb[0].mxu0 %v4164
  %v4601 = vpop.f32.mrb[0].mxu0
  %v4602 = vadd.f32 0.0, %v4601
  %v4603 = vpop.f32.mrb[0].mxu0
  %4604 = vmatprep.mubr.f32.mxu0 %v4313
  %4605 = vmatmul.mubr.f32.gmra.mrb[0].mxu0 %v4165
  %v4606 = vpop.f32.mrb[0].mxu0
  %v4607 = vadd.f32 0.0, %v4606
  %v4608 = vpop.f32.mrb[0].mxu0
  %4609 = vmatprep.mubr.f32.mxu0 %v4315
  %4610 = vmatmul.mubr.f32.gmra.mrb[0].mxu0 %v4166
  %v4611 = vpop.f32.mrb[0].mxu0
  %v4612 = vadd.f32 0.0, %v4611
  %v4613 = vpop.f32.mrb[0].mxu0
  %4614 = vmatprep.mubr.f32.mxu0 %v4317
  %4615 = vmatmul.mubr.f32.gmra.mrb[0].mxu0 %v4167
  %v4616 = vpop.f32.mrb[0].mxu0
  %v4617 = vadd.f32 0.0, %v4616
  %v4618 = vpop.f32.mrb[0].mxu0
  %4619 = vmatprep.mubr.f32.mxu0 %v4319
  %4620 = vmatmul.mubr.f32.gmra.mrb[0].mxu0 %v4168
  %v4621 = vpop.f32.mrb[0].mxu0
  %v4622 = vadd.f32 0.0, %v4621
  %v4623 = vpop.f32.mrb[0].mxu0
  %4624 = vmatprep.mubr.f32.mxu0 %v4321
  %4625 = vmatmul.mubr.f32.gmra.mrb[0].mxu0 %v4169
  %v4626 = vpop.f32.mrb[0].mxu0
  %v4627 = vadd.f32 0.0, %v4626
  %v4628 = vpop.f32.mrb[0].mxu0
  %4629 = vmatprep.mubr.f32.mxu0 %v4323
  %4630 = vmatmul.mubr.f32.gmra.mrb[0].mxu0 %v4170
  %v4631 = vpop.f32.mrb[0].mxu0
  %v4632 = vadd.f32 0.0, %v4631
  %v4633 = vpop.f32.mrb[0].mxu0
  %4634 = vmatprep.mubr.f32.mxu0 %v4325
  %4635 = vmatmul.mubr.f32.gmra.mrb[0].mxu0 %v4171
  %v4636 = vpop.f32.mrb[0].mxu0
  %v4637 = vadd.f32 0.0, %v4636
  %v4638 = vpop.f32.mrb[0].mxu0
  %4639 = vmatprep.mubr.f32.mxu0 %v4327
  %4640 = vmatmul.mubr.f32.gmra.mrb[0].mxu0 %v4172
  %v4641 = vpop.f32.mrb[0].mxu0
  %v4642 = vadd.f32 0.0, %v4641
  %v4643 = vpop.f32.mrb[0].mxu0
  %4644 = vmatprep.mubr.f32.mxu0 %v4329
  %4645 = vmatmul.mubr.f32.gmra.mrb[0].mxu0 %v4173
  %v4646 = vpop.f32.mrb[0].mxu0
  %v4647 = vadd.f32 0.0, %v4646
  %v4648 = vpop.f32.mrb[0].mxu0
  %4649 = vmatprep.mubr.f32.mxu0 %v4331
  %4650 = vmatmul.mubr.f32.gmra.mrb[0].mxu0 %v4174
  %v4651 = vpop.f32.mrb[0].mxu0
  %v4652 = vadd.f32 0.0, %v4651
  %v4653 = vpop.f32.mrb[0].mxu0
  %4654 = vmatprep.mubr.f32.mxu0 %v4333
  %4655 = vmatmul.mubr.f32.gmra.mrb[0].mxu0 %v4175
  %v4656 = vpop.f32.mrb[0].mxu0
  %v4657 = vadd.f32 0.0, %v4656
  %v4658 = vpop.f32.mrb[0].mxu0
  %4659 = vmatprep.mubr.f32.mxu0 %v4335
  %4660 = vmatmul.mubr.f32.gmra.mrb[0].mxu0 %v4176
  %v4661 = vpop.f32.mrb[0].mxu0
  %v4662 = vadd.f32 0.0, %v4661
  %v4663 = vpop.f32.mrb[0].mxu0
  %4664 = vmatprep.mubr.f32.mxu0 %v4337
  %4665 = vmatmul.mubr.f32.gmra.mrb[0].mxu0 %v4177
  %v4666 = vpop.f32.mrb[0].mxu0
  %v4667 = vadd.f32 0.0, %v4666
  %v4668 = vpop.f32.mrb[0].mxu0
  %4669 = vmatprep.mubr.f32.mxu0 %v4339
  %4670 = vmatmul.mubr.f32.gmra.mrb[0].mxu0 %v4178
  %v4671 = vpop.f32.mrb[0].mxu0
  %v4672 = vadd.f32 0.0, %v4671
  %v4673 = vpop.f32.mrb[0].mxu0
  %4674 = vmatprep.mubr.f32.mxu0 %v4341
  %4675 = vmatmul.mubr.f32.gmra.mrb[0].mxu0 %v4179
  %v4676 = vpop.f32.mrb[0].mxu0
  %v4677 = vadd.f32 0.0, %v4676
  %v4678 = vpop.f32.mrb[0].mxu0
  %4679 = vmatprep.mubr.f32.mxu0 %v4343
  %4680 = vmatmul.mubr.f32.gmra.mrb[0].mxu0 %v4180
  %v4681 = vpop.f32.mrb[0].mxu0
  %v4682 = vadd.f32 0.0, %v4681
  %v4683 = vpop.f32.mrb[0].mxu0
  %4684 = vmatprep.mubr.f32.mxu0 %v4345
  %4685 = vmatmul.mubr.f32.gmra.mrb[0].mxu0 %v4181
  %v4686 = vpop.f32.mrb[0].mxu0
  %v4687 = vadd.f32 0.0, %v4686
  %v4688 = vpop.f32.mrb[0].mxu0
  %4689 = vmatprep.mubr.f32.mxu0 %v4347
  %4690 = vmatmul.mubr.f32.gmra.mrb[0].mxu0 %v4182
  %v4691 = vpop.f32.mrb[0].mxu0
  %v4692 = vadd.f32 0.0, %v4691
  %v4693 = vpop.f32.mrb[0].mxu0
  %4694 = vmatprep.mubr.f32.mxu0 %v4349
  %4695 = vmatmul.mubr.f32.gmra.mrb[0].mxu0 %v4183
  %v4696 = vpop.f32.mrb[0].mxu0
  %v4697 = vadd.f32 0.0, %v4696
  %v4698 = vpop.f32.mrb[0].mxu0
  %4699 = vmatprep.mubr.f32.mxu0 %v4351
  %4700 = vmatmul.mubr.f32.gmra.mrb[0].mxu0 %v4184
  %v4701 = vpop.f32.mrb[0].mxu0
  %v4702 = vadd.f32 0.0, %v4701
  %v4703 = vpop.f32.mrb[0].mxu0
  %4704 = vmatprep.mubr.f32.mxu0 %v4353
  %4705 = vmatmul.mubr.f32.gmra.mrb[0].mxu0 %v4185
  %v4706 = vpop.f32.mrb[0].mxu0
  %v4707 = vadd.f32 0.0, %v4706
  %v4708 = vpop.f32.mrb[0].mxu0
  %4709 = vmatprep.mubr.f32.mxu0 %v4355
  %4710 = vmatmul.mubr.f32.gmra.mrb[0].mxu0 %v4186
  %v4711 = vpop.f32.mrb[0].mxu0
  %v4712 = vadd.f32 0.0, %v4711
  %v4713 = vpop.f32.mrb[0].mxu0
  %4714 = vmatprep.mubr.f32.mxu0 %v4357
  %4715 = vmatmul.mubr.f32.gmra.mrb[0].mxu0 %v4187
  %v4716 = vpop.f32.mrb[0].mxu0
  %v4717 = vadd.f32 0.0, %v4716
  %v4718 = vpop.f32.mrb[0].mxu0
  %4719 = vmatprep.mubr.f32.mxu0 %v4359
  %4720 = vmatmul.mubr.f32.gmra.mrb[0].mxu0 %v4188
  %v4721 = vpop.f32.mrb[0].mxu0
  %v4722 = vadd.f32 0.0, %v4721
  %v4723 = vpop.f32.mrb[0].mxu0
  %4724 = vmatprep.mubr.f32.mxu0 %v4361
  %4725 = vmatmul.mubr.f32.gmra.mrb[0].mxu0 %v4189
  %v4726 = vpop.f32.mrb[0].mxu0
  %v4727 = vadd.f32 0.0, %v4726
  %v4728 = vpop.f32.mrb[0].mxu0
  %4729 = vmatprep.mubr.f32.mxu0 %v4363
  %4730 = vmatmul.mubr.f32.gmra.mrb[0].mxu0 %v4190
  %v4731 = vpop.f32.mrb[0].mxu0
  %v4732 = vadd.f32 0.0, %v4731
  %v4733 = vpop.f32.mrb[0].mxu0
  %4734 = vmatprep.mubr.f32.mxu0 %v4365
  %4735 = vmatmul.mubr.f32.gmra.mrb[0].mxu0 %v4191
  %v4736 = vpop.f32.mrb[0].mxu0
  %v4737 = vadd.f32 0.0, %v4736
  %v4738 = vpop.f32.mrb[0].mxu0
  %4739 = vmatprep.mubr.f32.mxu0 %v4367
  %4740 = vmatmul.mubr.f32.gmra.mrb[0].mxu0 %v4192
  %v4741 = vpop.f32.mrb[0].mxu0
  %v4742 = vadd.f32 0.0, %v4741
  %v4743 = vpop.f32.mrb[0].mxu0
  %4744 = vmatprep.mubr.f32.mxu0 %v4369
  %4745 = vmatmul.mubr.f32.gmra.mrb[0].mxu0 %v4193
  %v4746 = vpop.f32.mrb[0].mxu0
  %v4747 = vadd.f32 0.0, %v4746
  %v4748 = vpop.f32.mrb[0].mxu0
  %4749 = vmatprep.mubr.f32.mxu0 %v4371
  %4750 = vmatmul.mubr.f32.gmra.mrb[0].mxu0 %v4194
  %v4751 = vpop.f32.mrb[0].mxu0
  %v4752 = vadd.f32 0.0, %v4751
  %v4753 = vpop.f32.mrb[0].mxu0
  %4754 = vmatprep.mubr.f32.mxu0 %v4373
  %4755 = vmatmul.mubr.f32.gmra.mrb[0].mxu0 %v4195
  %v4756 = vpop.f32.mrb[0].mxu0
  %v4757 = vadd.f32 0.0, %v4756
  %v4758 = vpop.f32.mrb[0].mxu0
  %4759 = vdwg.mxu0
  %v4760 = vsel %vm151, %v3948, 0
  %v4762 = vsel %vm151, %v3950, 0
  %v4764 = vsel %vm151, %v4038, 0
  %v4766 = vsel %vm151, %v4040, 0
  %4768 = vmatprep.subr.mxu0 0.0
  %4769 = vmatpush1.msra.mxu0 %v4198
  %4770 = vmatprep.subr.mxu0 0.0
  %4771 = vmatpush1.msra.mxu0 %v4199
  %4772 = vmatprep.subr.mxu0 0.0
  %4773 = vmatpush1.msra.mxu0 %v4200
  %4774 = vmatprep.subr.mxu0 0.0
  %4775 = vmatpush1.msra.mxu0 %v4201
  %4776 = vmatprep.subr.mxu0 0.0
  %4777 = vmatpush1.msra.mxu0 %v4202
  %4778 = vmatprep.subr.mxu0 0.0
  %4779 = vmatpush1.msra.mxu0 %v4203
  %4780 = vmatprep.subr.mxu0 0.0
  %4781 = vmatpush1.msra.mxu0 %v4204
  %4782 = vmatprep.subr.mxu0 0.0
  %4783 = vmatpush1.msra.mxu0 %v4205
  %4784 = vmatprep.subr.mxu0 0.0
  %4785 = vmatpush1.msra.mxu0 %v4206
  %4786 = vmatprep.subr.mxu0 0.0
  %4787 = vmatpush1.msra.mxu0 %v4207
  %4788 = vmatprep.subr.mxu0 0.0
  %4789 = vmatpush1.msra.mxu0 %v4208
  %4790 = vmatprep.subr.mxu0 0.0
  %4791 = vmatpush1.msra.mxu0 %v4209
  %4792 = vmatprep.subr.mxu0 0.0
  %4793 = vmatpush1.msra.mxu0 %v4210
  %4794 = vmatprep.subr.mxu0 0.0
  %4795 = vmatpush1.msra.mxu0 %v4211
  %4796 = vmatprep.subr.mxu0 0.0
  %4797 = vmatpush1.msra.mxu0 %v4212
  %4798 = vmatprep.subr.mxu0 0.0
  %4799 = vmatpush1.msra.mxu0 %v4213
  %4800 = vmatprep.subr.mxu0 0.0
  %4801 = vmatpush1.msra.mxu0 %v4214
  %4802 = vmatprep.subr.mxu0 0.0
  %4803 = vmatpush1.msra.mxu0 %v4215
  %4804 = vmatprep.subr.mxu0 0.0
  %4805 = vmatpush1.msra.mxu0 %v4216
  %4806 = vmatprep.subr.mxu0 0.0
  %4807 = vmatpush1.msra.mxu0 %v4217
  %4808 = vmatprep.subr.mxu0 0.0
  %4809 = vmatpush1.msra.mxu0 %v4218
  %4810 = vmatprep.subr.mxu0 0.0
  %4811 = vmatpush1.msra.mxu0 %v4219
  %4812 = vmatprep.subr.mxu0 0.0
  %4813 = vmatpush1.msra.mxu0 %v4220
  %4814 = vmatprep.subr.mxu0 0.0
  %4815 = vmatpush1.msra.mxu0 %v4221
  %4816 = vmatprep.subr.mxu0 0.0
  %4817 = vmatpush1.msra.mxu0 0.0
  %4818 = vmatprep.subr.mxu0 0.0
  %4819 = vmatpush1.msra.mxu0 0.0
  %4820 = vmatprep.subr.mxu0 0.0
  %4821 = vmatpush1.msra.mxu0 0.0
  %4822 = vmatprep.subr.mxu0 0.0
  %4823 = vmatpush1.msra.mxu0 0.0
  %4824 = vmatprep.subr.mxu0 0.0
  %4825 = vmatpush1.msra.mxu0 0.0
  %4826 = vmatprep.subr.mxu0 0.0
  %4827 = vmatpush1.msra.mxu0 0.0
  %4828 = vmatprep.subr.mxu0 0.0
  %4829 = vmatpush1.msra.mxu0 0.0
  %4830 = vmatprep.subr.mxu0 0.0
  %4831 = vmatpush1.msra.mxu0 0.0
  %4832 = vmatprep.mubr.f32.mxu0 %v4760
  %4833 = vmatmul.mubr.f32.gmra.mrb[0].mxu0 %v4126
  %v4834 = vpop.f32.mrb[0].mxu0
  %v4835 = vadd.f32 %v4442, %v4834
  %v4836 = vpop.f32.mrb[0].mxu0
  %4837 = vmatprep.mubr.f32.mxu0 %v4762
  %4838 = vmatmul.mubr.f32.gmra.mrb[0].mxu0 %v4127
  %v4839 = vpop.f32.mrb[0].mxu0
  %v4840 = vadd.f32 %v4447, %v4839
  %v4841 = vpop.f32.mrb[0].mxu0
  %4842 = vmatprep.mubr.f32.mxu0 %v4247
  %4843 = vmatmul.mubr.f32.gmra.mrb[0].mxu0 %v4128
  %v4844 = vpop.f32.mrb[0].mxu0
  %v4845 = vadd.f32 %v4452, %v4844
  %v4846 = vpop.f32.mrb[0].mxu0
  %4847 = vmatprep.mubr.f32.mxu0 %v4249
  %4848 = vmatmul.mubr.f32.gmra.mrb[0].mxu0 %v4129
  %v4849 = vpop.f32.mrb[0].mxu0
  %v4850 = vadd.f32 %v4457, %v4849
  %v4851 = vpop.f32.mrb[0].mxu0
  %4852 = vmatprep.mubr.f32.mxu0 %v4251
  %4853 = vmatmul.mubr.f32.gmra.mrb[0].mxu0 %v4130
  %v4854 = vpop.f32.mrb[0].mxu0
  %v4855 = vadd.f32 %v4462, %v4854
  %v4856 = vpop.f32.mrb[0].mxu0
  %4857 = vmatprep.mubr.f32.mxu0 %v4253
  %4858 = vmatmul.mubr.f32.gmra.mrb[0].mxu0 %v4131
  %v4859 = vpop.f32.mrb[0].mxu0
  %v4860 = vadd.f32 %v4467, %v4859
  %v4861 = vpop.f32.mrb[0].mxu0
  %4862 = vmatprep.mubr.f32.mxu0 %v4255
  %4863 = vmatmul.mubr.f32.gmra.mrb[0].mxu0 %v4132
  %v4864 = vpop.f32.mrb[0].mxu0
  %v4865 = vadd.f32 %v4472, %v4864
  %v4866 = vpop.f32.mrb[0].mxu0
  %4867 = vmatprep.mubr.f32.mxu0 %v4257
  %4868 = vmatmul.mubr.f32.gmra.mrb[0].mxu0 %v4133
  %v4869 = vpop.f32.mrb[0].mxu0
  %v4870 = vadd.f32 %v4477, %v4869
  %v4871 = vpop.f32.mrb[0].mxu0
  %4872 = vmatprep.mubr.f32.mxu0 %v4259
  %4873 = vmatmul.mubr.f32.gmra.mrb[0].mxu0 %v4134
  %v4874 = vpop.f32.mrb[0].mxu0
  %v4875 = vadd.f32 %v4482, %v4874
  %v4876 = vpop.f32.mrb[0].mxu0
  %4877 = vmatprep.mubr.f32.mxu0 %v4261
  %4878 = vmatmul.mubr.f32.gmra.mrb[0].mxu0 %v4135
  %v4879 = vpop.f32.mrb[0].mxu0
  %v4880 = vadd.f32 %v4487, %v4879
  %v4881 = vpop.f32.mrb[0].mxu0
  %4882 = vmatprep.mubr.f32.mxu0 %v4263
  %4883 = vmatmul.mubr.f32.gmra.mrb[0].mxu0 %v4136
  %v4884 = vpop.f32.mrb[0].mxu0
  %v4885 = vadd.f32 %v4492, %v4884
  %v4886 = vpop.f32.mrb[0].mxu0
  %4887 = vmatprep.mubr.f32.mxu0 %v4265
  %4888 = vmatmul.mubr.f32.gmra.mrb[0].mxu0 %v4137
  %v4889 = vpop.f32.mrb[0].mxu0
  %v4890 = vadd.f32 %v4497, %v4889
  %v4891 = vpop.f32.mrb[0].mxu0
  %4892 = vmatprep.mubr.f32.mxu0 %v4267
  %4893 = vmatmul.mubr.f32.gmra.mrb[0].mxu0 %v4138
  %v4894 = vpop.f32.mrb[0].mxu0
  %v4895 = vadd.f32 %v4502, %v4894
  %v4896 = vpop.f32.mrb[0].mxu0
  %4897 = vmatprep.mubr.f32.mxu0 %v4269
  %4898 = vmatmul.mubr.f32.gmra.mrb[0].mxu0 %v4139
  %v4899 = vpop.f32.mrb[0].mxu0
  %v4900 = vadd.f32 %v4507, %v4899
  %v4901 = vpop.f32.mrb[0].mxu0
  %4902 = vmatprep.mubr.f32.mxu0 %v4271
  %4903 = vmatmul.mubr.f32.gmra.mrb[0].mxu0 %v4140
  %v4904 = vpop.f32.mrb[0].mxu0
  %v4905 = vadd.f32 %v4512, %v4904
  %v4906 = vpop.f32.mrb[0].mxu0
  %4907 = vmatprep.mubr.f32.mxu0 %v4273
  %4908 = vmatmul.mubr.f32.gmra.mrb[0].mxu0 %v4141
  %v4909 = vpop.f32.mrb[0].mxu0
  %v4910 = vadd.f32 %v4517, %v4909
  %v4911 = vpop.f32.mrb[0].mxu0
  %4912 = vmatprep.mubr.f32.mxu0 %v4275
  %4913 = vmatmul.mubr.f32.gmra.mrb[0].mxu0 %v4142
  %v4914 = vpop.f32.mrb[0].mxu0
  %v4915 = vadd.f32 %v4522, %v4914
  %v4916 = vpop.f32.mrb[0].mxu0
  %4917 = vmatprep.mubr.f32.mxu0 %v4277
  %4918 = vmatmul.mubr.f32.gmra.mrb[0].mxu0 %v4143
  %v4919 = vpop.f32.mrb[0].mxu0
  %v4920 = vadd.f32 %v4527, %v4919
  %v4921 = vpop.f32.mrb[0].mxu0
  %4922 = vmatprep.mubr.f32.mxu0 %v4279
  %4923 = vmatmul.mubr.f32.gmra.mrb[0].mxu0 %v4144
  %v4924 = vpop.f32.mrb[0].mxu0
  %v4925 = vadd.f32 %v4532, %v4924
  %v4926 = vpop.f32.mrb[0].mxu0
  %4927 = vmatprep.mubr.f32.mxu0 %v4281
  %4928 = vmatmul.mubr.f32.gmra.mrb[0].mxu0 %v4145
  %v4929 = vpop.f32.mrb[0].mxu0
  %v4930 = vadd.f32 %v4537, %v4929
  %v4931 = vpop.f32.mrb[0].mxu0
  %4932 = vmatprep.mubr.f32.mxu0 %v4283
  %4933 = vmatmul.mubr.f32.gmra.mrb[0].mxu0 %v4146
  %v4934 = vpop.f32.mrb[0].mxu0
  %v4935 = vadd.f32 %v4542, %v4934
  %v4936 = vpop.f32.mrb[0].mxu0
  %4937 = vmatprep.mubr.f32.mxu0 %v4285
  %4938 = vmatmul.mubr.f32.gmra.mrb[0].mxu0 %v4147
  %v4939 = vpop.f32.mrb[0].mxu0
  %v4940 = vadd.f32 %v4547, %v4939
  %v4941 = vpop.f32.mrb[0].mxu0
  %4942 = vmatprep.mubr.f32.mxu0 %v4287
  %4943 = vmatmul.mubr.f32.gmra.mrb[0].mxu0 %v4148
  %v4944 = vpop.f32.mrb[0].mxu0
  %v4945 = vadd.f32 %v4552, %v4944
  %v4946 = vpop.f32.mrb[0].mxu0
  %4947 = vmatprep.mubr.f32.mxu0 %v4289
  %4948 = vmatmul.mubr.f32.gmra.mrb[0].mxu0 %v4149
  %v4949 = vpop.f32.mrb[0].mxu0
  %v4950 = vadd.f32 %v4557, %v4949
  %v4951 = vpop.f32.mrb[0].mxu0
  %4952 = vmatprep.mubr.f32.mxu0 %v4291
  %4953 = vmatmul.mubr.f32.gmra.mrb[0].mxu0 %v4150
  %v4954 = vpop.f32.mrb[0].mxu0
  %v4955 = vadd.f32 %v4562, %v4954
  %v4956 = vpop.f32.mrb[0].mxu0
  %4957 = vmatprep.mubr.f32.mxu0 %v4293
  %4958 = vmatmul.mubr.f32.gmra.mrb[0].mxu0 %v4151
  %v4959 = vpop.f32.mrb[0].mxu0
  %v4960 = vadd.f32 %v4567, %v4959
  %v4961 = vpop.f32.mrb[0].mxu0
  %4962 = vmatprep.mubr.f32.mxu0 %v4295
  %4963 = vmatmul.mubr.f32.gmra.mrb[0].mxu0 %v4152
  %v4964 = vpop.f32.mrb[0].mxu0
  %v4965 = vadd.f32 %v4572, %v4964
  %v4966 = vpop.f32.mrb[0].mxu0
  %4967 = vmatprep.mubr.f32.mxu0 %v4297
  %4968 = vmatmul.mubr.f32.gmra.mrb[0].mxu0 %v4153
  %v4969 = vpop.f32.mrb[0].mxu0
  %v4970 = vadd.f32 %v4577, %v4969
  %v4971 = vpop.f32.mrb[0].mxu0
  %4972 = vmatprep.mubr.f32.mxu0 %v4299
  %4973 = vmatmul.mubr.f32.gmra.mrb[0].mxu0 %v4154
  %v4974 = vpop.f32.mrb[0].mxu0
  %v4975 = vadd.f32 %v4582, %v4974
  %v4976 = vpop.f32.mrb[0].mxu0
  %4977 = vmatprep.mubr.f32.mxu0 %v4301
  %4978 = vmatmul.mubr.f32.gmra.mrb[0].mxu0 %v4155
  %v4979 = vpop.f32.mrb[0].mxu0
  %v4980 = vadd.f32 %v4587, %v4979
  %v4981 = vpop.f32.mrb[0].mxu0
  %4982 = vmatprep.mubr.f32.mxu0 %v4303
  %4983 = vmatmul.mubr.f32.gmra.mrb[0].mxu0 %v4156
  %v4984 = vpop.f32.mrb[0].mxu0
  %v4985 = vadd.f32 %v4592, %v4984
  %v4986 = vpop.f32.mrb[0].mxu0
  %4987 = vmatprep.mubr.f32.mxu0 %v4305
  %4988 = vmatmul.mubr.f32.gmra.mrb[0].mxu0 %v4157
  %v4989 = vpop.f32.mrb[0].mxu0
  %v4990 = vadd.f32 %v4597, %v4989
  %v4991 = vpop.f32.mrb[0].mxu0
  %4992 = vmatprep.mubr.f32.mxu0 %v4764
  %4993 = vmatmul.mubr.f32.gmra.mrb[0].mxu0 %v4162
  %v4994 = vpop.f32.mrb[0].mxu0
  %v4995 = vadd.f32 %v4602, %v4994
  %v4996 = vpop.f32.mrb[0].mxu0
  %4997 = vmatprep.mubr.f32.mxu0 %v4766
  %4998 = vmatmul.mubr.f32.gmra.mrb[0].mxu0 %v4163
  %v4999 = vpop.f32.mrb[0].mxu0
  %v5000 = vadd.f32 %v4607, %v4999
  %v5001 = vpop.f32.mrb[0].mxu0
  %5002 = vmatprep.mubr.f32.mxu0 %v4311
  %5003 = vmatmul.mubr.f32.gmra.mrb[0].mxu0 %v4164
  %v5004 = vpop.f32.mrb[0].mxu0
  %v5005 = vadd.f32 %v4612, %v5004
  %v5006 = vpop.f32.mrb[0].mxu0
  %5007 = vmatprep.mubr.f32.mxu0 %v4313
  %5008 = vmatmul.mubr.f32.gmra.mrb[0].mxu0 %v4165
  %v5009 = vpop.f32.mrb[0].mxu0
  %v5010 = vadd.f32 %v4617, %v5009
  %v5011 = vpop.f32.mrb[0].mxu0
  %5012 = vmatprep.mubr.f32.mxu0 %v4315
  %5013 = vmatmul.mubr.f32.gmra.mrb[0].mxu0 %v4166
  %v5014 = vpop.f32.mrb[0].mxu0
  %v5015 = vadd.f32 %v4622, %v5014
  %v5016 = vpop.f32.mrb[0].mxu0
  %5017 = vmatprep.mubr.f32.mxu0 %v4317
  %5018 = vmatmul.mubr.f32.gmra.mrb[0].mxu0 %v4167
  %v5019 = vpop.f32.mrb[0].mxu0
  %v5020 = vadd.f32 %v4627, %v5019
  %v5021 = vpop.f32.mrb[0].mxu0
  %5022 = vmatprep.mubr.f32.mxu0 %v4319
  %5023 = vmatmul.mubr.f32.gmra.mrb[0].mxu0 %v4168
  %v5024 = vpop.f32.mrb[0].mxu0
  %v5025 = vadd.f32 %v4632, %v5024
  %v5026 = vpop.f32.mrb[0].mxu0
  %5027 = vmatprep.mubr.f32.mxu0 %v4321
  %5028 = vmatmul.mubr.f32.gmra.mrb[0].mxu0 %v4169
  %v5029 = vpop.f32.mrb[0].mxu0
  %v5030 = vadd.f32 %v4637, %v5029
  %v5031 = vpop.f32.mrb[0].mxu0
  %5032 = vmatprep.mubr.f32.mxu0 %v4323
  %5033 = vmatmul.mubr.f32.gmra.mrb[0].mxu0 %v4170
  %v5034 = vpop.f32.mrb[0].mxu0
  %v5035 = vadd.f32 %v4642, %v5034
  %v5036 = vpop.f32.mrb[0].mxu0
  %5037 = vmatprep.mubr.f32.mxu0 %v4325
  %5038 = vmatmul.mubr.f32.gmra.mrb[0].mxu0 %v4171
  %v5039 = vpop.f32.mrb[0].mxu0
  %v5040 = vadd.f32 %v4647, %v5039
  %v5041 = vpop.f32.mrb[0].mxu0
  %5042 = vmatprep.mubr.f32.mxu0 %v4327
  %5043 = vmatmul.mubr.f32.gmra.mrb[0].mxu0 %v4172
  %v5044 = vpop.f32.mrb[0].mxu0
  %v5045 = vadd.f32 %v4652, %v5044
  %v5046 = vpop.f32.mrb[0].mxu0
  %5047 = vmatprep.mubr.f32.mxu0 %v4329
  %5048 = vmatmul.mubr.f32.gmra.mrb[0].mxu0 %v4173
  %v5049 = vpop.f32.mrb[0].mxu0
  %v5050 = vadd.f32 %v4657, %v5049
  %v5051 = vpop.f32.mrb[0].mxu0
  %5052 = vmatprep.mubr.f32.mxu0 %v4331
  %5053 = vmatmul.mubr.f32.gmra.mrb[0].mxu0 %v4174
  %v5054 = vpop.f32.mrb[0].mxu0
  %v5055 = vadd.f32 %v4662, %v5054
  %v5056 = vpop.f32.mrb[0].mxu0
  %5057 = vmatprep.mubr.f32.mxu0 %v4333
  %5058 = vmatmul.mubr.f32.gmra.mrb[0].mxu0 %v4175
  %v5059 = vpop.f32.mrb[0].mxu0
  %v5060 = vadd.f32 %v4667, %v5059
  %v5061 = vpop.f32.mrb[0].mxu0
  %5062 = vmatprep.mubr.f32.mxu0 %v4335
  %5063 = vmatmul.mubr.f32.gmra.mrb[0].mxu0 %v4176
  %v5064 = vpop.f32.mrb[0].mxu0
  %v5065 = vadd.f32 %v4672, %v5064
  %v5066 = vpop.f32.mrb[0].mxu0
  %5067 = vmatprep.mubr.f32.mxu0 %v4337
  %5068 = vmatmul.mubr.f32.gmra.mrb[0].mxu0 %v4177
  %v5069 = vpop.f32.mrb[0].mxu0
  %v5070 = vadd.f32 %v4677, %v5069
  %v5071 = vpop.f32.mrb[0].mxu0
  %5072 = vmatprep.mubr.f32.mxu0 %v4339
  %5073 = vmatmul.mubr.f32.gmra.mrb[0].mxu0 %v4178
  %v5074 = vpop.f32.mrb[0].mxu0
  %v5075 = vadd.f32 %v4682, %v5074
  %v5076 = vpop.f32.mrb[0].mxu0
  %5077 = vmatprep.mubr.f32.mxu0 %v4341
  %5078 = vmatmul.mubr.f32.gmra.mrb[0].mxu0 %v4179
  %v5079 = vpop.f32.mrb[0].mxu0
  %v5080 = vadd.f32 %v4687, %v5079
  %v5081 = vpop.f32.mrb[0].mxu0
  %5082 = vmatprep.mubr.f32.mxu0 %v4343
  %5083 = vmatmul.mubr.f32.gmra.mrb[0].mxu0 %v4180
  %v5084 = vpop.f32.mrb[0].mxu0
  %v5085 = vadd.f32 %v4692, %v5084
  %v5086 = vpop.f32.mrb[0].mxu0
  %5087 = vmatprep.mubr.f32.mxu0 %v4345
  %5088 = vmatmul.mubr.f32.gmra.mrb[0].mxu0 %v4181
  %v5089 = vpop.f32.mrb[0].mxu0
  %v5090 = vadd.f32 %v4697, %v5089
  %v5091 = vpop.f32.mrb[0].mxu0
  %5092 = vmatprep.mubr.f32.mxu0 %v4347
  %5093 = vmatmul.mubr.f32.gmra.mrb[0].mxu0 %v4182
  %v5094 = vpop.f32.mrb[0].mxu0
  %v5095 = vadd.f32 %v4702, %v5094
  %v5096 = vpop.f32.mrb[0].mxu0
  %5097 = vmatprep.mubr.f32.mxu0 %v4349
  %5098 = vmatmul.mubr.f32.gmra.mrb[0].mxu0 %v4183
  %v5099 = vpop.f32.mrb[0].mxu0
  %v5100 = vadd.f32 %v4707, %v5099
  %v5101 = vpop.f32.mrb[0].mxu0
  %5102 = vmatprep.mubr.f32.mxu0 %v4351
  %5103 = vmatmul.mubr.f32.gmra.mrb[0].mxu0 %v4184
  %v5104 = vpop.f32.mrb[0].mxu0
  %v5105 = vadd.f32 %v4712, %v5104
  %v5106 = vpop.f32.mrb[0].mxu0
  %5107 = vmatprep.mubr.f32.mxu0 %v4353
  %5108 = vmatmul.mubr.f32.gmra.mrb[0].mxu0 %v4185
  %v5109 = vpop.f32.mrb[0].mxu0
  %v5110 = vadd.f32 %v4717, %v5109
  %v5111 = vpop.f32.mrb[0].mxu0
  %5112 = vmatprep.mubr.f32.mxu0 %v4355
  %5113 = vmatmul.mubr.f32.gmra.mrb[0].mxu0 %v4186
  %v5114 = vpop.f32.mrb[0].mxu0
  %v5115 = vadd.f32 %v4722, %v5114
  %v5116 = vpop.f32.mrb[0].mxu0
  %5117 = vmatprep.mubr.f32.mxu0 %v4357
  %5118 = vmatmul.mubr.f32.gmra.mrb[0].mxu0 %v4187
  %v5119 = vpop.f32.mrb[0].mxu0
  %v5120 = vadd.f32 %v4727, %v5119
  %v5121 = vpop.f32.mrb[0].mxu0
  %5122 = vmatprep.mubr.f32.mxu0 %v4359
  %5123 = vmatmul.mubr.f32.gmra.mrb[0].mxu0 %v4188
  %v5124 = vpop.f32.mrb[0].mxu0
  %v5125 = vadd.f32 %v4732, %v5124
  %v5126 = vpop.f32.mrb[0].mxu0
  %5127 = vmatprep.mubr.f32.mxu0 %v4361
  %5128 = vmatmul.mubr.f32.gmra.mrb[0].mxu0 %v4189
  %v5129 = vpop.f32.mrb[0].mxu0
  %v5130 = vadd.f32 %v4737, %v5129
  %v5131 = vpop.f32.mrb[0].mxu0
  %5132 = vmatprep.mubr.f32.mxu0 %v4363
  %5133 = vmatmul.mubr.f32.gmra.mrb[0].mxu0 %v4190
  %v5134 = vpop.f32.mrb[0].mxu0
  %v5135 = vadd.f32 %v4742, %v5134
  %v5136 = vpop.f32.mrb[0].mxu0
  %5137 = vmatprep.mubr.f32.mxu0 %v4365
  %5138 = vmatmul.mubr.f32.gmra.mrb[0].mxu0 %v4191
  %v5139 = vpop.f32.mrb[0].mxu0
  %v5140 = vadd.f32 %v4747, %v5139
  %v5141 = vpop.f32.mrb[0].mxu0
  %5142 = vmatprep.mubr.f32.mxu0 %v4367
  %5143 = vmatmul.mubr.f32.gmra.mrb[0].mxu0 %v4192
  %v5144 = vpop.f32.mrb[0].mxu0
  %v5145 = vadd.f32 %v4752, %v5144
  %v5146 = vpop.f32.mrb[0].mxu0
  %5147 = vmatprep.mubr.f32.mxu0 %v4369
  %5148 = vmatmul.mubr.f32.gmra.mrb[0].mxu0 %v4193
  %v5149 = vpop.f32.mrb[0].mxu0
  %v5150 = vadd.f32 %v4757, %v5149
  %v5151 = vpop.f32.mrb[0].mxu0
  %5152 = vdwg.mxu0
  %s5153 = scalar_lea.vmem %s4, 384
  %v5154 = vld [vmem:[%s5153] sm:$0xff]
  %v5155 = vld [vmem:[%s5153 + $0x8] sm:$0xff]
  %v5156 = vld [vmem:[%s5153 + $0x10] sm:$0xff]
  %v5157 = vld [vmem:[%s5153 + $0x18] sm:$0xff]
  %v5158 = vld [vmem:[%s5153 + $0x20] sm:$0xff]
  %v5159 = vld [vmem:[%s5153 + $0x28] sm:$0xff]
  %v5160 = vld [vmem:[%s5153 + $0x30] sm:$0xff]
  %v5161 = vld [vmem:[%s5153 + $0x38] sm:$0xff]
  %v5162 = vld [vmem:[%s5153 + $0x40] sm:$0xff]
  %v5163 = vld [vmem:[%s5153 + $0x48] sm:$0xff]
  %v5164 = vld [vmem:[%s5153 + $0x50] sm:$0xff]
  %v5165 = vld [vmem:[%s5153 + $0x58] sm:$0xff]
  %v5166 = vld [vmem:[%s5153 + $0x60] sm:$0xff]
  %v5167 = vld [vmem:[%s5153 + $0x68] sm:$0xff]
  %v5168 = vld [vmem:[%s5153 + $0x70] sm:$0xff]
  %v5169 = vld [vmem:[%s5153 + $0x78] sm:$0xff]
  %v5170 = vld [vmem:[%s5153 + $0x80] sm:$0xff]
  %v5171 = vld [vmem:[%s5153 + $0x88] sm:$0xff]
  %v5172 = vld [vmem:[%s5153 + $0x90] sm:$0xff]
  %v5173 = vld [vmem:[%s5153 + $0x98] sm:$0xff]
  %v5174 = vld [vmem:[%s5153 + $0xa0] sm:$0xff]
  %v5175 = vld [vmem:[%s5153 + $0xa8] sm:$0xff]
  %v5176 = vld [vmem:[%s5153 + $0xb0] sm:$0xff]
  %v5177 = vld [vmem:[%s5153 + $0xb8] sm:$0xff]
  %v5178 = vsel %vm151, %v4033, 0
  %v5180 = vsel %vm151, %v4035, 0
  %v5182 = vsel %vm151, %v4123, 0
  %v5184 = vsel %vm151, %v4125, 0
  %5186 = vmatprep.subr.mxu0 0.0
  %5187 = vmatpush1.msra.mxu0 %v5154
  %5188 = vmatprep.subr.mxu0 0.0
  %5189 = vmatpush1.msra.mxu0 %v5155
  %5190 = vmatprep.subr.mxu0 0.0
  %5191 = vmatpush1.msra.mxu0 %v5156
  %5192 = vmatprep.subr.mxu0 0.0
  %5193 = vmatpush1.msra.mxu0 %v5157
  %5194 = vmatprep.subr.mxu0 0.0
  %5195 = vmatpush1.msra.mxu0 %v5158
  %5196 = vmatprep.subr.mxu0 0.0
  %5197 = vmatpush1.msra.mxu0 %v5159
  %5198 = vmatprep.subr.mxu0 0.0
  %5199 = vmatpush1.msra.mxu0 %v5160
  %5200 = vmatprep.subr.mxu0 0.0
  %5201 = vmatpush1.msra.mxu0 %v5161
  %5202 = vmatprep.subr.mxu0 0.0
  %5203 = vmatpush1.msra.mxu0 %v5162
  %5204 = vmatprep.subr.mxu0 0.0
  %5205 = vmatpush1.msra.mxu0 %v5163
  %5206 = vmatprep.subr.mxu0 0.0
  %5207 = vmatpush1.msra.mxu0 %v5164
  %5208 = vmatprep.subr.mxu0 0.0
  %5209 = vmatpush1.msra.mxu0 %v5165
  %5210 = vmatprep.subr.mxu0 0.0
  %5211 = vmatpush1.msra.mxu0 %v5166
  %5212 = vmatprep.subr.mxu0 0.0
  %5213 = vmatpush1.msra.mxu0 %v5167
  %5214 = vmatprep.subr.mxu0 0.0
  %5215 = vmatpush1.msra.mxu0 %v5168
  %5216 = vmatprep.subr.mxu0 0.0
  %5217 = vmatpush1.msra.mxu0 %v5169
  %5218 = vmatprep.subr.mxu0 0.0
  %5219 = vmatpush1.msra.mxu0 %v5170
  %5220 = vmatprep.subr.mxu0 0.0
  %5221 = vmatpush1.msra.mxu0 %v5171
  %5222 = vmatprep.subr.mxu0 0.0
  %5223 = vmatpush1.msra.mxu0 %v5172
  %5224 = vmatprep.subr.mxu0 0.0
  %5225 = vmatpush1.msra.mxu0 %v5173
  %5226 = vmatprep.subr.mxu0 0.0
  %5227 = vmatpush1.msra.mxu0 %v5174
  %5228 = vmatprep.subr.mxu0 0.0
  %5229 = vmatpush1.msra.mxu0 %v5175
  %5230 = vmatprep.subr.mxu0 0.0
  %5231 = vmatpush1.msra.mxu0 %v5176
  %5232 = vmatprep.subr.mxu0 0.0
  %5233 = vmatpush1.msra.mxu0 %v5177
  %5234 = vmatprep.subr.mxu0 0.0
  %5235 = vmatpush1.msra.mxu0 0.0
  %5236 = vmatprep.subr.mxu0 0.0
  %5237 = vmatpush1.msra.mxu0 0.0
  %5238 = vmatprep.subr.mxu0 0.0
  %5239 = vmatpush1.msra.mxu0 0.0
  %5240 = vmatprep.subr.mxu0 0.0
  %5241 = vmatpush1.msra.mxu0 0.0
  %5242 = vmatprep.subr.mxu0 0.0
  %5243 = vmatpush1.msra.mxu0 0.0
  %5244 = vmatprep.subr.mxu0 0.0
  %5245 = vmatpush1.msra.mxu0 0.0
  %5246 = vmatprep.subr.mxu0 0.0
  %5247 = vmatpush1.msra.mxu0 0.0
  %5248 = vmatprep.subr.mxu0 0.0
  %5249 = vmatpush1.msra.mxu0 0.0
  %5250 = vmatprep.mubr.f32.mxu0 %v4251
  %5251 = vmatmul.mubr.f32.gmra.mrb[0].mxu0 %v4130
  %v5252 = vpop.f32.mrb[0].mxu0
  %v5253 = vadd.f32 0.0, %v5252
  %v5254 = vpop.f32.mrb[0].mxu0
  %5255 = vmatprep.mubr.f32.mxu0 %v4253
  %5256 = vmatmul.mubr.f32.gmra.mrb[0].mxu0 %v4131
  %v5257 = vpop.f32.mrb[0].mxu0
  %v5258 = vadd.f32 0.0, %v5257
  %v5259 = vpop.f32.mrb[0].mxu0
  %5260 = vmatprep.mubr.f32.mxu0 %v4255
  %5261 = vmatmul.mubr.f32.gmra.mrb[0].mxu0 %v4132
  %v5262 = vpop.f32.mrb[0].mxu0
  %v5263 = vadd.f32 0.0, %v5262
  %v5264 = vpop.f32.mrb[0].mxu0
  %5265 = vmatprep.mubr.f32.mxu0 %v4257
  %5266 = vmatmul.mubr.f32.gmra.mrb[0].mxu0 %v4133
  %v5267 = vpop.f32.mrb[0].mxu0
  %v5268 = vadd.f32 0.0, %v5267
  %v5269 = vpop.f32.mrb[0].mxu0
  %5270 = vmatprep.mubr.f32.mxu0 %v4259
  %5271 = vmatmul.mubr.f32.gmra.mrb[0].mxu0 %v4134
  %v5272 = vpop.f32.mrb[0].mxu0
  %v5273 = vadd.f32 0.0, %v5272
  %v5274 = vpop.f32.mrb[0].mxu0
  %5275 = vmatprep.mubr.f32.mxu0 %v4261
  %5276 = vmatmul.mubr.f32.gmra.mrb[0].mxu0 %v4135
  %v5277 = vpop.f32.mrb[0].mxu0
  %v5278 = vadd.f32 0.0, %v5277
  %v5279 = vpop.f32.mrb[0].mxu0
  %5280 = vmatprep.mubr.f32.mxu0 %v4263
  %5281 = vmatmul.mubr.f32.gmra.mrb[0].mxu0 %v4136
  %v5282 = vpop.f32.mrb[0].mxu0
  %v5283 = vadd.f32 0.0, %v5282
  %v5284 = vpop.f32.mrb[0].mxu0
  %5285 = vmatprep.mubr.f32.mxu0 %v4265
  %5286 = vmatmul.mubr.f32.gmra.mrb[0].mxu0 %v4137
  %v5287 = vpop.f32.mrb[0].mxu0
  %v5288 = vadd.f32 0.0, %v5287
  %v5289 = vpop.f32.mrb[0].mxu0
  %5290 = vmatprep.mubr.f32.mxu0 %v4267
  %5291 = vmatmul.mubr.f32.gmra.mrb[0].mxu0 %v4138
  %v5292 = vpop.f32.mrb[0].mxu0
  %v5293 = vadd.f32 0.0, %v5292
  %v5294 = vpop.f32.mrb[0].mxu0
  %5295 = vmatprep.mubr.f32.mxu0 %v4269
  %5296 = vmatmul.mubr.f32.gmra.mrb[0].mxu0 %v4139
  %v5297 = vpop.f32.mrb[0].mxu0
  %v5298 = vadd.f32 0.0, %v5297
  %v5299 = vpop.f32.mrb[0].mxu0
  %5300 = vmatprep.mubr.f32.mxu0 %v4271
  %5301 = vmatmul.mubr.f32.gmra.mrb[0].mxu0 %v4140
  %v5302 = vpop.f32.mrb[0].mxu0
  %v5303 = vadd.f32 0.0, %v5302
  %v5304 = vpop.f32.mrb[0].mxu0
  %5305 = vmatprep.mubr.f32.mxu0 %v4273
  %5306 = vmatmul.mubr.f32.gmra.mrb[0].mxu0 %v4141
  %v5307 = vpop.f32.mrb[0].mxu0
  %v5308 = vadd.f32 0.0, %v5307
  %v5309 = vpop.f32.mrb[0].mxu0
  %5310 = vmatprep.mubr.f32.mxu0 %v4275
  %5311 = vmatmul.mubr.f32.gmra.mrb[0].mxu0 %v4142
  %v5312 = vpop.f32.mrb[0].mxu0
  %v5313 = vadd.f32 0.0, %v5312
  %v5314 = vpop.f32.mrb[0].mxu0
  %5315 = vmatprep.mubr.f32.mxu0 %v4277
  %5316 = vmatmul.mubr.f32.gmra.mrb[0].mxu0 %v4143
  %v5317 = vpop.f32.mrb[0].mxu0
  %v5318 = vadd.f32 0.0, %v5317
  %v5319 = vpop.f32.mrb[0].mxu0
  %5320 = vmatprep.mubr.f32.mxu0 %v4279
  %5321 = vmatmul.mubr.f32.gmra.mrb[0].mxu0 %v4144
  %v5322 = vpop.f32.mrb[0].mxu0
  %v5323 = vadd.f32 0.0, %v5322
  %v5324 = vpop.f32.mrb[0].mxu0
  %5325 = vmatprep.mubr.f32.mxu0 %v4281
  %5326 = vmatmul.mubr.f32.gmra.mrb[0].mxu0 %v4145
  %v5327 = vpop.f32.mrb[0].mxu0
  %v5328 = vadd.f32 0.0, %v5327
  %v5329 = vpop.f32.mrb[0].mxu0
  %5330 = vmatprep.mubr.f32.mxu0 %v4283
  %5331 = vmatmul.mubr.f32.gmra.mrb[0].mxu0 %v4146
  %v5332 = vpop.f32.mrb[0].mxu0
  %v5333 = vadd.f32 0.0, %v5332
  %v5334 = vpop.f32.mrb[0].mxu0
  %5335 = vmatprep.mubr.f32.mxu0 %v4285
  %5336 = vmatmul.mubr.f32.gmra.mrb[0].mxu0 %v4147
  %v5337 = vpop.f32.mrb[0].mxu0
  %v5338 = vadd.f32 0.0, %v5337
  %v5339 = vpop.f32.mrb[0].mxu0
  %5340 = vmatprep.mubr.f32.mxu0 %v4287
  %5341 = vmatmul.mubr.f32.gmra.mrb[0].mxu0 %v4148
  %v5342 = vpop.f32.mrb[0].mxu0
  %v5343 = vadd.f32 0.0, %v5342
  %v5344 = vpop.f32.mrb[0].mxu0
  %5345 = vmatprep.mubr.f32.mxu0 %v4289
  %5346 = vmatmul.mubr.f32.gmra.mrb[0].mxu0 %v4149
  %v5347 = vpop.f32.mrb[0].mxu0
  %v5348 = vadd.f32 0.0, %v5347
  %v5349 = vpop.f32.mrb[0].mxu0
  %5350 = vmatprep.mubr.f32.mxu0 %v4291
  %5351 = vmatmul.mubr.f32.gmra.mrb[0].mxu0 %v4150
  %v5352 = vpop.f32.mrb[0].mxu0
  %v5353 = vadd.f32 0.0, %v5352
  %v5354 = vpop.f32.mrb[0].mxu0
  %5355 = vmatprep.mubr.f32.mxu0 %v4293
  %5356 = vmatmul.mubr.f32.gmra.mrb[0].mxu0 %v4151
  %v5357 = vpop.f32.mrb[0].mxu0
  %v5358 = vadd.f32 0.0, %v5357
  %v5359 = vpop.f32.mrb[0].mxu0
  %5360 = vmatprep.mubr.f32.mxu0 %v4295
  %5361 = vmatmul.mubr.f32.gmra.mrb[0].mxu0 %v4152
  %v5362 = vpop.f32.mrb[0].mxu0
  %v5363 = vadd.f32 0.0, %v5362
  %v5364 = vpop.f32.mrb[0].mxu0
  %5365 = vmatprep.mubr.f32.mxu0 %v4297
  %5366 = vmatmul.mubr.f32.gmra.mrb[0].mxu0 %v4153
  %v5367 = vpop.f32.mrb[0].mxu0
  %v5368 = vadd.f32 0.0, %v5367
  %v5369 = vpop.f32.mrb[0].mxu0
  %5370 = vmatprep.mubr.f32.mxu0 %v4299
  %5371 = vmatmul.mubr.f32.gmra.mrb[0].mxu0 %v4154
  %v5372 = vpop.f32.mrb[0].mxu0
  %v5373 = vadd.f32 0.0, %v5372
  %v5374 = vpop.f32.mrb[0].mxu0
  %5375 = vmatprep.mubr.f32.mxu0 %v4301
  %5376 = vmatmul.mubr.f32.gmra.mrb[0].mxu0 %v4155
  %v5377 = vpop.f32.mrb[0].mxu0
  %v5378 = vadd.f32 0.0, %v5377
  %v5379 = vpop.f32.mrb[0].mxu0
  %5380 = vmatprep.mubr.f32.mxu0 %v4303
  %5381 = vmatmul.mubr.f32.gmra.mrb[0].mxu0 %v4156
  %v5382 = vpop.f32.mrb[0].mxu0
  %v5383 = vadd.f32 0.0, %v5382
  %v5384 = vpop.f32.mrb[0].mxu0
  %5385 = vmatprep.mubr.f32.mxu0 %v4305
  %5386 = vmatmul.mubr.f32.gmra.mrb[0].mxu0 %v4157
  %v5387 = vpop.f32.mrb[0].mxu0
  %v5388 = vadd.f32 0.0, %v5387
  %v5389 = vpop.f32.mrb[0].mxu0
  %5390 = vmatprep.mubr.f32.mxu0 %v4307
  %5391 = vmatmul.mubr.f32.gmra.mrb[0].mxu0 %v4158
  %v5392 = vpop.f32.mrb[0].mxu0
  %v5393 = vadd.f32 0.0, %v5392
  %v5394 = vpop.f32.mrb[0].mxu0
  %5395 = vmatprep.mubr.f32.mxu0 %v4309
  %5396 = vmatmul.mubr.f32.gmra.mrb[0].mxu0 %v4159
  %v5397 = vpop.f32.mrb[0].mxu0
  %v5398 = vadd.f32 0.0, %v5397
  %v5399 = vpop.f32.mrb[0].mxu0
  %5400 = vmatprep.mubr.f32.mxu0 %v5178
  %5401 = vmatmul.mubr.f32.gmra.mrb[0].mxu0 %v4160
  %v5402 = vpop.f32.mrb[0].mxu0
  %v5403 = vadd.f32 0.0, %v5402
  %v5404 = vpop.f32.mrb[0].mxu0
  %5405 = vmatprep.mubr.f32.mxu0 %v5180
  %5406 = vmatmul.mubr.f32.gmra.mrb[0].mxu0 %v4161
  %v5407 = vpop.f32.mrb[0].mxu0
  %v5408 = vadd.f32 0.0, %v5407
  %v5409 = vpop.f32.mrb[0].mxu0
  %5410 = vmatprep.mubr.f32.mxu0 %v4315
  %5411 = vmatmul.mubr.f32.gmra.mrb[0].mxu0 %v4166
  %v5412 = vpop.f32.mrb[0].mxu0
  %v5413 = vadd.f32 0.0, %v5412
  %v5414 = vpop.f32.mrb[0].mxu0
  %5415 = vmatprep.mubr.f32.mxu0 %v4317
  %5416 = vmatmul.mubr.f32.gmra.mrb[0].mxu0 %v4167
  %v5417 = vpop.f32.mrb[0].mxu0
  %v5418 = vadd.f32 0.0, %v5417
  %v5419 = vpop.f32.mrb[0].mxu0
  %5420 = vmatprep.mubr.f32.mxu0 %v4319
  %5421 = vmatmul.mubr.f32.gmra.mrb[0].mxu0 %v4168
  %v5422 = vpop.f32.mrb[0].mxu0
  %v5423 = vadd.f32 0.0, %v5422
  %v5424 = vpop.f32.mrb[0].mxu0
  %5425 = vmatprep.mubr.f32.mxu0 %v4321
  %5426 = vmatmul.mubr.f32.gmra.mrb[0].mxu0 %v4169
  %v5427 = vpop.f32.mrb[0].mxu0
  %v5428 = vadd.f32 0.0, %v5427
  %v5429 = vpop.f32.mrb[0].mxu0
  %5430 = vmatprep.mubr.f32.mxu0 %v4323
  %5431 = vmatmul.mubr.f32.gmra.mrb[0].mxu0 %v4170
  %v5432 = vpop.f32.mrb[0].mxu0
  %v5433 = vadd.f32 0.0, %v5432
  %v5434 = vpop.f32.mrb[0].mxu0
  %5435 = vmatprep.mubr.f32.mxu0 %v4325
  %5436 = vmatmul.mubr.f32.gmra.mrb[0].mxu0 %v4171
  %v5437 = vpop.f32.mrb[0].mxu0
  %v5438 = vadd.f32 0.0, %v5437
  %v5439 = vpop.f32.mrb[0].mxu0
  %5440 = vmatprep.mubr.f32.mxu0 %v4327
  %5441 = vmatmul.mubr.f32.gmra.mrb[0].mxu0 %v4172
  %v5442 = vpop.f32.mrb[0].mxu0
  %v5443 = vadd.f32 0.0, %v5442
  %v5444 = vpop.f32.mrb[0].mxu0
  %5445 = vmatprep.mubr.f32.mxu0 %v4329
  %5446 = vmatmul.mubr.f32.gmra.mrb[0].mxu0 %v4173
  %v5447 = vpop.f32.mrb[0].mxu0
  %v5448 = vadd.f32 0.0, %v5447
  %v5449 = vpop.f32.mrb[0].mxu0
  %5450 = vmatprep.mubr.f32.mxu0 %v4331
  %5451 = vmatmul.mubr.f32.gmra.mrb[0].mxu0 %v4174
  %v5452 = vpop.f32.mrb[0].mxu0
  %v5453 = vadd.f32 0.0, %v5452
  %v5454 = vpop.f32.mrb[0].mxu0
  %5455 = vmatprep.mubr.f32.mxu0 %v4333
  %5456 = vmatmul.mubr.f32.gmra.mrb[0].mxu0 %v4175
  %v5457 = vpop.f32.mrb[0].mxu0
  %v5458 = vadd.f32 0.0, %v5457
  %v5459 = vpop.f32.mrb[0].mxu0
  %5460 = vmatprep.mubr.f32.mxu0 %v4335
  %5461 = vmatmul.mubr.f32.gmra.mrb[0].mxu0 %v4176
  %v5462 = vpop.f32.mrb[0].mxu0
  %v5463 = vadd.f32 0.0, %v5462
  %v5464 = vpop.f32.mrb[0].mxu0
  %5465 = vmatprep.mubr.f32.mxu0 %v4337
  %5466 = vmatmul.mubr.f32.gmra.mrb[0].mxu0 %v4177
  %v5467 = vpop.f32.mrb[0].mxu0
  %v5468 = vadd.f32 0.0, %v5467
  %v5469 = vpop.f32.mrb[0].mxu0
  %5470 = vmatprep.mubr.f32.mxu0 %v4339
  %5471 = vmatmul.mubr.f32.gmra.mrb[0].mxu0 %v4178
  %v5472 = vpop.f32.mrb[0].mxu0
  %v5473 = vadd.f32 0.0, %v5472
  %v5474 = vpop.f32.mrb[0].mxu0
  %5475 = vmatprep.mubr.f32.mxu0 %v4341
  %5476 = vmatmul.mubr.f32.gmra.mrb[0].mxu0 %v4179
  %v5477 = vpop.f32.mrb[0].mxu0
  %v5478 = vadd.f32 0.0, %v5477
  %v5479 = vpop.f32.mrb[0].mxu0
  %5480 = vmatprep.mubr.f32.mxu0 %v4343
  %5481 = vmatmul.mubr.f32.gmra.mrb[0].mxu0 %v4180
  %v5482 = vpop.f32.mrb[0].mxu0
  %v5483 = vadd.f32 0.0, %v5482
  %v5484 = vpop.f32.mrb[0].mxu0
  %5485 = vmatprep.mubr.f32.mxu0 %v4345
  %5486 = vmatmul.mubr.f32.gmra.mrb[0].mxu0 %v4181
  %v5487 = vpop.f32.mrb[0].mxu0
  %v5488 = vadd.f32 0.0, %v5487
  %v5489 = vpop.f32.mrb[0].mxu0
  %5490 = vmatprep.mubr.f32.mxu0 %v4347
  %5491 = vmatmul.mubr.f32.gmra.mrb[0].mxu0 %v4182
  %v5492 = vpop.f32.mrb[0].mxu0
  %v5493 = vadd.f32 0.0, %v5492
  %v5494 = vpop.f32.mrb[0].mxu0
  %5495 = vmatprep.mubr.f32.mxu0 %v4349
  %5496 = vmatmul.mubr.f32.gmra.mrb[0].mxu0 %v4183
  %v5497 = vpop.f32.mrb[0].mxu0
  %v5498 = vadd.f32 0.0, %v5497
  %v5499 = vpop.f32.mrb[0].mxu0
  %5500 = vmatprep.mubr.f32.mxu0 %v4351
  %5501 = vmatmul.mubr.f32.gmra.mrb[0].mxu0 %v4184
  %v5502 = vpop.f32.mrb[0].mxu0
  %v5503 = vadd.f32 0.0, %v5502
  %v5504 = vpop.f32.mrb[0].mxu0
  %5505 = vmatprep.mubr.f32.mxu0 %v4353
  %5506 = vmatmul.mubr.f32.gmra.mrb[0].mxu0 %v4185
  %v5507 = vpop.f32.mrb[0].mxu0
  %v5508 = vadd.f32 0.0, %v5507
  %v5509 = vpop.f32.mrb[0].mxu0
  %5510 = vmatprep.mubr.f32.mxu0 %v4355
  %5511 = vmatmul.mubr.f32.gmra.mrb[0].mxu0 %v4186
  %v5512 = vpop.f32.mrb[0].mxu0
  %v5513 = vadd.f32 0.0, %v5512
  %v5514 = vpop.f32.mrb[0].mxu0
  %5515 = vmatprep.mubr.f32.mxu0 %v4357
  %5516 = vmatmul.mubr.f32.gmra.mrb[0].mxu0 %v4187
  %v5517 = vpop.f32.mrb[0].mxu0
  %v5518 = vadd.f32 0.0, %v5517
  %v5519 = vpop.f32.mrb[0].mxu0
  %5520 = vmatprep.mubr.f32.mxu0 %v4359
  %5521 = vmatmul.mubr.f32.gmra.mrb[0].mxu0 %v4188
  %v5522 = vpop.f32.mrb[0].mxu0
  %v5523 = vadd.f32 0.0, %v5522
  %v5524 = vpop.f32.mrb[0].mxu0
  %5525 = vmatprep.mubr.f32.mxu0 %v4361
  %5526 = vmatmul.mubr.f32.gmra.mrb[0].mxu0 %v4189
  %v5527 = vpop.f32.mrb[0].mxu0
  %v5528 = vadd.f32 0.0, %v5527
  %v5529 = vpop.f32.mrb[0].mxu0
  %5530 = vmatprep.mubr.f32.mxu0 %v4363
  %5531 = vmatmul.mubr.f32.gmra.mrb[0].mxu0 %v4190
  %v5532 = vpop.f32.mrb[0].mxu0
  %v5533 = vadd.f32 0.0, %v5532
  %v5534 = vpop.f32.mrb[0].mxu0
  %5535 = vmatprep.mubr.f32.mxu0 %v4365
  %5536 = vmatmul.mubr.f32.gmra.mrb[0].mxu0 %v4191
  %v5537 = vpop.f32.mrb[0].mxu0
  %v5538 = vadd.f32 0.0, %v5537
  %v5539 = vpop.f32.mrb[0].mxu0
  %5540 = vmatprep.mubr.f32.mxu0 %v4367
  %5541 = vmatmul.mubr.f32.gmra.mrb[0].mxu0 %v4192
  %v5542 = vpop.f32.mrb[0].mxu0
  %v5543 = vadd.f32 0.0, %v5542
  %v5544 = vpop.f32.mrb[0].mxu0
  %5545 = vmatprep.mubr.f32.mxu0 %v4369
  %5546 = vmatmul.mubr.f32.gmra.mrb[0].mxu0 %v4193
  %v5547 = vpop.f32.mrb[0].mxu0
  %v5548 = vadd.f32 0.0, %v5547
  %v5549 = vpop.f32.mrb[0].mxu0
  %5550 = vmatprep.mubr.f32.mxu0 %v4371
  %5551 = vmatmul.mubr.f32.gmra.mrb[0].mxu0 %v4194
  %v5552 = vpop.f32.mrb[0].mxu0
  %v5553 = vadd.f32 0.0, %v5552
  %v5554 = vpop.f32.mrb[0].mxu0
  %5555 = vmatprep.mubr.f32.mxu0 %v4373
  %5556 = vmatmul.mubr.f32.gmra.mrb[0].mxu0 %v4195
  %v5557 = vpop.f32.mrb[0].mxu0
  %v5558 = vadd.f32 0.0, %v5557
  %v5559 = vpop.f32.mrb[0].mxu0
  %5560 = vmatprep.mubr.f32.mxu0 %v5182
  %5561 = vmatmul.mubr.f32.gmra.mrb[0].mxu0 %v4196
  %v5562 = vpop.f32.mrb[0].mxu0
  %v5563 = vadd.f32 0.0, %v5562
  %v5564 = vpop.f32.mrb[0].mxu0
  %5565 = vmatprep.mubr.f32.mxu0 %v5184
  %5566 = vmatmul.mubr.f32.gmra.mrb[0].mxu0 %v4197
  %v5567 = vpop.f32.mrb[0].mxu0
  %v5568 = vadd.f32 0.0, %v5567
  %v5569 = vpop.f32.mrb[0].mxu0
  %5570 = vdwg.mxu0
  %v5571 = vadd.f32 %v4835, %v5253
  %v5572 = vadd.f32 %v4840, %v5258
  %v5573 = vadd.f32 %v4845, %v5263
  %v5574 = vadd.f32 %v4850, %v5268
  %v5575 = vadd.f32 %v4855, %v5273
  %v5576 = vadd.f32 %v4860, %v5278
  %v5577 = vadd.f32 %v4865, %v5283
  %v5578 = vadd.f32 %v4870, %v5288
  %v5579 = vadd.f32 %v4875, %v5293
  %v5580 = vadd.f32 %v4880, %v5298
  %v5581 = vadd.f32 %v4885, %v5303
  %v5582 = vadd.f32 %v4890, %v5308
  %v5583 = vadd.f32 %v4895, %v5313
  %v5584 = vadd.f32 %v4900, %v5318
  %v5585 = vadd.f32 %v4905, %v5323
  %v5586 = vadd.f32 %v4910, %v5328
  %v5587 = vadd.f32 %v4915, %v5333
  %v5588 = vadd.f32 %v4920, %v5338
  %v5589 = vadd.f32 %v4925, %v5343
  %v5590 = vadd.f32 %v4930, %v5348
  %v5591 = vadd.f32 %v4935, %v5353
  %v5592 = vadd.f32 %v4940, %v5358
  %v5593 = vadd.f32 %v4945, %v5363
  %v5594 = vadd.f32 %v4950, %v5368
  %v5595 = vadd.f32 %v4955, %v5373
  %v5596 = vadd.f32 %v4960, %v5378
  %v5597 = vadd.f32 %v4965, %v5383
  %v5598 = vadd.f32 %v4970, %v5388
  %v5599 = vadd.f32 %v4975, %v5393
  %v5600 = vadd.f32 %v4980, %v5398
  %v5601 = vadd.f32 %v4985, %v5403
  %v5602 = vadd.f32 %v4990, %v5408
  %v5603 = vadd.f32 %v4995, %v5413
  %v5604 = vadd.f32 %v5000, %v5418
  %v5605 = vadd.f32 %v5005, %v5423
  %v5606 = vadd.f32 %v5010, %v5428
  %v5607 = vadd.f32 %v5015, %v5433
  %v5608 = vadd.f32 %v5020, %v5438
  %v5609 = vadd.f32 %v5025, %v5443
  %v5610 = vadd.f32 %v5030, %v5448
  %v5611 = vadd.f32 %v5035, %v5453
  %v5612 = vadd.f32 %v5040, %v5458
  %v5613 = vadd.f32 %v5045, %v5463
  %v5614 = vadd.f32 %v5050, %v5468
  %v5615 = vadd.f32 %v5055, %v5473
  %v5616 = vadd.f32 %v5060, %v5478
  %v5617 = vadd.f32 %v5065, %v5483
  %v5618 = vadd.f32 %v5070, %v5488
  %v5619 = vadd.f32 %v5075, %v5493
  %v5620 = vadd.f32 %v5080, %v5498
  %v5621 = vadd.f32 %v5085, %v5503
  %v5622 = vadd.f32 %v5090, %v5508
  %v5623 = vadd.f32 %v5095, %v5513
  %v5624 = vadd.f32 %v5100, %v5518
  %v5625 = vadd.f32 %v5105, %v5523
  %v5626 = vadd.f32 %v5110, %v5528
  %v5627 = vadd.f32 %v5115, %v5533
  %v5628 = vadd.f32 %v5120, %v5538
  %v5629 = vadd.f32 %v5125, %v5543
  %v5630 = vadd.f32 %v5130, %v5548
  %v5631 = vadd.f32 %v5135, %v5553
  %v5632 = vadd.f32 %v5140, %v5558
  %v5633 = vadd.f32 %v5145, %v5563
  %v5634 = vadd.f32 %v5150, %v5568
  %v5635 = vld [vmem:[%s5] sm:$0x1]
  %v5637 = vlaneseq
  %v5638 = vshrl.u32 %v5637, 7
  %v5639 = vsub.s32 0, %v5638
  %v5640 = vrot.slane %v5635, %v5639
  %v5642 = vadd.f32 %v5571, %v5640
  %v5643 = vadd.f32 %v5572, %v5640
  %v5644 = vadd.f32 %v5573, %v5640
  %v5645 = vadd.f32 %v5574, %v5640
  %v5646 = vadd.f32 %v5575, %v5640
  %v5647 = vadd.f32 %v5576, %v5640
  %v5648 = vadd.f32 %v5577, %v5640
  %v5649 = vadd.f32 %v5578, %v5640
  %v5650 = vadd.f32 %v5579, %v5640
  %v5651 = vadd.f32 %v5580, %v5640
  %v5652 = vadd.f32 %v5581, %v5640
  %v5653 = vadd.f32 %v5582, %v5640
  %v5654 = vadd.f32 %v5583, %v5640
  %v5655 = vadd.f32 %v5584, %v5640
  %v5656 = vadd.f32 %v5585, %v5640
  %v5657 = vadd.f32 %v5586, %v5640
  %v5658 = vadd.f32 %v5587, %v5640
  %v5659 = vadd.f32 %v5588, %v5640
  %v5660 = vadd.f32 %v5589, %v5640
  %v5661 = vadd.f32 %v5590, %v5640
  %v5662 = vadd.f32 %v5591, %v5640
  %v5663 = vadd.f32 %v5592, %v5640
  %v5664 = vadd.f32 %v5593, %v5640
  %v5665 = vadd.f32 %v5594, %v5640
  %v5666 = vadd.f32 %v5595, %v5640
  %v5667 = vadd.f32 %v5596, %v5640
  %v5668 = vadd.f32 %v5597, %v5640
  %v5669 = vadd.f32 %v5598, %v5640
  %v5670 = vadd.f32 %v5599, %v5640
  %v5671 = vadd.f32 %v5600, %v5640
  %v5672 = vadd.f32 %v5601, %v5640
  %v5673 = vadd.f32 %v5602, %v5640
  %v5674 = vadd.f32 %v5603, %v5640
  %v5675 = vadd.f32 %v5604, %v5640
  %v5676 = vadd.f32 %v5605, %v5640
  %v5677 = vadd.f32 %v5606, %v5640
  %v5678 = vadd.f32 %v5607, %v5640
  %v5679 = vadd.f32 %v5608, %v5640
  %v5680 = vadd.f32 %v5609, %v5640
  %v5681 = vadd.f32 %v5610, %v5640
  %v5682 = vadd.f32 %v5611, %v5640
  %v5683 = vadd.f32 %v5612, %v5640
  %v5684 = vadd.f32 %v5613, %v5640
  %v5685 = vadd.f32 %v5614, %v5640
  %v5686 = vadd.f32 %v5615, %v5640
  %v5687 = vadd.f32 %v5616, %v5640
  %v5688 = vadd.f32 %v5617, %v5640
  %v5689 = vadd.f32 %v5618, %v5640
  %v5690 = vadd.f32 %v5619, %v5640
  %v5691 = vadd.f32 %v5620, %v5640
  %v5692 = vadd.f32 %v5621, %v5640
  %v5693 = vadd.f32 %v5622, %v5640
  %v5694 = vadd.f32 %v5623, %v5640
  %v5695 = vadd.f32 %v5624, %v5640
  %v5696 = vadd.f32 %v5625, %v5640
  %v5697 = vadd.f32 %v5626, %v5640
  %v5698 = vadd.f32 %v5627, %v5640
  %v5699 = vadd.f32 %v5628, %v5640
  %v5700 = vadd.f32 %v5629, %v5640
  %v5701 = vadd.f32 %v5630, %v5640
  %v5702 = vadd.f32 %v5631, %v5640
  %v5703 = vadd.f32 %v5632, %v5640
  %v5704 = vadd.f32 %v5633, %v5640
  %v5705 = vadd.f32 %v5634, %v5640
  %v5706 = vld [vmem:[%s6] sm:$0x1]
  %vm5707 = vcmp.gt.f32.partialorder %v5642, 0.0
  %vm5708 = vcmp.gt.f32.partialorder %v5643, 0.0
  %vm5709 = vcmp.gt.f32.partialorder %v5644, 0.0
  %vm5710 = vcmp.gt.f32.partialorder %v5645, 0.0
  %vm5711 = vcmp.gt.f32.partialorder %v5646, 0.0
  %vm5712 = vcmp.gt.f32.partialorder %v5647, 0.0
  %vm5713 = vcmp.gt.f32.partialorder %v5648, 0.0
  %vm5714 = vcmp.gt.f32.partialorder %v5649, 0.0
  %vm5715 = vcmp.gt.f32.partialorder %v5650, 0.0
  %vm5716 = vcmp.gt.f32.partialorder %v5651, 0.0
  %vm5717 = vcmp.gt.f32.partialorder %v5652, 0.0
  %vm5718 = vcmp.gt.f32.partialorder %v5653, 0.0
  %vm5719 = vcmp.gt.f32.partialorder %v5654, 0.0
  %vm5720 = vcmp.gt.f32.partialorder %v5655, 0.0
  %vm5721 = vcmp.gt.f32.partialorder %v5656, 0.0
  %vm5722 = vcmp.gt.f32.partialorder %v5657, 0.0
  %vm5723 = vcmp.gt.f32.partialorder %v5658, 0.0
  %vm5724 = vcmp.gt.f32.partialorder %v5659, 0.0
  %vm5725 = vcmp.gt.f32.partialorder %v5660, 0.0
  %vm5726 = vcmp.gt.f32.partialorder %v5661, 0.0
  %vm5727 = vcmp.gt.f32.partialorder %v5662, 0.0
  %vm5728 = vcmp.gt.f32.partialorder %v5663, 0.0
  %vm5729 = vcmp.gt.f32.partialorder %v5664, 0.0
  %vm5730 = vcmp.gt.f32.partialorder %v5665, 0.0
  %vm5731 = vcmp.gt.f32.partialorder %v5666, 0.0
  %vm5732 = vcmp.gt.f32.partialorder %v5667, 0.0
  %vm5733 = vcmp.gt.f32.partialorder %v5668, 0.0
  %vm5734 = vcmp.gt.f32.partialorder %v5669, 0.0
  %vm5735 = vcmp.gt.f32.partialorder %v5670, 0.0
  %vm5736 = vcmp.gt.f32.partialorder %v5671, 0.0
  %vm5737 = vcmp.gt.f32.partialorder %v5672, 0.0
  %vm5738 = vcmp.gt.f32.partialorder %v5673, 0.0
  %vm5739 = vcmp.gt.f32.partialorder %v5674, 0.0
  %vm5740 = vcmp.gt.f32.partialorder %v5675, 0.0
  %vm5741 = vcmp.gt.f32.partialorder %v5676, 0.0
  %vm5742 = vcmp.gt.f32.partialorder %v5677, 0.0
  %vm5743 = vcmp.gt.f32.partialorder %v5678, 0.0
  %vm5744 = vcmp.gt.f32.partialorder %v5679, 0.0
  %vm5745 = vcmp.gt.f32.partialorder %v5680, 0.0
  %vm5746 = vcmp.gt.f32.partialorder %v5681, 0.0
  %vm5747 = vcmp.gt.f32.partialorder %v5682, 0.0
  %vm5748 = vcmp.gt.f32.partialorder %v5683, 0.0
  %vm5749 = vcmp.gt.f32.partialorder %v5684, 0.0
  %vm5750 = vcmp.gt.f32.partialorder %v5685, 0.0
  %vm5751 = vcmp.gt.f32.partialorder %v5686, 0.0
  %vm5752 = vcmp.gt.f32.partialorder %v5687, 0.0
  %vm5753 = vcmp.gt.f32.partialorder %v5688, 0.0
  %vm5754 = vcmp.gt.f32.partialorder %v5689, 0.0
  %vm5755 = vcmp.gt.f32.partialorder %v5690, 0.0
  %vm5756 = vcmp.gt.f32.partialorder %v5691, 0.0
  %vm5757 = vcmp.gt.f32.partialorder %v5692, 0.0
  %vm5758 = vcmp.gt.f32.partialorder %v5693, 0.0
  %vm5759 = vcmp.gt.f32.partialorder %v5694, 0.0
  %vm5760 = vcmp.gt.f32.partialorder %v5695, 0.0
  %vm5761 = vcmp.gt.f32.partialorder %v5696, 0.0
  %vm5762 = vcmp.gt.f32.partialorder %v5697, 0.0
  %vm5763 = vcmp.gt.f32.partialorder %v5698, 0.0
  %vm5764 = vcmp.gt.f32.partialorder %v5699, 0.0
  %vm5765 = vcmp.gt.f32.partialorder %v5700, 0.0
  %vm5766 = vcmp.gt.f32.partialorder %v5701, 0.0
  %vm5767 = vcmp.gt.f32.partialorder %v5702, 0.0
  %vm5768 = vcmp.gt.f32.partialorder %v5703, 0.0
  %vm5769 = vcmp.gt.f32.partialorder %v5704, 0.0
  %vm5770 = vcmp.gt.f32.partialorder %v5705, 0.0
  %v5772 = vlaneseq
  %v5773 = vshrl.u32 %v5772, 7
  %v5774 = vsub.s32 0, %v5773
  %v5775 = vrot.slane %v5706, %v5774
  %v5777 = vmul.f32 %v5642, %v5775
  %v5778 = vmul.f32 %v5643, %v5775
  %v5779 = vmul.f32 %v5644, %v5775
  %v5780 = vmul.f32 %v5645, %v5775
  %v5781 = vmul.f32 %v5646, %v5775
  %v5782 = vmul.f32 %v5647, %v5775
  %v5783 = vmul.f32 %v5648, %v5775
  %v5784 = vmul.f32 %v5649, %v5775
  %v5785 = vmul.f32 %v5650, %v5775
  %v5786 = vmul.f32 %v5651, %v5775
  %v5787 = vmul.f32 %v5652, %v5775
  %v5788 = vmul.f32 %v5653, %v5775
  %v5789 = vmul.f32 %v5654, %v5775
  %v5790 = vmul.f32 %v5655, %v5775
  %v5791 = vmul.f32 %v5656, %v5775
  %v5792 = vmul.f32 %v5657, %v5775
  %v5793 = vmul.f32 %v5658, %v5775
  %v5794 = vmul.f32 %v5659, %v5775
  %v5795 = vmul.f32 %v5660, %v5775
  %v5796 = vmul.f32 %v5661, %v5775
  %v5797 = vmul.f32 %v5662, %v5775
  %v5798 = vmul.f32 %v5663, %v5775
  %v5799 = vmul.f32 %v5664, %v5775
  %v5800 = vmul.f32 %v5665, %v5775
  %v5801 = vmul.f32 %v5666, %v5775
  %v5802 = vmul.f32 %v5667, %v5775
  %v5803 = vmul.f32 %v5668, %v5775
  %v5804 = vmul.f32 %v5669, %v5775
  %v5805 = vmul.f32 %v5670, %v5775
  %v5806 = vmul.f32 %v5671, %v5775
  %v5807 = vmul.f32 %v5672, %v5775
  %v5808 = vmul.f32 %v5673, %v5775
  %v5809 = vmul.f32 %v5674, %v5775
  %v5810 = vmul.f32 %v5675, %v5775
  %v5811 = vmul.f32 %v5676, %v5775
  %v5812 = vmul.f32 %v5677, %v5775
  %v5813 = vmul.f32 %v5678, %v5775
  %v5814 = vmul.f32 %v5679, %v5775
  %v5815 = vmul.f32 %v5680, %v5775
  %v5816 = vmul.f32 %v5681, %v5775
  %v5817 = vmul.f32 %v5682, %v5775
  %v5818 = vmul.f32 %v5683, %v5775
  %v5819 = vmul.f32 %v5684, %v5775
  %v5820 = vmul.f32 %v5685, %v5775
  %v5821 = vmul.f32 %v5686, %v5775
  %v5822 = vmul.f32 %v5687, %v5775
  %v5823 = vmul.f32 %v5688, %v5775
  %v5824 = vmul.f32 %v5689, %v5775
  %v5825 = vmul.f32 %v5690, %v5775
  %v5826 = vmul.f32 %v5691, %v5775
  %v5827 = vmul.f32 %v5692, %v5775
  %v5828 = vmul.f32 %v5693, %v5775
  %v5829 = vmul.f32 %v5694, %v5775
  %v5830 = vmul.f32 %v5695, %v5775
  %v5831 = vmul.f32 %v5696, %v5775
  %v5832 = vmul.f32 %v5697, %v5775
  %v5833 = vmul.f32 %v5698, %v5775
  %v5834 = vmul.f32 %v5699, %v5775
  %v5835 = vmul.f32 %v5700, %v5775
  %v5836 = vmul.f32 %v5701, %v5775
  %v5837 = vmul.f32 %v5702, %v5775
  %v5838 = vmul.f32 %v5703, %v5775
  %v5839 = vmul.f32 %v5704, %v5775
  %v5840 = vmul.f32 %v5705, %v5775
  %v5841 = vsel %vm5707, %v5642, %v5777
  %v5842 = vsel %vm5708, %v5643, %v5778
  %v5843 = vsel %vm5709, %v5644, %v5779
  %v5844 = vsel %vm5710, %v5645, %v5780
  %v5845 = vsel %vm5711, %v5646, %v5781
  %v5846 = vsel %vm5712, %v5647, %v5782
  %v5847 = vsel %vm5713, %v5648, %v5783
  %v5848 = vsel %vm5714, %v5649, %v5784
  %v5849 = vsel %vm5715, %v5650, %v5785
  %v5850 = vsel %vm5716, %v5651, %v5786
  %v5851 = vsel %vm5717, %v5652, %v5787
  %v5852 = vsel %vm5718, %v5653, %v5788
  %v5853 = vsel %vm5719, %v5654, %v5789
  %v5854 = vsel %vm5720, %v5655, %v5790
  %v5855 = vsel %vm5721, %v5656, %v5791
  %v5856 = vsel %vm5722, %v5657, %v5792
  %v5857 = vsel %vm5723, %v5658, %v5793
  %v5858 = vsel %vm5724, %v5659, %v5794
  %v5859 = vsel %vm5725, %v5660, %v5795
  %v5860 = vsel %vm5726, %v5661, %v5796
  %v5861 = vsel %vm5727, %v5662, %v5797
  %v5862 = vsel %vm5728, %v5663, %v5798
  %v5863 = vsel %vm5729, %v5664, %v5799
  %v5864 = vsel %vm5730, %v5665, %v5800
  %v5865 = vsel %vm5731, %v5666, %v5801
  %v5866 = vsel %vm5732, %v5667, %v5802
  %v5867 = vsel %vm5733, %v5668, %v5803
  %v5868 = vsel %vm5734, %v5669, %v5804
  %v5869 = vsel %vm5735, %v5670, %v5805
  %v5870 = vsel %vm5736, %v5671, %v5806
  %v5871 = vsel %vm5737, %v5672, %v5807
  %v5872 = vsel %vm5738, %v5673, %v5808
  %v5873 = vsel %vm5739, %v5674, %v5809
  %v5874 = vsel %vm5740, %v5675, %v5810
  %v5875 = vsel %vm5741, %v5676, %v5811
  %v5876 = vsel %vm5742, %v5677, %v5812
  %v5877 = vsel %vm5743, %v5678, %v5813
  %v5878 = vsel %vm5744, %v5679, %v5814
  %v5879 = vsel %vm5745, %v5680, %v5815
  %v5880 = vsel %vm5746, %v5681, %v5816
  %v5881 = vsel %vm5747, %v5682, %v5817
  %v5882 = vsel %vm5748, %v5683, %v5818
  %v5883 = vsel %vm5749, %v5684, %v5819
  %v5884 = vsel %vm5750, %v5685, %v5820
  %v5885 = vsel %vm5751, %v5686, %v5821
  %v5886 = vsel %vm5752, %v5687, %v5822
  %v5887 = vsel %vm5753, %v5688, %v5823
  %v5888 = vsel %vm5754, %v5689, %v5824
  %v5889 = vsel %vm5755, %v5690, %v5825
  %v5890 = vsel %vm5756, %v5691, %v5826
  %v5891 = vsel %vm5757, %v5692, %v5827
  %v5892 = vsel %vm5758, %v5693, %v5828
  %v5893 = vsel %vm5759, %v5694, %v5829
  %v5894 = vsel %vm5760, %v5695, %v5830
  %v5895 = vsel %vm5761, %v5696, %v5831
  %v5896 = vsel %vm5762, %v5697, %v5832
  %v5897 = vsel %vm5763, %v5698, %v5833
  %v5898 = vsel %vm5764, %v5699, %v5834
  %v5899 = vsel %vm5765, %v5700, %v5835
  %v5900 = vsel %vm5766, %v5701, %v5836
  %v5901 = vsel %vm5767, %v5702, %v5837
  %v5902 = vsel %vm5768, %v5703, %v5838
  %v5903 = vsel %vm5769, %v5704, %v5839
  %v5904 = vsel %vm5770, %v5705, %v5840
  %v5905 = vadd.f32 %v3205, %v5841
  %v5906 = vadd.f32 %v3206, %v5842
  %v5907 = vadd.f32 %v3207, %v5843
  %v5908 = vadd.f32 %v3208, %v5844
  %v5909 = vadd.f32 %v3209, %v5845
  %v5910 = vadd.f32 %v3210, %v5846
  %v5911 = vadd.f32 %v3211, %v5847
  %v5912 = vadd.f32 %v3212, %v5848
  %v5913 = vadd.f32 %v3213, %v5849
  %v5914 = vadd.f32 %v3214, %v5850
  %v5915 = vadd.f32 %v3215, %v5851
  %v5916 = vadd.f32 %v3216, %v5852
  %v5917 = vadd.f32 %v3217, %v5853
  %v5918 = vadd.f32 %v3218, %v5854
  %v5919 = vadd.f32 %v3219, %v5855
  %v5920 = vadd.f32 %v3220, %v5856
  %v5921 = vadd.f32 %v3221, %v5857
  %v5922 = vadd.f32 %v3222, %v5858
  %v5923 = vadd.f32 %v3223, %v5859
  %v5924 = vadd.f32 %v3224, %v5860
  %v5925 = vadd.f32 %v3225, %v5861
  %v5926 = vadd.f32 %v3226, %v5862
  %v5927 = vadd.f32 %v3227, %v5863
  %v5928 = vadd.f32 %v3228, %v5864
  %v5929 = vadd.f32 %v3229, %v5865
  %v5930 = vadd.f32 %v3230, %v5866
  %v5931 = vadd.f32 %v3231, %v5867
  %v5932 = vadd.f32 %v3232, %v5868
  %v5933 = vadd.f32 %v3233, %v5869
  %v5934 = vadd.f32 %v3234, %v5870
  %v5935 = vadd.f32 %v3235, %v5871
  %v5936 = vadd.f32 %v3236, %v5872
  %v5937 = vadd.f32 %v3237, %v5873
  %v5938 = vadd.f32 %v3238, %v5874
  %v5939 = vadd.f32 %v3239, %v5875
  %v5940 = vadd.f32 %v3240, %v5876
  %v5941 = vadd.f32 %v3241, %v5877
  %v5942 = vadd.f32 %v3242, %v5878
  %v5943 = vadd.f32 %v3243, %v5879
  %v5944 = vadd.f32 %v3244, %v5880
  %v5945 = vadd.f32 %v3245, %v5881
  %v5946 = vadd.f32 %v3246, %v5882
  %v5947 = vadd.f32 %v3247, %v5883
  %v5948 = vadd.f32 %v3248, %v5884
  %v5949 = vadd.f32 %v3249, %v5885
  %v5950 = vadd.f32 %v3250, %v5886
  %v5951 = vadd.f32 %v3251, %v5887
  %v5952 = vadd.f32 %v3252, %v5888
  %v5953 = vadd.f32 %v3253, %v5889
  %v5954 = vadd.f32 %v3254, %v5890
  %v5955 = vadd.f32 %v3255, %v5891
  %v5956 = vadd.f32 %v3256, %v5892
  %v5957 = vadd.f32 %v3257, %v5893
  %v5958 = vadd.f32 %v3258, %v5894
  %v5959 = vadd.f32 %v3259, %v5895
  %v5960 = vadd.f32 %v3260, %v5896
  %v5961 = vadd.f32 %v3261, %v5897
  %v5962 = vadd.f32 %v3262, %v5898
  %v5963 = vadd.f32 %v3263, %v5899
  %v5964 = vadd.f32 %v3264, %v5900
  %v5965 = vadd.f32 %v3265, %v5901
  %v5966 = vadd.f32 %v3266, %v5902
  %v5967 = vadd.f32 %v3267, %v5903
  %v5968 = vadd.f32 %v3268, %v5904
  %5969 = vst.msk [vmem:[%s3269 + $0x1] sm:$0xff] %vm151, %v5905
  %5970 = vst.msk [vmem:[%s3269 + $0x9] sm:$0xff] %vm151, %v5906
  %5971 = vst.msk [vmem:[%s3269 + $0x19] sm:$0xff] %vm151, %v5907
  %5972 = vst.msk [vmem:[%s3269 + $0x21] sm:$0xff] %vm151, %v5908
  %5973 = vst.msk [vmem:[%s3269 + $0x31] sm:$0xff] %vm151, %v5909
  %5974 = vst.msk [vmem:[%s3269 + $0x39] sm:$0xff] %vm151, %v5910
  %5975 = vst.msk [vmem:[%s3269 + $0x49] sm:$0xff] %vm151, %v5911
  %5976 = vst.msk [vmem:[%s3269 + $0x51] sm:$0xff] %vm151, %v5912
  %5977 = vst.msk [vmem:[%s3269 + $0x61] sm:$0xff] %vm151, %v5913
  %5978 = vst.msk [vmem:[%s3269 + $0x69] sm:$0xff] %vm151, %v5914
  %5979 = vst.msk [vmem:[%s3269 + $0x79] sm:$0xff] %vm151, %v5915
  %5980 = vst.msk [vmem:[%s3269 + $0x81] sm:$0xff] %vm151, %v5916
  %5981 = vst.msk [vmem:[%s3269 + $0x91] sm:$0xff] %vm151, %v5917
  %5982 = vst.msk [vmem:[%s3269 + $0x99] sm:$0xff] %vm151, %v5918
  %5983 = vst.msk [vmem:[%s3269 + $0xa9] sm:$0xff] %vm151, %v5919
  %5984 = vst.msk [vmem:[%s3269 + $0xb1] sm:$0xff] %vm151, %v5920
  %5985 = vst.msk [vmem:[%s3269 + $0xc1] sm:$0xff] %vm151, %v5921
  %5986 = vst.msk [vmem:[%s3269 + $0xc9] sm:$0xff] %vm151, %v5922
  %5987 = vst.msk [vmem:[%s3269 + $0xd9] sm:$0xff] %vm151, %v5923
  %5988 = vst.msk [vmem:[%s3269 + $0xe1] sm:$0xff] %vm151, %v5924
  %5989 = vst.msk [vmem:[%s3269 + $0xf1] sm:$0xff] %vm151, %v5925
  %5990 = vst.msk [vmem:[%s3269 + $0xf9] sm:$0xff] %vm151, %v5926
  %5991 = vst.msk [vmem:[%s3269 + $0x109] sm:$0xff] %vm151, %v5927
  %5992 = vst.msk [vmem:[%s3269 + $0x111] sm:$0xff] %vm151, %v5928
  %5993 = vst.msk [vmem:[%s3269 + $0x121] sm:$0xff] %vm151, %v5929
  %5994 = vst.msk [vmem:[%s3269 + $0x129] sm:$0xff] %vm151, %v5930
  %5995 = vst.msk [vmem:[%s3269 + $0x139] sm:$0xff] %vm151, %v5931
  %5996 = vst.msk [vmem:[%s3269 + $0x141] sm:$0xff] %vm151, %v5932
  %5997 = vst.msk [vmem:[%s3269 + $0x151] sm:$0xff] %vm151, %v5933
  %5998 = vst.msk [vmem:[%s3269 + $0x159] sm:$0xff] %vm151, %v5934
  %5999 = vst.msk [vmem:[%s3269 + $0x169] sm:$0xff] %vm151, %v5935
  %6000 = vst.msk [vmem:[%s3269 + $0x171] sm:$0xff] %vm151, %v5936
  %6001 = vst.msk [vmem:[%s3269 + $0x1b1] sm:$0xff] %vm151, %v5937
  %6002 = vst.msk [vmem:[%s3269 + $0x1b9] sm:$0xff] %vm151, %v5938
  %6003 = vst.msk [vmem:[%s3269 + $0x1c9] sm:$0xff] %vm151, %v5939
  %6004 = vst.msk [vmem:[%s3269 + $0x1d1] sm:$0xff] %vm151, %v5940
  %6005 = vst.msk [vmem:[%s3269 + $0x1e1] sm:$0xff] %vm151, %v5941
  %6006 = vst.msk [vmem:[%s3269 + $0x1e9] sm:$0xff] %vm151, %v5942
  %6007 = vst.msk [vmem:[%s3269 + $0x1f9] sm:$0xff] %vm151, %v5943
  %6008 = vst.msk [vmem:[%s3269 + $0x201] sm:$0xff] %vm151, %v5944
  %6009 = vst.msk [vmem:[%s3269 + $0x211] sm:$0xff] %vm151, %v5945
  %6010 = vst.msk [vmem:[%s3269 + $0x219] sm:$0xff] %vm151, %v5946
  %6011 = vst.msk [vmem:[%s3269 + $0x229] sm:$0xff] %vm151, %v5947
  %6012 = vst.msk [vmem:[%s3269 + $0x231] sm:$0xff] %vm151, %v5948
  %6013 = vst.msk [vmem:[%s3269 + $0x241] sm:$0xff] %vm151, %v5949
  %6014 = vst.msk [vmem:[%s3269 + $0x249] sm:$0xff] %vm151, %v5950
  %6015 = vst.msk [vmem:[%s3269 + $0x259] sm:$0xff] %vm151, %v5951
  %6016 = vst.msk [vmem:[%s3269 + $0x261] sm:$0xff] %vm151, %v5952
  %6017 = vst.msk [vmem:[%s3269 + $0x271] sm:$0xff] %vm151, %v5953
  %6018 = vst.msk [vmem:[%s3269 + $0x279] sm:$0xff] %vm151, %v5954
  %6019 = vst.msk [vmem:[%s3269 + $0x289] sm:$0xff] %vm151, %v5955
  %6020 = vst.msk [vmem:[%s3269 + $0x291] sm:$0xff] %vm151, %v5956
  %6021 = vst.msk [vmem:[%s3269 + $0x2a1] sm:$0xff] %vm151, %v5957
  %6022 = vst.msk [vmem:[%s3269 + $0x2a9] sm:$0xff] %vm151, %v5958
  %6023 = vst.msk [vmem:[%s3269 + $0x2b9] sm:$0xff] %vm151, %v5959
  %6024 = vst.msk [vmem:[%s3269 + $0x2c1] sm:$0xff] %vm151, %v5960
  %6025 = vst.msk [vmem:[%s3269 + $0x2d1] sm:$0xff] %vm151, %v5961
  %6026 = vst.msk [vmem:[%s3269 + $0x2d9] sm:$0xff] %vm151, %v5962
  %6027 = vst.msk [vmem:[%s3269 + $0x2e9] sm:$0xff] %vm151, %v5963
  %6028 = vst.msk [vmem:[%s3269 + $0x2f1] sm:$0xff] %vm151, %v5964
  %6029 = vst.msk [vmem:[%s3269 + $0x301] sm:$0xff] %vm151, %v5965
  %6030 = vst.msk [vmem:[%s3269 + $0x309] sm:$0xff] %vm151, %v5966
  %6031 = vst.msk [vmem:[%s3269 + $0x319] sm:$0xff] %vm151, %v5967
  %6032 = vst.msk [vmem:[%s3269 + $0x321] sm:$0xff] %vm151, %v5968
  %v6033 = vld [vmem:[#allocation3] sm:$0xff]
  %v6034 = vld [vmem:[#allocation3 + $0x8] sm:$0xff]
  %v6035 = vld [vmem:[#allocation3 + $0x10] sm:$0x3]
  %v6036 = vld [vmem:[#allocation3 + $0x18] sm:$0xff]
  %v6037 = vld [vmem:[#allocation3 + $0x20] sm:$0xff]
  %v6038 = vld [vmem:[#allocation3 + $0x28] sm:$0x3]
  %v6039 = vld [vmem:[#allocation3 + $0x30] sm:$0xff]
  %v6040 = vld [vmem:[#allocation3 + $0x38] sm:$0xff]
  %v6041 = vld [vmem:[#allocation3 + $0x40] sm:$0x3]
  %v6042 = vld [vmem:[#allocation3 + $0x48] sm:$0xff]
  %v6043 = vld [vmem:[#allocation3 + $0x50] sm:$0xff]
  %v6044 = vld [vmem:[#allocation3 + $0x58] sm:$0x3]
  %v6045 = vld [vmem:[#allocation3 + $0x60] sm:$0xff]
  %v6046 = vld [vmem:[#allocation3 + $0x68] sm:$0xff]
  %v6047 = vld [vmem:[#allocation3 + $0x70] sm:$0x3]
  %v6048 = vld [vmem:[#allocation3 + $0x78] sm:$0xff]
  %v6049 = vld [vmem:[#allocation3 + $0x80] sm:$0xff]
  %v6050 = vld [vmem:[#allocation3 + $0x88] sm:$0x3]
  %v6051 = vld [vmem:[#allocation3 + $0x90] sm:$0xff]
  %v6052 = vld [vmem:[#allocation3 + $0x98] sm:$0xff]
  %v6053 = vld [vmem:[#allocation3 + $0xa0] sm:$0x3]
  %v6054 = vld [vmem:[#allocation3 + $0xa8] sm:$0xff]
  %v6055 = vld [vmem:[#allocation3 + $0xb0] sm:$0xff]
  %v6056 = vld [vmem:[#allocation3 + $0xb8] sm:$0x3]
  %v6057 = vld [vmem:[#allocation3 + $0xc0] sm:$0xff]
  %v6058 = vld [vmem:[#allocation3 + $0xc8] sm:$0xff]
  %v6059 = vld [vmem:[#allocation3 + $0xd0] sm:$0x3]
  %v6060 = vld [vmem:[#allocation3 + $0xd8] sm:$0xff]
  %v6061 = vld [vmem:[#allocation3 + $0xe0] sm:$0xff]
  %v6062 = vld [vmem:[#allocation3 + $0xe8] sm:$0x3]
  %v6063 = vld [vmem:[#allocation3 + $0xf0] sm:$0xff]
  %v6064 = vld [vmem:[#allocation3 + $0xf8] sm:$0xff]
  %v6065 = vld [vmem:[#allocation3 + $0x100] sm:$0x3]
  %v6066 = vld [vmem:[#allocation3 + $0x108] sm:$0xff]
  %v6067 = vld [vmem:[#allocation3 + $0x110] sm:$0xff]
  %v6068 = vld [vmem:[#allocation3 + $0x118] sm:$0x3]
  %v6069 = vld [vmem:[#allocation3 + $0x120] sm:$0xff]
  %v6070 = vld [vmem:[#allocation3 + $0x128] sm:$0xff]
  %v6071 = vld [vmem:[#allocation3 + $0x130] sm:$0x3]
  %v6072 = vld [vmem:[#allocation3 + $0x138] sm:$0xff]
  %v6073 = vld [vmem:[#allocation3 + $0x140] sm:$0xff]
  %v6074 = vld [vmem:[#allocation3 + $0x148] sm:$0x3]
  %v6075 = vld [vmem:[#allocation3 + $0x150] sm:$0xff]
  %v6076 = vld [vmem:[#allocation3 + $0x158] sm:$0xff]
  %v6077 = vld [vmem:[#allocation3 + $0x160] sm:$0x3]
  %v6078 = vld [vmem:[#allocation3 + $0x168] sm:$0xff]
  %v6079 = vld [vmem:[#allocation3 + $0x170] sm:$0xff]
  %v6080 = vld [vmem:[#allocation3 + $0x178] sm:$0x3]
  %v6081 = vld [vmem:[#allocation3 + $0x180] sm:$0xff]
  %v6082 = vld [vmem:[#allocation3 + $0x188] sm:$0xff]
  %v6083 = vld [vmem:[#allocation3 + $0x190] sm:$0x3]
  %v6084 = vld [vmem:[#allocation3 + $0x198] sm:$0xff]
  %v6085 = vld [vmem:[#allocation3 + $0x1a0] sm:$0xff]
  %v6086 = vld [vmem:[#allocation3 + $0x1a8] sm:$0x3]
  %v6087 = vld [vmem:[#allocation3 + $0x1b0] sm:$0xff]
  %v6088 = vld [vmem:[#allocation3 + $0x1b8] sm:$0xff]
  %v6089 = vld [vmem:[#allocation3 + $0x1c0] sm:$0x3]
  %v6090 = vld [vmem:[#allocation3 + $0x1c8] sm:$0xff]
  %v6091 = vld [vmem:[#allocation3 + $0x1d0] sm:$0xff]
  %v6092 = vld [vmem:[#allocation3 + $0x1d8] sm:$0x3]
  %v6093 = vld [vmem:[#allocation3 + $0x1e0] sm:$0xff]
  %v6094 = vld [vmem:[#allocation3 + $0x1e8] sm:$0xff]
  %v6095 = vld [vmem:[#allocation3 + $0x1f0] sm:$0x3]
  %v6096 = vld [vmem:[#allocation3 + $0x1f8] sm:$0xff]
  %v6097 = vld [vmem:[#allocation3 + $0x200] sm:$0xff]
  %v6098 = vld [vmem:[#allocation3 + $0x208] sm:$0x3]
  %v6099 = vld [vmem:[#allocation3 + $0x210] sm:$0xff]
  %v6100 = vld [vmem:[#allocation3 + $0x218] sm:$0xff]
  %v6101 = vld [vmem:[#allocation3 + $0x220] sm:$0x3]
  %v6102 = vld [vmem:[#allocation3 + $0x228] sm:$0xff]
  %v6103 = vld [vmem:[#allocation3 + $0x230] sm:$0xff]
  %v6104 = vld [vmem:[#allocation3 + $0x238] sm:$0x3]
  %v6105 = vld [vmem:[#allocation3 + $0x240] sm:$0xff]
  %v6106 = vld [vmem:[#allocation3 + $0x248] sm:$0xff]
  %v6107 = vld [vmem:[#allocation3 + $0x250] sm:$0x3]
  %v6108 = vld [vmem:[#allocation3 + $0x258] sm:$0xff]
  %v6109 = vld [vmem:[#allocation3 + $0x260] sm:$0xff]
  %v6110 = vld [vmem:[#allocation3 + $0x268] sm:$0x3]
  %v6111 = vld [vmem:[#allocation3 + $0x270] sm:$0xff]
  %v6112 = vld [vmem:[#allocation3 + $0x278] sm:$0xff]
  %v6113 = vld [vmem:[#allocation3 + $0x280] sm:$0x3]
  %v6114 = vld [vmem:[#allocation3 + $0x288] sm:$0xff]
  %v6115 = vld [vmem:[#allocation3 + $0x290] sm:$0xff]
  %v6116 = vld [vmem:[#allocation3 + $0x298] sm:$0x3]
  %v6117 = vld [vmem:[#allocation3 + $0x2a0] sm:$0xff]
  %v6118 = vld [vmem:[#allocation3 + $0x2a8] sm:$0xff]
  %v6119 = vld [vmem:[#allocation3 + $0x2b0] sm:$0x3]
  %v6120 = vld [vmem:[#allocation3 + $0x2b8] sm:$0xff]
  %v6121 = vld [vmem:[#allocation3 + $0x2c0] sm:$0xff]
  %v6122 = vld [vmem:[#allocation3 + $0x2c8] sm:$0x3]
  %v6123 = vld [vmem:[#allocation3 + $0x2d0] sm:$0xff]
  %v6124 = vld [vmem:[#allocation3 + $0x2d8] sm:$0xff]
  %v6125 = vld [vmem:[#allocation3 + $0x2e0] sm:$0x3]
  %v6126 = vld [vmem:[#allocation3 + $0x2e8] sm:$0xff]
  %v6127 = vld [vmem:[#allocation3 + $0x2f0] sm:$0xff]
  %v6128 = vld [vmem:[#allocation3 + $0x2f8] sm:$0x3]
  %v6129 = vld [vmem:[#allocation3 + $0x300] sm:$0xff]
  %v6130 = vld [vmem:[#allocation3 + $0x308] sm:$0xff]
  %v6131 = vld [vmem:[#allocation3 + $0x310] sm:$0x3]
  %v6132 = vld [vmem:[#allocation3 + $0x318] sm:$0xff]
  %v6133 = vld [vmem:[#allocation3 + $0x320] sm:$0xff]
  %v6134 = vld [vmem:[#allocation3 + $0x328] sm:$0x3]
  %v6135 = vld [vmem:[#allocation3 + $0x330] sm:$0xff]
  %v6136 = vld [vmem:[#allocation3 + $0x338] sm:$0xff]
  %v6137 = vld [vmem:[#allocation3 + $0x340] sm:$0x3]
  %v6138 = vld [vmem:[#allocation3 + $0x348] sm:$0xff]
  %v6139 = vld [vmem:[#allocation3 + $0x350] sm:$0xff]
  %v6140 = vld [vmem:[#allocation3 + $0x358] sm:$0x3]
  %v6249 = vrot.slane %v6033, 1
  %v6250 = vrot.slane %v6034, 1
  %v6251 = vsel %vm606, %v6249, %v6250
  %v6252 = vrot.slane %v6035, 1
  %v6253 = vsel %vm606, %v6250, %v6252
  %v6254 = vrot.slane %v6036, 1
  %v6255 = vrot.slane %v6037, 1
  %v6256 = vsel %vm606, %v6254, %v6255
  %v6257 = vrot.slane %v6038, 1
  %v6258 = vsel %vm606, %v6255, %v6257
  %v6259 = vrot.slane %v6039, 1
  %v6260 = vrot.slane %v6040, 1
  %v6261 = vsel %vm606, %v6259, %v6260
  %v6262 = vrot.slane %v6041, 1
  %v6263 = vsel %vm606, %v6260, %v6262
  %v6264 = vrot.slane %v6042, 1
  %v6265 = vrot.slane %v6043, 1
  %v6266 = vsel %vm606, %v6264, %v6265
  %v6267 = vrot.slane %v6044, 1
  %v6268 = vsel %vm606, %v6265, %v6267
  %v6269 = vrot.slane %v6045, 1
  %v6270 = vrot.slane %v6046, 1
  %v6271 = vsel %vm606, %v6269, %v6270
  %v6272 = vrot.slane %v6047, 1
  %v6273 = vsel %vm606, %v6270, %v6272
  %v6274 = vrot.slane %v6048, 1
  %v6275 = vrot.slane %v6049, 1
  %v6276 = vsel %vm606, %v6274, %v6275
  %v6277 = vrot.slane %v6050, 1
  %v6278 = vsel %vm606, %v6275, %v6277
  %v6279 = vrot.slane %v6051, 1
  %v6280 = vrot.slane %v6052, 1
  %v6281 = vsel %vm606, %v6279, %v6280
  %v6282 = vrot.slane %v6053, 1
  %v6283 = vsel %vm606, %v6280, %v6282
  %v6284 = vrot.slane %v6054, 1
  %v6285 = vrot.slane %v6055, 1
  %v6286 = vsel %vm606, %v6284, %v6285
  %v6287 = vrot.slane %v6056, 1
  %v6288 = vsel %vm606, %v6285, %v6287
  %v6289 = vrot.slane %v6057, 1
  %v6290 = vrot.slane %v6058, 1
  %v6291 = vsel %vm606, %v6289, %v6290
  %v6292 = vrot.slane %v6059, 1
  %v6293 = vsel %vm606, %v6290, %v6292
  %v6294 = vrot.slane %v6060, 1
  %v6295 = vrot.slane %v6061, 1
  %v6296 = vsel %vm606, %v6294, %v6295
  %v6297 = vrot.slane %v6062, 1
  %v6298 = vsel %vm606, %v6295, %v6297
  %v6299 = vrot.slane %v6063, 1
  %v6300 = vrot.slane %v6064, 1
  %v6301 = vsel %vm606, %v6299, %v6300
  %v6302 = vrot.slane %v6065, 1
  %v6303 = vsel %vm606, %v6300, %v6302
  %v6304 = vrot.slane %v6066, 1
  %v6305 = vrot.slane %v6067, 1
  %v6306 = vsel %vm606, %v6304, %v6305
  %v6307 = vrot.slane %v6068, 1
  %v6308 = vsel %vm606, %v6305, %v6307
  %v6309 = vrot.slane %v6069, 1
  %v6310 = vrot.slane %v6070, 1
  %v6311 = vsel %vm606, %v6309, %v6310
  %v6312 = vrot.slane %v6071, 1
  %v6313 = vsel %vm606, %v6310, %v6312
  %v6314 = vrot.slane %v6072, 1
  %v6315 = vrot.slane %v6073, 1
  %v6316 = vsel %vm606, %v6314, %v6315
  %v6317 = vrot.slane %v6074, 1
  %v6318 = vsel %vm606, %v6315, %v6317
  %v6319 = vrot.slane %v6075, 1
  %v6320 = vrot.slane %v6076, 1
  %v6321 = vsel %vm606, %v6319, %v6320
  %v6322 = vrot.slane %v6077, 1
  %v6323 = vsel %vm606, %v6320, %v6322
  %v6324 = vrot.slane %v6078, 1
  %v6325 = vrot.slane %v6079, 1
  %v6326 = vsel %vm606, %v6324, %v6325
  %v6327 = vrot.slane %v6080, 1
  %v6328 = vsel %vm606, %v6325, %v6327
  %v6329 = vrot.slane %v6081, 1
  %v6330 = vrot.slane %v6082, 1
  %v6331 = vsel %vm606, %v6329, %v6330
  %v6332 = vrot.slane %v6083, 1
  %v6333 = vsel %vm606, %v6330, %v6332
  %v6334 = vrot.slane %v6084, 1
  %v6335 = vrot.slane %v6085, 1
  %v6336 = vsel %vm606, %v6334, %v6335
  %v6337 = vrot.slane %v6086, 1
  %v6338 = vsel %vm606, %v6335, %v6337
  %v6339 = vrot.slane %v6087, 1
  %v6340 = vrot.slane %v6088, 1
  %v6341 = vsel %vm606, %v6339, %v6340
  %v6342 = vrot.slane %v6089, 1
  %v6343 = vsel %vm606, %v6340, %v6342
  %v6344 = vrot.slane %v6090, 1
  %v6345 = vrot.slane %v6091, 1
  %v6346 = vsel %vm606, %v6344, %v6345
  %v6347 = vrot.slane %v6092, 1
  %v6348 = vsel %vm606, %v6345, %v6347
  %v6349 = vrot.slane %v6093, 1
  %v6350 = vrot.slane %v6094, 1
  %v6351 = vsel %vm606, %v6349, %v6350
  %v6352 = vrot.slane %v6095, 1
  %v6353 = vsel %vm606, %v6350, %v6352
  %v6354 = vrot.slane %v6096, 1
  %v6355 = vrot.slane %v6097, 1
  %v6356 = vsel %vm606, %v6354, %v6355
  %v6357 = vrot.slane %v6098, 1
  %v6358 = vsel %vm606, %v6355, %v6357
  %v6359 = vrot.slane %v6099, 1
  %v6360 = vrot.slane %v6100, 1
  %v6361 = vsel %vm606, %v6359, %v6360
  %v6362 = vrot.slane %v6101, 1
  %v6363 = vsel %vm606, %v6360, %v6362
  %v6364 = vrot.slane %v6102, 1
  %v6365 = vrot.slane %v6103, 1
  %v6366 = vsel %vm606, %v6364, %v6365
  %v6367 = vrot.slane %v6104, 1
  %v6368 = vsel %vm606, %v6365, %v6367
  %v6369 = vrot.slane %v6105, 1
  %v6370 = vrot.slane %v6106, 1
  %v6371 = vsel %vm606, %v6369, %v6370
  %v6372 = vrot.slane %v6107, 1
  %v6373 = vsel %vm606, %v6370, %v6372
  %v6374 = vrot.slane %v6108, 1
  %v6375 = vrot.slane %v6109, 1
  %v6376 = vsel %vm606, %v6374, %v6375
  %v6377 = vrot.slane %v6110, 1
  %v6378 = vsel %vm606, %v6375, %v6377
  %v6379 = vrot.slane %v6111, 1
  %v6380 = vrot.slane %v6112, 1
  %v6381 = vsel %vm606, %v6379, %v6380
  %v6382 = vrot.slane %v6113, 1
  %v6383 = vsel %vm606, %v6380, %v6382
  %v6384 = vrot.slane %v6114, 1
  %v6385 = vrot.slane %v6115, 1
  %v6386 = vsel %vm606, %v6384, %v6385
  %v6387 = vrot.slane %v6116, 1
  %v6388 = vsel %vm606, %v6385, %v6387
  %v6389 = vrot.slane %v6117, 1
  %v6390 = vrot.slane %v6118, 1
  %v6391 = vsel %vm606, %v6389, %v6390
  %v6392 = vrot.slane %v6119, 1
  %v6393 = vsel %vm606, %v6390, %v6392
  %v6394 = vrot.slane %v6120, 1
  %v6395 = vrot.slane %v6121, 1
  %v6396 = vsel %vm606, %v6394, %v6395
  %v6397 = vrot.slane %v6122, 1
  %v6398 = vsel %vm606, %v6395, %v6397
  %v6399 = vrot.slane %v6123, 1
  %v6400 = vrot.slane %v6124, 1
  %v6401 = vsel %vm606, %v6399, %v6400
  %v6402 = vrot.slane %v6125, 1
  %v6403 = vsel %vm606, %v6400, %v6402
  %v6404 = vrot.slane %v6126, 1
  %v6405 = vrot.slane %v6127, 1
  %v6406 = vsel %vm606, %v6404, %v6405
  %v6407 = vrot.slane %v6128, 1
  %v6408 = vsel %vm606, %v6405, %v6407
  %v6409 = vrot.slane %v6129, 1
  %v6410 = vrot.slane %v6130, 1
  %v6411 = vsel %vm606, %v6409, %v6410
  %v6412 = vrot.slane %v6131, 1
  %v6413 = vsel %vm606, %v6410, %v6412
  %v6414 = vrot.slane %v6132, 1
  %v6415 = vrot.slane %v6133, 1
  %v6416 = vsel %vm606, %v6414, %v6415
  %v6417 = vrot.slane %v6134, 1
  %v6418 = vsel %vm606, %v6415, %v6417
  %v6419 = vrot.slane %v6135, 1
  %v6420 = vrot.slane %v6136, 1
  %v6421 = vsel %vm606, %v6419, %v6420
  %v6422 = vrot.slane %v6137, 1
  %v6423 = vsel %vm606, %v6420, %v6422
  %v6424 = vrot.slane %v6138, 1
  %v6425 = vrot.slane %v6139, 1
  %v6426 = vsel %vm606, %v6424, %v6425
  %v6427 = vrot.slane %v6140, 1
  %v6428 = vsel %vm606, %v6425, %v6427
  %6429 = vrot.lane.b32.xlu0 %v6251, 64
  %v6430 = vpop.permute.xlu0 %6429
  %6431 = vrot.lane.b32.xlu0 %v6253, 64
  %v6432 = vpop.permute.xlu0 %6431
  %6433 = vrot.lane.b32.xlu0 %v6256, 64
  %v6434 = vpop.permute.xlu0 %6433
  %6435 = vrot.lane.b32.xlu0 %v6258, 64
  %v6436 = vpop.permute.xlu0 %6435
  %6437 = vrot.lane.b32.xlu0 %v6261, 64
  %v6438 = vpop.permute.xlu0 %6437
  %6439 = vrot.lane.b32.xlu0 %v6263, 64
  %v6440 = vpop.permute.xlu0 %6439
  %6441 = vrot.lane.b32.xlu0 %v6266, 64
  %v6442 = vpop.permute.xlu0 %6441
  %6443 = vrot.lane.b32.xlu0 %v6268, 64
  %v6444 = vpop.permute.xlu0 %6443
  %6445 = vrot.lane.b32.xlu0 %v6271, 64
  %v6446 = vpop.permute.xlu0 %6445
  %6447 = vrot.lane.b32.xlu0 %v6273, 64
  %v6448 = vpop.permute.xlu0 %6447
  %6449 = vrot.lane.b32.xlu0 %v6276, 64
  %v6450 = vpop.permute.xlu0 %6449
  %6451 = vrot.lane.b32.xlu0 %v6278, 64
  %v6452 = vpop.permute.xlu0 %6451
  %6453 = vrot.lane.b32.xlu0 %v6281, 64
  %v6454 = vpop.permute.xlu0 %6453
  %6455 = vrot.lane.b32.xlu0 %v6283, 64
  %v6456 = vpop.permute.xlu0 %6455
  %6457 = vrot.lane.b32.xlu0 %v6286, 64
  %v6458 = vpop.permute.xlu0 %6457
  %6459 = vrot.lane.b32.xlu0 %v6288, 64
  %v6460 = vpop.permute.xlu0 %6459
  %6461 = vrot.lane.b32.xlu0 %v6291, 64
  %v6462 = vpop.permute.xlu0 %6461
  %6463 = vrot.lane.b32.xlu0 %v6293, 64
  %v6464 = vpop.permute.xlu0 %6463
  %6465 = vrot.lane.b32.xlu0 %v6296, 64
  %v6466 = vpop.permute.xlu0 %6465
  %6467 = vrot.lane.b32.xlu0 %v6298, 64
  %v6468 = vpop.permute.xlu0 %6467
  %6469 = vrot.lane.b32.xlu0 %v6301, 64
  %v6470 = vpop.permute.xlu0 %6469
  %6471 = vrot.lane.b32.xlu0 %v6303, 64
  %v6472 = vpop.permute.xlu0 %6471
  %6473 = vrot.lane.b32.xlu0 %v6306, 64
  %v6474 = vpop.permute.xlu0 %6473
  %6475 = vrot.lane.b32.xlu0 %v6308, 64
  %v6476 = vpop.permute.xlu0 %6475
  %6477 = vrot.lane.b32.xlu0 %v6311, 64
  %v6478 = vpop.permute.xlu0 %6477
  %6479 = vrot.lane.b32.xlu0 %v6313, 64
  %v6480 = vpop.permute.xlu0 %6479
  %6481 = vrot.lane.b32.xlu0 %v6316, 64
  %v6482 = vpop.permute.xlu0 %6481
  %6483 = vrot.lane.b32.xlu0 %v6318, 64
  %v6484 = vpop.permute.xlu0 %6483
  %6485 = vrot.lane.b32.xlu0 %v6321, 64
  %v6486 = vpop.permute.xlu0 %6485
  %6487 = vrot.lane.b32.xlu0 %v6323, 64
  %v6488 = vpop.permute.xlu0 %6487
  %6489 = vrot.lane.b32.xlu0 %v6326, 64
  %v6490 = vpop.permute.xlu0 %6489
  %6491 = vrot.lane.b32.xlu0 %v6328, 64
  %v6492 = vpop.permute.xlu0 %6491
  %6493 = vrot.lane.b32.xlu0 %v6331, 64
  %v6494 = vpop.permute.xlu0 %6493
  %6495 = vrot.lane.b32.xlu0 %v6333, 64
  %v6496 = vpop.permute.xlu0 %6495
  %6497 = vrot.lane.b32.xlu0 %v6336, 64
  %v6498 = vpop.permute.xlu0 %6497
  %6499 = vrot.lane.b32.xlu0 %v6338, 64
  %v6500 = vpop.permute.xlu0 %6499
  %6501 = vrot.lane.b32.xlu0 %v6341, 64
  %v6502 = vpop.permute.xlu0 %6501
  %6503 = vrot.lane.b32.xlu0 %v6343, 64
  %v6504 = vpop.permute.xlu0 %6503
  %6505 = vrot.lane.b32.xlu0 %v6346, 64
  %v6506 = vpop.permute.xlu0 %6505
  %6507 = vrot.lane.b32.xlu0 %v6348, 64
  %v6508 = vpop.permute.xlu0 %6507
  %6509 = vrot.lane.b32.xlu0 %v6351, 64
  %v6510 = vpop.permute.xlu0 %6509
  %6511 = vrot.lane.b32.xlu0 %v6353, 64
  %v6512 = vpop.permute.xlu0 %6511
  %6513 = vrot.lane.b32.xlu0 %v6356, 64
  %v6514 = vpop.permute.xlu0 %6513
  %6515 = vrot.lane.b32.xlu0 %v6358, 64
  %v6516 = vpop.permute.xlu0 %6515
  %6517 = vrot.lane.b32.xlu0 %v6361, 64
  %v6518 = vpop.permute.xlu0 %6517
  %6519 = vrot.lane.b32.xlu0 %v6363, 64
  %v6520 = vpop.permute.xlu0 %6519
  %6521 = vrot.lane.b32.xlu0 %v6366, 64
  %v6522 = vpop.permute.xlu0 %6521
  %6523 = vrot.lane.b32.xlu0 %v6368, 64
  %v6524 = vpop.permute.xlu0 %6523
  %6525 = vrot.lane.b32.xlu0 %v6371, 64
  %v6526 = vpop.permute.xlu0 %6525
  %6527 = vrot.lane.b32.xlu0 %v6373, 64
  %v6528 = vpop.permute.xlu0 %6527
  %6529 = vrot.lane.b32.xlu0 %v6376, 64
  %v6530 = vpop.permute.xlu0 %6529
  %6531 = vrot.lane.b32.xlu0 %v6378, 64
  %v6532 = vpop.permute.xlu0 %6531
  %6533 = vrot.lane.b32.xlu0 %v6381, 64
  %v6534 = vpop.permute.xlu0 %6533
  %6535 = vrot.lane.b32.xlu0 %v6383, 64
  %v6536 = vpop.permute.xlu0 %6535
  %6537 = vrot.lane.b32.xlu0 %v6386, 64
  %v6538 = vpop.permute.xlu0 %6537
  %6539 = vrot.lane.b32.xlu0 %v6388, 64
  %v6540 = vpop.permute.xlu0 %6539
  %6541 = vrot.lane.b32.xlu0 %v6391, 64
  %v6542 = vpop.permute.xlu0 %6541
  %6543 = vrot.lane.b32.xlu0 %v6393, 64
  %v6544 = vpop.permute.xlu0 %6543
  %6545 = vrot.lane.b32.xlu0 %v6396, 64
  %v6546 = vpop.permute.xlu0 %6545
  %6547 = vrot.lane.b32.xlu0 %v6398, 64
  %v6548 = vpop.permute.xlu0 %6547
  %6549 = vrot.lane.b32.xlu0 %v6401, 64
  %v6550 = vpop.permute.xlu0 %6549
  %6551 = vrot.lane.b32.xlu0 %v6403, 64
  %v6552 = vpop.permute.xlu0 %6551
  %6553 = vrot.lane.b32.xlu0 %v6406, 64
  %v6554 = vpop.permute.xlu0 %6553
  %6555 = vrot.lane.b32.xlu0 %v6408, 64
  %v6556 = vpop.permute.xlu0 %6555
  %6557 = vrot.lane.b32.xlu0 %v6411, 64
  %v6558 = vpop.permute.xlu0 %6557
  %6559 = vrot.lane.b32.xlu0 %v6413, 64
  %v6560 = vpop.permute.xlu0 %6559
  %6561 = vrot.lane.b32.xlu0 %v6416, 64
  %v6562 = vpop.permute.xlu0 %6561
  %6563 = vrot.lane.b32.xlu0 %v6418, 64
  %v6564 = vpop.permute.xlu0 %6563
  %6565 = vrot.lane.b32.xlu0 %v6421, 64
  %v6566 = vpop.permute.xlu0 %6565
  %6567 = vrot.lane.b32.xlu0 %v6423, 64
  %v6568 = vpop.permute.xlu0 %6567
  %6569 = vrot.lane.b32.xlu0 %v6426, 64
  %v6570 = vpop.permute.xlu0 %6569
  %6571 = vrot.lane.b32.xlu0 %v6428, 64
  %v6572 = vpop.permute.xlu0 %6571
  %v6645 = vrot.slane %v6033, 2
  %v6646 = vrot.slane %v6034, 2
  %v6647 = vsel %vm1003, %v6645, %v6646
  %v6648 = vrot.slane %v6035, 2
  %v6649 = vsel %vm1003, %v6646, %v6648
  %v6650 = vrot.slane %v6036, 2
  %v6651 = vrot.slane %v6037, 2
  %v6652 = vsel %vm1003, %v6650, %v6651
  %v6653 = vrot.slane %v6038, 2
  %v6654 = vsel %vm1003, %v6651, %v6653
  %v6655 = vrot.slane %v6039, 2
  %v6656 = vrot.slane %v6040, 2
  %v6657 = vsel %vm1003, %v6655, %v6656
  %v6658 = vrot.slane %v6041, 2
  %v6659 = vsel %vm1003, %v6656, %v6658
  %v6660 = vrot.slane %v6042, 2
  %v6661 = vrot.slane %v6043, 2
  %v6662 = vsel %vm1003, %v6660, %v6661
  %v6663 = vrot.slane %v6044, 2
  %v6664 = vsel %vm1003, %v6661, %v6663
  %v6665 = vrot.slane %v6045, 2
  %v6666 = vrot.slane %v6046, 2
  %v6667 = vsel %vm1003, %v6665, %v6666
  %v6668 = vrot.slane %v6047, 2
  %v6669 = vsel %vm1003, %v6666, %v6668
  %v6670 = vrot.slane %v6048, 2
  %v6671 = vrot.slane %v6049, 2
  %v6672 = vsel %vm1003, %v6670, %v6671
  %v6673 = vrot.slane %v6050, 2
  %v6674 = vsel %vm1003, %v6671, %v6673
  %v6675 = vrot.slane %v6051, 2
  %v6676 = vrot.slane %v6052, 2
  %v6677 = vsel %vm1003, %v6675, %v6676
  %v6678 = vrot.slane %v6053, 2
  %v6679 = vsel %vm1003, %v6676, %v6678
  %v6680 = vrot.slane %v6054, 2
  %v6681 = vrot.slane %v6055, 2
  %v6682 = vsel %vm1003, %v6680, %v6681
  %v6683 = vrot.slane %v6056, 2
  %v6684 = vsel %vm1003, %v6681, %v6683
  %v6685 = vrot.slane %v6057, 2
  %v6686 = vrot.slane %v6058, 2
  %v6687 = vsel %vm1003, %v6685, %v6686
  %v6688 = vrot.slane %v6059, 2
  %v6689 = vsel %vm1003, %v6686, %v6688
  %v6690 = vrot.slane %v6060, 2
  %v6691 = vrot.slane %v6061, 2
  %v6692 = vsel %vm1003, %v6690, %v6691
  %v6693 = vrot.slane %v6062, 2
  %v6694 = vsel %vm1003, %v6691, %v6693
  %v6695 = vrot.slane %v6063, 2
  %v6696 = vrot.slane %v6064, 2
  %v6697 = vsel %vm1003, %v6695, %v6696
  %v6698 = vrot.slane %v6065, 2
  %v6699 = vsel %vm1003, %v6696, %v6698
  %v6700 = vrot.slane %v6066, 2
  %v6701 = vrot.slane %v6067, 2
  %v6702 = vsel %vm1003, %v6700, %v6701
  %v6703 = vrot.slane %v6068, 2
  %v6704 = vsel %vm1003, %v6701, %v6703
  %v6705 = vrot.slane %v6069, 2
  %v6706 = vrot.slane %v6070, 2
  %v6707 = vsel %vm1003, %v6705, %v6706
  %v6708 = vrot.slane %v6071, 2
  %v6709 = vsel %vm1003, %v6706, %v6708
  %v6710 = vrot.slane %v6072, 2
  %v6711 = vrot.slane %v6073, 2
  %v6712 = vsel %vm1003, %v6710, %v6711
  %v6713 = vrot.slane %v6074, 2
  %v6714 = vsel %vm1003, %v6711, %v6713
  %v6715 = vrot.slane %v6075, 2
  %v6716 = vrot.slane %v6076, 2
  %v6717 = vsel %vm1003, %v6715, %v6716
  %v6718 = vrot.slane %v6077, 2
  %v6719 = vsel %vm1003, %v6716, %v6718
  %v6720 = vrot.slane %v6078, 2
  %v6721 = vrot.slane %v6079, 2
  %v6722 = vsel %vm1003, %v6720, %v6721
  %v6723 = vrot.slane %v6080, 2
  %v6724 = vsel %vm1003, %v6721, %v6723
  %v6725 = vrot.slane %v6081, 2
  %v6726 = vrot.slane %v6082, 2
  %v6727 = vsel %vm1003, %v6725, %v6726
  %v6728 = vrot.slane %v6083, 2
  %v6729 = vsel %vm1003, %v6726, %v6728
  %v6730 = vrot.slane %v6084, 2
  %v6731 = vrot.slane %v6085, 2
  %v6732 = vsel %vm1003, %v6730, %v6731
  %v6733 = vrot.slane %v6086, 2
  %v6734 = vsel %vm1003, %v6731, %v6733
  %v6735 = vrot.slane %v6087, 2
  %v6736 = vrot.slane %v6088, 2
  %v6737 = vsel %vm1003, %v6735, %v6736
  %v6738 = vrot.slane %v6089, 2
  %v6739 = vsel %vm1003, %v6736, %v6738
  %v6740 = vrot.slane %v6090, 2
  %v6741 = vrot.slane %v6091, 2
  %v6742 = vsel %vm1003, %v6740, %v6741
  %v6743 = vrot.slane %v6092, 2
  %v6744 = vsel %vm1003, %v6741, %v6743
  %v6745 = vrot.slane %v6093, 2
  %v6746 = vrot.slane %v6094, 2
  %v6747 = vsel %vm1003, %v6745, %v6746
  %v6748 = vrot.slane %v6095, 2
  %v6749 = vsel %vm1003, %v6746, %v6748
  %v6750 = vrot.slane %v6096, 2
  %v6751 = vrot.slane %v6097, 2
  %v6752 = vsel %vm1003, %v6750, %v6751
  %v6753 = vrot.slane %v6098, 2
  %v6754 = vsel %vm1003, %v6751, %v6753
  %v6755 = vrot.slane %v6099, 2
  %v6756 = vrot.slane %v6100, 2
  %v6757 = vsel %vm1003, %v6755, %v6756
  %v6758 = vrot.slane %v6101, 2
  %v6759 = vsel %vm1003, %v6756, %v6758
  %v6760 = vrot.slane %v6102, 2
  %v6761 = vrot.slane %v6103, 2
  %v6762 = vsel %vm1003, %v6760, %v6761
  %v6763 = vrot.slane %v6104, 2
  %v6764 = vsel %vm1003, %v6761, %v6763
  %v6765 = vrot.slane %v6105, 2
  %v6766 = vrot.slane %v6106, 2
  %v6767 = vsel %vm1003, %v6765, %v6766
  %v6768 = vrot.slane %v6107, 2
  %v6769 = vsel %vm1003, %v6766, %v6768
  %v6770 = vrot.slane %v6108, 2
  %v6771 = vrot.slane %v6109, 2
  %v6772 = vsel %vm1003, %v6770, %v6771
  %v6773 = vrot.slane %v6110, 2
  %v6774 = vsel %vm1003, %v6771, %v6773
  %v6775 = vrot.slane %v6111, 2
  %v6776 = vrot.slane %v6112, 2
  %v6777 = vsel %vm1003, %v6775, %v6776
  %v6778 = vrot.slane %v6113, 2
  %v6779 = vsel %vm1003, %v6776, %v6778
  %v6780 = vrot.slane %v6114, 2
  %v6781 = vrot.slane %v6115, 2
  %v6782 = vsel %vm1003, %v6780, %v6781
  %v6783 = vrot.slane %v6116, 2
  %v6784 = vsel %vm1003, %v6781, %v6783
  %v6785 = vrot.slane %v6117, 2
  %v6786 = vrot.slane %v6118, 2
  %v6787 = vsel %vm1003, %v6785, %v6786
  %v6788 = vrot.slane %v6119, 2
  %v6789 = vsel %vm1003, %v6786, %v6788
  %v6790 = vrot.slane %v6120, 2
  %v6791 = vrot.slane %v6121, 2
  %v6792 = vsel %vm1003, %v6790, %v6791
  %v6793 = vrot.slane %v6122, 2
  %v6794 = vsel %vm1003, %v6791, %v6793
  %v6795 = vrot.slane %v6123, 2
  %v6796 = vrot.slane %v6124, 2
  %v6797 = vsel %vm1003, %v6795, %v6796
  %v6798 = vrot.slane %v6125, 2
  %v6799 = vsel %vm1003, %v6796, %v6798
  %v6800 = vrot.slane %v6126, 2
  %v6801 = vrot.slane %v6127, 2
  %v6802 = vsel %vm1003, %v6800, %v6801
  %v6803 = vrot.slane %v6128, 2
  %v6804 = vsel %vm1003, %v6801, %v6803
  %v6805 = vrot.slane %v6129, 2
  %v6806 = vrot.slane %v6130, 2
  %v6807 = vsel %vm1003, %v6805, %v6806
  %v6808 = vrot.slane %v6131, 2
  %v6809 = vsel %vm1003, %v6806, %v6808
  %v6810 = vrot.slane %v6132, 2
  %v6811 = vrot.slane %v6133, 2
  %v6812 = vsel %vm1003, %v6810, %v6811
  %v6813 = vrot.slane %v6134, 2
  %v6814 = vsel %vm1003, %v6811, %v6813
  %v6815 = vrot.slane %v6135, 2
  %v6816 = vrot.slane %v6136, 2
  %v6817 = vsel %vm1003, %v6815, %v6816
  %v6818 = vrot.slane %v6137, 2
  %v6819 = vsel %vm1003, %v6816, %v6818
  %v6820 = vrot.slane %v6138, 2
  %v6821 = vrot.slane %v6139, 2
  %v6822 = vsel %vm1003, %v6820, %v6821
  %v6823 = vrot.slane %v6140, 2
  %v6824 = vsel %vm1003, %v6821, %v6823
  %v6825 = vsel %vm151, %v6033, %v6430
  %v6826 = vsel %vm151, %v6034, %v6432
  %v6827 = vsel %vm151, %v6036, %v6434
  %v6828 = vsel %vm151, %v6037, %v6436
  %v6829 = vsel %vm151, %v6039, %v6438
  %v6830 = vsel %vm151, %v6040, %v6440
  %v6831 = vsel %vm151, %v6042, %v6442
  %v6832 = vsel %vm151, %v6043, %v6444
  %v6833 = vsel %vm151, %v6045, %v6446
  %v6834 = vsel %vm151, %v6046, %v6448
  %v6835 = vsel %vm151, %v6048, %v6450
  %v6836 = vsel %vm151, %v6049, %v6452
  %v6837 = vsel %vm151, %v6051, %v6454
  %v6838 = vsel %vm151, %v6052, %v6456
  %v6839 = vsel %vm151, %v6054, %v6458
  %v6840 = vsel %vm151, %v6055, %v6460
  %v6841 = vsel %vm151, %v6057, %v6462
  %v6842 = vsel %vm151, %v6058, %v6464
  %v6843 = vsel %vm151, %v6060, %v6466
  %v6844 = vsel %vm151, %v6061, %v6468
  %v6845 = vsel %vm151, %v6063, %v6470
  %v6846 = vsel %vm151, %v6064, %v6472
  %v6847 = vsel %vm151, %v6066, %v6474
  %v6848 = vsel %vm151, %v6067, %v6476
  %v6849 = vsel %vm151, %v6069, %v6478
  %v6850 = vsel %vm151, %v6070, %v6480
  %v6851 = vsel %vm151, %v6072, %v6482
  %v6852 = vsel %vm151, %v6073, %v6484
  %v6853 = vsel %vm151, %v6075, %v6486
  %v6854 = vsel %vm151, %v6076, %v6488
  %v6855 = vsel %vm151, %v6078, %v6490
  %v6856 = vsel %vm151, %v6079, %v6492
  %v6857 = vsel %vm151, %v6081, %v6494
  %v6858 = vsel %vm151, %v6082, %v6496
  %v6859 = vsel %vm151, %v6084, %v6498
  %v6860 = vsel %vm151, %v6085, %v6500
  %v6861 = vsel %vm151, %v6087, %v6502
  %v6862 = vsel %vm151, %v6088, %v6504
  %v6863 = vsel %vm151, %v6090, %v6506
  %v6864 = vsel %vm151, %v6091, %v6508
  %v6865 = vsel %vm151, %v6093, %v6510
  %v6866 = vsel %vm151, %v6094, %v6512
  %v6867 = vsel %vm151, %v6096, %v6514
  %v6868 = vsel %vm151, %v6097, %v6516
  %v6869 = vsel %vm151, %v6099, %v6518
  %v6870 = vsel %vm151, %v6100, %v6520
  %v6871 = vsel %vm151, %v6102, %v6522
  %v6872 = vsel %vm151, %v6103, %v6524
  %v6873 = vsel %vm151, %v6105, %v6526
  %v6874 = vsel %vm151, %v6106, %v6528
  %v6875 = vsel %vm151, %v6108, %v6530
  %v6876 = vsel %vm151, %v6109, %v6532
  %v6877 = vsel %vm151, %v6111, %v6534
  %v6878 = vsel %vm151, %v6112, %v6536
  %v6879 = vsel %vm151, %v6114, %v6538
  %v6880 = vsel %vm151, %v6115, %v6540
  %v6881 = vsel %vm151, %v6117, %v6542
  %v6882 = vsel %vm151, %v6118, %v6544
  %v6883 = vsel %vm151, %v6120, %v6546
  %v6884 = vsel %vm151, %v6121, %v6548
  %v6885 = vsel %vm151, %v6123, %v6550
  %v6886 = vsel %vm151, %v6124, %v6552
  %v6887 = vsel %vm151, %v6126, %v6554
  %v6888 = vsel %vm151, %v6127, %v6556
  %v6889 = vsel %vm151, %v6129, %v6558
  %v6890 = vsel %vm151, %v6130, %v6560
  %v6891 = vsel %vm151, %v6132, %v6562
  %v6892 = vsel %vm151, %v6133, %v6564
  %v6893 = vsel %vm151, %v6135, %v6566
  %v6894 = vsel %vm151, %v6136, %v6568
  %v6895 = vsel %vm151, %v6138, %v6570
  %v6896 = vsel %vm151, %v6139, %v6572
  %v6897 = vld [vmem:[%s7] sm:$0xff]
  %v6898 = vld [vmem:[%s7 + $0x8] sm:$0xff]
  %v6899 = vld [vmem:[%s7 + $0x10] sm:$0xff]
  %v6900 = vld [vmem:[%s7 + $0x18] sm:$0xff]
  %v6901 = vld [vmem:[%s7 + $0x20] sm:$0xff]
  %v6902 = vld [vmem:[%s7 + $0x28] sm:$0xff]
  %v6903 = vld [vmem:[%s7 + $0x30] sm:$0xff]
  %v6904 = vld [vmem:[%s7 + $0x38] sm:$0xff]
  %v6905 = vld [vmem:[%s7 + $0x40] sm:$0xff]
  %v6906 = vld [vmem:[%s7 + $0x48] sm:$0xff]
  %v6907 = vld [vmem:[%s7 + $0x50] sm:$0xff]
  %v6908 = vld [vmem:[%s7 + $0x58] sm:$0xff]
  %v6909 = vld [vmem:[%s7 + $0x60] sm:$0xff]
  %v6910 = vld [vmem:[%s7 + $0x68] sm:$0xff]
  %v6911 = vld [vmem:[%s7 + $0x70] sm:$0xff]
  %v6912 = vld [vmem:[%s7 + $0x78] sm:$0xff]
  %v6913 = vld [vmem:[%s7 + $0x80] sm:$0xff]
  %v6914 = vld [vmem:[%s7 + $0x88] sm:$0xff]
  %v6915 = vld [vmem:[%s7 + $0x90] sm:$0xff]
  %v6916 = vld [vmem:[%s7 + $0x98] sm:$0xff]
  %v6917 = vld [vmem:[%s7 + $0xa0] sm:$0xff]
  %v6918 = vld [vmem:[%s7 + $0xa8] sm:$0xff]
  %v6919 = vld [vmem:[%s7 + $0xb0] sm:$0xff]
  %v6920 = vld [vmem:[%s7 + $0xb8] sm:$0xff]
  %s6921 = scalar_lea.vmem %s7, 192
  %v6922 = vld [vmem:[%s6921] sm:$0xff]
  %v6923 = vld [vmem:[%s6921 + $0x8] sm:$0xff]
  %v6924 = vld [vmem:[%s6921 + $0x10] sm:$0xff]
  %v6925 = vld [vmem:[%s6921 + $0x18] sm:$0xff]
  %v6926 = vld [vmem:[%s6921 + $0x20] sm:$0xff]
  %v6927 = vld [vmem:[%s6921 + $0x28] sm:$0xff]
  %v6928 = vld [vmem:[%s6921 + $0x30] sm:$0xff]
  %v6929 = vld [vmem:[%s6921 + $0x38] sm:$0xff]
  %v6930 = vld [vmem:[%s6921 + $0x40] sm:$0xff]
  %v6931 = vld [vmem:[%s6921 + $0x48] sm:$0xff]
  %v6932 = vld [vmem:[%s6921 + $0x50] sm:$0xff]
  %v6933 = vld [vmem:[%s6921 + $0x58] sm:$0xff]
  %v6934 = vld [vmem:[%s6921 + $0x60] sm:$0xff]
  %v6935 = vld [vmem:[%s6921 + $0x68] sm:$0xff]
  %v6936 = vld [vmem:[%s6921 + $0x70] sm:$0xff]
  %v6937 = vld [vmem:[%s6921 + $0x78] sm:$0xff]
  %v6938 = vld [vmem:[%s6921 + $0x80] sm:$0xff]
  %v6939 = vld [vmem:[%s6921 + $0x88] sm:$0xff]
  %v6940 = vld [vmem:[%s6921 + $0x90] sm:$0xff]
  %v6941 = vld [vmem:[%s6921 + $0x98] sm:$0xff]
  %v6942 = vld [vmem:[%s6921 + $0xa0] sm:$0xff]
  %v6943 = vld [vmem:[%s6921 + $0xa8] sm:$0xff]
  %v6944 = vld [vmem:[%s6921 + $0xb0] sm:$0xff]
  %v6945 = vld [vmem:[%s6921 + $0xb8] sm:$0xff]
  %v6946 = vsel %vm151, %v6652, 0
  %v6948 = vsel %vm151, %v6654, 0
  %v6950 = vsel %vm151, %v6657, 0
  %v6952 = vsel %vm151, %v6659, 0
  %v6954 = vsel %vm151, %v6662, 0
  %v6956 = vsel %vm151, %v6664, 0
  %v6958 = vsel %vm151, %v6667, 0
  %v6960 = vsel %vm151, %v6669, 0
  %v6962 = vsel %vm151, %v6672, 0
  %v6964 = vsel %vm151, %v6674, 0
  %v6966 = vsel %vm151, %v6677, 0
  %v6968 = vsel %vm151, %v6679, 0
  %v6970 = vsel %vm151, %v6682, 0
  %v6972 = vsel %vm151, %v6684, 0
  %v6974 = vsel %vm151, %v6687, 0
  %v6976 = vsel %vm151, %v6689, 0
  %v6978 = vsel %vm151, %v6692, 0
  %v6980 = vsel %vm151, %v6694, 0
  %v6982 = vsel %vm151, %v6697, 0
  %v6984 = vsel %vm151, %v6699, 0
  %v6986 = vsel %vm151, %v6702, 0
  %v6988 = vsel %vm151, %v6704, 0
  %v6990 = vsel %vm151, %v6707, 0
  %v6992 = vsel %vm151, %v6709, 0
  %v6994 = vsel %vm151, %v6712, 0
  %v6996 = vsel %vm151, %v6714, 0
  %v6998 = vsel %vm151, %v6717, 0
  %v7000 = vsel %vm151, %v6719, 0
  %v7002 = vsel %vm151, %v6722, 0
  %v7004 = vsel %vm151, %v6724, 0
  %v7006 = vsel %vm151, %v6727, 0
  %v7008 = vsel %vm151, %v6729, 0
  %v7010 = vsel %vm151, %v6742, 0
  %v7012 = vsel %vm151, %v6744, 0
  %v7014 = vsel %vm151, %v6747, 0
  %v7016 = vsel %vm151, %v6749, 0
  %v7018 = vsel %vm151, %v6752, 0
  %v7020 = vsel %vm151, %v6754, 0
  %v7022 = vsel %vm151, %v6757, 0
  %v7024 = vsel %vm151, %v6759, 0
  %v7026 = vsel %vm151, %v6762, 0
  %v7028 = vsel %vm151, %v6764, 0
  %v7030 = vsel %vm151, %v6767, 0
  %v7032 = vsel %vm151, %v6769, 0
  %v7034 = vsel %vm151, %v6772, 0
  %v7036 = vsel %vm151, %v6774, 0
  %v7038 = vsel %vm151, %v6777, 0
  %v7040 = vsel %vm151, %v6779, 0
  %v7042 = vsel %vm151, %v6782, 0
  %v7044 = vsel %vm151, %v6784, 0
  %v7046 = vsel %vm151, %v6787, 0
  %v7048 = vsel %vm151, %v6789, 0
  %v7050 = vsel %vm151, %v6792, 0
  %v7052 = vsel %vm151, %v6794, 0
  %v7054 = vsel %vm151, %v6797, 0
  %v7056 = vsel %vm151, %v6799, 0
  %v7058 = vsel %vm151, %v6802, 0
  %v7060 = vsel %vm151, %v6804, 0
  %v7062 = vsel %vm151, %v6807, 0
  %v7064 = vsel %vm151, %v6809, 0
  %v7066 = vsel %vm151, %v6812, 0
  %v7068 = vsel %vm151, %v6814, 0
  %v7070 = vsel %vm151, %v6817, 0
  %v7072 = vsel %vm151, %v6819, 0
  %7074 = vmatprep.subr.mxu0 0.0
  %7075 = vmatpush1.msra.mxu0 %v6922
  %7076 = vmatprep.subr.mxu0 0.0
  %7077 = vmatpush1.msra.mxu0 %v6923
  %7078 = vmatprep.subr.mxu0 0.0
  %7079 = vmatpush1.msra.mxu0 %v6924
  %7080 = vmatprep.subr.mxu0 0.0
  %7081 = vmatpush1.msra.mxu0 %v6925
  %7082 = vmatprep.subr.mxu0 0.0
  %7083 = vmatpush1.msra.mxu0 %v6926
  %7084 = vmatprep.subr.mxu0 0.0
  %7085 = vmatpush1.msra.mxu0 %v6927
  %7086 = vmatprep.subr.mxu0 0.0
  %7087 = vmatpush1.msra.mxu0 %v6928
  %7088 = vmatprep.subr.mxu0 0.0
  %7089 = vmatpush1.msra.mxu0 %v6929
  %7090 = vmatprep.subr.mxu0 0.0
  %7091 = vmatpush1.msra.mxu0 %v6930
  %7092 = vmatprep.subr.mxu0 0.0
  %7093 = vmatpush1.msra.mxu0 %v6931
  %7094 = vmatprep.subr.mxu0 0.0
  %7095 = vmatpush1.msra.mxu0 %v6932
  %7096 = vmatprep.subr.mxu0 0.0
  %7097 = vmatpush1.msra.mxu0 %v6933
  %7098 = vmatprep.subr.mxu0 0.0
  %7099 = vmatpush1.msra.mxu0 %v6934
  %7100 = vmatprep.subr.mxu0 0.0
  %7101 = vmatpush1.msra.mxu0 %v6935
  %7102 = vmatprep.subr.mxu0 0.0
  %7103 = vmatpush1.msra.mxu0 %v6936
  %7104 = vmatprep.subr.mxu0 0.0
  %7105 = vmatpush1.msra.mxu0 %v6937
  %7106 = vmatprep.subr.mxu0 0.0
  %7107 = vmatpush1.msra.mxu0 %v6938
  %7108 = vmatprep.subr.mxu0 0.0
  %7109 = vmatpush1.msra.mxu0 %v6939
  %7110 = vmatprep.subr.mxu0 0.0
  %7111 = vmatpush1.msra.mxu0 %v6940
  %7112 = vmatprep.subr.mxu0 0.0
  %7113 = vmatpush1.msra.mxu0 %v6941
  %7114 = vmatprep.subr.mxu0 0.0
  %7115 = vmatpush1.msra.mxu0 %v6942
  %7116 = vmatprep.subr.mxu0 0.0
  %7117 = vmatpush1.msra.mxu0 %v6943
  %7118 = vmatprep.subr.mxu0 0.0
  %7119 = vmatpush1.msra.mxu0 %v6944
  %7120 = vmatprep.subr.mxu0 0.0
  %7121 = vmatpush1.msra.mxu0 %v6945
  %7122 = vmatprep.subr.mxu0 0.0
  %7123 = vmatpush1.msra.mxu0 0.0
  %7124 = vmatprep.subr.mxu0 0.0
  %7125 = vmatpush1.msra.mxu0 0.0
  %7126 = vmatprep.subr.mxu0 0.0
  %7127 = vmatpush1.msra.mxu0 0.0
  %7128 = vmatprep.subr.mxu0 0.0
  %7129 = vmatpush1.msra.mxu0 0.0
  %7130 = vmatprep.subr.mxu0 0.0
  %7131 = vmatpush1.msra.mxu0 0.0
  %7132 = vmatprep.subr.mxu0 0.0
  %7133 = vmatpush1.msra.mxu0 0.0
  %7134 = vmatprep.subr.mxu0 0.0
  %7135 = vmatpush1.msra.mxu0 0.0
  %7136 = vmatprep.subr.mxu0 0.0
  %7137 = vmatpush1.msra.mxu0 0.0
  %7138 = vmatprep.mubr.f32.mxu0 %v6946
  %7139 = vmatmul.mubr.f32.gmra.mrb[0].mxu0 %v6827
  %v7140 = vpop.f32.mrb[0].mxu0
  %v7141 = vadd.f32 0.0, %v7140
  %v7142 = vpop.f32.mrb[0].mxu0
  %7143 = vmatprep.mubr.f32.mxu0 %v6948
  %7144 = vmatmul.mubr.f32.gmra.mrb[0].mxu0 %v6828
  %v7145 = vpop.f32.mrb[0].mxu0
  %v7146 = vadd.f32 0.0, %v7145
  %v7147 = vpop.f32.mrb[0].mxu0
  %7148 = vmatprep.mubr.f32.mxu0 %v6950
  %7149 = vmatmul.mubr.f32.gmra.mrb[0].mxu0 %v6829
  %v7150 = vpop.f32.mrb[0].mxu0
  %v7151 = vadd.f32 0.0, %v7150
  %v7152 = vpop.f32.mrb[0].mxu0
  %7153 = vmatprep.mubr.f32.mxu0 %v6952
  %7154 = vmatmul.mubr.f32.gmra.mrb[0].mxu0 %v6830
  %v7155 = vpop.f32.mrb[0].mxu0
  %v7156 = vadd.f32 0.0, %v7155
  %v7157 = vpop.f32.mrb[0].mxu0
  %7158 = vmatprep.mubr.f32.mxu0 %v6954
  %7159 = vmatmul.mubr.f32.gmra.mrb[0].mxu0 %v6831
  %v7160 = vpop.f32.mrb[0].mxu0
  %v7161 = vadd.f32 0.0, %v7160
  %v7162 = vpop.f32.mrb[0].mxu0
  %7163 = vmatprep.mubr.f32.mxu0 %v6956
  %7164 = vmatmul.mubr.f32.gmra.mrb[0].mxu0 %v6832
  %v7165 = vpop.f32.mrb[0].mxu0
  %v7166 = vadd.f32 0.0, %v7165
  %v7167 = vpop.f32.mrb[0].mxu0
  %7168 = vmatprep.mubr.f32.mxu0 %v6958
  %7169 = vmatmul.mubr.f32.gmra.mrb[0].mxu0 %v6833
  %v7170 = vpop.f32.mrb[0].mxu0
  %v7171 = vadd.f32 0.0, %v7170
  %v7172 = vpop.f32.mrb[0].mxu0
  %7173 = vmatprep.mubr.f32.mxu0 %v6960
  %7174 = vmatmul.mubr.f32.gmra.mrb[0].mxu0 %v6834
  %v7175 = vpop.f32.mrb[0].mxu0
  %v7176 = vadd.f32 0.0, %v7175
  %v7177 = vpop.f32.mrb[0].mxu0
  %7178 = vmatprep.mubr.f32.mxu0 %v6962
  %7179 = vmatmul.mubr.f32.gmra.mrb[0].mxu0 %v6835
  %v7180 = vpop.f32.mrb[0].mxu0
  %v7181 = vadd.f32 0.0, %v7180
  %v7182 = vpop.f32.mrb[0].mxu0
  %7183 = vmatprep.mubr.f32.mxu0 %v6964
  %7184 = vmatmul.mubr.f32.gmra.mrb[0].mxu0 %v6836
  %v7185 = vpop.f32.mrb[0].mxu0
  %v7186 = vadd.f32 0.0, %v7185
  %v7187 = vpop.f32.mrb[0].mxu0
  %7188 = vmatprep.mubr.f32.mxu0 %v6966
  %7189 = vmatmul.mubr.f32.gmra.mrb[0].mxu0 %v6837
  %v7190 = vpop.f32.mrb[0].mxu0
  %v7191 = vadd.f32 0.0, %v7190
  %v7192 = vpop.f32.mrb[0].mxu0
  %7193 = vmatprep.mubr.f32.mxu0 %v6968
  %7194 = vmatmul.mubr.f32.gmra.mrb[0].mxu0 %v6838
  %v7195 = vpop.f32.mrb[0].mxu0
  %v7196 = vadd.f32 0.0, %v7195
  %v7197 = vpop.f32.mrb[0].mxu0
  %7198 = vmatprep.mubr.f32.mxu0 %v6970
  %7199 = vmatmul.mubr.f32.gmra.mrb[0].mxu0 %v6839
  %v7200 = vpop.f32.mrb[0].mxu0
  %v7201 = vadd.f32 0.0, %v7200
  %v7202 = vpop.f32.mrb[0].mxu0
  %7203 = vmatprep.mubr.f32.mxu0 %v6972
  %7204 = vmatmul.mubr.f32.gmra.mrb[0].mxu0 %v6840
  %v7205 = vpop.f32.mrb[0].mxu0
  %v7206 = vadd.f32 0.0, %v7205
  %v7207 = vpop.f32.mrb[0].mxu0
  %7208 = vmatprep.mubr.f32.mxu0 %v6974
  %7209 = vmatmul.mubr.f32.gmra.mrb[0].mxu0 %v6841
  %v7210 = vpop.f32.mrb[0].mxu0
  %v7211 = vadd.f32 0.0, %v7210
  %v7212 = vpop.f32.mrb[0].mxu0
  %7213 = vmatprep.mubr.f32.mxu0 %v6976
  %7214 = vmatmul.mubr.f32.gmra.mrb[0].mxu0 %v6842
  %v7215 = vpop.f32.mrb[0].mxu0
  %v7216 = vadd.f32 0.0, %v7215
  %v7217 = vpop.f32.mrb[0].mxu0
  %7218 = vmatprep.mubr.f32.mxu0 %v6978
  %7219 = vmatmul.mubr.f32.gmra.mrb[0].mxu0 %v6843
  %v7220 = vpop.f32.mrb[0].mxu0
  %v7221 = vadd.f32 0.0, %v7220
  %v7222 = vpop.f32.mrb[0].mxu0
  %7223 = vmatprep.mubr.f32.mxu0 %v6980
  %7224 = vmatmul.mubr.f32.gmra.mrb[0].mxu0 %v6844
  %v7225 = vpop.f32.mrb[0].mxu0
  %v7226 = vadd.f32 0.0, %v7225
  %v7227 = vpop.f32.mrb[0].mxu0
  %7228 = vmatprep.mubr.f32.mxu0 %v6982
  %7229 = vmatmul.mubr.f32.gmra.mrb[0].mxu0 %v6845
  %v7230 = vpop.f32.mrb[0].mxu0
  %v7231 = vadd.f32 0.0, %v7230
  %v7232 = vpop.f32.mrb[0].mxu0
  %7233 = vmatprep.mubr.f32.mxu0 %v6984
  %7234 = vmatmul.mubr.f32.gmra.mrb[0].mxu0 %v6846
  %v7235 = vpop.f32.mrb[0].mxu0
  %v7236 = vadd.f32 0.0, %v7235
  %v7237 = vpop.f32.mrb[0].mxu0
  %7238 = vmatprep.mubr.f32.mxu0 %v6986
  %7239 = vmatmul.mubr.f32.gmra.mrb[0].mxu0 %v6847
  %v7240 = vpop.f32.mrb[0].mxu0
  %v7241 = vadd.f32 0.0, %v7240
  %v7242 = vpop.f32.mrb[0].mxu0
  %7243 = vmatprep.mubr.f32.mxu0 %v6988
  %7244 = vmatmul.mubr.f32.gmra.mrb[0].mxu0 %v6848
  %v7245 = vpop.f32.mrb[0].mxu0
  %v7246 = vadd.f32 0.0, %v7245
  %v7247 = vpop.f32.mrb[0].mxu0
  %7248 = vmatprep.mubr.f32.mxu0 %v6990
  %7249 = vmatmul.mubr.f32.gmra.mrb[0].mxu0 %v6849
  %v7250 = vpop.f32.mrb[0].mxu0
  %v7251 = vadd.f32 0.0, %v7250
  %v7252 = vpop.f32.mrb[0].mxu0
  %7253 = vmatprep.mubr.f32.mxu0 %v6992
  %7254 = vmatmul.mubr.f32.gmra.mrb[0].mxu0 %v6850
  %v7255 = vpop.f32.mrb[0].mxu0
  %v7256 = vadd.f32 0.0, %v7255
  %v7257 = vpop.f32.mrb[0].mxu0
  %7258 = vmatprep.mubr.f32.mxu0 %v6994
  %7259 = vmatmul.mubr.f32.gmra.mrb[0].mxu0 %v6851
  %v7260 = vpop.f32.mrb[0].mxu0
  %v7261 = vadd.f32 0.0, %v7260
  %v7262 = vpop.f32.mrb[0].mxu0
  %7263 = vmatprep.mubr.f32.mxu0 %v6996
  %7264 = vmatmul.mubr.f32.gmra.mrb[0].mxu0 %v6852
  %v7265 = vpop.f32.mrb[0].mxu0
  %v7266 = vadd.f32 0.0, %v7265
  %v7267 = vpop.f32.mrb[0].mxu0
  %7268 = vmatprep.mubr.f32.mxu0 %v6998
  %7269 = vmatmul.mubr.f32.gmra.mrb[0].mxu0 %v6853
  %v7270 = vpop.f32.mrb[0].mxu0
  %v7271 = vadd.f32 0.0, %v7270
  %v7272 = vpop.f32.mrb[0].mxu0
  %7273 = vmatprep.mubr.f32.mxu0 %v7000
  %7274 = vmatmul.mubr.f32.gmra.mrb[0].mxu0 %v6854
  %v7275 = vpop.f32.mrb[0].mxu0
  %v7276 = vadd.f32 0.0, %v7275
  %v7277 = vpop.f32.mrb[0].mxu0
  %7278 = vmatprep.mubr.f32.mxu0 %v7002
  %7279 = vmatmul.mubr.f32.gmra.mrb[0].mxu0 %v6855
  %v7280 = vpop.f32.mrb[0].mxu0
  %v7281 = vadd.f32 0.0, %v7280
  %v7282 = vpop.f32.mrb[0].mxu0
  %7283 = vmatprep.mubr.f32.mxu0 %v7004
  %7284 = vmatmul.mubr.f32.gmra.mrb[0].mxu0 %v6856
  %v7285 = vpop.f32.mrb[0].mxu0
  %v7286 = vadd.f32 0.0, %v7285
  %v7287 = vpop.f32.mrb[0].mxu0
  %7288 = vmatprep.mubr.f32.mxu0 %v7006
  %7289 = vmatmul.mubr.f32.gmra.mrb[0].mxu0 %v6857
  %v7290 = vpop.f32.mrb[0].mxu0
  %v7291 = vadd.f32 0.0, %v7290
  %v7292 = vpop.f32.mrb[0].mxu0
  %7293 = vmatprep.mubr.f32.mxu0 %v7008
  %7294 = vmatmul.mubr.f32.gmra.mrb[0].mxu0 %v6858
  %v7295 = vpop.f32.mrb[0].mxu0
  %v7296 = vadd.f32 0.0, %v7295
  %v7297 = vpop.f32.mrb[0].mxu0
  %7298 = vmatprep.mubr.f32.mxu0 %v7010
  %7299 = vmatmul.mubr.f32.gmra.mrb[0].mxu0 %v6863
  %v7300 = vpop.f32.mrb[0].mxu0
  %v7301 = vadd.f32 0.0, %v7300
  %v7302 = vpop.f32.mrb[0].mxu0
  %7303 = vmatprep.mubr.f32.mxu0 %v7012
  %7304 = vmatmul.mubr.f32.gmra.mrb[0].mxu0 %v6864
  %v7305 = vpop.f32.mrb[0].mxu0
  %v7306 = vadd.f32 0.0, %v7305
  %v7307 = vpop.f32.mrb[0].mxu0
  %7308 = vmatprep.mubr.f32.mxu0 %v7014
  %7309 = vmatmul.mubr.f32.gmra.mrb[0].mxu0 %v6865
  %v7310 = vpop.f32.mrb[0].mxu0
  %v7311 = vadd.f32 0.0, %v7310
  %v7312 = vpop.f32.mrb[0].mxu0
  %7313 = vmatprep.mubr.f32.mxu0 %v7016
  %7314 = vmatmul.mubr.f32.gmra.mrb[0].mxu0 %v6866
  %v7315 = vpop.f32.mrb[0].mxu0
  %v7316 = vadd.f32 0.0, %v7315
  %v7317 = vpop.f32.mrb[0].mxu0
  %7318 = vmatprep.mubr.f32.mxu0 %v7018
  %7319 = vmatmul.mubr.f32.gmra.mrb[0].mxu0 %v6867
  %v7320 = vpop.f32.mrb[0].mxu0
  %v7321 = vadd.f32 0.0, %v7320
  %v7322 = vpop.f32.mrb[0].mxu0
  %7323 = vmatprep.mubr.f32.mxu0 %v7020
  %7324 = vmatmul.mubr.f32.gmra.mrb[0].mxu0 %v6868
  %v7325 = vpop.f32.mrb[0].mxu0
  %v7326 = vadd.f32 0.0, %v7325
  %v7327 = vpop.f32.mrb[0].mxu0
  %7328 = vmatprep.mubr.f32.mxu0 %v7022
  %7329 = vmatmul.mubr.f32.gmra.mrb[0].mxu0 %v6869
  %v7330 = vpop.f32.mrb[0].mxu0
  %v7331 = vadd.f32 0.0, %v7330
  %v7332 = vpop.f32.mrb[0].mxu0
  %7333 = vmatprep.mubr.f32.mxu0 %v7024
  %7334 = vmatmul.mubr.f32.gmra.mrb[0].mxu0 %v6870
  %v7335 = vpop.f32.mrb[0].mxu0
  %v7336 = vadd.f32 0.0, %v7335
  %v7337 = vpop.f32.mrb[0].mxu0
  %7338 = vmatprep.mubr.f32.mxu0 %v7026
  %7339 = vmatmul.mubr.f32.gmra.mrb[0].mxu0 %v6871
  %v7340 = vpop.f32.mrb[0].mxu0
  %v7341 = vadd.f32 0.0, %v7340
  %v7342 = vpop.f32.mrb[0].mxu0
  %7343 = vmatprep.mubr.f32.mxu0 %v7028
  %7344 = vmatmul.mubr.f32.gmra.mrb[0].mxu0 %v6872
  %v7345 = vpop.f32.mrb[0].mxu0
  %v7346 = vadd.f32 0.0, %v7345
  %v7347 = vpop.f32.mrb[0].mxu0
  %7348 = vmatprep.mubr.f32.mxu0 %v7030
  %7349 = vmatmul.mubr.f32.gmra.mrb[0].mxu0 %v6873
  %v7350 = vpop.f32.mrb[0].mxu0
  %v7351 = vadd.f32 0.0, %v7350
  %v7352 = vpop.f32.mrb[0].mxu0
  %7353 = vmatprep.mubr.f32.mxu0 %v7032
  %7354 = vmatmul.mubr.f32.gmra.mrb[0].mxu0 %v6874
  %v7355 = vpop.f32.mrb[0].mxu0
  %v7356 = vadd.f32 0.0, %v7355
  %v7357 = vpop.f32.mrb[0].mxu0
  %7358 = vmatprep.mubr.f32.mxu0 %v7034
  %7359 = vmatmul.mubr.f32.gmra.mrb[0].mxu0 %v6875
  %v7360 = vpop.f32.mrb[0].mxu0
  %v7361 = vadd.f32 0.0, %v7360
  %v7362 = vpop.f32.mrb[0].mxu0
  %7363 = vmatprep.mubr.f32.mxu0 %v7036
  %7364 = vmatmul.mubr.f32.gmra.mrb[0].mxu0 %v6876
  %v7365 = vpop.f32.mrb[0].mxu0
  %v7366 = vadd.f32 0.0, %v7365
  %v7367 = vpop.f32.mrb[0].mxu0
  %7368 = vmatprep.mubr.f32.mxu0 %v7038
  %7369 = vmatmul.mubr.f32.gmra.mrb[0].mxu0 %v6877
  %v7370 = vpop.f32.mrb[0].mxu0
  %v7371 = vadd.f32 0.0, %v7370
  %v7372 = vpop.f32.mrb[0].mxu0
  %7373 = vmatprep.mubr.f32.mxu0 %v7040
  %7374 = vmatmul.mubr.f32.gmra.mrb[0].mxu0 %v6878
  %v7375 = vpop.f32.mrb[0].mxu0
  %v7376 = vadd.f32 0.0, %v7375
  %v7377 = vpop.f32.mrb[0].mxu0
  %7378 = vmatprep.mubr.f32.mxu0 %v7042
  %7379 = vmatmul.mubr.f32.gmra.mrb[0].mxu0 %v6879
  %v7380 = vpop.f32.mrb[0].mxu0
  %v7381 = vadd.f32 0.0, %v7380
  %v7382 = vpop.f32.mrb[0].mxu0
  %7383 = vmatprep.mubr.f32.mxu0 %v7044
  %7384 = vmatmul.mubr.f32.gmra.mrb[0].mxu0 %v6880
  %v7385 = vpop.f32.mrb[0].mxu0
  %v7386 = vadd.f32 0.0, %v7385
  %v7387 = vpop.f32.mrb[0].mxu0
  %7388 = vmatprep.mubr.f32.mxu0 %v7046
  %7389 = vmatmul.mubr.f32.gmra.mrb[0].mxu0 %v6881
  %v7390 = vpop.f32.mrb[0].mxu0
  %v7391 = vadd.f32 0.0, %v7390
  %v7392 = vpop.f32.mrb[0].mxu0
  %7393 = vmatprep.mubr.f32.mxu0 %v7048
  %7394 = vmatmul.mubr.f32.gmra.mrb[0].mxu0 %v6882
  %v7395 = vpop.f32.mrb[0].mxu0
  %v7396 = vadd.f32 0.0, %v7395
  %v7397 = vpop.f32.mrb[0].mxu0
  %7398 = vmatprep.mubr.f32.mxu0 %v7050
  %7399 = vmatmul.mubr.f32.gmra.mrb[0].mxu0 %v6883
  %v7400 = vpop.f32.mrb[0].mxu0
  %v7401 = vadd.f32 0.0, %v7400
  %v7402 = vpop.f32.mrb[0].mxu0
  %7403 = vmatprep.mubr.f32.mxu0 %v7052
  %7404 = vmatmul.mubr.f32.gmra.mrb[0].mxu0 %v6884
  %v7405 = vpop.f32.mrb[0].mxu0
  %v7406 = vadd.f32 0.0, %v7405
  %v7407 = vpop.f32.mrb[0].mxu0
  %7408 = vmatprep.mubr.f32.mxu0 %v7054
  %7409 = vmatmul.mubr.f32.gmra.mrb[0].mxu0 %v6885
  %v7410 = vpop.f32.mrb[0].mxu0
  %v7411 = vadd.f32 0.0, %v7410
  %v7412 = vpop.f32.mrb[0].mxu0
  %7413 = vmatprep.mubr.f32.mxu0 %v7056
  %7414 = vmatmul.mubr.f32.gmra.mrb[0].mxu0 %v6886
  %v7415 = vpop.f32.mrb[0].mxu0
  %v7416 = vadd.f32 0.0, %v7415
  %v7417 = vpop.f32.mrb[0].mxu0
  %7418 = vmatprep.mubr.f32.mxu0 %v7058
  %7419 = vmatmul.mubr.f32.gmra.mrb[0].mxu0 %v6887
  %v7420 = vpop.f32.mrb[0].mxu0
  %v7421 = vadd.f32 0.0, %v7420
  %v7422 = vpop.f32.mrb[0].mxu0
  %7423 = vmatprep.mubr.f32.mxu0 %v7060
  %7424 = vmatmul.mubr.f32.gmra.mrb[0].mxu0 %v6888
  %v7425 = vpop.f32.mrb[0].mxu0
  %v7426 = vadd.f32 0.0, %v7425
  %v7427 = vpop.f32.mrb[0].mxu0
  %7428 = vmatprep.mubr.f32.mxu0 %v7062
  %7429 = vmatmul.mubr.f32.gmra.mrb[0].mxu0 %v6889
  %v7430 = vpop.f32.mrb[0].mxu0
  %v7431 = vadd.f32 0.0, %v7430
  %v7432 = vpop.f32.mrb[0].mxu0
  %7433 = vmatprep.mubr.f32.mxu0 %v7064
  %7434 = vmatmul.mubr.f32.gmra.mrb[0].mxu0 %v6890
  %v7435 = vpop.f32.mrb[0].mxu0
  %v7436 = vadd.f32 0.0, %v7435
  %v7437 = vpop.f32.mrb[0].mxu0
  %7438 = vmatprep.mubr.f32.mxu0 %v7066
  %7439 = vmatmul.mubr.f32.gmra.mrb[0].mxu0 %v6891
  %v7440 = vpop.f32.mrb[0].mxu0
  %v7441 = vadd.f32 0.0, %v7440
  %v7442 = vpop.f32.mrb[0].mxu0
  %7443 = vmatprep.mubr.f32.mxu0 %v7068
  %7444 = vmatmul.mubr.f32.gmra.mrb[0].mxu0 %v6892
  %v7445 = vpop.f32.mrb[0].mxu0
  %v7446 = vadd.f32 0.0, %v7445
  %v7447 = vpop.f32.mrb[0].mxu0
  %7448 = vmatprep.mubr.f32.mxu0 %v7070
  %7449 = vmatmul.mubr.f32.gmra.mrb[0].mxu0 %v6893
  %v7450 = vpop.f32.mrb[0].mxu0
  %v7451 = vadd.f32 0.0, %v7450
  %v7452 = vpop.f32.mrb[0].mxu0
  %7453 = vmatprep.mubr.f32.mxu0 %v7072
  %7454 = vmatmul.mubr.f32.gmra.mrb[0].mxu0 %v6894
  %v7455 = vpop.f32.mrb[0].mxu0
  %v7456 = vadd.f32 0.0, %v7455
  %v7457 = vpop.f32.mrb[0].mxu0
  %7458 = vdwg.mxu0
  %v7459 = vsel %vm151, %v6647, 0
  %v7461 = vsel %vm151, %v6649, 0
  %v7463 = vsel %vm151, %v6737, 0
  %v7465 = vsel %vm151, %v6739, 0
  %7467 = vmatprep.subr.mxu0 0.0
  %7468 = vmatpush1.msra.mxu0 %v6897
  %7469 = vmatprep.subr.mxu0 0.0
  %7470 = vmatpush1.msra.mxu0 %v6898
  %7471 = vmatprep.subr.mxu0 0.0
  %7472 = vmatpush1.msra.mxu0 %v6899
  %7473 = vmatprep.subr.mxu0 0.0
  %7474 = vmatpush1.msra.mxu0 %v6900
  %7475 = vmatprep.subr.mxu0 0.0
  %7476 = vmatpush1.msra.mxu0 %v6901
  %7477 = vmatprep.subr.mxu0 0.0
  %7478 = vmatpush1.msra.mxu0 %v6902
  %7479 = vmatprep.subr.mxu0 0.0
  %7480 = vmatpush1.msra.mxu0 %v6903
  %7481 = vmatprep.subr.mxu0 0.0
  %7482 = vmatpush1.msra.mxu0 %v6904
  %7483 = vmatprep.subr.mxu0 0.0
  %7484 = vmatpush1.msra.mxu0 %v6905
  %7485 = vmatprep.subr.mxu0 0.0
  %7486 = vmatpush1.msra.mxu0 %v6906
  %7487 = vmatprep.subr.mxu0 0.0
  %7488 = vmatpush1.msra.mxu0 %v6907
  %7489 = vmatprep.subr.mxu0 0.0
  %7490 = vmatpush1.msra.mxu0 %v6908
  %7491 = vmatprep.subr.mxu0 0.0
  %7492 = vmatpush1.msra.mxu0 %v6909
  %7493 = vmatprep.subr.mxu0 0.0
  %7494 = vmatpush1.msra.mxu0 %v6910
  %7495 = vmatprep.subr.mxu0 0.0
  %7496 = vmatpush1.msra.mxu0 %v6911
  %7497 = vmatprep.subr.mxu0 0.0
  %7498 = vmatpush1.msra.mxu0 %v6912
  %7499 = vmatprep.subr.mxu0 0.0
  %7500 = vmatpush1.msra.mxu0 %v6913
  %7501 = vmatprep.subr.mxu0 0.0
  %7502 = vmatpush1.msra.mxu0 %v6914
  %7503 = vmatprep.subr.mxu0 0.0
  %7504 = vmatpush1.msra.mxu0 %v6915
  %7505 = vmatprep.subr.mxu0 0.0
  %7506 = vmatpush1.msra.mxu0 %v6916
  %7507 = vmatprep.subr.mxu0 0.0
  %7508 = vmatpush1.msra.mxu0 %v6917
  %7509 = vmatprep.subr.mxu0 0.0
  %7510 = vmatpush1.msra.mxu0 %v6918
  %7511 = vmatprep.subr.mxu0 0.0
  %7512 = vmatpush1.msra.mxu0 %v6919
  %7513 = vmatprep.subr.mxu0 0.0
  %7514 = vmatpush1.msra.mxu0 %v6920
  %7515 = vmatprep.subr.mxu0 0.0
  %7516 = vmatpush1.msra.mxu0 0.0
  %7517 = vmatprep.subr.mxu0 0.0
  %7518 = vmatpush1.msra.mxu0 0.0
  %7519 = vmatprep.subr.mxu0 0.0
  %7520 = vmatpush1.msra.mxu0 0.0
  %7521 = vmatprep.subr.mxu0 0.0
  %7522 = vmatpush1.msra.mxu0 0.0
  %7523 = vmatprep.subr.mxu0 0.0
  %7524 = vmatpush1.msra.mxu0 0.0
  %7525 = vmatprep.subr.mxu0 0.0
  %7526 = vmatpush1.msra.mxu0 0.0
  %7527 = vmatprep.subr.mxu0 0.0
  %7528 = vmatpush1.msra.mxu0 0.0
  %7529 = vmatprep.subr.mxu0 0.0
  %7530 = vmatpush1.msra.mxu0 0.0
  %7531 = vmatprep.mubr.f32.mxu0 %v7459
  %7532 = vmatmul.mubr.f32.gmra.mrb[0].mxu0 %v6825
  %v7533 = vpop.f32.mrb[0].mxu0
  %v7534 = vadd.f32 %v7141, %v7533
  %v7535 = vpop.f32.mrb[0].mxu0
  %7536 = vmatprep.mubr.f32.mxu0 %v7461
  %7537 = vmatmul.mubr.f32.gmra.mrb[0].mxu0 %v6826
  %v7538 = vpop.f32.mrb[0].mxu0
  %v7539 = vadd.f32 %v7146, %v7538
  %v7540 = vpop.f32.mrb[0].mxu0
  %7541 = vmatprep.mubr.f32.mxu0 %v6946
  %7542 = vmatmul.mubr.f32.gmra.mrb[0].mxu0 %v6827
  %v7543 = vpop.f32.mrb[0].mxu0
  %v7544 = vadd.f32 %v7151, %v7543
  %v7545 = vpop.f32.mrb[0].mxu0
  %7546 = vmatprep.mubr.f32.mxu0 %v6948
  %7547 = vmatmul.mubr.f32.gmra.mrb[0].mxu0 %v6828
  %v7548 = vpop.f32.mrb[0].mxu0
  %v7549 = vadd.f32 %v7156, %v7548
  %v7550 = vpop.f32.mrb[0].mxu0
  %7551 = vmatprep.mubr.f32.mxu0 %v6950
  %7552 = vmatmul.mubr.f32.gmra.mrb[0].mxu0 %v6829
  %v7553 = vpop.f32.mrb[0].mxu0
  %v7554 = vadd.f32 %v7161, %v7553
  %v7555 = vpop.f32.mrb[0].mxu0
  %7556 = vmatprep.mubr.f32.mxu0 %v6952
  %7557 = vmatmul.mubr.f32.gmra.mrb[0].mxu0 %v6830
  %v7558 = vpop.f32.mrb[0].mxu0
  %v7559 = vadd.f32 %v7166, %v7558
  %v7560 = vpop.f32.mrb[0].mxu0
  %7561 = vmatprep.mubr.f32.mxu0 %v6954
  %7562 = vmatmul.mubr.f32.gmra.mrb[0].mxu0 %v6831
  %v7563 = vpop.f32.mrb[0].mxu0
  %v7564 = vadd.f32 %v7171, %v7563
  %v7565 = vpop.f32.mrb[0].mxu0
  %7566 = vmatprep.mubr.f32.mxu0 %v6956
  %7567 = vmatmul.mubr.f32.gmra.mrb[0].mxu0 %v6832
  %v7568 = vpop.f32.mrb[0].mxu0
  %v7569 = vadd.f32 %v7176, %v7568
  %v7570 = vpop.f32.mrb[0].mxu0
  %7571 = vmatprep.mubr.f32.mxu0 %v6958
  %7572 = vmatmul.mubr.f32.gmra.mrb[0].mxu0 %v6833
  %v7573 = vpop.f32.mrb[0].mxu0
  %v7574 = vadd.f32 %v7181, %v7573
  %v7575 = vpop.f32.mrb[0].mxu0
  %7576 = vmatprep.mubr.f32.mxu0 %v6960
  %7577 = vmatmul.mubr.f32.gmra.mrb[0].mxu0 %v6834
  %v7578 = vpop.f32.mrb[0].mxu0
  %v7579 = vadd.f32 %v7186, %v7578
  %v7580 = vpop.f32.mrb[0].mxu0
  %7581 = vmatprep.mubr.f32.mxu0 %v6962
  %7582 = vmatmul.mubr.f32.gmra.mrb[0].mxu0 %v6835
  %v7583 = vpop.f32.mrb[0].mxu0
  %v7584 = vadd.f32 %v7191, %v7583
  %v7585 = vpop.f32.mrb[0].mxu0
  %7586 = vmatprep.mubr.f32.mxu0 %v6964
  %7587 = vmatmul.mubr.f32.gmra.mrb[0].mxu0 %v6836
  %v7588 = vpop.f32.mrb[0].mxu0
  %v7589 = vadd.f32 %v7196, %v7588
  %v7590 = vpop.f32.mrb[0].mxu0
  %7591 = vmatprep.mubr.f32.mxu0 %v6966
  %7592 = vmatmul.mubr.f32.gmra.mrb[0].mxu0 %v6837
  %v7593 = vpop.f32.mrb[0].mxu0
  %v7594 = vadd.f32 %v7201, %v7593
  %v7595 = vpop.f32.mrb[0].mxu0
  %7596 = vmatprep.mubr.f32.mxu0 %v6968
  %7597 = vmatmul.mubr.f32.gmra.mrb[0].mxu0 %v6838
  %v7598 = vpop.f32.mrb[0].mxu0
  %v7599 = vadd.f32 %v7206, %v7598
  %v7600 = vpop.f32.mrb[0].mxu0
  %7601 = vmatprep.mubr.f32.mxu0 %v6970
  %7602 = vmatmul.mubr.f32.gmra.mrb[0].mxu0 %v6839
  %v7603 = vpop.f32.mrb[0].mxu0
  %v7604 = vadd.f32 %v7211, %v7603
  %v7605 = vpop.f32.mrb[0].mxu0
  %7606 = vmatprep.mubr.f32.mxu0 %v6972
  %7607 = vmatmul.mubr.f32.gmra.mrb[0].mxu0 %v6840
  %v7608 = vpop.f32.mrb[0].mxu0
  %v7609 = vadd.f32 %v7216, %v7608
  %v7610 = vpop.f32.mrb[0].mxu0
  %7611 = vmatprep.mubr.f32.mxu0 %v6974
  %7612 = vmatmul.mubr.f32.gmra.mrb[0].mxu0 %v6841
  %v7613 = vpop.f32.mrb[0].mxu0
  %v7614 = vadd.f32 %v7221, %v7613
  %v7615 = vpop.f32.mrb[0].mxu0
  %7616 = vmatprep.mubr.f32.mxu0 %v6976
  %7617 = vmatmul.mubr.f32.gmra.mrb[0].mxu0 %v6842
  %v7618 = vpop.f32.mrb[0].mxu0
  %v7619 = vadd.f32 %v7226, %v7618
  %v7620 = vpop.f32.mrb[0].mxu0
  %7621 = vmatprep.mubr.f32.mxu0 %v6978
  %7622 = vmatmul.mubr.f32.gmra.mrb[0].mxu0 %v6843
  %v7623 = vpop.f32.mrb[0].mxu0
  %v7624 = vadd.f32 %v7231, %v7623
  %v7625 = vpop.f32.mrb[0].mxu0
  %7626 = vmatprep.mubr.f32.mxu0 %v6980
  %7627 = vmatmul.mubr.f32.gmra.mrb[0].mxu0 %v6844
  %v7628 = vpop.f32.mrb[0].mxu0
  %v7629 = vadd.f32 %v7236, %v7628
  %v7630 = vpop.f32.mrb[0].mxu0
  %7631 = vmatprep.mubr.f32.mxu0 %v6982
  %7632 = vmatmul.mubr.f32.gmra.mrb[0].mxu0 %v6845
  %v7633 = vpop.f32.mrb[0].mxu0
  %v7634 = vadd.f32 %v7241, %v7633
  %v7635 = vpop.f32.mrb[0].mxu0
  %7636 = vmatprep.mubr.f32.mxu0 %v6984
  %7637 = vmatmul.mubr.f32.gmra.mrb[0].mxu0 %v6846
  %v7638 = vpop.f32.mrb[0].mxu0
  %v7639 = vadd.f32 %v7246, %v7638
  %v7640 = vpop.f32.mrb[0].mxu0
  %7641 = vmatprep.mubr.f32.mxu0 %v6986
  %7642 = vmatmul.mubr.f32.gmra.mrb[0].mxu0 %v6847
  %v7643 = vpop.f32.mrb[0].mxu0
  %v7644 = vadd.f32 %v7251, %v7643
  %v7645 = vpop.f32.mrb[0].mxu0
  %7646 = vmatprep.mubr.f32.mxu0 %v6988
  %7647 = vmatmul.mubr.f32.gmra.mrb[0].mxu0 %v6848
  %v7648 = vpop.f32.mrb[0].mxu0
  %v7649 = vadd.f32 %v7256, %v7648
  %v7650 = vpop.f32.mrb[0].mxu0
  %7651 = vmatprep.mubr.f32.mxu0 %v6990
  %7652 = vmatmul.mubr.f32.gmra.mrb[0].mxu0 %v6849
  %v7653 = vpop.f32.mrb[0].mxu0
  %v7654 = vadd.f32 %v7261, %v7653
  %v7655 = vpop.f32.mrb[0].mxu0
  %7656 = vmatprep.mubr.f32.mxu0 %v6992
  %7657 = vmatmul.mubr.f32.gmra.mrb[0].mxu0 %v6850
  %v7658 = vpop.f32.mrb[0].mxu0
  %v7659 = vadd.f32 %v7266, %v7658
  %v7660 = vpop.f32.mrb[0].mxu0
  %7661 = vmatprep.mubr.f32.mxu0 %v6994
  %7662 = vmatmul.mubr.f32.gmra.mrb[0].mxu0 %v6851
  %v7663 = vpop.f32.mrb[0].mxu0
  %v7664 = vadd.f32 %v7271, %v7663
  %v7665 = vpop.f32.mrb[0].mxu0
  %7666 = vmatprep.mubr.f32.mxu0 %v6996
  %7667 = vmatmul.mubr.f32.gmra.mrb[0].mxu0 %v6852
  %v7668 = vpop.f32.mrb[0].mxu0
  %v7669 = vadd.f32 %v7276, %v7668
  %v7670 = vpop.f32.mrb[0].mxu0
  %7671 = vmatprep.mubr.f32.mxu0 %v6998
  %7672 = vmatmul.mubr.f32.gmra.mrb[0].mxu0 %v6853
  %v7673 = vpop.f32.mrb[0].mxu0
  %v7674 = vadd.f32 %v7281, %v7673
  %v7675 = vpop.f32.mrb[0].mxu0
  %7676 = vmatprep.mubr.f32.mxu0 %v7000
  %7677 = vmatmul.mubr.f32.gmra.mrb[0].mxu0 %v6854
  %v7678 = vpop.f32.mrb[0].mxu0
  %v7679 = vadd.f32 %v7286, %v7678
  %v7680 = vpop.f32.mrb[0].mxu0
  %7681 = vmatprep.mubr.f32.mxu0 %v7002
  %7682 = vmatmul.mubr.f32.gmra.mrb[0].mxu0 %v6855
  %v7683 = vpop.f32.mrb[0].mxu0
  %v7684 = vadd.f32 %v7291, %v7683
  %v7685 = vpop.f32.mrb[0].mxu0
  %7686 = vmatprep.mubr.f32.mxu0 %v7004
  %7687 = vmatmul.mubr.f32.gmra.mrb[0].mxu0 %v6856
  %v7688 = vpop.f32.mrb[0].mxu0
  %v7689 = vadd.f32 %v7296, %v7688
  %v7690 = vpop.f32.mrb[0].mxu0
  %7691 = vmatprep.mubr.f32.mxu0 %v7463
  %7692 = vmatmul.mubr.f32.gmra.mrb[0].mxu0 %v6861
  %v7693 = vpop.f32.mrb[0].mxu0
  %v7694 = vadd.f32 %v7301, %v7693
  %v7695 = vpop.f32.mrb[0].mxu0
  %7696 = vmatprep.mubr.f32.mxu0 %v7465
  %7697 = vmatmul.mubr.f32.gmra.mrb[0].mxu0 %v6862
  %v7698 = vpop.f32.mrb[0].mxu0
  %v7699 = vadd.f32 %v7306, %v7698
  %v7700 = vpop.f32.mrb[0].mxu0
  %7701 = vmatprep.mubr.f32.mxu0 %v7010
  %7702 = vmatmul.mubr.f32.gmra.mrb[0].mxu0 %v6863
  %v7703 = vpop.f32.mrb[0].mxu0
  %v7704 = vadd.f32 %v7311, %v7703
  %v7705 = vpop.f32.mrb[0].mxu0
  %7706 = vmatprep.mubr.f32.mxu0 %v7012
  %7707 = vmatmul.mubr.f32.gmra.mrb[0].mxu0 %v6864
  %v7708 = vpop.f32.mrb[0].mxu0
  %v7709 = vadd.f32 %v7316, %v7708
  %v7710 = vpop.f32.mrb[0].mxu0
  %7711 = vmatprep.mubr.f32.mxu0 %v7014
  %7712 = vmatmul.mubr.f32.gmra.mrb[0].mxu0 %v6865
  %v7713 = vpop.f32.mrb[0].mxu0
  %v7714 = vadd.f32 %v7321, %v7713
  %v7715 = vpop.f32.mrb[0].mxu0
  %7716 = vmatprep.mubr.f32.mxu0 %v7016
  %7717 = vmatmul.mubr.f32.gmra.mrb[0].mxu0 %v6866
  %v7718 = vpop.f32.mrb[0].mxu0
  %v7719 = vadd.f32 %v7326, %v7718
  %v7720 = vpop.f32.mrb[0].mxu0
  %7721 = vmatprep.mubr.f32.mxu0 %v7018
  %7722 = vmatmul.mubr.f32.gmra.mrb[0].mxu0 %v6867
  %v7723 = vpop.f32.mrb[0].mxu0
  %v7724 = vadd.f32 %v7331, %v7723
  %v7725 = vpop.f32.mrb[0].mxu0
  %7726 = vmatprep.mubr.f32.mxu0 %v7020
  %7727 = vmatmul.mubr.f32.gmra.mrb[0].mxu0 %v6868
  %v7728 = vpop.f32.mrb[0].mxu0
  %v7729 = vadd.f32 %v7336, %v7728
  %v7730 = vpop.f32.mrb[0].mxu0
  %7731 = vmatprep.mubr.f32.mxu0 %v7022
  %7732 = vmatmul.mubr.f32.gmra.mrb[0].mxu0 %v6869
  %v7733 = vpop.f32.mrb[0].mxu0
  %v7734 = vadd.f32 %v7341, %v7733
  %v7735 = vpop.f32.mrb[0].mxu0
  %7736 = vmatprep.mubr.f32.mxu0 %v7024
  %7737 = vmatmul.mubr.f32.gmra.mrb[0].mxu0 %v6870
  %v7738 = vpop.f32.mrb[0].mxu0
  %v7739 = vadd.f32 %v7346, %v7738
  %v7740 = vpop.f32.mrb[0].mxu0
  %7741 = vmatprep.mubr.f32.mxu0 %v7026
  %7742 = vmatmul.mubr.f32.gmra.mrb[0].mxu0 %v6871
  %v7743 = vpop.f32.mrb[0].mxu0
  %v7744 = vadd.f32 %v7351, %v7743
  %v7745 = vpop.f32.mrb[0].mxu0
  %7746 = vmatprep.mubr.f32.mxu0 %v7028
  %7747 = vmatmul.mubr.f32.gmra.mrb[0].mxu0 %v6872
  %v7748 = vpop.f32.mrb[0].mxu0
  %v7749 = vadd.f32 %v7356, %v7748
  %v7750 = vpop.f32.mrb[0].mxu0
  %7751 = vmatprep.mubr.f32.mxu0 %v7030
  %7752 = vmatmul.mubr.f32.gmra.mrb[0].mxu0 %v6873
  %v7753 = vpop.f32.mrb[0].mxu0
  %v7754 = vadd.f32 %v7361, %v7753
  %v7755 = vpop.f32.mrb[0].mxu0
  %7756 = vmatprep.mubr.f32.mxu0 %v7032
  %7757 = vmatmul.mubr.f32.gmra.mrb[0].mxu0 %v6874
  %v7758 = vpop.f32.mrb[0].mxu0
  %v7759 = vadd.f32 %v7366, %v7758
  %v7760 = vpop.f32.mrb[0].mxu0
  %7761 = vmatprep.mubr.f32.mxu0 %v7034
  %7762 = vmatmul.mubr.f32.gmra.mrb[0].mxu0 %v6875
  %v7763 = vpop.f32.mrb[0].mxu0
  %v7764 = vadd.f32 %v7371, %v7763
  %v7765 = vpop.f32.mrb[0].mxu0
  %7766 = vmatprep.mubr.f32.mxu0 %v7036
  %7767 = vmatmul.mubr.f32.gmra.mrb[0].mxu0 %v6876
  %v7768 = vpop.f32.mrb[0].mxu0
  %v7769 = vadd.f32 %v7376, %v7768
  %v7770 = vpop.f32.mrb[0].mxu0
  %7771 = vmatprep.mubr.f32.mxu0 %v7038
  %7772 = vmatmul.mubr.f32.gmra.mrb[0].mxu0 %v6877
  %v7773 = vpop.f32.mrb[0].mxu0
  %v7774 = vadd.f32 %v7381, %v7773
  %v7775 = vpop.f32.mrb[0].mxu0
  %7776 = vmatprep.mubr.f32.mxu0 %v7040
  %7777 = vmatmul.mubr.f32.gmra.mrb[0].mxu0 %v6878
  %v7778 = vpop.f32.mrb[0].mxu0
  %v7779 = vadd.f32 %v7386, %v7778
  %v7780 = vpop.f32.mrb[0].mxu0
  %7781 = vmatprep.mubr.f32.mxu0 %v7042
  %7782 = vmatmul.mubr.f32.gmra.mrb[0].mxu0 %v6879
  %v7783 = vpop.f32.mrb[0].mxu0
  %v7784 = vadd.f32 %v7391, %v7783
  %v7785 = vpop.f32.mrb[0].mxu0
  %7786 = vmatprep.mubr.f32.mxu0 %v7044
  %7787 = vmatmul.mubr.f32.gmra.mrb[0].mxu0 %v6880
  %v7788 = vpop.f32.mrb[0].mxu0
  %v7789 = vadd.f32 %v7396, %v7788
  %v7790 = vpop.f32.mrb[0].mxu0
  %7791 = vmatprep.mubr.f32.mxu0 %v7046
  %7792 = vmatmul.mubr.f32.gmra.mrb[0].mxu0 %v6881
  %v7793 = vpop.f32.mrb[0].mxu0
  %v7794 = vadd.f32 %v7401, %v7793
  %v7795 = vpop.f32.mrb[0].mxu0
  %7796 = vmatprep.mubr.f32.mxu0 %v7048
  %7797 = vmatmul.mubr.f32.gmra.mrb[0].mxu0 %v6882
  %v7798 = vpop.f32.mrb[0].mxu0
  %v7799 = vadd.f32 %v7406, %v7798
  %v7800 = vpop.f32.mrb[0].mxu0
  %7801 = vmatprep.mubr.f32.mxu0 %v7050
  %7802 = vmatmul.mubr.f32.gmra.mrb[0].mxu0 %v6883
  %v7803 = vpop.f32.mrb[0].mxu0
  %v7804 = vadd.f32 %v7411, %v7803
  %v7805 = vpop.f32.mrb[0].mxu0
  %7806 = vmatprep.mubr.f32.mxu0 %v7052
  %7807 = vmatmul.mubr.f32.gmra.mrb[0].mxu0 %v6884
  %v7808 = vpop.f32.mrb[0].mxu0
  %v7809 = vadd.f32 %v7416, %v7808
  %v7810 = vpop.f32.mrb[0].mxu0
  %7811 = vmatprep.mubr.f32.mxu0 %v7054
  %7812 = vmatmul.mubr.f32.gmra.mrb[0].mxu0 %v6885
  %v7813 = vpop.f32.mrb[0].mxu0
  %v7814 = vadd.f32 %v7421, %v7813
  %v7815 = vpop.f32.mrb[0].mxu0
  %7816 = vmatprep.mubr.f32.mxu0 %v7056
  %7817 = vmatmul.mubr.f32.gmra.mrb[0].mxu0 %v6886
  %v7818 = vpop.f32.mrb[0].mxu0
  %v7819 = vadd.f32 %v7426, %v7818
  %v7820 = vpop.f32.mrb[0].mxu0
  %7821 = vmatprep.mubr.f32.mxu0 %v7058
  %7822 = vmatmul.mubr.f32.gmra.mrb[0].mxu0 %v6887
  %v7823 = vpop.f32.mrb[0].mxu0
  %v7824 = vadd.f32 %v7431, %v7823
  %v7825 = vpop.f32.mrb[0].mxu0
  %7826 = vmatprep.mubr.f32.mxu0 %v7060
  %7827 = vmatmul.mubr.f32.gmra.mrb[0].mxu0 %v6888
  %v7828 = vpop.f32.mrb[0].mxu0
  %v7829 = vadd.f32 %v7436, %v7828
  %v7830 = vpop.f32.mrb[0].mxu0
  %7831 = vmatprep.mubr.f32.mxu0 %v7062
  %7832 = vmatmul.mubr.f32.gmra.mrb[0].mxu0 %v6889
  %v7833 = vpop.f32.mrb[0].mxu0
  %v7834 = vadd.f32 %v7441, %v7833
  %v7835 = vpop.f32.mrb[0].mxu0
  %7836 = vmatprep.mubr.f32.mxu0 %v7064
  %7837 = vmatmul.mubr.f32.gmra.mrb[0].mxu0 %v6890
  %v7838 = vpop.f32.mrb[0].mxu0
  %v7839 = vadd.f32 %v7446, %v7838
  %v7840 = vpop.f32.mrb[0].mxu0
  %7841 = vmatprep.mubr.f32.mxu0 %v7066
  %7842 = vmatmul.mubr.f32.gmra.mrb[0].mxu0 %v6891
  %v7843 = vpop.f32.mrb[0].mxu0
  %v7844 = vadd.f32 %v7451, %v7843
  %v7845 = vpop.f32.mrb[0].mxu0
  %7846 = vmatprep.mubr.f32.mxu0 %v7068
  %7847 = vmatmul.mubr.f32.gmra.mrb[0].mxu0 %v6892
  %v7848 = vpop.f32.mrb[0].mxu0
  %v7849 = vadd.f32 %v7456, %v7848
  %v7850 = vpop.f32.mrb[0].mxu0
  %7851 = vdwg.mxu0
  %s7852 = scalar_lea.vmem %s7, 384
  %v7853 = vld [vmem:[%s7852] sm:$0xff]
  %v7854 = vld [vmem:[%s7852 + $0x8] sm:$0xff]
  %v7855 = vld [vmem:[%s7852 + $0x10] sm:$0xff]
  %v7856 = vld [vmem:[%s7852 + $0x18] sm:$0xff]
  %v7857 = vld [vmem:[%s7852 + $0x20] sm:$0xff]
  %v7858 = vld [vmem:[%s7852 + $0x28] sm:$0xff]
  %v7859 = vld [vmem:[%s7852 + $0x30] sm:$0xff]
  %v7860 = vld [vmem:[%s7852 + $0x38] sm:$0xff]
  %v7861 = vld [vmem:[%s7852 + $0x40] sm:$0xff]
  %v7862 = vld [vmem:[%s7852 + $0x48] sm:$0xff]
  %v7863 = vld [vmem:[%s7852 + $0x50] sm:$0xff]
  %v7864 = vld [vmem:[%s7852 + $0x58] sm:$0xff]
  %v7865 = vld [vmem:[%s7852 + $0x60] sm:$0xff]
  %v7866 = vld [vmem:[%s7852 + $0x68] sm:$0xff]
  %v7867 = vld [vmem:[%s7852 + $0x70] sm:$0xff]
  %v7868 = vld [vmem:[%s7852 + $0x78] sm:$0xff]
  %v7869 = vld [vmem:[%s7852 + $0x80] sm:$0xff]
  %v7870 = vld [vmem:[%s7852 + $0x88] sm:$0xff]
  %v7871 = vld [vmem:[%s7852 + $0x90] sm:$0xff]
  %v7872 = vld [vmem:[%s7852 + $0x98] sm:$0xff]
  %v7873 = vld [vmem:[%s7852 + $0xa0] sm:$0xff]
  %v7874 = vld [vmem:[%s7852 + $0xa8] sm:$0xff]
  %v7875 = vld [vmem:[%s7852 + $0xb0] sm:$0xff]
  %v7876 = vld [vmem:[%s7852 + $0xb8] sm:$0xff]
  %v7877 = vsel %vm151, %v6732, 0
  %v7879 = vsel %vm151, %v6734, 0
  %v7881 = vsel %vm151, %v6822, 0
  %v7883 = vsel %vm151, %v6824, 0
  %7885 = vmatprep.subr.mxu0 0.0
  %7886 = vmatpush1.msra.mxu0 %v7853
  %7887 = vmatprep.subr.mxu0 0.0
  %7888 = vmatpush1.msra.mxu0 %v7854
  %7889 = vmatprep.subr.mxu0 0.0
  %7890 = vmatpush1.msra.mxu0 %v7855
  %7891 = vmatprep.subr.mxu0 0.0
  %7892 = vmatpush1.msra.mxu0 %v7856
  %7893 = vmatprep.subr.mxu0 0.0
  %7894 = vmatpush1.msra.mxu0 %v7857
  %7895 = vmatprep.subr.mxu0 0.0
  %7896 = vmatpush1.msra.mxu0 %v7858
  %7897 = vmatprep.subr.mxu0 0.0
  %7898 = vmatpush1.msra.mxu0 %v7859
  %7899 = vmatprep.subr.mxu0 0.0
  %7900 = vmatpush1.msra.mxu0 %v7860
  %7901 = vmatprep.subr.mxu0 0.0
  %7902 = vmatpush1.msra.mxu0 %v7861
  %7903 = vmatprep.subr.mxu0 0.0
  %7904 = vmatpush1.msra.mxu0 %v7862
  %7905 = vmatprep.subr.mxu0 0.0
  %7906 = vmatpush1.msra.mxu0 %v7863
  %7907 = vmatprep.subr.mxu0 0.0
  %7908 = vmatpush1.msra.mxu0 %v7864
  %7909 = vmatprep.subr.mxu0 0.0
  %7910 = vmatpush1.msra.mxu0 %v7865
  %7911 = vmatprep.subr.mxu0 0.0
  %7912 = vmatpush1.msra.mxu0 %v7866
  %7913 = vmatprep.subr.mxu0 0.0
  %7914 = vmatpush1.msra.mxu0 %v7867
  %7915 = vmatprep.subr.mxu0 0.0
  %7916 = vmatpush1.msra.mxu0 %v7868
  %7917 = vmatprep.subr.mxu0 0.0
  %7918 = vmatpush1.msra.mxu0 %v7869
  %7919 = vmatprep.subr.mxu0 0.0
  %7920 = vmatpush1.msra.mxu0 %v7870
  %7921 = vmatprep.subr.mxu0 0.0
  %7922 = vmatpush1.msra.mxu0 %v7871
  %7923 = vmatprep.subr.mxu0 0.0
  %7924 = vmatpush1.msra.mxu0 %v7872
  %7925 = vmatprep.subr.mxu0 0.0
  %7926 = vmatpush1.msra.mxu0 %v7873
  %7927 = vmatprep.subr.mxu0 0.0
  %7928 = vmatpush1.msra.mxu0 %v7874
  %7929 = vmatprep.subr.mxu0 0.0
  %7930 = vmatpush1.msra.mxu0 %v7875
  %7931 = vmatprep.subr.mxu0 0.0
  %7932 = vmatpush1.msra.mxu0 %v7876
  %7933 = vmatprep.subr.mxu0 0.0
  %7934 = vmatpush1.msra.mxu0 0.0
  %7935 = vmatprep.subr.mxu0 0.0
  %7936 = vmatpush1.msra.mxu0 0.0
  %7937 = vmatprep.subr.mxu0 0.0
  %7938 = vmatpush1.msra.mxu0 0.0
  %7939 = vmatprep.subr.mxu0 0.0
  %7940 = vmatpush1.msra.mxu0 0.0
  %7941 = vmatprep.subr.mxu0 0.0
  %7942 = vmatpush1.msra.mxu0 0.0
  %7943 = vmatprep.subr.mxu0 0.0
  %7944 = vmatpush1.msra.mxu0 0.0
  %7945 = vmatprep.subr.mxu0 0.0
  %7946 = vmatpush1.msra.mxu0 0.0
  %7947 = vmatprep.subr.mxu0 0.0
  %7948 = vmatpush1.msra.mxu0 0.0
  %7949 = vmatprep.mubr.f32.mxu0 %v6950
  %7950 = vmatmul.mubr.f32.gmra.mrb[0].mxu0 %v6829
  %v7951 = vpop.f32.mrb[0].mxu0
  %v7952 = vadd.f32 0.0, %v7951
  %v7953 = vpop.f32.mrb[0].mxu0
  %7954 = vmatprep.mubr.f32.mxu0 %v6952
  %7955 = vmatmul.mubr.f32.gmra.mrb[0].mxu0 %v6830
  %v7956 = vpop.f32.mrb[0].mxu0
  %v7957 = vadd.f32 0.0, %v7956
  %v7958 = vpop.f32.mrb[0].mxu0
  %7959 = vmatprep.mubr.f32.mxu0 %v6954
  %7960 = vmatmul.mubr.f32.gmra.mrb[0].mxu0 %v6831
  %v7961 = vpop.f32.mrb[0].mxu0
  %v7962 = vadd.f32 0.0, %v7961
  %v7963 = vpop.f32.mrb[0].mxu0
  %7964 = vmatprep.mubr.f32.mxu0 %v6956
  %7965 = vmatmul.mubr.f32.gmra.mrb[0].mxu0 %v6832
  %v7966 = vpop.f32.mrb[0].mxu0
  %v7967 = vadd.f32 0.0, %v7966
  %v7968 = vpop.f32.mrb[0].mxu0
  %7969 = vmatprep.mubr.f32.mxu0 %v6958
  %7970 = vmatmul.mubr.f32.gmra.mrb[0].mxu0 %v6833
  %v7971 = vpop.f32.mrb[0].mxu0
  %v7972 = vadd.f32 0.0, %v7971
  %v7973 = vpop.f32.mrb[0].mxu0
  %7974 = vmatprep.mubr.f32.mxu0 %v6960
  %7975 = vmatmul.mubr.f32.gmra.mrb[0].mxu0 %v6834
  %v7976 = vpop.f32.mrb[0].mxu0
  %v7977 = vadd.f32 0.0, %v7976
  %v7978 = vpop.f32.mrb[0].mxu0
  %7979 = vmatprep.mubr.f32.mxu0 %v6962
  %7980 = vmatmul.mubr.f32.gmra.mrb[0].mxu0 %v6835
  %v7981 = vpop.f32.mrb[0].mxu0
  %v7982 = vadd.f32 0.0, %v7981
  %v7983 = vpop.f32.mrb[0].mxu0
  %7984 = vmatprep.mubr.f32.mxu0 %v6964
  %7985 = vmatmul.mubr.f32.gmra.mrb[0].mxu0 %v6836
  %v7986 = vpop.f32.mrb[0].mxu0
  %v7987 = vadd.f32 0.0, %v7986
  %v7988 = vpop.f32.mrb[0].mxu0
  %7989 = vmatprep.mubr.f32.mxu0 %v6966
  %7990 = vmatmul.mubr.f32.gmra.mrb[0].mxu0 %v6837
  %v7991 = vpop.f32.mrb[0].mxu0
  %v7992 = vadd.f32 0.0, %v7991
  %v7993 = vpop.f32.mrb[0].mxu0
  %7994 = vmatprep.mubr.f32.mxu0 %v6968
  %7995 = vmatmul.mubr.f32.gmra.mrb[0].mxu0 %v6838
  %v7996 = vpop.f32.mrb[0].mxu0
  %v7997 = vadd.f32 0.0, %v7996
  %v7998 = vpop.f32.mrb[0].mxu0
  %7999 = vmatprep.mubr.f32.mxu0 %v6970
  %8000 = vmatmul.mubr.f32.gmra.mrb[0].mxu0 %v6839
  %v8001 = vpop.f32.mrb[0].mxu0
  %v8002 = vadd.f32 0.0, %v8001
  %v8003 = vpop.f32.mrb[0].mxu0
  %8004 = vmatprep.mubr.f32.mxu0 %v6972
  %8005 = vmatmul.mubr.f32.gmra.mrb[0].mxu0 %v6840
  %v8006 = vpop.f32.mrb[0].mxu0
  %v8007 = vadd.f32 0.0, %v8006
  %v8008 = vpop.f32.mrb[0].mxu0
  %8009 = vmatprep.mubr.f32.mxu0 %v6974
  %8010 = vmatmul.mubr.f32.gmra.mrb[0].mxu0 %v6841
  %v8011 = vpop.f32.mrb[0].mxu0
  %v8012 = vadd.f32 0.0, %v8011
  %v8013 = vpop.f32.mrb[0].mxu0
  %8014 = vmatprep.mubr.f32.mxu0 %v6976
  %8015 = vmatmul.mubr.f32.gmra.mrb[0].mxu0 %v6842
  %v8016 = vpop.f32.mrb[0].mxu0
  %v8017 = vadd.f32 0.0, %v8016
  %v8018 = vpop.f32.mrb[0].mxu0
  %8019 = vmatprep.mubr.f32.mxu0 %v6978
  %8020 = vmatmul.mubr.f32.gmra.mrb[0].mxu0 %v6843
  %v8021 = vpop.f32.mrb[0].mxu0
  %v8022 = vadd.f32 0.0, %v8021
  %v8023 = vpop.f32.mrb[0].mxu0
  %8024 = vmatprep.mubr.f32.mxu0 %v6980
  %8025 = vmatmul.mubr.f32.gmra.mrb[0].mxu0 %v6844
  %v8026 = vpop.f32.mrb[0].mxu0
  %v8027 = vadd.f32 0.0, %v8026
  %v8028 = vpop.f32.mrb[0].mxu0
  %8029 = vmatprep.mubr.f32.mxu0 %v6982
  %8030 = vmatmul.mubr.f32.gmra.mrb[0].mxu0 %v6845
  %v8031 = vpop.f32.mrb[0].mxu0
  %v8032 = vadd.f32 0.0, %v8031
  %v8033 = vpop.f32.mrb[0].mxu0
  %8034 = vmatprep.mubr.f32.mxu0 %v6984
  %8035 = vmatmul.mubr.f32.gmra.mrb[0].mxu0 %v6846
  %v8036 = vpop.f32.mrb[0].mxu0
  %v8037 = vadd.f32 0.0, %v8036
  %v8038 = vpop.f32.mrb[0].mxu0
  %8039 = vmatprep.mubr.f32.mxu0 %v6986
  %8040 = vmatmul.mubr.f32.gmra.mrb[0].mxu0 %v6847
  %v8041 = vpop.f32.mrb[0].mxu0
  %v8042 = vadd.f32 0.0, %v8041
  %v8043 = vpop.f32.mrb[0].mxu0
  %8044 = vmatprep.mubr.f32.mxu0 %v6988
  %8045 = vmatmul.mubr.f32.gmra.mrb[0].mxu0 %v6848
  %v8046 = vpop.f32.mrb[0].mxu0
  %v8047 = vadd.f32 0.0, %v8046
  %v8048 = vpop.f32.mrb[0].mxu0
  %8049 = vmatprep.mubr.f32.mxu0 %v6990
  %8050 = vmatmul.mubr.f32.gmra.mrb[0].mxu0 %v6849
  %v8051 = vpop.f32.mrb[0].mxu0
  %v8052 = vadd.f32 0.0, %v8051
  %v8053 = vpop.f32.mrb[0].mxu0
  %8054 = vmatprep.mubr.f32.mxu0 %v6992
  %8055 = vmatmul.mubr.f32.gmra.mrb[0].mxu0 %v6850
  %v8056 = vpop.f32.mrb[0].mxu0
  %v8057 = vadd.f32 0.0, %v8056
  %v8058 = vpop.f32.mrb[0].mxu0
  %8059 = vmatprep.mubr.f32.mxu0 %v6994
  %8060 = vmatmul.mubr.f32.gmra.mrb[0].mxu0 %v6851
  %v8061 = vpop.f32.mrb[0].mxu0
  %v8062 = vadd.f32 0.0, %v8061
  %v8063 = vpop.f32.mrb[0].mxu0
  %8064 = vmatprep.mubr.f32.mxu0 %v6996
  %8065 = vmatmul.mubr.f32.gmra.mrb[0].mxu0 %v6852
  %v8066 = vpop.f32.mrb[0].mxu0
  %v8067 = vadd.f32 0.0, %v8066
  %v8068 = vpop.f32.mrb[0].mxu0
  %8069 = vmatprep.mubr.f32.mxu0 %v6998
  %8070 = vmatmul.mubr.f32.gmra.mrb[0].mxu0 %v6853
  %v8071 = vpop.f32.mrb[0].mxu0
  %v8072 = vadd.f32 0.0, %v8071
  %v8073 = vpop.f32.mrb[0].mxu0
  %8074 = vmatprep.mubr.f32.mxu0 %v7000
  %8075 = vmatmul.mubr.f32.gmra.mrb[0].mxu0 %v6854
  %v8076 = vpop.f32.mrb[0].mxu0
  %v8077 = vadd.f32 0.0, %v8076
  %v8078 = vpop.f32.mrb[0].mxu0
  %8079 = vmatprep.mubr.f32.mxu0 %v7002
  %8080 = vmatmul.mubr.f32.gmra.mrb[0].mxu0 %v6855
  %v8081 = vpop.f32.mrb[0].mxu0
  %v8082 = vadd.f32 0.0, %v8081
  %v8083 = vpop.f32.mrb[0].mxu0
  %8084 = vmatprep.mubr.f32.mxu0 %v7004
  %8085 = vmatmul.mubr.f32.gmra.mrb[0].mxu0 %v6856
  %v8086 = vpop.f32.mrb[0].mxu0
  %v8087 = vadd.f32 0.0, %v8086
  %v8088 = vpop.f32.mrb[0].mxu0
  %8089 = vmatprep.mubr.f32.mxu0 %v7006
  %8090 = vmatmul.mubr.f32.gmra.mrb[0].mxu0 %v6857
  %v8091 = vpop.f32.mrb[0].mxu0
  %v8092 = vadd.f32 0.0, %v8091
  %v8093 = vpop.f32.mrb[0].mxu0
  %8094 = vmatprep.mubr.f32.mxu0 %v7008
  %8095 = vmatmul.mubr.f32.gmra.mrb[0].mxu0 %v6858
  %v8096 = vpop.f32.mrb[0].mxu0
  %v8097 = vadd.f32 0.0, %v8096
  %v8098 = vpop.f32.mrb[0].mxu0
  %8099 = vmatprep.mubr.f32.mxu0 %v7877
  %8100 = vmatmul.mubr.f32.gmra.mrb[0].mxu0 %v6859
  %v8101 = vpop.f32.mrb[0].mxu0
  %v8102 = vadd.f32 0.0, %v8101
  %v8103 = vpop.f32.mrb[0].mxu0
  %8104 = vmatprep.mubr.f32.mxu0 %v7879
  %8105 = vmatmul.mubr.f32.gmra.mrb[0].mxu0 %v6860
  %v8106 = vpop.f32.mrb[0].mxu0
  %v8107 = vadd.f32 0.0, %v8106
  %v8108 = vpop.f32.mrb[0].mxu0
  %8109 = vmatprep.mubr.f32.mxu0 %v7014
  %8110 = vmatmul.mubr.f32.gmra.mrb[0].mxu0 %v6865
  %v8111 = vpop.f32.mrb[0].mxu0
  %v8112 = vadd.f32 0.0, %v8111
  %v8113 = vpop.f32.mrb[0].mxu0
  %8114 = vmatprep.mubr.f32.mxu0 %v7016
  %8115 = vmatmul.mubr.f32.gmra.mrb[0].mxu0 %v6866
  %v8116 = vpop.f32.mrb[0].mxu0
  %v8117 = vadd.f32 0.0, %v8116
  %v8118 = vpop.f32.mrb[0].mxu0
  %8119 = vmatprep.mubr.f32.mxu0 %v7018
  %8120 = vmatmul.mubr.f32.gmra.mrb[0].mxu0 %v6867
  %v8121 = vpop.f32.mrb[0].mxu0
  %v8122 = vadd.f32 0.0, %v8121
  %v8123 = vpop.f32.mrb[0].mxu0
  %8124 = vmatprep.mubr.f32.mxu0 %v7020
  %8125 = vmatmul.mubr.f32.gmra.mrb[0].mxu0 %v6868
  %v8126 = vpop.f32.mrb[0].mxu0
  %v8127 = vadd.f32 0.0, %v8126
  %v8128 = vpop.f32.mrb[0].mxu0
  %8129 = vmatprep.mubr.f32.mxu0 %v7022
  %8130 = vmatmul.mubr.f32.gmra.mrb[0].mxu0 %v6869
  %v8131 = vpop.f32.mrb[0].mxu0
  %v8132 = vadd.f32 0.0, %v8131
  %v8133 = vpop.f32.mrb[0].mxu0
  %8134 = vmatprep.mubr.f32.mxu0 %v7024
  %8135 = vmatmul.mubr.f32.gmra.mrb[0].mxu0 %v6870
  %v8136 = vpop.f32.mrb[0].mxu0
  %v8137 = vadd.f32 0.0, %v8136
  %v8138 = vpop.f32.mrb[0].mxu0
  %8139 = vmatprep.mubr.f32.mxu0 %v7026
  %8140 = vmatmul.mubr.f32.gmra.mrb[0].mxu0 %v6871
  %v8141 = vpop.f32.mrb[0].mxu0
  %v8142 = vadd.f32 0.0, %v8141
  %v8143 = vpop.f32.mrb[0].mxu0
  %8144 = vmatprep.mubr.f32.mxu0 %v7028
  %8145 = vmatmul.mubr.f32.gmra.mrb[0].mxu0 %v6872
  %v8146 = vpop.f32.mrb[0].mxu0
  %v8147 = vadd.f32 0.0, %v8146
  %v8148 = vpop.f32.mrb[0].mxu0
  %8149 = vmatprep.mubr.f32.mxu0 %v7030
  %8150 = vmatmul.mubr.f32.gmra.mrb[0].mxu0 %v6873
  %v8151 = vpop.f32.mrb[0].mxu0
  %v8152 = vadd.f32 0.0, %v8151
  %v8153 = vpop.f32.mrb[0].mxu0
  %8154 = vmatprep.mubr.f32.mxu0 %v7032
  %8155 = vmatmul.mubr.f32.gmra.mrb[0].mxu0 %v6874
  %v8156 = vpop.f32.mrb[0].mxu0
  %v8157 = vadd.f32 0.0, %v8156
  %v8158 = vpop.f32.mrb[0].mxu0
  %8159 = vmatprep.mubr.f32.mxu0 %v7034
  %8160 = vmatmul.mubr.f32.gmra.mrb[0].mxu0 %v6875
  %v8161 = vpop.f32.mrb[0].mxu0
  %v8162 = vadd.f32 0.0, %v8161
  %v8163 = vpop.f32.mrb[0].mxu0
  %8164 = vmatprep.mubr.f32.mxu0 %v7036
  %8165 = vmatmul.mubr.f32.gmra.mrb[0].mxu0 %v6876
  %v8166 = vpop.f32.mrb[0].mxu0
  %v8167 = vadd.f32 0.0, %v8166
  %v8168 = vpop.f32.mrb[0].mxu0
  %8169 = vmatprep.mubr.f32.mxu0 %v7038
  %8170 = vmatmul.mubr.f32.gmra.mrb[0].mxu0 %v6877
  %v8171 = vpop.f32.mrb[0].mxu0
  %v8172 = vadd.f32 0.0, %v8171
  %v8173 = vpop.f32.mrb[0].mxu0
  %8174 = vmatprep.mubr.f32.mxu0 %v7040
  %8175 = vmatmul.mubr.f32.gmra.mrb[0].mxu0 %v6878
  %v8176 = vpop.f32.mrb[0].mxu0
  %v8177 = vadd.f32 0.0, %v8176
  %v8178 = vpop.f32.mrb[0].mxu0
  %8179 = vmatprep.mubr.f32.mxu0 %v7042
  %8180 = vmatmul.mubr.f32.gmra.mrb[0].mxu0 %v6879
  %v8181 = vpop.f32.mrb[0].mxu0
  %v8182 = vadd.f32 0.0, %v8181
  %v8183 = vpop.f32.mrb[0].mxu0
  %8184 = vmatprep.mubr.f32.mxu0 %v7044
  %8185 = vmatmul.mubr.f32.gmra.mrb[0].mxu0 %v6880
  %v8186 = vpop.f32.mrb[0].mxu0
  %v8187 = vadd.f32 0.0, %v8186
  %v8188 = vpop.f32.mrb[0].mxu0
  %8189 = vmatprep.mubr.f32.mxu0 %v7046
  %8190 = vmatmul.mubr.f32.gmra.mrb[0].mxu0 %v6881
  %v8191 = vpop.f32.mrb[0].mxu0
  %v8192 = vadd.f32 0.0, %v8191
  %v8193 = vpop.f32.mrb[0].mxu0
  %8194 = vmatprep.mubr.f32.mxu0 %v7048
  %8195 = vmatmul.mubr.f32.gmra.mrb[0].mxu0 %v6882
  %v8196 = vpop.f32.mrb[0].mxu0
  %v8197 = vadd.f32 0.0, %v8196
  %v8198 = vpop.f32.mrb[0].mxu0
  %8199 = vmatprep.mubr.f32.mxu0 %v7050
  %8200 = vmatmul.mubr.f32.gmra.mrb[0].mxu0 %v6883
  %v8201 = vpop.f32.mrb[0].mxu0
  %v8202 = vadd.f32 0.0, %v8201
  %v8203 = vpop.f32.mrb[0].mxu0
  %8204 = vmatprep.mubr.f32.mxu0 %v7052
  %8205 = vmatmul.mubr.f32.gmra.mrb[0].mxu0 %v6884
  %v8206 = vpop.f32.mrb[0].mxu0
  %v8207 = vadd.f32 0.0, %v8206
  %v8208 = vpop.f32.mrb[0].mxu0
  %8209 = vmatprep.mubr.f32.mxu0 %v7054
  %8210 = vmatmul.mubr.f32.gmra.mrb[0].mxu0 %v6885
  %v8211 = vpop.f32.mrb[0].mxu0
  %v8212 = vadd.f32 0.0, %v8211
  %v8213 = vpop.f32.mrb[0].mxu0
  %8214 = vmatprep.mubr.f32.mxu0 %v7056
  %8215 = vmatmul.mubr.f32.gmra.mrb[0].mxu0 %v6886
  %v8216 = vpop.f32.mrb[0].mxu0
  %v8217 = vadd.f32 0.0, %v8216
  %v8218 = vpop.f32.mrb[0].mxu0
  %8219 = vmatprep.mubr.f32.mxu0 %v7058
  %8220 = vmatmul.mubr.f32.gmra.mrb[0].mxu0 %v6887
  %v8221 = vpop.f32.mrb[0].mxu0
  %v8222 = vadd.f32 0.0, %v8221
  %v8223 = vpop.f32.mrb[0].mxu0
  %8224 = vmatprep.mubr.f32.mxu0 %v7060
  %8225 = vmatmul.mubr.f32.gmra.mrb[0].mxu0 %v6888
  %v8226 = vpop.f32.mrb[0].mxu0
  %v8227 = vadd.f32 0.0, %v8226
  %v8228 = vpop.f32.mrb[0].mxu0
  %8229 = vmatprep.mubr.f32.mxu0 %v7062
  %8230 = vmatmul.mubr.f32.gmra.mrb[0].mxu0 %v6889
  %v8231 = vpop.f32.mrb[0].mxu0
  %v8232 = vadd.f32 0.0, %v8231
  %v8233 = vpop.f32.mrb[0].mxu0
  %8234 = vmatprep.mubr.f32.mxu0 %v7064
  %8235 = vmatmul.mubr.f32.gmra.mrb[0].mxu0 %v6890
  %v8236 = vpop.f32.mrb[0].mxu0
  %v8237 = vadd.f32 0.0, %v8236
  %v8238 = vpop.f32.mrb[0].mxu0
  %8239 = vmatprep.mubr.f32.mxu0 %v7066
  %8240 = vmatmul.mubr.f32.gmra.mrb[0].mxu0 %v6891
  %v8241 = vpop.f32.mrb[0].mxu0
  %v8242 = vadd.f32 0.0, %v8241
  %v8243 = vpop.f32.mrb[0].mxu0
  %8244 = vmatprep.mubr.f32.mxu0 %v7068
  %8245 = vmatmul.mubr.f32.gmra.mrb[0].mxu0 %v6892
  %v8246 = vpop.f32.mrb[0].mxu0
  %v8247 = vadd.f32 0.0, %v8246
  %v8248 = vpop.f32.mrb[0].mxu0
  %8249 = vmatprep.mubr.f32.mxu0 %v7070
  %8250 = vmatmul.mubr.f32.gmra.mrb[0].mxu0 %v6893
  %v8251 = vpop.f32.mrb[0].mxu0
  %v8252 = vadd.f32 0.0, %v8251
  %v8253 = vpop.f32.mrb[0].mxu0
  %8254 = vmatprep.mubr.f32.mxu0 %v7072
  %8255 = vmatmul.mubr.f32.gmra.mrb[0].mxu0 %v6894
  %v8256 = vpop.f32.mrb[0].mxu0
  %v8257 = vadd.f32 0.0, %v8256
  %v8258 = vpop.f32.mrb[0].mxu0
  %8259 = vmatprep.mubr.f32.mxu0 %v7881
  %8260 = vmatmul.mubr.f32.gmra.mrb[0].mxu0 %v6895
  %v8261 = vpop.f32.mrb[0].mxu0
  %v8262 = vadd.f32 0.0, %v8261
  %v8263 = vpop.f32.mrb[0].mxu0
  %8264 = vmatprep.mubr.f32.mxu0 %v7883
  %8265 = vmatmul.mubr.f32.gmra.mrb[0].mxu0 %v6896
  %v8266 = vpop.f32.mrb[0].mxu0
  %v8267 = vadd.f32 0.0, %v8266
  %v8268 = vpop.f32.mrb[0].mxu0
  %8269 = vdwg.mxu0
  %v8270 = vadd.f32 %v7534, %v7952
  %v8271 = vadd.f32 %v7539, %v7957
  %v8272 = vadd.f32 %v7544, %v7962
  %v8273 = vadd.f32 %v7549, %v7967
  %v8274 = vadd.f32 %v7554, %v7972
  %v8275 = vadd.f32 %v7559, %v7977
  %v8276 = vadd.f32 %v7564, %v7982
  %v8277 = vadd.f32 %v7569, %v7987
  %v8278 = vadd.f32 %v7574, %v7992
  %v8279 = vadd.f32 %v7579, %v7997
  %v8280 = vadd.f32 %v7584, %v8002
  %v8281 = vadd.f32 %v7589, %v8007
  %v8282 = vadd.f32 %v7594, %v8012
  %v8283 = vadd.f32 %v7599, %v8017
  %v8284 = vadd.f32 %v7604, %v8022
  %v8285 = vadd.f32 %v7609, %v8027
  %v8286 = vadd.f32 %v7614, %v8032
  %v8287 = vadd.f32 %v7619, %v8037
  %v8288 = vadd.f32 %v7624, %v8042
  %v8289 = vadd.f32 %v7629, %v8047
  %v8290 = vadd.f32 %v7634, %v8052
  %v8291 = vadd.f32 %v7639, %v8057
  %v8292 = vadd.f32 %v7644, %v8062
  %v8293 = vadd.f32 %v7649, %v8067
  %v8294 = vadd.f32 %v7654, %v8072
  %v8295 = vadd.f32 %v7659, %v8077
  %v8296 = vadd.f32 %v7664, %v8082
  %v8297 = vadd.f32 %v7669, %v8087
  %v8298 = vadd.f32 %v7674, %v8092
  %v8299 = vadd.f32 %v7679, %v8097
  %v8300 = vadd.f32 %v7684, %v8102
  %v8301 = vadd.f32 %v7689, %v8107
  %v8302 = vadd.f32 %v7694, %v8112
  %v8303 = vadd.f32 %v7699, %v8117
  %v8304 = vadd.f32 %v7704, %v8122
  %v8305 = vadd.f32 %v7709, %v8127
  %v8306 = vadd.f32 %v7714, %v8132
  %v8307 = vadd.f32 %v7719, %v8137
  %v8308 = vadd.f32 %v7724, %v8142
  %v8309 = vadd.f32 %v7729, %v8147
  %v8310 = vadd.f32 %v7734, %v8152
  %v8311 = vadd.f32 %v7739, %v8157
  %v8312 = vadd.f32 %v7744, %v8162
  %v8313 = vadd.f32 %v7749, %v8167
  %v8314 = vadd.f32 %v7754, %v8172
  %v8315 = vadd.f32 %v7759, %v8177
  %v8316 = vadd.f32 %v7764, %v8182
  %v8317 = vadd.f32 %v7769, %v8187
  %v8318 = vadd.f32 %v7774, %v8192
  %v8319 = vadd.f32 %v7779, %v8197
  %v8320 = vadd.f32 %v7784, %v8202
  %v8321 = vadd.f32 %v7789, %v8207
  %v8322 = vadd.f32 %v7794, %v8212
  %v8323 = vadd.f32 %v7799, %v8217
  %v8324 = vadd.f32 %v7804, %v8222
  %v8325 = vadd.f32 %v7809, %v8227
  %v8326 = vadd.f32 %v7814, %v8232
  %v8327 = vadd.f32 %v7819, %v8237
  %v8328 = vadd.f32 %v7824, %v8242
  %v8329 = vadd.f32 %v7829, %v8247
  %v8330 = vadd.f32 %v7834, %v8252
  %v8331 = vadd.f32 %v7839, %v8257
  %v8332 = vadd.f32 %v7844, %v8262
  %v8333 = vadd.f32 %v7849, %v8267
  %v8334 = vld [vmem:[%s8] sm:$0x1]
  %v8336 = vlaneseq
  %v8337 = vshrl.u32 %v8336, 7
  %v8338 = vsub.s32 0, %v8337
  %v8339 = vrot.slane %v8334, %v8338
  %v8341 = vadd.f32 %v8270, %v8339
  %v8342 = vadd.f32 %v8271, %v8339
  %v8343 = vadd.f32 %v8272, %v8339
  %v8344 = vadd.f32 %v8273, %v8339
  %v8345 = vadd.f32 %v8274, %v8339
  %v8346 = vadd.f32 %v8275, %v8339
  %v8347 = vadd.f32 %v8276, %v8339
  %v8348 = vadd.f32 %v8277, %v8339
  %v8349 = vadd.f32 %v8278, %v8339
  %v8350 = vadd.f32 %v8279, %v8339
  %v8351 = vadd.f32 %v8280, %v8339
  %v8352 = vadd.f32 %v8281, %v8339
  %v8353 = vadd.f32 %v8282, %v8339
  %v8354 = vadd.f32 %v8283, %v8339
  %v8355 = vadd.f32 %v8284, %v8339
  %v8356 = vadd.f32 %v8285, %v8339
  %v8357 = vadd.f32 %v8286, %v8339
  %v8358 = vadd.f32 %v8287, %v8339
  %v8359 = vadd.f32 %v8288, %v8339
  %v8360 = vadd.f32 %v8289, %v8339
  %v8361 = vadd.f32 %v8290, %v8339
  %v8362 = vadd.f32 %v8291, %v8339
  %v8363 = vadd.f32 %v8292, %v8339
  %v8364 = vadd.f32 %v8293, %v8339
  %v8365 = vadd.f32 %v8294, %v8339
  %v8366 = vadd.f32 %v8295, %v8339
  %v8367 = vadd.f32 %v8296, %v8339
  %v8368 = vadd.f32 %v8297, %v8339
  %v8369 = vadd.f32 %v8298, %v8339
  %v8370 = vadd.f32 %v8299, %v8339
  %v8371 = vadd.f32 %v8300, %v8339
  %v8372 = vadd.f32 %v8301, %v8339
  %v8373 = vadd.f32 %v8302, %v8339
  %v8374 = vadd.f32 %v8303, %v8339
  %v8375 = vadd.f32 %v8304, %v8339
  %v8376 = vadd.f32 %v8305, %v8339
  %v8377 = vadd.f32 %v8306, %v8339
  %v8378 = vadd.f32 %v8307, %v8339
  %v8379 = vadd.f32 %v8308, %v8339
  %v8380 = vadd.f32 %v8309, %v8339
  %v8381 = vadd.f32 %v8310, %v8339
  %v8382 = vadd.f32 %v8311, %v8339
  %v8383 = vadd.f32 %v8312, %v8339
  %v8384 = vadd.f32 %v8313, %v8339
  %v8385 = vadd.f32 %v8314, %v8339
  %v8386 = vadd.f32 %v8315, %v8339
  %v8387 = vadd.f32 %v8316, %v8339
  %v8388 = vadd.f32 %v8317, %v8339
  %v8389 = vadd.f32 %v8318, %v8339
  %v8390 = vadd.f32 %v8319, %v8339
  %v8391 = vadd.f32 %v8320, %v8339
  %v8392 = vadd.f32 %v8321, %v8339
  %v8393 = vadd.f32 %v8322, %v8339
  %v8394 = vadd.f32 %v8323, %v8339
  %v8395 = vadd.f32 %v8324, %v8339
  %v8396 = vadd.f32 %v8325, %v8339
  %v8397 = vadd.f32 %v8326, %v8339
  %v8398 = vadd.f32 %v8327, %v8339
  %v8399 = vadd.f32 %v8328, %v8339
  %v8400 = vadd.f32 %v8329, %v8339
  %v8401 = vadd.f32 %v8330, %v8339
  %v8402 = vadd.f32 %v8331, %v8339
  %v8403 = vadd.f32 %v8332, %v8339
  %v8404 = vadd.f32 %v8333, %v8339
  %v8405 = vld [vmem:[%s9] sm:$0x1]
  %vm8406 = vcmp.gt.f32.partialorder %v8341, 0.0
  %vm8407 = vcmp.gt.f32.partialorder %v8342, 0.0
  %vm8408 = vcmp.gt.f32.partialorder %v8343, 0.0
  %vm8409 = vcmp.gt.f32.partialorder %v8344, 0.0
  %vm8410 = vcmp.gt.f32.partialorder %v8345, 0.0
  %vm8411 = vcmp.gt.f32.partialorder %v8346, 0.0
  %vm8412 = vcmp.gt.f32.partialorder %v8347, 0.0
  %vm8413 = vcmp.gt.f32.partialorder %v8348, 0.0
  %vm8414 = vcmp.gt.f32.partialorder %v8349, 0.0
  %vm8415 = vcmp.gt.f32.partialorder %v8350, 0.0
  %vm8416 = vcmp.gt.f32.partialorder %v8351, 0.0
  %vm8417 = vcmp.gt.f32.partialorder %v8352, 0.0
  %vm8418 = vcmp.gt.f32.partialorder %v8353, 0.0
  %vm8419 = vcmp.gt.f32.partialorder %v8354, 0.0
  %vm8420 = vcmp.gt.f32.partialorder %v8355, 0.0
  %vm8421 = vcmp.gt.f32.partialorder %v8356, 0.0
  %vm8422 = vcmp.gt.f32.partialorder %v8357, 0.0
  %vm8423 = vcmp.gt.f32.partialorder %v8358, 0.0
  %vm8424 = vcmp.gt.f32.partialorder %v8359, 0.0
  %vm8425 = vcmp.gt.f32.partialorder %v8360, 0.0
  %vm8426 = vcmp.gt.f32.partialorder %v8361, 0.0
  %vm8427 = vcmp.gt.f32.partialorder %v8362, 0.0
  %vm8428 = vcmp.gt.f32.partialorder %v8363, 0.0
  %vm8429 = vcmp.gt.f32.partialorder %v8364, 0.0
  %vm8430 = vcmp.gt.f32.partialorder %v8365, 0.0
  %vm8431 = vcmp.gt.f32.partialorder %v8366, 0.0
  %vm8432 = vcmp.gt.f32.partialorder %v8367, 0.0
  %vm8433 = vcmp.gt.f32.partialorder %v8368, 0.0
  %vm8434 = vcmp.gt.f32.partialorder %v8369, 0.0
  %vm8435 = vcmp.gt.f32.partialorder %v8370, 0.0
  %vm8436 = vcmp.gt.f32.partialorder %v8371, 0.0
  %vm8437 = vcmp.gt.f32.partialorder %v8372, 0.0
  %vm8438 = vcmp.gt.f32.partialorder %v8373, 0.0
  %vm8439 = vcmp.gt.f32.partialorder %v8374, 0.0
  %vm8440 = vcmp.gt.f32.partialorder %v8375, 0.0
  %vm8441 = vcmp.gt.f32.partialorder %v8376, 0.0
  %vm8442 = vcmp.gt.f32.partialorder %v8377, 0.0
  %vm8443 = vcmp.gt.f32.partialorder %v8378, 0.0
  %vm8444 = vcmp.gt.f32.partialorder %v8379, 0.0
  %vm8445 = vcmp.gt.f32.partialorder %v8380, 0.0
  %vm8446 = vcmp.gt.f32.partialorder %v8381, 0.0
  %vm8447 = vcmp.gt.f32.partialorder %v8382, 0.0
  %vm8448 = vcmp.gt.f32.partialorder %v8383, 0.0
  %vm8449 = vcmp.gt.f32.partialorder %v8384, 0.0
  %vm8450 = vcmp.gt.f32.partialorder %v8385, 0.0
  %vm8451 = vcmp.gt.f32.partialorder %v8386, 0.0
  %vm8452 = vcmp.gt.f32.partialorder %v8387, 0.0
  %vm8453 = vcmp.gt.f32.partialorder %v8388, 0.0
  %vm8454 = vcmp.gt.f32.partialorder %v8389, 0.0
  %vm8455 = vcmp.gt.f32.partialorder %v8390, 0.0
  %vm8456 = vcmp.gt.f32.partialorder %v8391, 0.0
  %vm8457 = vcmp.gt.f32.partialorder %v8392, 0.0
  %vm8458 = vcmp.gt.f32.partialorder %v8393, 0.0
  %vm8459 = vcmp.gt.f32.partialorder %v8394, 0.0
  %vm8460 = vcmp.gt.f32.partialorder %v8395, 0.0
  %vm8461 = vcmp.gt.f32.partialorder %v8396, 0.0
  %vm8462 = vcmp.gt.f32.partialorder %v8397, 0.0
  %vm8463 = vcmp.gt.f32.partialorder %v8398, 0.0
  %vm8464 = vcmp.gt.f32.partialorder %v8399, 0.0
  %vm8465 = vcmp.gt.f32.partialorder %v8400, 0.0
  %vm8466 = vcmp.gt.f32.partialorder %v8401, 0.0
  %vm8467 = vcmp.gt.f32.partialorder %v8402, 0.0
  %vm8468 = vcmp.gt.f32.partialorder %v8403, 0.0
  %vm8469 = vcmp.gt.f32.partialorder %v8404, 0.0
  %v8471 = vlaneseq
  %v8472 = vshrl.u32 %v8471, 7
  %v8473 = vsub.s32 0, %v8472
  %v8474 = vrot.slane %v8405, %v8473
  %v8476 = vmul.f32 %v8341, %v8474
  %v8477 = vmul.f32 %v8342, %v8474
  %v8478 = vmul.f32 %v8343, %v8474
  %v8479 = vmul.f32 %v8344, %v8474
  %v8480 = vmul.f32 %v8345, %v8474
  %v8481 = vmul.f32 %v8346, %v8474
  %v8482 = vmul.f32 %v8347, %v8474
  %v8483 = vmul.f32 %v8348, %v8474
  %v8484 = vmul.f32 %v8349, %v8474
  %v8485 = vmul.f32 %v8350, %v8474
  %v8486 = vmul.f32 %v8351, %v8474
  %v8487 = vmul.f32 %v8352, %v8474
  %v8488 = vmul.f32 %v8353, %v8474
  %v8489 = vmul.f32 %v8354, %v8474
  %v8490 = vmul.f32 %v8355, %v8474
  %v8491 = vmul.f32 %v8356, %v8474
  %v8492 = vmul.f32 %v8357, %v8474
  %v8493 = vmul.f32 %v8358, %v8474
  %v8494 = vmul.f32 %v8359, %v8474
  %v8495 = vmul.f32 %v8360, %v8474
  %v8496 = vmul.f32 %v8361, %v8474
  %v8497 = vmul.f32 %v8362, %v8474
  %v8498 = vmul.f32 %v8363, %v8474
  %v8499 = vmul.f32 %v8364, %v8474
  %v8500 = vmul.f32 %v8365, %v8474
  %v8501 = vmul.f32 %v8366, %v8474
  %v8502 = vmul.f32 %v8367, %v8474
  %v8503 = vmul.f32 %v8368, %v8474
  %v8504 = vmul.f32 %v8369, %v8474
  %v8505 = vmul.f32 %v8370, %v8474
  %v8506 = vmul.f32 %v8371, %v8474
  %v8507 = vmul.f32 %v8372, %v8474
  %v8508 = vmul.f32 %v8373, %v8474
  %v8509 = vmul.f32 %v8374, %v8474
  %v8510 = vmul.f32 %v8375, %v8474
  %v8511 = vmul.f32 %v8376, %v8474
  %v8512 = vmul.f32 %v8377, %v8474
  %v8513 = vmul.f32 %v8378, %v8474
  %v8514 = vmul.f32 %v8379, %v8474
  %v8515 = vmul.f32 %v8380, %v8474
  %v8516 = vmul.f32 %v8381, %v8474
  %v8517 = vmul.f32 %v8382, %v8474
  %v8518 = vmul.f32 %v8383, %v8474
  %v8519 = vmul.f32 %v8384, %v8474
  %v8520 = vmul.f32 %v8385, %v8474
  %v8521 = vmul.f32 %v8386, %v8474
  %v8522 = vmul.f32 %v8387, %v8474
  %v8523 = vmul.f32 %v8388, %v8474
  %v8524 = vmul.f32 %v8389, %v8474
  %v8525 = vmul.f32 %v8390, %v8474
  %v8526 = vmul.f32 %v8391, %v8474
  %v8527 = vmul.f32 %v8392, %v8474
  %v8528 = vmul.f32 %v8393, %v8474
  %v8529 = vmul.f32 %v8394, %v8474
  %v8530 = vmul.f32 %v8395, %v8474
  %v8531 = vmul.f32 %v8396, %v8474
  %v8532 = vmul.f32 %v8397, %v8474
  %v8533 = vmul.f32 %v8398, %v8474
  %v8534 = vmul.f32 %v8399, %v8474
  %v8535 = vmul.f32 %v8400, %v8474
  %v8536 = vmul.f32 %v8401, %v8474
  %v8537 = vmul.f32 %v8402, %v8474
  %v8538 = vmul.f32 %v8403, %v8474
  %v8539 = vmul.f32 %v8404, %v8474
  %v8540 = vsel %vm8406, %v8341, %v8476
  %v8541 = vsel %vm8407, %v8342, %v8477
  %v8542 = vsel %vm8408, %v8343, %v8478
  %v8543 = vsel %vm8409, %v8344, %v8479
  %v8544 = vsel %vm8410, %v8345, %v8480
  %v8545 = vsel %vm8411, %v8346, %v8481
  %v8546 = vsel %vm8412, %v8347, %v8482
  %v8547 = vsel %vm8413, %v8348, %v8483
  %v8548 = vsel %vm8414, %v8349, %v8484
  %v8549 = vsel %vm8415, %v8350, %v8485
  %v8550 = vsel %vm8416, %v8351, %v8486
  %v8551 = vsel %vm8417, %v8352, %v8487
  %v8552 = vsel %vm8418, %v8353, %v8488
  %v8553 = vsel %vm8419, %v8354, %v8489
  %v8554 = vsel %vm8420, %v8355, %v8490
  %v8555 = vsel %vm8421, %v8356, %v8491
  %v8556 = vsel %vm8422, %v8357, %v8492
  %v8557 = vsel %vm8423, %v8358, %v8493
  %v8558 = vsel %vm8424, %v8359, %v8494
  %v8559 = vsel %vm8425, %v8360, %v8495
  %v8560 = vsel %vm8426, %v8361, %v8496
  %v8561 = vsel %vm8427, %v8362, %v8497
  %v8562 = vsel %vm8428, %v8363, %v8498
  %v8563 = vsel %vm8429, %v8364, %v8499
  %v8564 = vsel %vm8430, %v8365, %v8500
  %v8565 = vsel %vm8431, %v8366, %v8501
  %v8566 = vsel %vm8432, %v8367, %v8502
  %v8567 = vsel %vm8433, %v8368, %v8503
  %v8568 = vsel %vm8434, %v8369, %v8504
  %v8569 = vsel %vm8435, %v8370, %v8505
  %v8570 = vsel %vm8436, %v8371, %v8506
  %v8571 = vsel %vm8437, %v8372, %v8507
  %v8572 = vsel %vm8438, %v8373, %v8508
  %v8573 = vsel %vm8439, %v8374, %v8509
  %v8574 = vsel %vm8440, %v8375, %v8510
  %v8575 = vsel %vm8441, %v8376, %v8511
  %v8576 = vsel %vm8442, %v8377, %v8512
  %v8577 = vsel %vm8443, %v8378, %v8513
  %v8578 = vsel %vm8444, %v8379, %v8514
  %v8579 = vsel %vm8445, %v8380, %v8515
  %v8580 = vsel %vm8446, %v8381, %v8516
  %v8581 = vsel %vm8447, %v8382, %v8517
  %v8582 = vsel %vm8448, %v8383, %v8518
  %v8583 = vsel %vm8449, %v8384, %v8519
  %v8584 = vsel %vm8450, %v8385, %v8520
  %v8585 = vsel %vm8451, %v8386, %v8521
  %v8586 = vsel %vm8452, %v8387, %v8522
  %v8587 = vsel %vm8453, %v8388, %v8523
  %v8588 = vsel %vm8454, %v8389, %v8524
  %v8589 = vsel %vm8455, %v8390, %v8525
  %v8590 = vsel %vm8456, %v8391, %v8526
  %v8591 = vsel %vm8457, %v8392, %v8527
  %v8592 = vsel %vm8458, %v8393, %v8528
  %v8593 = vsel %vm8459, %v8394, %v8529
  %v8594 = vsel %vm8460, %v8395, %v8530
  %v8595 = vsel %vm8461, %v8396, %v8531
  %v8596 = vsel %vm8462, %v8397, %v8532
  %v8597 = vsel %vm8463, %v8398, %v8533
  %v8598 = vsel %vm8464, %v8399, %v8534
  %v8599 = vsel %vm8465, %v8400, %v8535
  %v8600 = vsel %vm8466, %v8401, %v8536
  %v8601 = vsel %vm8467, %v8402, %v8537
  %v8602 = vsel %vm8468, %v8403, %v8538
  %v8603 = vsel %vm8469, %v8404, %v8539
  %v8604 = vadd.f32 %v5905, %v8540
  %v8605 = vadd.f32 %v5906, %v8541
  %v8606 = vadd.f32 %v5907, %v8542
  %v8607 = vadd.f32 %v5908, %v8543
  %v8608 = vadd.f32 %v5909, %v8544
  %v8609 = vadd.f32 %v5910, %v8545
  %v8610 = vadd.f32 %v5911, %v8546
  %v8611 = vadd.f32 %v5912, %v8547
  %v8612 = vadd.f32 %v5913, %v8548
  %v8613 = vadd.f32 %v5914, %v8549
  %v8614 = vadd.f32 %v5915, %v8550
  %v8615 = vadd.f32 %v5916, %v8551
  %v8616 = vadd.f32 %v5917, %v8552
  %v8617 = vadd.f32 %v5918, %v8553
  %v8618 = vadd.f32 %v5919, %v8554
  %v8619 = vadd.f32 %v5920, %v8555
  %v8620 = vadd.f32 %v5921, %v8556
  %v8621 = vadd.f32 %v5922, %v8557
  %v8622 = vadd.f32 %v5923, %v8558
  %v8623 = vadd.f32 %v5924, %v8559
  %v8624 = vadd.f32 %v5925, %v8560
  %v8625 = vadd.f32 %v5926, %v8561
  %v8626 = vadd.f32 %v5927, %v8562
  %v8627 = vadd.f32 %v5928, %v8563
  %v8628 = vadd.f32 %v5929, %v8564
  %v8629 = vadd.f32 %v5930, %v8565
  %v8630 = vadd.f32 %v5931, %v8566
  %v8631 = vadd.f32 %v5932, %v8567
  %v8632 = vadd.f32 %v5933, %v8568
  %v8633 = vadd.f32 %v5934, %v8569
  %v8634 = vadd.f32 %v5935, %v8570
  %v8635 = vadd.f32 %v5936, %v8571
  %v8636 = vadd.f32 %v5937, %v8572
  %v8637 = vadd.f32 %v5938, %v8573
  %v8638 = vadd.f32 %v5939, %v8574
  %v8639 = vadd.f32 %v5940, %v8575
  %v8640 = vadd.f32 %v5941, %v8576
  %v8641 = vadd.f32 %v5942, %v8577
  %v8642 = vadd.f32 %v5943, %v8578
  %v8643 = vadd.f32 %v5944, %v8579
  %v8644 = vadd.f32 %v5945, %v8580
  %v8645 = vadd.f32 %v5946, %v8581
  %v8646 = vadd.f32 %v5947, %v8582
  %v8647 = vadd.f32 %v5948, %v8583
  %v8648 = vadd.f32 %v5949, %v8584
  %v8649 = vadd.f32 %v5950, %v8585
  %v8650 = vadd.f32 %v5951, %v8586
  %v8651 = vadd.f32 %v5952, %v8587
  %v8652 = vadd.f32 %v5953, %v8588
  %v8653 = vadd.f32 %v5954, %v8589
  %v8654 = vadd.f32 %v5955, %v8590
  %v8655 = vadd.f32 %v5956, %v8591
  %v8656 = vadd.f32 %v5957, %v8592
  %v8657 = vadd.f32 %v5958, %v8593
  %v8658 = vadd.f32 %v5959, %v8594
  %v8659 = vadd.f32 %v5960, %v8595
  %v8660 = vadd.f32 %v5961, %v8596
  %v8661 = vadd.f32 %v5962, %v8597
  %v8662 = vadd.f32 %v5963, %v8598
  %v8663 = vadd.f32 %v5964, %v8599
  %v8664 = vadd.f32 %v5965, %v8600
  %v8665 = vadd.f32 %v5966, %v8601
  %v8666 = vadd.f32 %v5967, %v8602
  %v8667 = vadd.f32 %v5968, %v8603
  %8668 = vst.msk [vmem:[%s3269 + $0x1] sm:$0xff] %vm151, %v8604
  %8669 = vst.msk [vmem:[%s3269 + $0x9] sm:$0xff] %vm151, %v8605
  %8670 = vst.msk [vmem:[%s3269 + $0x19] sm:$0xff] %vm151, %v8606
  %8671 = vst.msk [vmem:[%s3269 + $0x21] sm:$0xff] %vm151, %v8607
  %8672 = vst.msk [vmem:[%s3269 + $0x31] sm:$0xff] %vm151, %v8608
  %8673 = vst.msk [vmem:[%s3269 + $0x39] sm:$0xff] %vm151, %v8609
  %8674 = vst.msk [vmem:[%s3269 + $0x49] sm:$0xff] %vm151, %v8610
  %8675 = vst.msk [vmem:[%s3269 + $0x51] sm:$0xff] %vm151, %v8611
  %8676 = vst.msk [vmem:[%s3269 + $0x61] sm:$0xff] %vm151, %v8612
  %8677 = vst.msk [vmem:[%s3269 + $0x69] sm:$0xff] %vm151, %v8613
  %8678 = vst.msk [vmem:[%s3269 + $0x79] sm:$0xff] %vm151, %v8614
  %8679 = vst.msk [vmem:[%s3269 + $0x81] sm:$0xff] %vm151, %v8615
  %8680 = vst.msk [vmem:[%s3269 + $0x91] sm:$0xff] %vm151, %v8616
  %8681 = vst.msk [vmem:[%s3269 + $0x99] sm:$0xff] %vm151, %v8617
  %8682 = vst.msk [vmem:[%s3269 + $0xa9] sm:$0xff] %vm151, %v8618
  %8683 = vst.msk [vmem:[%s3269 + $0xb1] sm:$0xff] %vm151, %v8619
  %8684 = vst.msk [vmem:[%s3269 + $0xc1] sm:$0xff] %vm151, %v8620
  %8685 = vst.msk [vmem:[%s3269 + $0xc9] sm:$0xff] %vm151, %v8621
  %8686 = vst.msk [vmem:[%s3269 + $0xd9] sm:$0xff] %vm151, %v8622
  %8687 = vst.msk [vmem:[%s3269 + $0xe1] sm:$0xff] %vm151, %v8623
  %8688 = vst.msk [vmem:[%s3269 + $0xf1] sm:$0xff] %vm151, %v8624
  %8689 = vst.msk [vmem:[%s3269 + $0xf9] sm:$0xff] %vm151, %v8625
  %8690 = vst.msk [vmem:[%s3269 + $0x109] sm:$0xff] %vm151, %v8626
  %8691 = vst.msk [vmem:[%s3269 + $0x111] sm:$0xff] %vm151, %v8627
  %8692 = vst.msk [vmem:[%s3269 + $0x121] sm:$0xff] %vm151, %v8628
  %8693 = vst.msk [vmem:[%s3269 + $0x129] sm:$0xff] %vm151, %v8629
  %8694 = vst.msk [vmem:[%s3269 + $0x139] sm:$0xff] %vm151, %v8630
  %8695 = vst.msk [vmem:[%s3269 + $0x141] sm:$0xff] %vm151, %v8631
  %8696 = vst.msk [vmem:[%s3269 + $0x151] sm:$0xff] %vm151, %v8632
  %8697 = vst.msk [vmem:[%s3269 + $0x159] sm:$0xff] %vm151, %v8633
  %8698 = vst.msk [vmem:[%s3269 + $0x169] sm:$0xff] %vm151, %v8634
  %8699 = vst.msk [vmem:[%s3269 + $0x171] sm:$0xff] %vm151, %v8635
  %8700 = vst.msk [vmem:[%s3269 + $0x1b1] sm:$0xff] %vm151, %v8636
  %8701 = vst.msk [vmem:[%s3269 + $0x1b9] sm:$0xff] %vm151, %v8637
  %8702 = vst.msk [vmem:[%s3269 + $0x1c9] sm:$0xff] %vm151, %v8638
  %8703 = vst.msk [vmem:[%s3269 + $0x1d1] sm:$0xff] %vm151, %v8639
  %8704 = vst.msk [vmem:[%s3269 + $0x1e1] sm:$0xff] %vm151, %v8640
  %8705 = vst.msk [vmem:[%s3269 + $0x1e9] sm:$0xff] %vm151, %v8641
  %8706 = vst.msk [vmem:[%s3269 + $0x1f9] sm:$0xff] %vm151, %v8642
  %8707 = vst.msk [vmem:[%s3269 + $0x201] sm:$0xff] %vm151, %v8643
  %8708 = vst.msk [vmem:[%s3269 + $0x211] sm:$0xff] %vm151, %v8644
  %8709 = vst.msk [vmem:[%s3269 + $0x219] sm:$0xff] %vm151, %v8645
  %8710 = vst.msk [vmem:[%s3269 + $0x229] sm:$0xff] %vm151, %v8646
  %8711 = vst.msk [vmem:[%s3269 + $0x231] sm:$0xff] %vm151, %v8647
  %8712 = vst.msk [vmem:[%s3269 + $0x241] sm:$0xff] %vm151, %v8648
  %8713 = vst.msk [vmem:[%s3269 + $0x249] sm:$0xff] %vm151, %v8649
  %8714 = vst.msk [vmem:[%s3269 + $0x259] sm:$0xff] %vm151, %v8650
  %8715 = vst.msk [vmem:[%s3269 + $0x261] sm:$0xff] %vm151, %v8651
  %8716 = vst.msk [vmem:[%s3269 + $0x271] sm:$0xff] %vm151, %v8652
  %8717 = vst.msk [vmem:[%s3269 + $0x279] sm:$0xff] %vm151, %v8653
  %8718 = vst.msk [vmem:[%s3269 + $0x289] sm:$0xff] %vm151, %v8654
  %8719 = vst.msk [vmem:[%s3269 + $0x291] sm:$0xff] %vm151, %v8655
  %8720 = vst.msk [vmem:[%s3269 + $0x2a1] sm:$0xff] %vm151, %v8656
  %8721 = vst.msk [vmem:[%s3269 + $0x2a9] sm:$0xff] %vm151, %v8657
  %8722 = vst.msk [vmem:[%s3269 + $0x2b9] sm:$0xff] %vm151, %v8658
  %8723 = vst.msk [vmem:[%s3269 + $0x2c1] sm:$0xff] %vm151, %v8659
  %8724 = vst.msk [vmem:[%s3269 + $0x2d1] sm:$0xff] %vm151, %v8660
  %8725 = vst.msk [vmem:[%s3269 + $0x2d9] sm:$0xff] %vm151, %v8661
  %8726 = vst.msk [vmem:[%s3269 + $0x2e9] sm:$0xff] %vm151, %v8662
  %8727 = vst.msk [vmem:[%s3269 + $0x2f1] sm:$0xff] %vm151, %v8663
  %8728 = vst.msk [vmem:[%s3269 + $0x301] sm:$0xff] %vm151, %v8664
  %8729 = vst.msk [vmem:[%s3269 + $0x309] sm:$0xff] %vm151, %v8665
  %8730 = vst.msk [vmem:[%s3269 + $0x319] sm:$0xff] %vm151, %v8666
  %8731 = vst.msk [vmem:[%s3269 + $0x321] sm:$0xff] %vm151, %v8667
  %v8732 = vld [vmem:[#allocation3] sm:$0xff]
  %v8733 = vld [vmem:[#allocation3 + $0x8] sm:$0xff]
  %v8734 = vld [vmem:[#allocation3 + $0x10] sm:$0x3]
  %v8735 = vld [vmem:[#allocation3 + $0x18] sm:$0xff]
  %v8736 = vld [vmem:[#allocation3 + $0x20] sm:$0xff]
  %v8737 = vld [vmem:[#allocation3 + $0x28] sm:$0x3]
  %v8738 = vld [vmem:[#allocation3 + $0x30] sm:$0xff]
  %v8739 = vld [vmem:[#allocation3 + $0x38] sm:$0xff]
  %v8740 = vld [vmem:[#allocation3 + $0x40] sm:$0x3]
  %v8741 = vld [vmem:[#allocation3 + $0x48] sm:$0xff]
  %v8742 = vld [vmem:[#allocation3 + $0x50] sm:$0xff]
  %v8743 = vld [vmem:[#allocation3 + $0x58] sm:$0x3]
  %v8744 = vld [vmem:[#allocation3 + $0x60] sm:$0xff]
  %v8745 = vld [vmem:[#allocation3 + $0x68] sm:$0xff]
  %v8746 = vld [vmem:[#allocation3 + $0x70] sm:$0x3]
  %v8747 = vld [vmem:[#allocation3 + $0x78] sm:$0xff]
  %v8748 = vld [vmem:[#allocation3 + $0x80] sm:$0xff]
  %v8749 = vld [vmem:[#allocation3 + $0x88] sm:$0x3]
  %v8750 = vld [vmem:[#allocation3 + $0x90] sm:$0xff]
  %v8751 = vld [vmem:[#allocation3 + $0x98] sm:$0xff]
  %v8752 = vld [vmem:[#allocation3 + $0xa0] sm:$0x3]
  %v8753 = vld [vmem:[#allocation3 + $0xa8] sm:$0xff]
  %v8754 = vld [vmem:[#allocation3 + $0xb0] sm:$0xff]
  %v8755 = vld [vmem:[#allocation3 + $0xb8] sm:$0x3]
  %v8756 = vld [vmem:[#allocation3 + $0xc0] sm:$0xff]
  %v8757 = vld [vmem:[#allocation3 + $0xc8] sm:$0xff]
  %v8758 = vld [vmem:[#allocation3 + $0xd0] sm:$0x3]
  %v8759 = vld [vmem:[#allocation3 + $0xd8] sm:$0xff]
  %v8760 = vld [vmem:[#allocation3 + $0xe0] sm:$0xff]
  %v8761 = vld [vmem:[#allocation3 + $0xe8] sm:$0x3]
  %v8762 = vld [vmem:[#allocation3 + $0xf0] sm:$0xff]
  %v8763 = vld [vmem:[#allocation3 + $0xf8] sm:$0xff]
  %v8764 = vld [vmem:[#allocation3 + $0x100] sm:$0x3]
  %v8765 = vld [vmem:[#allocation3 + $0x108] sm:$0xff]
  %v8766 = vld [vmem:[#allocation3 + $0x110] sm:$0xff]
  %v8767 = vld [vmem:[#allocation3 + $0x118] sm:$0x3]
  %v8768 = vld [vmem:[#allocation3 + $0x120] sm:$0xff]
  %v8769 = vld [vmem:[#allocation3 + $0x128] sm:$0xff]
  %v8770 = vld [vmem:[#allocation3 + $0x130] sm:$0x3]
  %v8771 = vld [vmem:[#allocation3 + $0x138] sm:$0xff]
  %v8772 = vld [vmem:[#allocation3 + $0x140] sm:$0xff]
  %v8773 = vld [vmem:[#allocation3 + $0x148] sm:$0x3]
  %v8774 = vld [vmem:[#allocation3 + $0x150] sm:$0xff]
  %v8775 = vld [vmem:[#allocation3 + $0x158] sm:$0xff]
  %v8776 = vld [vmem:[#allocation3 + $0x160] sm:$0x3]
  %v8777 = vld [vmem:[#allocation3 + $0x168] sm:$0xff]
  %v8778 = vld [vmem:[#allocation3 + $0x170] sm:$0xff]
  %v8779 = vld [vmem:[#allocation3 + $0x178] sm:$0x3]
  %v8780 = vld [vmem:[#allocation3 + $0x180] sm:$0xff]
  %v8781 = vld [vmem:[#allocation3 + $0x188] sm:$0xff]
  %v8782 = vld [vmem:[#allocation3 + $0x190] sm:$0x3]
  %v8783 = vld [vmem:[#allocation3 + $0x198] sm:$0xff]
  %v8784 = vld [vmem:[#allocation3 + $0x1a0] sm:$0xff]
  %v8785 = vld [vmem:[#allocation3 + $0x1a8] sm:$0x3]
  %v8786 = vld [vmem:[#allocation3 + $0x1b0] sm:$0xff]
  %v8787 = vld [vmem:[#allocation3 + $0x1b8] sm:$0xff]
  %v8788 = vld [vmem:[#allocation3 + $0x1c0] sm:$0x3]
  %v8789 = vld [vmem:[#allocation3 + $0x1c8] sm:$0xff]
  %v8790 = vld [vmem:[#allocation3 + $0x1d0] sm:$0xff]
  %v8791 = vld [vmem:[#allocation3 + $0x1d8] sm:$0x3]
  %v8792 = vld [vmem:[#allocation3 + $0x1e0] sm:$0xff]
  %v8793 = vld [vmem:[#allocation3 + $0x1e8] sm:$0xff]
  %v8794 = vld [vmem:[#allocation3 + $0x1f0] sm:$0x3]
  %v8795 = vld [vmem:[#allocation3 + $0x1f8] sm:$0xff]
  %v8796 = vld [vmem:[#allocation3 + $0x200] sm:$0xff]
  %v8797 = vld [vmem:[#allocation3 + $0x208] sm:$0x3]
  %v8798 = vld [vmem:[#allocation3 + $0x210] sm:$0xff]
  %v8799 = vld [vmem:[#allocation3 + $0x218] sm:$0xff]
  %v8800 = vld [vmem:[#allocation3 + $0x220] sm:$0x3]
  %v8801 = vld [vmem:[#allocation3 + $0x228] sm:$0xff]
  %v8802 = vld [vmem:[#allocation3 + $0x230] sm:$0xff]
  %v8803 = vld [vmem:[#allocation3 + $0x238] sm:$0x3]
  %v8804 = vld [vmem:[#allocation3 + $0x240] sm:$0xff]
  %v8805 = vld [vmem:[#allocation3 + $0x248] sm:$0xff]
  %v8806 = vld [vmem:[#allocation3 + $0x250] sm:$0x3]
  %v8807 = vld [vmem:[#allocation3 + $0x258] sm:$0xff]
  %v8808 = vld [vmem:[#allocation3 + $0x260] sm:$0xff]
  %v8809 = vld [vmem:[#allocation3 + $0x268] sm:$0x3]
  %v8810 = vld [vmem:[#allocation3 + $0x270] sm:$0xff]
  %v8811 = vld [vmem:[#allocation3 + $0x278] sm:$0xff]
  %v8812 = vld [vmem:[#allocation3 + $0x280] sm:$0x3]
  %v8813 = vld [vmem:[#allocation3 + $0x288] sm:$0xff]
  %v8814 = vld [vmem:[#allocation3 + $0x290] sm:$0xff]
  %v8815 = vld [vmem:[#allocation3 + $0x298] sm:$0x3]
  %v8816 = vld [vmem:[#allocation3 + $0x2a0] sm:$0xff]
  %v8817 = vld [vmem:[#allocation3 + $0x2a8] sm:$0xff]
  %v8818 = vld [vmem:[#allocation3 + $0x2b0] sm:$0x3]
  %v8819 = vld [vmem:[#allocation3 + $0x2b8] sm:$0xff]
  %v8820 = vld [vmem:[#allocation3 + $0x2c0] sm:$0xff]
  %v8821 = vld [vmem:[#allocation3 + $0x2c8] sm:$0x3]
  %v8822 = vld [vmem:[#allocation3 + $0x2d0] sm:$0xff]
  %v8823 = vld [vmem:[#allocation3 + $0x2d8] sm:$0xff]
  %v8824 = vld [vmem:[#allocation3 + $0x2e0] sm:$0x3]
  %v8825 = vld [vmem:[#allocation3 + $0x2e8] sm:$0xff]
  %v8826 = vld [vmem:[#allocation3 + $0x2f0] sm:$0xff]
  %v8827 = vld [vmem:[#allocation3 + $0x2f8] sm:$0x3]
  %v8828 = vld [vmem:[#allocation3 + $0x300] sm:$0xff]
  %v8829 = vld [vmem:[#allocation3 + $0x308] sm:$0xff]
  %v8830 = vld [vmem:[#allocation3 + $0x310] sm:$0x3]
  %v8831 = vld [vmem:[#allocation3 + $0x318] sm:$0xff]
  %v8832 = vld [vmem:[#allocation3 + $0x320] sm:$0xff]
  %v8833 = vld [vmem:[#allocation3 + $0x328] sm:$0x3]
  %v8834 = vld [vmem:[#allocation3 + $0x330] sm:$0xff]
  %v8835 = vld [vmem:[#allocation3 + $0x338] sm:$0xff]
  %v8836 = vld [vmem:[#allocation3 + $0x340] sm:$0x3]
  %v8837 = vld [vmem:[#allocation3 + $0x348] sm:$0xff]
  %v8838 = vld [vmem:[#allocation3 + $0x350] sm:$0xff]
  %v8839 = vld [vmem:[#allocation3 + $0x358] sm:$0x3]
  %v8948 = vrot.slane %v8732, 1
  %v8949 = vrot.slane %v8733, 1
  %v8950 = vsel %vm606, %v8948, %v8949
  %v8951 = vrot.slane %v8734, 1
  %v8952 = vsel %vm606, %v8949, %v8951
  %v8953 = vrot.slane %v8735, 1
  %v8954 = vrot.slane %v8736, 1
  %v8955 = vsel %vm606, %v8953, %v8954
  %v8956 = vrot.slane %v8737, 1
  %v8957 = vsel %vm606, %v8954, %v8956
  %v8958 = vrot.slane %v8738, 1
  %v8959 = vrot.slane %v8739, 1
  %v8960 = vsel %vm606, %v8958, %v8959
  %v8961 = vrot.slane %v8740, 1
  %v8962 = vsel %vm606, %v8959, %v8961
  %v8963 = vrot.slane %v8741, 1
  %v8964 = vrot.slane %v8742, 1
  %v8965 = vsel %vm606, %v8963, %v8964
  %v8966 = vrot.slane %v8743, 1
  %v8967 = vsel %vm606, %v8964, %v8966
  %v8968 = vrot.slane %v8744, 1
  %v8969 = vrot.slane %v8745, 1
  %v8970 = vsel %vm606, %v8968, %v8969
  %v8971 = vrot.slane %v8746, 1
  %v8972 = vsel %vm606, %v8969, %v8971
  %v8973 = vrot.slane %v8747, 1
  %v8974 = vrot.slane %v8748, 1
  %v8975 = vsel %vm606, %v8973, %v8974
  %v8976 = vrot.slane %v8749, 1
  %v8977 = vsel %vm606, %v8974, %v8976
  %v8978 = vrot.slane %v8750, 1
  %v8979 = vrot.slane %v8751, 1
  %v8980 = vsel %vm606, %v8978, %v8979
  %v8981 = vrot.slane %v8752, 1
  %v8982 = vsel %vm606, %v8979, %v8981
  %v8983 = vrot.slane %v8753, 1
  %v8984 = vrot.slane %v8754, 1
  %v8985 = vsel %vm606, %v8983, %v8984
  %v8986 = vrot.slane %v8755, 1
  %v8987 = vsel %vm606, %v8984, %v8986
  %v8988 = vrot.slane %v8756, 1
  %v8989 = vrot.slane %v8757, 1
  %v8990 = vsel %vm606, %v8988, %v8989
  %v8991 = vrot.slane %v8758, 1
  %v8992 = vsel %vm606, %v8989, %v8991
  %v8993 = vrot.slane %v8759, 1
  %v8994 = vrot.slane %v8760, 1
  %v8995 = vsel %vm606, %v8993, %v8994
  %v8996 = vrot.slane %v8761, 1
  %v8997 = vsel %vm606, %v8994, %v8996
  %v8998 = vrot.slane %v8762, 1
  %v8999 = vrot.slane %v8763, 1
  %v9000 = vsel %vm606, %v8998, %v8999
  %v9001 = vrot.slane %v8764, 1
  %v9002 = vsel %vm606, %v8999, %v9001
  %v9003 = vrot.slane %v8765, 1
  %v9004 = vrot.slane %v8766, 1
  %v9005 = vsel %vm606, %v9003, %v9004
  %v9006 = vrot.slane %v8767, 1
  %v9007 = vsel %vm606, %v9004, %v9006
  %v9008 = vrot.slane %v8768, 1
  %v9009 = vrot.slane %v8769, 1
  %v9010 = vsel %vm606, %v9008, %v9009
  %v9011 = vrot.slane %v8770, 1
  %v9012 = vsel %vm606, %v9009, %v9011
  %v9013 = vrot.slane %v8771, 1
  %v9014 = vrot.slane %v8772, 1
  %v9015 = vsel %vm606, %v9013, %v9014
  %v9016 = vrot.slane %v8773, 1
  %v9017 = vsel %vm606, %v9014, %v9016
  %v9018 = vrot.slane %v8774, 1
  %v9019 = vrot.slane %v8775, 1
  %v9020 = vsel %vm606, %v9018, %v9019
  %v9021 = vrot.slane %v8776, 1
  %v9022 = vsel %vm606, %v9019, %v9021
  %v9023 = vrot.slane %v8777, 1
  %v9024 = vrot.slane %v8778, 1
  %v9025 = vsel %vm606, %v9023, %v9024
  %v9026 = vrot.slane %v8779, 1
  %v9027 = vsel %vm606, %v9024, %v9026
  %v9028 = vrot.slane %v8780, 1
  %v9029 = vrot.slane %v8781, 1
  %v9030 = vsel %vm606, %v9028, %v9029
  %v9031 = vrot.slane %v8782, 1
  %v9032 = vsel %vm606, %v9029, %v9031
  %v9033 = vrot.slane %v8783, 1
  %v9034 = vrot.slane %v8784, 1
  %v9035 = vsel %vm606, %v9033, %v9034
  %v9036 = vrot.slane %v8785, 1
  %v9037 = vsel %vm606, %v9034, %v9036
  %v9038 = vrot.slane %v8786, 1
  %v9039 = vrot.slane %v8787, 1
  %v9040 = vsel %vm606, %v9038, %v9039
  %v9041 = vrot.slane %v8788, 1
  %v9042 = vsel %vm606, %v9039, %v9041
  %v9043 = vrot.slane %v8789, 1
  %v9044 = vrot.slane %v8790, 1
  %v9045 = vsel %vm606, %v9043, %v9044
  %v9046 = vrot.slane %v8791, 1
  %v9047 = vsel %vm606, %v9044, %v9046
  %v9048 = vrot.slane %v8792, 1
  %v9049 = vrot.slane %v8793, 1
  %v9050 = vsel %vm606, %v9048, %v9049
  %v9051 = vrot.slane %v8794, 1
  %v9052 = vsel %vm606, %v9049, %v9051
  %v9053 = vrot.slane %v8795, 1
  %v9054 = vrot.slane %v8796, 1
  %v9055 = vsel %vm606, %v9053, %v9054
  %v9056 = vrot.slane %v8797, 1
  %v9057 = vsel %vm606, %v9054, %v9056
  %v9058 = vrot.slane %v8798, 1
  %v9059 = vrot.slane %v8799, 1
  %v9060 = vsel %vm606, %v9058, %v9059
  %v9061 = vrot.slane %v8800, 1
  %v9062 = vsel %vm606, %v9059, %v9061
  %v9063 = vrot.slane %v8801, 1
  %v9064 = vrot.slane %v8802, 1
  %v9065 = vsel %vm606, %v9063, %v9064
  %v9066 = vrot.slane %v8803, 1
  %v9067 = vsel %vm606, %v9064, %v9066
  %v9068 = vrot.slane %v8804, 1
  %v9069 = vrot.slane %v8805, 1
  %v9070 = vsel %vm606, %v9068, %v9069
  %v9071 = vrot.slane %v8806, 1
  %v9072 = vsel %vm606, %v9069, %v9071
  %v9073 = vrot.slane %v8807, 1
  %v9074 = vrot.slane %v8808, 1
  %v9075 = vsel %vm606, %v9073, %v9074
  %v9076 = vrot.slane %v8809, 1
  %v9077 = vsel %vm606, %v9074, %v9076
  %v9078 = vrot.slane %v8810, 1
  %v9079 = vrot.slane %v8811, 1
  %v9080 = vsel %vm606, %v9078, %v9079
  %v9081 = vrot.slane %v8812, 1
  %v9082 = vsel %vm606, %v9079, %v9081
  %v9083 = vrot.slane %v8813, 1
  %v9084 = vrot.slane %v8814, 1
  %v9085 = vsel %vm606, %v9083, %v9084
  %v9086 = vrot.slane %v8815, 1
  %v9087 = vsel %vm606, %v9084, %v9086
  %v9088 = vrot.slane %v8816, 1
  %v9089 = vrot.slane %v8817, 1
  %v9090 = vsel %vm606, %v9088, %v9089
  %v9091 = vrot.slane %v8818, 1
  %v9092 = vsel %vm606, %v9089, %v9091
  %v9093 = vrot.slane %v8819, 1
  %v9094 = vrot.slane %v8820, 1
  %v9095 = vsel %vm606, %v9093, %v9094
  %v9096 = vrot.slane %v8821, 1
  %v9097 = vsel %vm606, %v9094, %v9096
  %v9098 = vrot.slane %v8822, 1
  %v9099 = vrot.slane %v8823, 1
  %v9100 = vsel %vm606, %v9098, %v9099
  %v9101 = vrot.slane %v8824, 1
  %v9102 = vsel %vm606, %v9099, %v9101
  %v9103 = vrot.slane %v8825, 1
  %v9104 = vrot.slane %v8826, 1
  %v9105 = vsel %vm606, %v9103, %v9104
  %v9106 = vrot.slane %v8827, 1
  %v9107 = vsel %vm606, %v9104, %v9106
  %v9108 = vrot.slane %v8828, 1
  %v9109 = vrot.slane %v8829, 1
  %v9110 = vsel %vm606, %v9108, %v9109
  %v9111 = vrot.slane %v8830, 1
  %v9112 = vsel %vm606, %v9109, %v9111
  %v9113 = vrot.slane %v8831, 1
  %v9114 = vrot.slane %v8832, 1
  %v9115 = vsel %vm606, %v9113, %v9114
  %v9116 = vrot.slane %v8833, 1
  %v9117 = vsel %vm606, %v9114, %v9116
  %v9118 = vrot.slane %v8834, 1
  %v9119 = vrot.slane %v8835, 1
  %v9120 = vsel %vm606, %v9118, %v9119
  %v9121 = vrot.slane %v8836, 1
  %v9122 = vsel %vm606, %v9119, %v9121
  %v9123 = vrot.slane %v8837, 1
  %v9124 = vrot.slane %v8838, 1
  %v9125 = vsel %vm606, %v9123, %v9124
  %v9126 = vrot.slane %v8839, 1
  %v9127 = vsel %vm606, %v9124, %v9126
  %9128 = vrot.lane.b32.xlu0 %v8950, 64
  %v9129 = vpop.permute.xlu0 %9128
  %9130 = vrot.lane.b32.xlu0 %v8952, 64
  %v9131 = vpop.permute.xlu0 %9130
  %9132 = vrot.lane.b32.xlu0 %v8955, 64
  %v9133 = vpop.permute.xlu0 %9132
  %9134 = vrot.lane.b32.xlu0 %v8957, 64
  %v9135 = vpop.permute.xlu0 %9134
  %9136 = vrot.lane.b32.xlu0 %v8960, 64
  %v9137 = vpop.permute.xlu0 %9136
  %9138 = vrot.lane.b32.xlu0 %v8962, 64
  %v9139 = vpop.permute.xlu0 %9138
  %9140 = vrot.lane.b32.xlu0 %v8965, 64
  %v9141 = vpop.permute.xlu0 %9140
  %9142 = vrot.lane.b32.xlu0 %v8967, 64
  %v9143 = vpop.permute.xlu0 %9142
  %9144 = vrot.lane.b32.xlu0 %v8970, 64
  %v9145 = vpop.permute.xlu0 %9144
  %9146 = vrot.lane.b32.xlu0 %v8972, 64
  %v9147 = vpop.permute.xlu0 %9146
  %9148 = vrot.lane.b32.xlu0 %v8975, 64
  %v9149 = vpop.permute.xlu0 %9148
  %9150 = vrot.lane.b32.xlu0 %v8977, 64
  %v9151 = vpop.permute.xlu0 %9150
  %9152 = vrot.lane.b32.xlu0 %v8980, 64
  %v9153 = vpop.permute.xlu0 %9152
  %9154 = vrot.lane.b32.xlu0 %v8982, 64
  %v9155 = vpop.permute.xlu0 %9154
  %9156 = vrot.lane.b32.xlu0 %v8985, 64
  %v9157 = vpop.permute.xlu0 %9156
  %9158 = vrot.lane.b32.xlu0 %v8987, 64
  %v9159 = vpop.permute.xlu0 %9158
  %9160 = vrot.lane.b32.xlu0 %v8990, 64
  %v9161 = vpop.permute.xlu0 %9160
  %9162 = vrot.lane.b32.xlu0 %v8992, 64
  %v9163 = vpop.permute.xlu0 %9162
  %9164 = vrot.lane.b32.xlu0 %v8995, 64
  %v9165 = vpop.permute.xlu0 %9164
  %9166 = vrot.lane.b32.xlu0 %v8997, 64
  %v9167 = vpop.permute.xlu0 %9166
  %9168 = vrot.lane.b32.xlu0 %v9000, 64
  %v9169 = vpop.permute.xlu0 %9168
  %9170 = vrot.lane.b32.xlu0 %v9002, 64
  %v9171 = vpop.permute.xlu0 %9170
  %9172 = vrot.lane.b32.xlu0 %v9005, 64
  %v9173 = vpop.permute.xlu0 %9172
  %9174 = vrot.lane.b32.xlu0 %v9007, 64
  %v9175 = vpop.permute.xlu0 %9174
  %9176 = vrot.lane.b32.xlu0 %v9010, 64
  %v9177 = vpop.permute.xlu0 %9176
  %9178 = vrot.lane.b32.xlu0 %v9012, 64
  %v9179 = vpop.permute.xlu0 %9178
  %9180 = vrot.lane.b32.xlu0 %v9015, 64
  %v9181 = vpop.permute.xlu0 %9180
  %9182 = vrot.lane.b32.xlu0 %v9017, 64
  %v9183 = vpop.permute.xlu0 %9182
  %9184 = vrot.lane.b32.xlu0 %v9020, 64
  %v9185 = vpop.permute.xlu0 %9184
  %9186 = vrot.lane.b32.xlu0 %v9022, 64
  %v9187 = vpop.permute.xlu0 %9186
  %9188 = vrot.lane.b32.xlu0 %v9025, 64
  %v9189 = vpop.permute.xlu0 %9188
  %9190 = vrot.lane.b32.xlu0 %v9027, 64
  %v9191 = vpop.permute.xlu0 %9190
  %9192 = vrot.lane.b32.xlu0 %v9030, 64
  %v9193 = vpop.permute.xlu0 %9192
  %9194 = vrot.lane.b32.xlu0 %v9032, 64
  %v9195 = vpop.permute.xlu0 %9194
  %9196 = vrot.lane.b32.xlu0 %v9035, 64
  %v9197 = vpop.permute.xlu0 %9196
  %9198 = vrot.lane.b32.xlu0 %v9037, 64
  %v9199 = vpop.permute.xlu0 %9198
  %9200 = vrot.lane.b32.xlu0 %v9040, 64
  %v9201 = vpop.permute.xlu0 %9200
  %9202 = vrot.lane.b32.xlu0 %v9042, 64
  %v9203 = vpop.permute.xlu0 %9202
  %9204 = vrot.lane.b32.xlu0 %v9045, 64
  %v9205 = vpop.permute.xlu0 %9204
  %9206 = vrot.lane.b32.xlu0 %v9047, 64
  %v9207 = vpop.permute.xlu0 %9206
  %9208 = vrot.lane.b32.xlu0 %v9050, 64
  %v9209 = vpop.permute.xlu0 %9208
  %9210 = vrot.lane.b32.xlu0 %v9052, 64
  %v9211 = vpop.permute.xlu0 %9210
  %9212 = vrot.lane.b32.xlu0 %v9055, 64
  %v9213 = vpop.permute.xlu0 %9212
  %9214 = vrot.lane.b32.xlu0 %v9057, 64
  %v9215 = vpop.permute.xlu0 %9214
  %9216 = vrot.lane.b32.xlu0 %v9060, 64
  %v9217 = vpop.permute.xlu0 %9216
  %9218 = vrot.lane.b32.xlu0 %v9062, 64
  %v9219 = vpop.permute.xlu0 %9218
  %9220 = vrot.lane.b32.xlu0 %v9065, 64
  %v9221 = vpop.permute.xlu0 %9220
  %9222 = vrot.lane.b32.xlu0 %v9067, 64
  %v9223 = vpop.permute.xlu0 %9222
  %9224 = vrot.lane.b32.xlu0 %v9070, 64
  %v9225 = vpop.permute.xlu0 %9224
  %9226 = vrot.lane.b32.xlu0 %v9072, 64
  %v9227 = vpop.permute.xlu0 %9226
  %9228 = vrot.lane.b32.xlu0 %v9075, 64
  %v9229 = vpop.permute.xlu0 %9228
  %9230 = vrot.lane.b32.xlu0 %v9077, 64
  %v9231 = vpop.permute.xlu0 %9230
  %9232 = vrot.lane.b32.xlu0 %v9080, 64
  %v9233 = vpop.permute.xlu0 %9232
  %9234 = vrot.lane.b32.xlu0 %v9082, 64
  %v9235 = vpop.permute.xlu0 %9234
  %9236 = vrot.lane.b32.xlu0 %v9085, 64
  %v9237 = vpop.permute.xlu0 %9236
  %9238 = vrot.lane.b32.xlu0 %v9087, 64
  %v9239 = vpop.permute.xlu0 %9238
  %9240 = vrot.lane.b32.xlu0 %v9090, 64
  %v9241 = vpop.permute.xlu0 %9240
  %9242 = vrot.lane.b32.xlu0 %v9092, 64
  %v9243 = vpop.permute.xlu0 %9242
  %9244 = vrot.lane.b32.xlu0 %v9095, 64
  %v9245 = vpop.permute.xlu0 %9244
  %9246 = vrot.lane.b32.xlu0 %v9097, 64
  %v9247 = vpop.permute.xlu0 %9246
  %9248 = vrot.lane.b32.xlu0 %v9100, 64
  %v9249 = vpop.permute.xlu0 %9248
  %9250 = vrot.lane.b32.xlu0 %v9102, 64
  %v9251 = vpop.permute.xlu0 %9250
  %9252 = vrot.lane.b32.xlu0 %v9105, 64
  %v9253 = vpop.permute.xlu0 %9252
  %9254 = vrot.lane.b32.xlu0 %v9107, 64
  %v9255 = vpop.permute.xlu0 %9254
  %9256 = vrot.lane.b32.xlu0 %v9110, 64
  %v9257 = vpop.permute.xlu0 %9256
  %9258 = vrot.lane.b32.xlu0 %v9112, 64
  %v9259 = vpop.permute.xlu0 %9258
  %9260 = vrot.lane.b32.xlu0 %v9115, 64
  %v9261 = vpop.permute.xlu0 %9260
  %9262 = vrot.lane.b32.xlu0 %v9117, 64
  %v9263 = vpop.permute.xlu0 %9262
  %9264 = vrot.lane.b32.xlu0 %v9120, 64
  %v9265 = vpop.permute.xlu0 %9264
  %9266 = vrot.lane.b32.xlu0 %v9122, 64
  %v9267 = vpop.permute.xlu0 %9266
  %9268 = vrot.lane.b32.xlu0 %v9125, 64
  %v9269 = vpop.permute.xlu0 %9268
  %9270 = vrot.lane.b32.xlu0 %v9127, 64
  %v9271 = vpop.permute.xlu0 %9270
  %v9344 = vrot.slane %v8732, 2
  %v9345 = vrot.slane %v8733, 2
  %v9346 = vsel %vm1003, %v9344, %v9345
  %v9347 = vrot.slane %v8734, 2
  %v9348 = vsel %vm1003, %v9345, %v9347
  %v9349 = vrot.slane %v8735, 2
  %v9350 = vrot.slane %v8736, 2
  %v9351 = vsel %vm1003, %v9349, %v9350
  %v9352 = vrot.slane %v8737, 2
  %v9353 = vsel %vm1003, %v9350, %v9352
  %v9354 = vrot.slane %v8738, 2
  %v9355 = vrot.slane %v8739, 2
  %v9356 = vsel %vm1003, %v9354, %v9355
  %v9357 = vrot.slane %v8740, 2
  %v9358 = vsel %vm1003, %v9355, %v9357
  %v9359 = vrot.slane %v8741, 2
  %v9360 = vrot.slane %v8742, 2
  %v9361 = vsel %vm1003, %v9359, %v9360
  %v9362 = vrot.slane %v8743, 2
  %v9363 = vsel %vm1003, %v9360, %v9362
  %v9364 = vrot.slane %v8744, 2
  %v9365 = vrot.slane %v8745, 2
  %v9366 = vsel %vm1003, %v9364, %v9365
  %v9367 = vrot.slane %v8746, 2
  %v9368 = vsel %vm1003, %v9365, %v9367
  %v9369 = vrot.slane %v8747, 2
  %v9370 = vrot.slane %v8748, 2
  %v9371 = vsel %vm1003, %v9369, %v9370
  %v9372 = vrot.slane %v8749, 2
  %v9373 = vsel %vm1003, %v9370, %v9372
  %v9374 = vrot.slane %v8750, 2
  %v9375 = vrot.slane %v8751, 2
  %v9376 = vsel %vm1003, %v9374, %v9375
  %v9377 = vrot.slane %v8752, 2
  %v9378 = vsel %vm1003, %v9375, %v9377
  %v9379 = vrot.slane %v8753, 2
  %v9380 = vrot.slane %v8754, 2
  %v9381 = vsel %vm1003, %v9379, %v9380
  %v9382 = vrot.slane %v8755, 2
  %v9383 = vsel %vm1003, %v9380, %v9382
  %v9384 = vrot.slane %v8756, 2
  %v9385 = vrot.slane %v8757, 2
  %v9386 = vsel %vm1003, %v9384, %v9385
  %v9387 = vrot.slane %v8758, 2
  %v9388 = vsel %vm1003, %v9385, %v9387
  %v9389 = vrot.slane %v8759, 2
  %v9390 = vrot.slane %v8760, 2
  %v9391 = vsel %vm1003, %v9389, %v9390
  %v9392 = vrot.slane %v8761, 2
  %v9393 = vsel %vm1003, %v9390, %v9392
  %v9394 = vrot.slane %v8762, 2
  %v9395 = vrot.slane %v8763, 2
  %v9396 = vsel %vm1003, %v9394, %v9395
  %v9397 = vrot.slane %v8764, 2
  %v9398 = vsel %vm1003, %v9395, %v9397
  %v9399 = vrot.slane %v8765, 2
  %v9400 = vrot.slane %v8766, 2
  %v9401 = vsel %vm1003, %v9399, %v9400
  %v9402 = vrot.slane %v8767, 2
  %v9403 = vsel %vm1003, %v9400, %v9402
  %v9404 = vrot.slane %v8768, 2
  %v9405 = vrot.slane %v8769, 2
  %v9406 = vsel %vm1003, %v9404, %v9405
  %v9407 = vrot.slane %v8770, 2
  %v9408 = vsel %vm1003, %v9405, %v9407
  %v9409 = vrot.slane %v8771, 2
  %v9410 = vrot.slane %v8772, 2
  %v9411 = vsel %vm1003, %v9409, %v9410
  %v9412 = vrot.slane %v8773, 2
  %v9413 = vsel %vm1003, %v9410, %v9412
  %v9414 = vrot.slane %v8774, 2
  %v9415 = vrot.slane %v8775, 2
  %v9416 = vsel %vm1003, %v9414, %v9415
  %v9417 = vrot.slane %v8776, 2
  %v9418 = vsel %vm1003, %v9415, %v9417
  %v9419 = vrot.slane %v8777, 2
  %v9420 = vrot.slane %v8778, 2
  %v9421 = vsel %vm1003, %v9419, %v9420
  %v9422 = vrot.slane %v8779, 2
  %v9423 = vsel %vm1003, %v9420, %v9422
  %v9424 = vrot.slane %v8780, 2
  %v9425 = vrot.slane %v8781, 2
  %v9426 = vsel %vm1003, %v9424, %v9425
  %v9427 = vrot.slane %v8782, 2
  %v9428 = vsel %vm1003, %v9425, %v9427
  %v9429 = vrot.slane %v8783, 2
  %v9430 = vrot.slane %v8784, 2
  %v9431 = vsel %vm1003, %v9429, %v9430
  %v9432 = vrot.slane %v8785, 2
  %v9433 = vsel %vm1003, %v9430, %v9432
  %v9434 = vrot.slane %v8786, 2
  %v9435 = vrot.slane %v8787, 2
  %v9436 = vsel %vm1003, %v9434, %v9435
  %v9437 = vrot.slane %v8788, 2
  %v9438 = vsel %vm1003, %v9435, %v9437
  %v9439 = vrot.slane %v8789, 2
  %v9440 = vrot.slane %v8790, 2
  %v9441 = vsel %vm1003, %v9439, %v9440
  %v9442 = vrot.slane %v8791, 2
  %v9443 = vsel %vm1003, %v9440, %v9442
  %v9444 = vrot.slane %v8792, 2
  %v9445 = vrot.slane %v8793, 2
  %v9446 = vsel %vm1003, %v9444, %v9445
  %v9447 = vrot.slane %v8794, 2
  %v9448 = vsel %vm1003, %v9445, %v9447
  %v9449 = vrot.slane %v8795, 2
  %v9450 = vrot.slane %v8796, 2
  %v9451 = vsel %vm1003, %v9449, %v9450
  %v9452 = vrot.slane %v8797, 2
  %v9453 = vsel %vm1003, %v9450, %v9452
  %v9454 = vrot.slane %v8798, 2
  %v9455 = vrot.slane %v8799, 2
  %v9456 = vsel %vm1003, %v9454, %v9455
  %v9457 = vrot.slane %v8800, 2
  %v9458 = vsel %vm1003, %v9455, %v9457
  %v9459 = vrot.slane %v8801, 2
  %v9460 = vrot.slane %v8802, 2
  %v9461 = vsel %vm1003, %v9459, %v9460
  %v9462 = vrot.slane %v8803, 2
  %v9463 = vsel %vm1003, %v9460, %v9462
  %v9464 = vrot.slane %v8804, 2
  %v9465 = vrot.slane %v8805, 2
  %v9466 = vsel %vm1003, %v9464, %v9465
  %v9467 = vrot.slane %v8806, 2
  %v9468 = vsel %vm1003, %v9465, %v9467
  %v9469 = vrot.slane %v8807, 2
  %v9470 = vrot.slane %v8808, 2
  %v9471 = vsel %vm1003, %v9469, %v9470
  %v9472 = vrot.slane %v8809, 2
  %v9473 = vsel %vm1003, %v9470, %v9472
  %v9474 = vrot.slane %v8810, 2
  %v9475 = vrot.slane %v8811, 2
  %v9476 = vsel %vm1003, %v9474, %v9475
  %v9477 = vrot.slane %v8812, 2
  %v9478 = vsel %vm1003, %v9475, %v9477
  %v9479 = vrot.slane %v8813, 2
  %v9480 = vrot.slane %v8814, 2
  %v9481 = vsel %vm1003, %v9479, %v9480
  %v9482 = vrot.slane %v8815, 2
  %v9483 = vsel %vm1003, %v9480, %v9482
  %v9484 = vrot.slane %v8816, 2
  %v9485 = vrot.slane %v8817, 2
  %v9486 = vsel %vm1003, %v9484, %v9485
  %v9487 = vrot.slane %v8818, 2
  %v9488 = vsel %vm1003, %v9485, %v9487
  %v9489 = vrot.slane %v8819, 2
  %v9490 = vrot.slane %v8820, 2
  %v9491 = vsel %vm1003, %v9489, %v9490
  %v9492 = vrot.slane %v8821, 2
  %v9493 = vsel %vm1003, %v9490, %v9492
  %v9494 = vrot.slane %v8822, 2
  %v9495 = vrot.slane %v8823, 2
  %v9496 = vsel %vm1003, %v9494, %v9495
  %v9497 = vrot.slane %v8824, 2
  %v9498 = vsel %vm1003, %v9495, %v9497
  %v9499 = vrot.slane %v8825, 2
  %v9500 = vrot.slane %v8826, 2
  %v9501 = vsel %vm1003, %v9499, %v9500
  %v9502 = vrot.slane %v8827, 2
  %v9503 = vsel %vm1003, %v9500, %v9502
  %v9504 = vrot.slane %v8828, 2
  %v9505 = vrot.slane %v8829, 2
  %v9506 = vsel %vm1003, %v9504, %v9505
  %v9507 = vrot.slane %v8830, 2
  %v9508 = vsel %vm1003, %v9505, %v9507
  %v9509 = vrot.slane %v8831, 2
  %v9510 = vrot.slane %v8832, 2
  %v9511 = vsel %vm1003, %v9509, %v9510
  %v9512 = vrot.slane %v8833, 2
  %v9513 = vsel %vm1003, %v9510, %v9512
  %v9514 = vrot.slane %v8834, 2
  %v9515 = vrot.slane %v8835, 2
  %v9516 = vsel %vm1003, %v9514, %v9515
  %v9517 = vrot.slane %v8836, 2
  %v9518 = vsel %vm1003, %v9515, %v9517
  %v9519 = vrot.slane %v8837, 2
  %v9520 = vrot.slane %v8838, 2
  %v9521 = vsel %vm1003, %v9519, %v9520
  %v9522 = vrot.slane %v8839, 2
  %v9523 = vsel %vm1003, %v9520, %v9522
  %v9524 = vsel %vm151, %v8732, %v9129
  %v9525 = vsel %vm151, %v8733, %v9131
  %v9526 = vsel %vm151, %v8735, %v9133
  %v9527 = vsel %vm151, %v8736, %v9135
  %v9528 = vsel %vm151, %v8738, %v9137
  %v9529 = vsel %vm151, %v8739, %v9139
  %v9530 = vsel %vm151, %v8741, %v9141
  %v9531 = vsel %vm151, %v8742, %v9143
  %v9532 = vsel %vm151, %v8744, %v9145
  %v9533 = vsel %vm151, %v8745, %v9147
  %v9534 = vsel %vm151, %v8747, %v9149
  %v9535 = vsel %vm151, %v8748, %v9151
  %v9536 = vsel %vm151, %v8750, %v9153
  %v9537 = vsel %vm151, %v8751, %v9155
  %v9538 = vsel %vm151, %v8753, %v9157
  %v9539 = vsel %vm151, %v8754, %v9159
  %v9540 = vsel %vm151, %v8756, %v9161
  %v9541 = vsel %vm151, %v8757, %v9163
  %v9542 = vsel %vm151, %v8759, %v9165
  %v9543 = vsel %vm151, %v8760, %v9167
  %v9544 = vsel %vm151, %v8762, %v9169
  %v9545 = vsel %vm151, %v8763, %v9171
  %v9546 = vsel %vm151, %v8765, %v9173
  %v9547 = vsel %vm151, %v8766, %v9175
  %v9548 = vsel %vm151, %v8768, %v9177
  %v9549 = vsel %vm151, %v8769, %v9179
  %v9550 = vsel %vm151, %v8771, %v9181
  %v9551 = vsel %vm151, %v8772, %v9183
  %v9552 = vsel %vm151, %v8774, %v9185
  %v9553 = vsel %vm151, %v8775, %v9187
  %v9554 = vsel %vm151, %v8777, %v9189
  %v9555 = vsel %vm151, %v8778, %v9191
  %v9556 = vsel %vm151, %v8780, %v9193
  %v9557 = vsel %vm151, %v8781, %v9195
  %v9558 = vsel %vm151, %v8783, %v9197
  %v9559 = vsel %vm151, %v8784, %v9199
  %v9560 = vsel %vm151, %v8786, %v9201
  %v9561 = vsel %vm151, %v8787, %v9203
  %v9562 = vsel %vm151, %v8789, %v9205
  %v9563 = vsel %vm151, %v8790, %v9207
  %v9564 = vsel %vm151, %v8792, %v9209
  %v9565 = vsel %vm151, %v8793, %v9211
  %v9566 = vsel %vm151, %v8795, %v9213
  %v9567 = vsel %vm151, %v8796, %v9215
  %v9568 = vsel %vm151, %v8798, %v9217
  %v9569 = vsel %vm151, %v8799, %v9219
  %v9570 = vsel %vm151, %v8801, %v9221
  %v9571 = vsel %vm151, %v8802, %v9223
  %v9572 = vsel %vm151, %v8804, %v9225
  %v9573 = vsel %vm151, %v8805, %v9227
  %v9574 = vsel %vm151, %v8807, %v9229
  %v9575 = vsel %vm151, %v8808, %v9231
  %v9576 = vsel %vm151, %v8810, %v9233
  %v9577 = vsel %vm151, %v8811, %v9235
  %v9578 = vsel %vm151, %v8813, %v9237
  %v9579 = vsel %vm151, %v8814, %v9239
  %v9580 = vsel %vm151, %v8816, %v9241
  %v9581 = vsel %vm151, %v8817, %v9243
  %v9582 = vsel %vm151, %v8819, %v9245
  %v9583 = vsel %vm151, %v8820, %v9247
  %v9584 = vsel %vm151, %v8822, %v9249
  %v9585 = vsel %vm151, %v8823, %v9251
  %v9586 = vsel %vm151, %v8825, %v9253
  %v9587 = vsel %vm151, %v8826, %v9255
  %v9588 = vsel %vm151, %v8828, %v9257
  %v9589 = vsel %vm151, %v8829, %v9259
  %v9590 = vsel %vm151, %v8831, %v9261
  %v9591 = vsel %vm151, %v8832, %v9263
  %v9592 = vsel %vm151, %v8834, %v9265
  %v9593 = vsel %vm151, %v8835, %v9267
  %v9594 = vsel %vm151, %v8837, %v9269
  %v9595 = vsel %vm151, %v8838, %v9271
  %v9596 = vld [vmem:[%s10] sm:$0xff]
  %v9597 = vld [vmem:[%s10 + $0x8] sm:$0xff]
  %v9598 = vld [vmem:[%s10 + $0x10] sm:$0xff]
  %v9599 = vld [vmem:[%s10 + $0x18] sm:$0xff]
  %v9600 = vld [vmem:[%s10 + $0x20] sm:$0xff]
  %v9601 = vld [vmem:[%s10 + $0x28] sm:$0xff]
  %v9602 = vld [vmem:[%s10 + $0x30] sm:$0xff]
  %v9603 = vld [vmem:[%s10 + $0x38] sm:$0xff]
  %v9604 = vld [vmem:[%s10 + $0x40] sm:$0xff]
  %v9605 = vld [vmem:[%s10 + $0x48] sm:$0xff]
  %v9606 = vld [vmem:[%s10 + $0x50] sm:$0xff]
  %v9607 = vld [vmem:[%s10 + $0x58] sm:$0xff]
  %v9608 = vld [vmem:[%s10 + $0x60] sm:$0xff]
  %v9609 = vld [vmem:[%s10 + $0x68] sm:$0xff]
  %v9610 = vld [vmem:[%s10 + $0x70] sm:$0xff]
  %v9611 = vld [vmem:[%s10 + $0x78] sm:$0xff]
  %v9612 = vld [vmem:[%s10 + $0x80] sm:$0xff]
  %v9613 = vld [vmem:[%s10 + $0x88] sm:$0xff]
  %v9614 = vld [vmem:[%s10 + $0x90] sm:$0xff]
  %v9615 = vld [vmem:[%s10 + $0x98] sm:$0xff]
  %v9616 = vld [vmem:[%s10 + $0xa0] sm:$0xff]
  %v9617 = vld [vmem:[%s10 + $0xa8] sm:$0xff]
  %v9618 = vld [vmem:[%s10 + $0xb0] sm:$0xff]
  %v9619 = vld [vmem:[%s10 + $0xb8] sm:$0xff]
  %v9620 = vld [vmem:[%s11] sm:$0x1]
  %v9622 = vlaneseq
  %v9623 = vshrl.u32 %v9622, 7
  %v9624 = vsub.s32 0, %v9623
  %v9625 = vrot.slane %v9620, %v9624
  %v9627 = vsel %vm151, %v9346, 0
  %v9629 = vsel %vm151, %v9348, 0
  %v9631 = vsel %vm151, %v9351, 0
  %v9633 = vsel %vm151, %v9353, 0
  %v9635 = vsel %vm151, %v9356, 0
  %v9637 = vsel %vm151, %v9358, 0
  %v9639 = vsel %vm151, %v9361, 0
  %v9641 = vsel %vm151, %v9363, 0
  %v9643 = vsel %vm151, %v9366, 0
  %v9645 = vsel %vm151, %v9368, 0
  %v9647 = vsel %vm151, %v9371, 0
  %v9649 = vsel %vm151, %v9373, 0
  %v9651 = vsel %vm151, %v9376, 0
  %v9653 = vsel %vm151, %v9378, 0
  %v9655 = vsel %vm151, %v9381, 0
  %v9657 = vsel %vm151, %v9383, 0
  %v9659 = vsel %vm151, %v9386, 0
  %v9661 = vsel %vm151, %v9388, 0
  %v9663 = vsel %vm151, %v9391, 0
  %v9665 = vsel %vm151, %v9393, 0
  %v9667 = vsel %vm151, %v9396, 0
  %v9669 = vsel %vm151, %v9398, 0
  %v9671 = vsel %vm151, %v9401, 0
  %v9673 = vsel %vm151, %v9403, 0
  %v9675 = vsel %vm151, %v9406, 0
  %v9677 = vsel %vm151, %v9408, 0
  %v9679 = vsel %vm151, %v9411, 0
  %v9681 = vsel %vm151, %v9413, 0
  %v9683 = vsel %vm151, %v9416, 0
  %v9685 = vsel %vm151, %v9418, 0
  %v9687 = vsel %vm151, %v9421, 0
  %v9689 = vsel %vm151, %v9423, 0
  %v9691 = vsel %vm151, %v9436, 0
  %v9693 = vsel %vm151, %v9438, 0
  %v9695 = vsel %vm151, %v9441, 0
  %v9697 = vsel %vm151, %v9443, 0
  %v9699 = vsel %vm151, %v9446, 0
  %v9701 = vsel %vm151, %v9448, 0
  %v9703 = vsel %vm151, %v9451, 0
  %v9705 = vsel %vm151, %v9453, 0
  %v9707 = vsel %vm151, %v9456, 0
  %v9709 = vsel %vm151, %v9458, 0
  %v9711 = vsel %vm151, %v9461, 0
  %v9713 = vsel %vm151, %v9463, 0
  %v9715 = vsel %vm151, %v9466, 0
  %v9717 = vsel %vm151, %v9468, 0
  %v9719 = vsel %vm151, %v9471, 0
  %v9721 = vsel %vm151, %v9473, 0
  %v9723 = vsel %vm151, %v9476, 0
  %v9725 = vsel %vm151, %v9478, 0
  %v9727 = vsel %vm151, %v9481, 0
  %v9729 = vsel %vm151, %v9483, 0
  %v9731 = vsel %vm151, %v9486, 0
  %v9733 = vsel %vm151, %v9488, 0
  %v9735 = vsel %vm151, %v9491, 0
  %v9737 = vsel %vm151, %v9493, 0
  %v9739 = vsel %vm151, %v9496, 0
  %v9741 = vsel %vm151, %v9498, 0
  %v9743 = vsel %vm151, %v9501, 0
  %v9745 = vsel %vm151, %v9503, 0
  %v9747 = vsel %vm151, %v9506, 0
  %v9749 = vsel %vm151, %v9508, 0
  %v9751 = vsel %vm151, %v9511, 0
  %v9753 = vsel %vm151, %v9513, 0
  %9755 = vmatprep.subr.mxu0 0.0
  %9756 = vmatpush1.msra.mxu0 %v9596
  %9757 = vmatprep.subr.mxu0 0.0
  %9758 = vmatpush1.msra.mxu0 %v9597
  %9759 = vmatprep.subr.mxu0 0.0
  %9760 = vmatpush1.msra.mxu0 %v9598
  %9761 = vmatprep.subr.mxu0 0.0
  %9762 = vmatpush1.msra.mxu0 %v9599
  %9763 = vmatprep.subr.mxu0 0.0
  %9764 = vmatpush1.msra.mxu0 %v9600
  %9765 = vmatprep.subr.mxu0 0.0
  %9766 = vmatpush1.msra.mxu0 %v9601
  %9767 = vmatprep.subr.mxu0 0.0
  %9768 = vmatpush1.msra.mxu0 %v9602
  %9769 = vmatprep.subr.mxu0 0.0
  %9770 = vmatpush1.msra.mxu0 %v9603
  %9771 = vmatprep.subr.mxu0 0.0
  %9772 = vmatpush1.msra.mxu0 %v9604
  %9773 = vmatprep.subr.mxu0 0.0
  %9774 = vmatpush1.msra.mxu0 %v9605
  %9775 = vmatprep.subr.mxu0 0.0
  %9776 = vmatpush1.msra.mxu0 %v9606
  %9777 = vmatprep.subr.mxu0 0.0
  %9778 = vmatpush1.msra.mxu0 %v9607
  %9779 = vmatprep.subr.mxu0 0.0
  %9780 = vmatpush1.msra.mxu0 %v9608
  %9781 = vmatprep.subr.mxu0 0.0
  %9782 = vmatpush1.msra.mxu0 %v9609
  %9783 = vmatprep.subr.mxu0 0.0
  %9784 = vmatpush1.msra.mxu0 %v9610
  %9785 = vmatprep.subr.mxu0 0.0
  %9786 = vmatpush1.msra.mxu0 %v9611
  %9787 = vmatprep.subr.mxu0 0.0
  %9788 = vmatpush1.msra.mxu0 %v9612
  %9789 = vmatprep.subr.mxu0 0.0
  %9790 = vmatpush1.msra.mxu0 %v9613
  %9791 = vmatprep.subr.mxu0 0.0
  %9792 = vmatpush1.msra.mxu0 %v9614
  %9793 = vmatprep.subr.mxu0 0.0
  %9794 = vmatpush1.msra.mxu0 %v9615
  %9795 = vmatprep.subr.mxu0 0.0
  %9796 = vmatpush1.msra.mxu0 %v9616
  %9797 = vmatprep.subr.mxu0 0.0
  %9798 = vmatpush1.msra.mxu0 %v9617
  %9799 = vmatprep.subr.mxu0 0.0
  %9800 = vmatpush1.msra.mxu0 %v9618
  %9801 = vmatprep.subr.mxu0 0.0
  %9802 = vmatpush1.msra.mxu0 %v9619
  %9803 = vmatprep.subr.mxu0 0.0
  %9804 = vmatpush1.msra.mxu0 0.0
  %9805 = vmatprep.subr.mxu0 0.0
  %9806 = vmatpush1.msra.mxu0 0.0
  %9807 = vmatprep.subr.mxu0 0.0
  %9808 = vmatpush1.msra.mxu0 0.0
  %9809 = vmatprep.subr.mxu0 0.0
  %9810 = vmatpush1.msra.mxu0 0.0
  %9811 = vmatprep.subr.mxu0 0.0
  %9812 = vmatpush1.msra.mxu0 0.0
  %9813 = vmatprep.subr.mxu0 0.0
  %9814 = vmatpush1.msra.mxu0 0.0
  %9815 = vmatprep.subr.mxu0 0.0
  %9816 = vmatpush1.msra.mxu0 0.0
  %9817 = vmatprep.subr.mxu0 0.0
  %9818 = vmatpush1.msra.mxu0 0.0
  %9819 = vmatprep.mubr.f32.mxu0 %v9627
  %9820 = vmatmul.mubr.f32.gmra.mrb[0].mxu0 %v9524
  %v9821 = vpop.f32.mrb[0].mxu0
  %v9822 = vadd.f32 %v9625, %v9821
  %v9823 = vpop.f32.mrb[0].mxu0
  %9824 = vmatprep.mubr.f32.mxu0 %v9629
  %9825 = vmatmul.mubr.f32.gmra.mrb[0].mxu0 %v9525
  %v9826 = vpop.f32.mrb[0].mxu0
  %v9827 = vadd.f32 %v9625, %v9826
  %v9828 = vpop.f32.mrb[0].mxu0
  %9829 = vmatprep.mubr.f32.mxu0 %v9631
  %9830 = vmatmul.mubr.f32.gmra.mrb[0].mxu0 %v9526
  %v9831 = vpop.f32.mrb[0].mxu0
  %v9832 = vadd.f32 %v9625, %v9831
  %v9833 = vpop.f32.mrb[0].mxu0
  %9834 = vmatprep.mubr.f32.mxu0 %v9633
  %9835 = vmatmul.mubr.f32.gmra.mrb[0].mxu0 %v9527
  %v9836 = vpop.f32.mrb[0].mxu0
  %v9837 = vadd.f32 %v9625, %v9836
  %v9838 = vpop.f32.mrb[0].mxu0
  %9839 = vmatprep.mubr.f32.mxu0 %v9635
  %9840 = vmatmul.mubr.f32.gmra.mrb[0].mxu0 %v9528
  %v9841 = vpop.f32.mrb[0].mxu0
  %v9842 = vadd.f32 %v9625, %v9841
  %v9843 = vpop.f32.mrb[0].mxu0
  %9844 = vmatprep.mubr.f32.mxu0 %v9637
  %9845 = vmatmul.mubr.f32.gmra.mrb[0].mxu0 %v9529
  %v9846 = vpop.f32.mrb[0].mxu0
  %v9847 = vadd.f32 %v9625, %v9846
  %v9848 = vpop.f32.mrb[0].mxu0
  %9849 = vmatprep.mubr.f32.mxu0 %v9639
  %9850 = vmatmul.mubr.f32.gmra.mrb[0].mxu0 %v9530
  %v9851 = vpop.f32.mrb[0].mxu0
  %v9852 = vadd.f32 %v9625, %v9851
  %v9853 = vpop.f32.mrb[0].mxu0
  %9854 = vmatprep.mubr.f32.mxu0 %v9641
  %9855 = vmatmul.mubr.f32.gmra.mrb[0].mxu0 %v9531
  %v9856 = vpop.f32.mrb[0].mxu0
  %v9857 = vadd.f32 %v9625, %v9856
  %v9858 = vpop.f32.mrb[0].mxu0
  %9859 = vmatprep.mubr.f32.mxu0 %v9643
  %9860 = vmatmul.mubr.f32.gmra.mrb[0].mxu0 %v9532
  %v9861 = vpop.f32.mrb[0].mxu0
  %v9862 = vadd.f32 %v9625, %v9861
  %v9863 = vpop.f32.mrb[0].mxu0
  %9864 = vmatprep.mubr.f32.mxu0 %v9645
  %9865 = vmatmul.mubr.f32.gmra.mrb[0].mxu0 %v9533
  %v9866 = vpop.f32.mrb[0].mxu0
  %v9867 = vadd.f32 %v9625, %v9866
  %v9868 = vpop.f32.mrb[0].mxu0
  %9869 = vmatprep.mubr.f32.mxu0 %v9647
  %9870 = vmatmul.mubr.f32.gmra.mrb[0].mxu0 %v9534
  %v9871 = vpop.f32.mrb[0].mxu0
  %v9872 = vadd.f32 %v9625, %v9871
  %v9873 = vpop.f32.mrb[0].mxu0
  %9874 = vmatprep.mubr.f32.mxu0 %v9649
  %9875 = vmatmul.mubr.f32.gmra.mrb[0].mxu0 %v9535
  %v9876 = vpop.f32.mrb[0].mxu0
  %v9877 = vadd.f32 %v9625, %v9876
  %v9878 = vpop.f32.mrb[0].mxu0
  %9879 = vmatprep.mubr.f32.mxu0 %v9651
  %9880 = vmatmul.mubr.f32.gmra.mrb[0].mxu0 %v9536
  %v9881 = vpop.f32.mrb[0].mxu0
  %v9882 = vadd.f32 %v9625, %v9881
  %v9883 = vpop.f32.mrb[0].mxu0
  %9884 = vmatprep.mubr.f32.mxu0 %v9653
  %9885 = vmatmul.mubr.f32.gmra.mrb[0].mxu0 %v9537
  %v9886 = vpop.f32.mrb[0].mxu0
  %v9887 = vadd.f32 %v9625, %v9886
  %v9888 = vpop.f32.mrb[0].mxu0
  %9889 = vmatprep.mubr.f32.mxu0 %v9655
  %9890 = vmatmul.mubr.f32.gmra.mrb[0].mxu0 %v9538
  %v9891 = vpop.f32.mrb[0].mxu0
  %v9892 = vadd.f32 %v9625, %v9891
  %v9893 = vpop.f32.mrb[0].mxu0
  %9894 = vmatprep.mubr.f32.mxu0 %v9657
  %9895 = vmatmul.mubr.f32.gmra.mrb[0].mxu0 %v9539
  %v9896 = vpop.f32.mrb[0].mxu0
  %v9897 = vadd.f32 %v9625, %v9896
  %v9898 = vpop.f32.mrb[0].mxu0
  %9899 = vmatprep.mubr.f32.mxu0 %v9659
  %9900 = vmatmul.mubr.f32.gmra.mrb[0].mxu0 %v9540
  %v9901 = vpop.f32.mrb[0].mxu0
  %v9902 = vadd.f32 %v9625, %v9901
  %v9903 = vpop.f32.mrb[0].mxu0
  %9904 = vmatprep.mubr.f32.mxu0 %v9661
  %9905 = vmatmul.mubr.f32.gmra.mrb[0].mxu0 %v9541
  %v9906 = vpop.f32.mrb[0].mxu0
  %v9907 = vadd.f32 %v9625, %v9906
  %v9908 = vpop.f32.mrb[0].mxu0
  %9909 = vmatprep.mubr.f32.mxu0 %v9663
  %9910 = vmatmul.mubr.f32.gmra.mrb[0].mxu0 %v9542
  %v9911 = vpop.f32.mrb[0].mxu0
  %v9912 = vadd.f32 %v9625, %v9911
  %v9913 = vpop.f32.mrb[0].mxu0
  %9914 = vmatprep.mubr.f32.mxu0 %v9665
  %9915 = vmatmul.mubr.f32.gmra.mrb[0].mxu0 %v9543
  %v9916 = vpop.f32.mrb[0].mxu0
  %v9917 = vadd.f32 %v9625, %v9916
  %v9918 = vpop.f32.mrb[0].mxu0
  %9919 = vmatprep.mubr.f32.mxu0 %v9667
  %9920 = vmatmul.mubr.f32.gmra.mrb[0].mxu0 %v9544
  %v9921 = vpop.f32.mrb[0].mxu0
  %v9922 = vadd.f32 %v9625, %v9921
  %v9923 = vpop.f32.mrb[0].mxu0
  %9924 = vmatprep.mubr.f32.mxu0 %v9669
  %9925 = vmatmul.mubr.f32.gmra.mrb[0].mxu0 %v9545
  %v9926 = vpop.f32.mrb[0].mxu0
  %v9927 = vadd.f32 %v9625, %v9926
  %v9928 = vpop.f32.mrb[0].mxu0
  %9929 = vmatprep.mubr.f32.mxu0 %v9671
  %9930 = vmatmul.mubr.f32.gmra.mrb[0].mxu0 %v9546
  %v9931 = vpop.f32.mrb[0].mxu0
  %v9932 = vadd.f32 %v9625, %v9931
  %v9933 = vpop.f32.mrb[0].mxu0
  %9934 = vmatprep.mubr.f32.mxu0 %v9673
  %9935 = vmatmul.mubr.f32.gmra.mrb[0].mxu0 %v9547
  %v9936 = vpop.f32.mrb[0].mxu0
  %v9937 = vadd.f32 %v9625, %v9936
  %v9938 = vpop.f32.mrb[0].mxu0
  %9939 = vmatprep.mubr.f32.mxu0 %v9675
  %9940 = vmatmul.mubr.f32.gmra.mrb[0].mxu0 %v9548
  %v9941 = vpop.f32.mrb[0].mxu0
  %v9942 = vadd.f32 %v9625, %v9941
  %v9943 = vpop.f32.mrb[0].mxu0
  %9944 = vmatprep.mubr.f32.mxu0 %v9677
  %9945 = vmatmul.mubr.f32.gmra.mrb[0].mxu0 %v9549
  %v9946 = vpop.f32.mrb[0].mxu0
  %v9947 = vadd.f32 %v9625, %v9946
  %v9948 = vpop.f32.mrb[0].mxu0
  %9949 = vmatprep.mubr.f32.mxu0 %v9679
  %9950 = vmatmul.mubr.f32.gmra.mrb[0].mxu0 %v9550
  %v9951 = vpop.f32.mrb[0].mxu0
  %v9952 = vadd.f32 %v9625, %v9951
  %v9953 = vpop.f32.mrb[0].mxu0
  %9954 = vmatprep.mubr.f32.mxu0 %v9681
  %9955 = vmatmul.mubr.f32.gmra.mrb[0].mxu0 %v9551
  %v9956 = vpop.f32.mrb[0].mxu0
  %v9957 = vadd.f32 %v9625, %v9956
  %v9958 = vpop.f32.mrb[0].mxu0
  %9959 = vmatprep.mubr.f32.mxu0 %v9683
  %9960 = vmatmul.mubr.f32.gmra.mrb[0].mxu0 %v9552
  %v9961 = vpop.f32.mrb[0].mxu0
  %v9962 = vadd.f32 %v9625, %v9961
  %v9963 = vpop.f32.mrb[0].mxu0
  %9964 = vmatprep.mubr.f32.mxu0 %v9685
  %9965 = vmatmul.mubr.f32.gmra.mrb[0].mxu0 %v9553
  %v9966 = vpop.f32.mrb[0].mxu0
  %v9967 = vadd.f32 %v9625, %v9966
  %v9968 = vpop.f32.mrb[0].mxu0
  %9969 = vmatprep.mubr.f32.mxu0 %v9687
  %9970 = vmatmul.mubr.f32.gmra.mrb[0].mxu0 %v9554
  %v9971 = vpop.f32.mrb[0].mxu0
  %v9972 = vadd.f32 %v9625, %v9971
  %v9973 = vpop.f32.mrb[0].mxu0
  %9974 = vmatprep.mubr.f32.mxu0 %v9689
  %9975 = vmatmul.mubr.f32.gmra.mrb[0].mxu0 %v9555
  %v9976 = vpop.f32.mrb[0].mxu0
  %v9977 = vadd.f32 %v9625, %v9976
  %v9978 = vpop.f32.mrb[0].mxu0
  %9979 = vmatprep.mubr.f32.mxu0 %v9691
  %9980 = vmatmul.mubr.f32.gmra.mrb[0].mxu0 %v9560
  %v9981 = vpop.f32.mrb[0].mxu0
  %v9982 = vadd.f32 %v9625, %v9981
  %v9983 = vpop.f32.mrb[0].mxu0
  %9984 = vmatprep.mubr.f32.mxu0 %v9693
  %9985 = vmatmul.mubr.f32.gmra.mrb[0].mxu0 %v9561
  %v9986 = vpop.f32.mrb[0].mxu0
  %v9987 = vadd.f32 %v9625, %v9986
  %v9988 = vpop.f32.mrb[0].mxu0
  %9989 = vmatprep.mubr.f32.mxu0 %v9695
  %9990 = vmatmul.mubr.f32.gmra.mrb[0].mxu0 %v9562
  %v9991 = vpop.f32.mrb[0].mxu0
  %v9992 = vadd.f32 %v9625, %v9991
  %v9993 = vpop.f32.mrb[0].mxu0
  %9994 = vmatprep.mubr.f32.mxu0 %v9697
  %9995 = vmatmul.mubr.f32.gmra.mrb[0].mxu0 %v9563
  %v9996 = vpop.f32.mrb[0].mxu0
  %v9997 = vadd.f32 %v9625, %v9996
  %v9998 = vpop.f32.mrb[0].mxu0
  %9999 = vmatprep.mubr.f32.mxu0 %v9699
  %10000 = vmatmul.mubr.f32.gmra.mrb[0].mxu0 %v9564
  %v10001 = vpop.f32.mrb[0].mxu0
  %v10002 = vadd.f32 %v9625, %v10001
  %v10003 = vpop.f32.mrb[0].mxu0
  %10004 = vmatprep.mubr.f32.mxu0 %v9701
  %10005 = vmatmul.mubr.f32.gmra.mrb[0].mxu0 %v9565
  %v10006 = vpop.f32.mrb[0].mxu0
  %v10007 = vadd.f32 %v9625, %v10006
  %v10008 = vpop.f32.mrb[0].mxu0
  %10009 = vmatprep.mubr.f32.mxu0 %v9703
  %10010 = vmatmul.mubr.f32.gmra.mrb[0].mxu0 %v9566
  %v10011 = vpop.f32.mrb[0].mxu0
  %v10012 = vadd.f32 %v9625, %v10011
  %v10013 = vpop.f32.mrb[0].mxu0
  %10014 = vmatprep.mubr.f32.mxu0 %v9705
  %10015 = vmatmul.mubr.f32.gmra.mrb[0].mxu0 %v9567
  %v10016 = vpop.f32.mrb[0].mxu0
  %v10017 = vadd.f32 %v9625, %v10016
  %v10018 = vpop.f32.mrb[0].mxu0
  %10019 = vmatprep.mubr.f32.mxu0 %v9707
  %10020 = vmatmul.mubr.f32.gmra.mrb[0].mxu0 %v9568
  %v10021 = vpop.f32.mrb[0].mxu0
  %v10022 = vadd.f32 %v9625, %v10021
  %v10023 = vpop.f32.mrb[0].mxu0
  %10024 = vmatprep.mubr.f32.mxu0 %v9709
  %10025 = vmatmul.mubr.f32.gmra.mrb[0].mxu0 %v9569
  %v10026 = vpop.f32.mrb[0].mxu0
  %v10027 = vadd.f32 %v9625, %v10026
  %v10028 = vpop.f32.mrb[0].mxu0
  %10029 = vmatprep.mubr.f32.mxu0 %v9711
  %10030 = vmatmul.mubr.f32.gmra.mrb[0].mxu0 %v9570
  %v10031 = vpop.f32.mrb[0].mxu0
  %v10032 = vadd.f32 %v9625, %v10031
  %v10033 = vpop.f32.mrb[0].mxu0
  %10034 = vmatprep.mubr.f32.mxu0 %v9713
  %10035 = vmatmul.mubr.f32.gmra.mrb[0].mxu0 %v9571
  %v10036 = vpop.f32.mrb[0].mxu0
  %v10037 = vadd.f32 %v9625, %v10036
  %v10038 = vpop.f32.mrb[0].mxu0
  %10039 = vmatprep.mubr.f32.mxu0 %v9715
  %10040 = vmatmul.mubr.f32.gmra.mrb[0].mxu0 %v9572
  %v10041 = vpop.f32.mrb[0].mxu0
  %v10042 = vadd.f32 %v9625, %v10041
  %v10043 = vpop.f32.mrb[0].mxu0
  %10044 = vmatprep.mubr.f32.mxu0 %v9717
  %10045 = vmatmul.mubr.f32.gmra.mrb[0].mxu0 %v9573
  %v10046 = vpop.f32.mrb[0].mxu0
  %v10047 = vadd.f32 %v9625, %v10046
  %v10048 = vpop.f32.mrb[0].mxu0
  %10049 = vmatprep.mubr.f32.mxu0 %v9719
  %10050 = vmatmul.mubr.f32.gmra.mrb[0].mxu0 %v9574
  %v10051 = vpop.f32.mrb[0].mxu0
  %v10052 = vadd.f32 %v9625, %v10051
  %v10053 = vpop.f32.mrb[0].mxu0
  %10054 = vmatprep.mubr.f32.mxu0 %v9721
  %10055 = vmatmul.mubr.f32.gmra.mrb[0].mxu0 %v9575
  %v10056 = vpop.f32.mrb[0].mxu0
  %v10057 = vadd.f32 %v9625, %v10056
  %v10058 = vpop.f32.mrb[0].mxu0
  %10059 = vmatprep.mubr.f32.mxu0 %v9723
  %10060 = vmatmul.mubr.f32.gmra.mrb[0].mxu0 %v9576
  %v10061 = vpop.f32.mrb[0].mxu0
  %v10062 = vadd.f32 %v9625, %v10061
  %v10063 = vpop.f32.mrb[0].mxu0
  %10064 = vmatprep.mubr.f32.mxu0 %v9725
  %10065 = vmatmul.mubr.f32.gmra.mrb[0].mxu0 %v9577
  %v10066 = vpop.f32.mrb[0].mxu0
  %v10067 = vadd.f32 %v9625, %v10066
  %v10068 = vpop.f32.mrb[0].mxu0
  %10069 = vmatprep.mubr.f32.mxu0 %v9727
  %10070 = vmatmul.mubr.f32.gmra.mrb[0].mxu0 %v9578
  %v10071 = vpop.f32.mrb[0].mxu0
  %v10072 = vadd.f32 %v9625, %v10071
  %v10073 = vpop.f32.mrb[0].mxu0
  %10074 = vmatprep.mubr.f32.mxu0 %v9729
  %10075 = vmatmul.mubr.f32.gmra.mrb[0].mxu0 %v9579
  %v10076 = vpop.f32.mrb[0].mxu0
  %v10077 = vadd.f32 %v9625, %v10076
  %v10078 = vpop.f32.mrb[0].mxu0
  %10079 = vmatprep.mubr.f32.mxu0 %v9731
  %10080 = vmatmul.mubr.f32.gmra.mrb[0].mxu0 %v9580
  %v10081 = vpop.f32.mrb[0].mxu0
  %v10082 = vadd.f32 %v9625, %v10081
  %v10083 = vpop.f32.mrb[0].mxu0
  %10084 = vmatprep.mubr.f32.mxu0 %v9733
  %10085 = vmatmul.mubr.f32.gmra.mrb[0].mxu0 %v9581
  %v10086 = vpop.f32.mrb[0].mxu0
  %v10087 = vadd.f32 %v9625, %v10086
  %v10088 = vpop.f32.mrb[0].mxu0
  %10089 = vmatprep.mubr.f32.mxu0 %v9735
  %10090 = vmatmul.mubr.f32.gmra.mrb[0].mxu0 %v9582
  %v10091 = vpop.f32.mrb[0].mxu0
  %v10092 = vadd.f32 %v9625, %v10091
  %v10093 = vpop.f32.mrb[0].mxu0
  %10094 = vmatprep.mubr.f32.mxu0 %v9737
  %10095 = vmatmul.mubr.f32.gmra.mrb[0].mxu0 %v9583
  %v10096 = vpop.f32.mrb[0].mxu0
  %v10097 = vadd.f32 %v9625, %v10096
  %v10098 = vpop.f32.mrb[0].mxu0
  %10099 = vmatprep.mubr.f32.mxu0 %v9739
  %10100 = vmatmul.mubr.f32.gmra.mrb[0].mxu0 %v9584
  %v10101 = vpop.f32.mrb[0].mxu0
  %v10102 = vadd.f32 %v9625, %v10101
  %v10103 = vpop.f32.mrb[0].mxu0
  %10104 = vmatprep.mubr.f32.mxu0 %v9741
  %10105 = vmatmul.mubr.f32.gmra.mrb[0].mxu0 %v9585
  %v10106 = vpop.f32.mrb[0].mxu0
  %v10107 = vadd.f32 %v9625, %v10106
  %v10108 = vpop.f32.mrb[0].mxu0
  %10109 = vmatprep.mubr.f32.mxu0 %v9743
  %10110 = vmatmul.mubr.f32.gmra.mrb[0].mxu0 %v9586
  %v10111 = vpop.f32.mrb[0].mxu0
  %v10112 = vadd.f32 %v9625, %v10111
  %v10113 = vpop.f32.mrb[0].mxu0
  %10114 = vmatprep.mubr.f32.mxu0 %v9745
  %10115 = vmatmul.mubr.f32.gmra.mrb[0].mxu0 %v9587
  %v10116 = vpop.f32.mrb[0].mxu0
  %v10117 = vadd.f32 %v9625, %v10116
  %v10118 = vpop.f32.mrb[0].mxu0
  %10119 = vmatprep.mubr.f32.mxu0 %v9747
  %10120 = vmatmul.mubr.f32.gmra.mrb[0].mxu0 %v9588
  %v10121 = vpop.f32.mrb[0].mxu0
  %v10122 = vadd.f32 %v9625, %v10121
  %v10123 = vpop.f32.mrb[0].mxu0
  %10124 = vmatprep.mubr.f32.mxu0 %v9749
  %10125 = vmatmul.mubr.f32.gmra.mrb[0].mxu0 %v9589
  %v10126 = vpop.f32.mrb[0].mxu0
  %v10127 = vadd.f32 %v9625, %v10126
  %v10128 = vpop.f32.mrb[0].mxu0
  %10129 = vmatprep.mubr.f32.mxu0 %v9751
  %10130 = vmatmul.mubr.f32.gmra.mrb[0].mxu0 %v9590
  %v10131 = vpop.f32.mrb[0].mxu0
  %v10132 = vadd.f32 %v9625, %v10131
  %v10133 = vpop.f32.mrb[0].mxu0
  %10134 = vmatprep.mubr.f32.mxu0 %v9753
  %10135 = vmatmul.mubr.f32.gmra.mrb[0].mxu0 %v9591
  %v10136 = vpop.f32.mrb[0].mxu0
  %v10137 = vadd.f32 %v9625, %v10136
  %v10138 = vpop.f32.mrb[0].mxu0
  %10139 = vdwg.mxu0
  %10140 = vst [vmem:[%s12] sm:$0xff] %v9822
  %10141 = vst [vmem:[%s12 + $0x8] sm:$0xff] %v9827
  %10142 = vst [vmem:[%s12 + $0x10] sm:$0xff] %v9832
  %10143 = vst [vmem:[%s12 + $0x18] sm:$0xff] %v9837
  %10144 = vst [vmem:[%s12 + $0x20] sm:$0xff] %v9842
  %10145 = vst [vmem:[%s12 + $0x28] sm:$0xff] %v9847
  %10146 = vst [vmem:[%s12 + $0x30] sm:$0xff] %v9852
  %10147 = vst [vmem:[%s12 + $0x38] sm:$0xff] %v9857
  %10148 = vst [vmem:[%s12 + $0x40] sm:$0xff] %v9862
  %10149 = vst [vmem:[%s12 + $0x48] sm:$0xff] %v9867
  %10150 = vst [vmem:[%s12 + $0x50] sm:$0xff] %v9872
  %10151 = vst [vmem:[%s12 + $0x58] sm:$0xff] %v9877
  %10152 = vst [vmem:[%s12 + $0x60] sm:$0xff] %v9882
  %10153 = vst [vmem:[%s12 + $0x68] sm:$0xff] %v9887
  %10154 = vst [vmem:[%s12 + $0x70] sm:$0xff] %v9892
  %10155 = vst [vmem:[%s12 + $0x78] sm:$0xff] %v9897
  %10156 = vst [vmem:[%s12 + $0x80] sm:$0xff] %v9902
  %10157 = vst [vmem:[%s12 + $0x88] sm:$0xff] %v9907
  %10158 = vst [vmem:[%s12 + $0x90] sm:$0xff] %v9912
  %10159 = vst [vmem:[%s12 + $0x98] sm:$0xff] %v9917
  %10160 = vst [vmem:[%s12 + $0xa0] sm:$0xff] %v9922
  %10161 = vst [vmem:[%s12 + $0xa8] sm:$0xff] %v9927
  %10162 = vst [vmem:[%s12 + $0xb0] sm:$0xff] %v9932
  %10163 = vst [vmem:[%s12 + $0xb8] sm:$0xff] %v9937
  %10164 = vst [vmem:[%s12 + $0xc0] sm:$0xff] %v9942
  %10165 = vst [vmem:[%s12 + $0xc8] sm:$0xff] %v9947
  %10166 = vst [vmem:[%s12 + $0xd0] sm:$0xff] %v9952
  %10167 = vst [vmem:[%s12 + $0xd8] sm:$0xff] %v9957
  %10168 = vst [vmem:[%s12 + $0xe0] sm:$0xff] %v9962
  %10169 = vst [vmem:[%s12 + $0xe8] sm:$0xff] %v9967
  %10170 = vst [vmem:[%s12 + $0xf0] sm:$0xff] %v9972
  %10171 = vst [vmem:[%s12 + $0xf8] sm:$0xff] %v9977
  %10172 = vst [vmem:[%s12 + $0x100] sm:$0xff] %v9982
  %10173 = vst [vmem:[%s12 + $0x108] sm:$0xff] %v9987
  %10174 = vst [vmem:[%s12 + $0x110] sm:$0xff] %v9992
  %10175 = vst [vmem:[%s12 + $0x118] sm:$0xff] %v9997
  %10176 = vst [vmem:[%s12 + $0x120] sm:$0xff] %v10002
  %10177 = vst [vmem:[%s12 + $0x128] sm:$0xff] %v10007
  %10178 = vst [vmem:[%s12 + $0x130] sm:$0xff] %v10012
  %10179 = vst [vmem:[%s12 + $0x138] sm:$0xff] %v10017
  %10180 = vst [vmem:[%s12 + $0x140] sm:$0xff] %v10022
  %10181 = vst [vmem:[%s12 + $0x148] sm:$0xff] %v10027
  %10182 = vst [vmem:[%s12 + $0x150] sm:$0xff] %v10032
  %10183 = vst [vmem:[%s12 + $0x158] sm:$0xff] %v10037
  %10184 = vst [vmem:[%s12 + $0x160] sm:$0xff] %v10042
  %10185 = vst [vmem:[%s12 + $0x168] sm:$0xff] %v10047
  %10186 = vst [vmem:[%s12 + $0x170] sm:$0xff] %v10052
  %10187 = vst [vmem:[%s12 + $0x178] sm:$0xff] %v10057
  %10188 = vst [vmem:[%s12 + $0x180] sm:$0xff] %v10062
  %10189 = vst [vmem:[%s12 + $0x188] sm:$0xff] %v10067
  %10190 = vst [vmem:[%s12 + $0x190] sm:$0xff] %v10072
  %10191 = vst [vmem:[%s12 + $0x198] sm:$0xff] %v10077
  %10192 = vst [vmem:[%s12 + $0x1a0] sm:$0xff] %v10082
  %10193 = vst [vmem:[%s12 + $0x1a8] sm:$0xff] %v10087
  %10194 = vst [vmem:[%s12 + $0x1b0] sm:$0xff] %v10092
  %10195 = vst [vmem:[%s12 + $0x1b8] sm:$0xff] %v10097
  %10196 = vst [vmem:[%s12 + $0x1c0] sm:$0xff] %v10102
  %10197 = vst [vmem:[%s12 + $0x1c8] sm:$0xff] %v10107
  %10198 = vst [vmem:[%s12 + $0x1d0] sm:$0xff] %v10112
  %10199 = vst [vmem:[%s12 + $0x1d8] sm:$0xff] %v10117
  %10200 = vst [vmem:[%s12 + $0x1e0] sm:$0xff] %v10122
  %10201 = vst [vmem:[%s12 + $0x1e8] sm:$0xff] %v10127
  %10202 = vst [vmem:[%s12 + $0x1f0] sm:$0xff] %v10132
  %10203 = vst [vmem:[%s12 + $0x1f8] sm:$0xff] %v10137
  %v10204 = vld [vmem:[%s12] sm:$0xff]
  %v10205 = vld [vmem:[%s12 + $0x8] sm:$0xff]
  %v10206 = vld [vmem:[%s12 + $0x10] sm:$0xff]
  %v10207 = vld [vmem:[%s12 + $0x18] sm:$0xff]
  %v10208 = vld [vmem:[%s12 + $0x20] sm:$0xff]
  %v10209 = vld [vmem:[%s12 + $0x28] sm:$0xff]
  %v10210 = vld [vmem:[%s12 + $0x30] sm:$0xff]
  %v10211 = vld [vmem:[%s12 + $0x38] sm:$0xff]
  %v10212 = vld [vmem:[%s12 + $0x40] sm:$0xff]
  %v10213 = vld [vmem:[%s12 + $0x48] sm:$0xff]
  %v10214 = vld [vmem:[%s12 + $0x50] sm:$0xff]
  %v10215 = vld [vmem:[%s12 + $0x58] sm:$0xff]
  %v10216 = vld [vmem:[%s12 + $0x60] sm:$0xff]
  %v10217 = vld [vmem:[%s12 + $0x68] sm:$0xff]
  %v10218 = vld [vmem:[%s12 + $0x70] sm:$0xff]
  %v10219 = vld [vmem:[%s12 + $0x78] sm:$0xff]
  %v10220 = vld [vmem:[%s12 + $0x80] sm:$0xff]
  %v10221 = vld [vmem:[%s12 + $0x88] sm:$0xff]
  %v10222 = vld [vmem:[%s12 + $0x90] sm:$0xff]
  %v10223 = vld [vmem:[%s12 + $0x98] sm:$0xff]
  %v10224 = vld [vmem:[%s12 + $0xa0] sm:$0xff]
  %v10225 = vld [vmem:[%s12 + $0xa8] sm:$0xff]
  %v10226 = vld [vmem:[%s12 + $0xb0] sm:$0xff]
  %v10227 = vld [vmem:[%s12 + $0xb8] sm:$0xff]
  %v10228 = vld [vmem:[%s12 + $0xc0] sm:$0xff]
  %v10229 = vld [vmem:[%s12 + $0xc8] sm:$0xff]
  %v10230 = vld [vmem:[%s12 + $0xd0] sm:$0xff]
  %v10231 = vld [vmem:[%s12 + $0xd8] sm:$0xff]
  %v10232 = vld [vmem:[%s12 + $0xe0] sm:$0xff]
  %v10233 = vld [vmem:[%s12 + $0xe8] sm:$0xff]
  %v10234 = vld [vmem:[%s12 + $0xf0] sm:$0xff]
  %v10235 = vld [vmem:[%s12 + $0xf8] sm:$0xff]
  %v10236 = vld [vmem:[%s12 + $0x100] sm:$0xff]
  %v10237 = vld [vmem:[%s12 + $0x108] sm:$0xff]
  %v10238 = vld [vmem:[%s12 + $0x110] sm:$0xff]
  %v10239 = vld [vmem:[%s12 + $0x118] sm:$0xff]
  %v10240 = vld [vmem:[%s12 + $0x120] sm:$0xff]
  %v10241 = vld [vmem:[%s12 + $0x128] sm:$0xff]
  %v10242 = vld [vmem:[%s12 + $0x130] sm:$0xff]
  %v10243 = vld [vmem:[%s12 + $0x138] sm:$0xff]
  %v10244 = vld [vmem:[%s12 + $0x140] sm:$0xff]
  %v10245 = vld [vmem:[%s12 + $0x148] sm:$0xff]
  %v10246 = vld [vmem:[%s12 + $0x150] sm:$0xff]
  %v10247 = vld [vmem:[%s12 + $0x158] sm:$0xff]
  %v10248 = vld [vmem:[%s12 + $0x160] sm:$0xff]
  %v10249 = vld [vmem:[%s12 + $0x168] sm:$0xff]
  %v10250 = vld [vmem:[%s12 + $0x170] sm:$0xff]
  %v10251 = vld [vmem:[%s12 + $0x178] sm:$0xff]
  %v10252 = vld [vmem:[%s12 + $0x180] sm:$0xff]
  %v10253 = vld [vmem:[%s12 + $0x188] sm:$0xff]
  %v10254 = vld [vmem:[%s12 + $0x190] sm:$0xff]
  %v10255 = vld [vmem:[%s12 + $0x198] sm:$0xff]
  %v10256 = vld [vmem:[%s12 + $0x1a0] sm:$0xff]
  %v10257 = vld [vmem:[%s12 + $0x1a8] sm:$0xff]
  %v10258 = vld [vmem:[%s12 + $0x1b0] sm:$0xff]
  %v10259 = vld [vmem:[%s12 + $0x1b8] sm:$0xff]
  %v10260 = vld [vmem:[%s12 + $0x1c0] sm:$0xff]
  %v10261 = vld [vmem:[%s12 + $0x1c8] sm:$0xff]
  %v10262 = vld [vmem:[%s12 + $0x1d0] sm:$0xff]
  %v10263 = vld [vmem:[%s12 + $0x1d8] sm:$0xff]
  %v10264 = vld [vmem:[%s12 + $0x1e0] sm:$0xff]
  %v10265 = vld [vmem:[%s12 + $0x1e8] sm:$0xff]
  %v10266 = vld [vmem:[%s12 + $0x1f0] sm:$0xff]
  %v10267 = vld [vmem:[%s12 + $0x1f8] sm:$0xff]
  %s10268 = scalar_lea.vmem %s10, 192
  %v10269 = vld [vmem:[%s10268] sm:$0xff]
  %v10270 = vld [vmem:[%s10268 + $0x8] sm:$0xff]
  %v10271 = vld [vmem:[%s10268 + $0x10] sm:$0xff]
  %v10272 = vld [vmem:[%s10268 + $0x18] sm:$0xff]
  %v10273 = vld [vmem:[%s10268 + $0x20] sm:$0xff]
  %v10274 = vld [vmem:[%s10268 + $0x28] sm:$0xff]
  %v10275 = vld [vmem:[%s10268 + $0x30] sm:$0xff]
  %v10276 = vld [vmem:[%s10268 + $0x38] sm:$0xff]
  %v10277 = vld [vmem:[%s10268 + $0x40] sm:$0xff]
  %v10278 = vld [vmem:[%s10268 + $0x48] sm:$0xff]
  %v10279 = vld [vmem:[%s10268 + $0x50] sm:$0xff]
  %v10280 = vld [vmem:[%s10268 + $0x58] sm:$0xff]
  %v10281 = vld [vmem:[%s10268 + $0x60] sm:$0xff]
  %v10282 = vld [vmem:[%s10268 + $0x68] sm:$0xff]
  %v10283 = vld [vmem:[%s10268 + $0x70] sm:$0xff]
  %v10284 = vld [vmem:[%s10268 + $0x78] sm:$0xff]
  %v10285 = vld [vmem:[%s10268 + $0x80] sm:$0xff]
  %v10286 = vld [vmem:[%s10268 + $0x88] sm:$0xff]
  %v10287 = vld [vmem:[%s10268 + $0x90] sm:$0xff]
  %v10288 = vld [vmem:[%s10268 + $0x98] sm:$0xff]
  %v10289 = vld [vmem:[%s10268 + $0xa0] sm:$0xff]
  %v10290 = vld [vmem:[%s10268 + $0xa8] sm:$0xff]
  %v10291 = vld [vmem:[%s10268 + $0xb0] sm:$0xff]
  %v10292 = vld [vmem:[%s10268 + $0xb8] sm:$0xff]
  %v10293 = vsel %vm151, %v9426, 0
  %v10295 = vsel %vm151, %v9428, 0
  %v10297 = vsel %vm151, %v9516, 0
  %v10299 = vsel %vm151, %v9518, 0
  %10301 = vmatprep.subr.mxu0 0.0
  %10302 = vmatpush1.msra.mxu0 %v10269
  %10303 = vmatprep.subr.mxu0 0.0
  %10304 = vmatpush1.msra.mxu0 %v10270
  %10305 = vmatprep.subr.mxu0 0.0
  %10306 = vmatpush1.msra.mxu0 %v10271
  %10307 = vmatprep.subr.mxu0 0.0
  %10308 = vmatpush1.msra.mxu0 %v10272
  %10309 = vmatprep.subr.mxu0 0.0
  %10310 = vmatpush1.msra.mxu0 %v10273
  %10311 = vmatprep.subr.mxu0 0.0
  %10312 = vmatpush1.msra.mxu0 %v10274
  %10313 = vmatprep.subr.mxu0 0.0
  %10314 = vmatpush1.msra.mxu0 %v10275
  %10315 = vmatprep.subr.mxu0 0.0
  %10316 = vmatpush1.msra.mxu0 %v10276
  %10317 = vmatprep.subr.mxu0 0.0
  %10318 = vmatpush1.msra.mxu0 %v10277
  %10319 = vmatprep.subr.mxu0 0.0
  %10320 = vmatpush1.msra.mxu0 %v10278
  %10321 = vmatprep.subr.mxu0 0.0
  %10322 = vmatpush1.msra.mxu0 %v10279
  %10323 = vmatprep.subr.mxu0 0.0
  %10324 = vmatpush1.msra.mxu0 %v10280
  %10325 = vmatprep.subr.mxu0 0.0
  %10326 = vmatpush1.msra.mxu0 %v10281
  %10327 = vmatprep.subr.mxu0 0.0
  %10328 = vmatpush1.msra.mxu0 %v10282
  %10329 = vmatprep.subr.mxu0 0.0
  %10330 = vmatpush1.msra.mxu0 %v10283
  %10331 = vmatprep.subr.mxu0 0.0
  %10332 = vmatpush1.msra.mxu0 %v10284
  %10333 = vmatprep.subr.mxu0 0.0
  %10334 = vmatpush1.msra.mxu0 %v10285
  %10335 = vmatprep.subr.mxu0 0.0
  %10336 = vmatpush1.msra.mxu0 %v10286
  %10337 = vmatprep.subr.mxu0 0.0
  %10338 = vmatpush1.msra.mxu0 %v10287
  %10339 = vmatprep.subr.mxu0 0.0
  %10340 = vmatpush1.msra.mxu0 %v10288
  %10341 = vmatprep.subr.mxu0 0.0
  %10342 = vmatpush1.msra.mxu0 %v10289
  %10343 = vmatprep.subr.mxu0 0.0
  %10344 = vmatpush1.msra.mxu0 %v10290
  %10345 = vmatprep.subr.mxu0 0.0
  %10346 = vmatpush1.msra.mxu0 %v10291
  %10347 = vmatprep.subr.mxu0 0.0
  %10348 = vmatpush1.msra.mxu0 %v10292
  %10349 = vmatprep.subr.mxu0 0.0
  %10350 = vmatpush1.msra.mxu0 0.0
  %10351 = vmatprep.subr.mxu0 0.0
  %10352 = vmatpush1.msra.mxu0 0.0
  %10353 = vmatprep.subr.mxu0 0.0
  %10354 = vmatpush1.msra.mxu0 0.0
  %10355 = vmatprep.subr.mxu0 0.0
  %10356 = vmatpush1.msra.mxu0 0.0
  %10357 = vmatprep.subr.mxu0 0.0
  %10358 = vmatpush1.msra.mxu0 0.0
  %10359 = vmatprep.subr.mxu0 0.0
  %10360 = vmatpush1.msra.mxu0 0.0
  %10361 = vmatprep.subr.mxu0 0.0
  %10362 = vmatpush1.msra.mxu0 0.0
  %10363 = vmatprep.subr.mxu0 0.0
  %10364 = vmatpush1.msra.mxu0 0.0
  %10365 = vmatprep.mubr.f32.mxu0 %v9631
  %10366 = vmatmul.mubr.f32.gmra.mrb[0].mxu0 %v9526
  %v10367 = vpop.f32.mrb[0].mxu0
  %v10368 = vadd.f32 0.0, %v10367
  %v10369 = vpop.f32.mrb[0].mxu0
  %10370 = vmatprep.mubr.f32.mxu0 %v9633
  %10371 = vmatmul.mubr.f32.gmra.mrb[0].mxu0 %v9527
  %v10372 = vpop.f32.mrb[0].mxu0
  %v10373 = vadd.f32 0.0, %v10372
  %v10374 = vpop.f32.mrb[0].mxu0
  %10375 = vmatprep.mubr.f32.mxu0 %v9635
  %10376 = vmatmul.mubr.f32.gmra.mrb[0].mxu0 %v9528
  %v10377 = vpop.f32.mrb[0].mxu0
  %v10378 = vadd.f32 0.0, %v10377
  %v10379 = vpop.f32.mrb[0].mxu0
  %10380 = vmatprep.mubr.f32.mxu0 %v9637
  %10381 = vmatmul.mubr.f32.gmra.mrb[0].mxu0 %v9529
  %v10382 = vpop.f32.mrb[0].mxu0
  %v10383 = vadd.f32 0.0, %v10382
  %v10384 = vpop.f32.mrb[0].mxu0
  %10385 = vmatprep.mubr.f32.mxu0 %v9639
  %10386 = vmatmul.mubr.f32.gmra.mrb[0].mxu0 %v9530
  %v10387 = vpop.f32.mrb[0].mxu0
  %v10388 = vadd.f32 0.0, %v10387
  %v10389 = vpop.f32.mrb[0].mxu0
  %10390 = vmatprep.mubr.f32.mxu0 %v9641
  %10391 = vmatmul.mubr.f32.gmra.mrb[0].mxu0 %v9531
  %v10392 = vpop.f32.mrb[0].mxu0
  %v10393 = vadd.f32 0.0, %v10392
  %v10394 = vpop.f32.mrb[0].mxu0
  %10395 = vmatprep.mubr.f32.mxu0 %v9643
  %10396 = vmatmul.mubr.f32.gmra.mrb[0].mxu0 %v9532
  %v10397 = vpop.f32.mrb[0].mxu0
  %v10398 = vadd.f32 0.0, %v10397
  %v10399 = vpop.f32.mrb[0].mxu0
  %10400 = vmatprep.mubr.f32.mxu0 %v9645
  %10401 = vmatmul.mubr.f32.gmra.mrb[0].mxu0 %v9533
  %v10402 = vpop.f32.mrb[0].mxu0
  %v10403 = vadd.f32 0.0, %v10402
  %v10404 = vpop.f32.mrb[0].mxu0
  %10405 = vmatprep.mubr.f32.mxu0 %v9647
  %10406 = vmatmul.mubr.f32.gmra.mrb[0].mxu0 %v9534
  %v10407 = vpop.f32.mrb[0].mxu0
  %v10408 = vadd.f32 0.0, %v10407
  %v10409 = vpop.f32.mrb[0].mxu0
  %10410 = vmatprep.mubr.f32.mxu0 %v9649
  %10411 = vmatmul.mubr.f32.gmra.mrb[0].mxu0 %v9535
  %v10412 = vpop.f32.mrb[0].mxu0
  %v10413 = vadd.f32 0.0, %v10412
  %v10414 = vpop.f32.mrb[0].mxu0
  %10415 = vmatprep.mubr.f32.mxu0 %v9651
  %10416 = vmatmul.mubr.f32.gmra.mrb[0].mxu0 %v9536
  %v10417 = vpop.f32.mrb[0].mxu0
  %v10418 = vadd.f32 0.0, %v10417
  %v10419 = vpop.f32.mrb[0].mxu0
  %10420 = vmatprep.mubr.f32.mxu0 %v9653
  %10421 = vmatmul.mubr.f32.gmra.mrb[0].mxu0 %v9537
  %v10422 = vpop.f32.mrb[0].mxu0
  %v10423 = vadd.f32 0.0, %v10422
  %v10424 = vpop.f32.mrb[0].mxu0
  %10425 = vmatprep.mubr.f32.mxu0 %v9655
  %10426 = vmatmul.mubr.f32.gmra.mrb[0].mxu0 %v9538
  %v10427 = vpop.f32.mrb[0].mxu0
  %v10428 = vadd.f32 0.0, %v10427
  %v10429 = vpop.f32.mrb[0].mxu0
  %10430 = vmatprep.mubr.f32.mxu0 %v9657
  %10431 = vmatmul.mubr.f32.gmra.mrb[0].mxu0 %v9539
  %v10432 = vpop.f32.mrb[0].mxu0
  %v10433 = vadd.f32 0.0, %v10432
  %v10434 = vpop.f32.mrb[0].mxu0
  %10435 = vmatprep.mubr.f32.mxu0 %v9659
  %10436 = vmatmul.mubr.f32.gmra.mrb[0].mxu0 %v9540
  %v10437 = vpop.f32.mrb[0].mxu0
  %v10438 = vadd.f32 0.0, %v10437
  %v10439 = vpop.f32.mrb[0].mxu0
  %10440 = vmatprep.mubr.f32.mxu0 %v9661
  %10441 = vmatmul.mubr.f32.gmra.mrb[0].mxu0 %v9541
  %v10442 = vpop.f32.mrb[0].mxu0
  %v10443 = vadd.f32 0.0, %v10442
  %v10444 = vpop.f32.mrb[0].mxu0
  %10445 = vmatprep.mubr.f32.mxu0 %v9663
  %10446 = vmatmul.mubr.f32.gmra.mrb[0].mxu0 %v9542
  %v10447 = vpop.f32.mrb[0].mxu0
  %v10448 = vadd.f32 0.0, %v10447
  %v10449 = vpop.f32.mrb[0].mxu0
  %10450 = vmatprep.mubr.f32.mxu0 %v9665
  %10451 = vmatmul.mubr.f32.gmra.mrb[0].mxu0 %v9543
  %v10452 = vpop.f32.mrb[0].mxu0
  %v10453 = vadd.f32 0.0, %v10452
  %v10454 = vpop.f32.mrb[0].mxu0
  %10455 = vmatprep.mubr.f32.mxu0 %v9667
  %10456 = vmatmul.mubr.f32.gmra.mrb[0].mxu0 %v9544
  %v10457 = vpop.f32.mrb[0].mxu0
  %v10458 = vadd.f32 0.0, %v10457
  %v10459 = vpop.f32.mrb[0].mxu0
  %10460 = vmatprep.mubr.f32.mxu0 %v9669
  %10461 = vmatmul.mubr.f32.gmra.mrb[0].mxu0 %v9545
  %v10462 = vpop.f32.mrb[0].mxu0
  %v10463 = vadd.f32 0.0, %v10462
  %v10464 = vpop.f32.mrb[0].mxu0
  %10465 = vmatprep.mubr.f32.mxu0 %v9671
  %10466 = vmatmul.mubr.f32.gmra.mrb[0].mxu0 %v9546
  %v10467 = vpop.f32.mrb[0].mxu0
  %v10468 = vadd.f32 0.0, %v10467
  %v10469 = vpop.f32.mrb[0].mxu0
  %10470 = vmatprep.mubr.f32.mxu0 %v9673
  %10471 = vmatmul.mubr.f32.gmra.mrb[0].mxu0 %v9547
  %v10472 = vpop.f32.mrb[0].mxu0
  %v10473 = vadd.f32 0.0, %v10472
  %v10474 = vpop.f32.mrb[0].mxu0
  %10475 = vmatprep.mubr.f32.mxu0 %v9675
  %10476 = vmatmul.mubr.f32.gmra.mrb[0].mxu0 %v9548
  %v10477 = vpop.f32.mrb[0].mxu0
  %v10478 = vadd.f32 0.0, %v10477
  %v10479 = vpop.f32.mrb[0].mxu0
  %10480 = vmatprep.mubr.f32.mxu0 %v9677
  %10481 = vmatmul.mubr.f32.gmra.mrb[0].mxu0 %v9549
  %v10482 = vpop.f32.mrb[0].mxu0
  %v10483 = vadd.f32 0.0, %v10482
  %v10484 = vpop.f32.mrb[0].mxu0
  %10485 = vmatprep.mubr.f32.mxu0 %v9679
  %10486 = vmatmul.mubr.f32.gmra.mrb[0].mxu0 %v9550
  %v10487 = vpop.f32.mrb[0].mxu0
  %v10488 = vadd.f32 0.0, %v10487
  %v10489 = vpop.f32.mrb[0].mxu0
  %10490 = vmatprep.mubr.f32.mxu0 %v9681
  %10491 = vmatmul.mubr.f32.gmra.mrb[0].mxu0 %v9551
  %v10492 = vpop.f32.mrb[0].mxu0
  %v10493 = vadd.f32 0.0, %v10492
  %v10494 = vpop.f32.mrb[0].mxu0
  %10495 = vmatprep.mubr.f32.mxu0 %v9683
  %10496 = vmatmul.mubr.f32.gmra.mrb[0].mxu0 %v9552
  %v10497 = vpop.f32.mrb[0].mxu0
  %v10498 = vadd.f32 0.0, %v10497
  %v10499 = vpop.f32.mrb[0].mxu0
  %10500 = vmatprep.mubr.f32.mxu0 %v9685
  %10501 = vmatmul.mubr.f32.gmra.mrb[0].mxu0 %v9553
  %v10502 = vpop.f32.mrb[0].mxu0
  %v10503 = vadd.f32 0.0, %v10502
  %v10504 = vpop.f32.mrb[0].mxu0
  %10505 = vmatprep.mubr.f32.mxu0 %v9687
  %10506 = vmatmul.mubr.f32.gmra.mrb[0].mxu0 %v9554
  %v10507 = vpop.f32.mrb[0].mxu0
  %v10508 = vadd.f32 0.0, %v10507
  %v10509 = vpop.f32.mrb[0].mxu0
  %10510 = vmatprep.mubr.f32.mxu0 %v9689
  %10511 = vmatmul.mubr.f32.gmra.mrb[0].mxu0 %v9555
  %v10512 = vpop.f32.mrb[0].mxu0
  %v10513 = vadd.f32 0.0, %v10512
  %v10514 = vpop.f32.mrb[0].mxu0
  %10515 = vmatprep.mubr.f32.mxu0 %v10293
  %10516 = vmatmul.mubr.f32.gmra.mrb[0].mxu0 %v9556
  %v10517 = vpop.f32.mrb[0].mxu0
  %v10518 = vadd.f32 0.0, %v10517
  %v10519 = vpop.f32.mrb[0].mxu0
  %10520 = vmatprep.mubr.f32.mxu0 %v10295
  %10521 = vmatmul.mubr.f32.gmra.mrb[0].mxu0 %v9557
  %v10522 = vpop.f32.mrb[0].mxu0
  %v10523 = vadd.f32 0.0, %v10522
  %v10524 = vpop.f32.mrb[0].mxu0
  %10525 = vmatprep.mubr.f32.mxu0 %v9695
  %10526 = vmatmul.mubr.f32.gmra.mrb[0].mxu0 %v9562
  %v10527 = vpop.f32.mrb[0].mxu0
  %v10528 = vadd.f32 0.0, %v10527
  %v10529 = vpop.f32.mrb[0].mxu0
  %10530 = vmatprep.mubr.f32.mxu0 %v9697
  %10531 = vmatmul.mubr.f32.gmra.mrb[0].mxu0 %v9563
  %v10532 = vpop.f32.mrb[0].mxu0
  %v10533 = vadd.f32 0.0, %v10532
  %v10534 = vpop.f32.mrb[0].mxu0
  %10535 = vmatprep.mubr.f32.mxu0 %v9699
  %10536 = vmatmul.mubr.f32.gmra.mrb[0].mxu0 %v9564
  %v10537 = vpop.f32.mrb[0].mxu0
  %v10538 = vadd.f32 0.0, %v10537
  %v10539 = vpop.f32.mrb[0].mxu0
  %10540 = vmatprep.mubr.f32.mxu0 %v9701
  %10541 = vmatmul.mubr.f32.gmra.mrb[0].mxu0 %v9565
  %v10542 = vpop.f32.mrb[0].mxu0
  %v10543 = vadd.f32 0.0, %v10542
  %v10544 = vpop.f32.mrb[0].mxu0
  %10545 = vmatprep.mubr.f32.mxu0 %v9703
  %10546 = vmatmul.mubr.f32.gmra.mrb[0].mxu0 %v9566
  %v10547 = vpop.f32.mrb[0].mxu0
  %v10548 = vadd.f32 0.0, %v10547
  %v10549 = vpop.f32.mrb[0].mxu0
  %10550 = vmatprep.mubr.f32.mxu0 %v9705
  %10551 = vmatmul.mubr.f32.gmra.mrb[0].mxu0 %v9567
  %v10552 = vpop.f32.mrb[0].mxu0
  %v10553 = vadd.f32 0.0, %v10552
  %v10554 = vpop.f32.mrb[0].mxu0
  %10555 = vmatprep.mubr.f32.mxu0 %v9707
  %10556 = vmatmul.mubr.f32.gmra.mrb[0].mxu0 %v9568
  %v10557 = vpop.f32.mrb[0].mxu0
  %v10558 = vadd.f32 0.0, %v10557
  %v10559 = vpop.f32.mrb[0].mxu0
  %10560 = vmatprep.mubr.f32.mxu0 %v9709
  %10561 = vmatmul.mubr.f32.gmra.mrb[0].mxu0 %v9569
  %v10562 = vpop.f32.mrb[0].mxu0
  %v10563 = vadd.f32 0.0, %v10562
  %v10564 = vpop.f32.mrb[0].mxu0
  %10565 = vmatprep.mubr.f32.mxu0 %v9711
  %10566 = vmatmul.mubr.f32.gmra.mrb[0].mxu0 %v9570
  %v10567 = vpop.f32.mrb[0].mxu0
  %v10568 = vadd.f32 0.0, %v10567
  %v10569 = vpop.f32.mrb[0].mxu0
  %10570 = vmatprep.mubr.f32.mxu0 %v9713
  %10571 = vmatmul.mubr.f32.gmra.mrb[0].mxu0 %v9571
  %v10572 = vpop.f32.mrb[0].mxu0
  %v10573 = vadd.f32 0.0, %v10572
  %v10574 = vpop.f32.mrb[0].mxu0
  %10575 = vmatprep.mubr.f32.mxu0 %v9715
  %10576 = vmatmul.mubr.f32.gmra.mrb[0].mxu0 %v9572
  %v10577 = vpop.f32.mrb[0].mxu0
  %v10578 = vadd.f32 0.0, %v10577
  %v10579 = vpop.f32.mrb[0].mxu0
  %10580 = vmatprep.mubr.f32.mxu0 %v9717
  %10581 = vmatmul.mubr.f32.gmra.mrb[0].mxu0 %v9573
  %v10582 = vpop.f32.mrb[0].mxu0
  %v10583 = vadd.f32 0.0, %v10582
  %v10584 = vpop.f32.mrb[0].mxu0
  %10585 = vmatprep.mubr.f32.mxu0 %v9719
  %10586 = vmatmul.mubr.f32.gmra.mrb[0].mxu0 %v9574
  %v10587 = vpop.f32.mrb[0].mxu0
  %v10588 = vadd.f32 0.0, %v10587
  %v10589 = vpop.f32.mrb[0].mxu0
  %10590 = vmatprep.mubr.f32.mxu0 %v9721
  %10591 = vmatmul.mubr.f32.gmra.mrb[0].mxu0 %v9575
  %v10592 = vpop.f32.mrb[0].mxu0
  %v10593 = vadd.f32 0.0, %v10592
  %v10594 = vpop.f32.mrb[0].mxu0
  %10595 = vmatprep.mubr.f32.mxu0 %v9723
  %10596 = vmatmul.mubr.f32.gmra.mrb[0].mxu0 %v9576
  %v10597 = vpop.f32.mrb[0].mxu0
  %v10598 = vadd.f32 0.0, %v10597
  %v10599 = vpop.f32.mrb[0].mxu0
  %10600 = vmatprep.mubr.f32.mxu0 %v9725
  %10601 = vmatmul.mubr.f32.gmra.mrb[0].mxu0 %v9577
  %v10602 = vpop.f32.mrb[0].mxu0
  %v10603 = vadd.f32 0.0, %v10602
  %v10604 = vpop.f32.mrb[0].mxu0
  %10605 = vmatprep.mubr.f32.mxu0 %v9727
  %10606 = vmatmul.mubr.f32.gmra.mrb[0].mxu0 %v9578
  %v10607 = vpop.f32.mrb[0].mxu0
  %v10608 = vadd.f32 0.0, %v10607
  %v10609 = vpop.f32.mrb[0].mxu0
  %10610 = vmatprep.mubr.f32.mxu0 %v9729
  %10611 = vmatmul.mubr.f32.gmra.mrb[0].mxu0 %v9579
  %v10612 = vpop.f32.mrb[0].mxu0
  %v10613 = vadd.f32 0.0, %v10612
  %v10614 = vpop.f32.mrb[0].mxu0
  %10615 = vmatprep.mubr.f32.mxu0 %v9731
  %10616 = vmatmul.mubr.f32.gmra.mrb[0].mxu0 %v9580
  %v10617 = vpop.f32.mrb[0].mxu0
  %v10618 = vadd.f32 0.0, %v10617
  %v10619 = vpop.f32.mrb[0].mxu0
  %10620 = vmatprep.mubr.f32.mxu0 %v9733
  %10621 = vmatmul.mubr.f32.gmra.mrb[0].mxu0 %v9581
  %v10622 = vpop.f32.mrb[0].mxu0
  %v10623 = vadd.f32 0.0, %v10622
  %v10624 = vpop.f32.mrb[0].mxu0
  %10625 = vmatprep.mubr.f32.mxu0 %v9735
  %10626 = vmatmul.mubr.f32.gmra.mrb[0].mxu0 %v9582
  %v10627 = vpop.f32.mrb[0].mxu0
  %v10628 = vadd.f32 0.0, %v10627
  %v10629 = vpop.f32.mrb[0].mxu0
  %10630 = vmatprep.mubr.f32.mxu0 %v9737
  %10631 = vmatmul.mubr.f32.gmra.mrb[0].mxu0 %v9583
  %v10632 = vpop.f32.mrb[0].mxu0
  %v10633 = vadd.f32 0.0, %v10632
  %v10634 = vpop.f32.mrb[0].mxu0
  %10635 = vmatprep.mubr.f32.mxu0 %v9739
  %10636 = vmatmul.mubr.f32.gmra.mrb[0].mxu0 %v9584
  %v10637 = vpop.f32.mrb[0].mxu0
  %v10638 = vadd.f32 0.0, %v10637
  %v10639 = vpop.f32.mrb[0].mxu0
  %10640 = vmatprep.mubr.f32.mxu0 %v9741
  %10641 = vmatmul.mubr.f32.gmra.mrb[0].mxu0 %v9585
  %v10642 = vpop.f32.mrb[0].mxu0
  %v10643 = vadd.f32 0.0, %v10642
  %v10644 = vpop.f32.mrb[0].mxu0
  %10645 = vmatprep.mubr.f32.mxu0 %v9743
  %10646 = vmatmul.mubr.f32.gmra.mrb[0].mxu0 %v9586
  %v10647 = vpop.f32.mrb[0].mxu0
  %v10648 = vadd.f32 0.0, %v10647
  %v10649 = vpop.f32.mrb[0].mxu0
  %10650 = vmatprep.mubr.f32.mxu0 %v9745
  %10651 = vmatmul.mubr.f32.gmra.mrb[0].mxu0 %v9587
  %v10652 = vpop.f32.mrb[0].mxu0
  %v10653 = vadd.f32 0.0, %v10652
  %v10654 = vpop.f32.mrb[0].mxu0
  %10655 = vmatprep.mubr.f32.mxu0 %v9747
  %10656 = vmatmul.mubr.f32.gmra.mrb[0].mxu0 %v9588
  %v10657 = vpop.f32.mrb[0].mxu0
  %v10658 = vadd.f32 0.0, %v10657
  %v10659 = vpop.f32.mrb[0].mxu0
  %10660 = vmatprep.mubr.f32.mxu0 %v9749
  %10661 = vmatmul.mubr.f32.gmra.mrb[0].mxu0 %v9589
  %v10662 = vpop.f32.mrb[0].mxu0
  %v10663 = vadd.f32 0.0, %v10662
  %v10664 = vpop.f32.mrb[0].mxu0
  %10665 = vmatprep.mubr.f32.mxu0 %v9751
  %10666 = vmatmul.mubr.f32.gmra.mrb[0].mxu0 %v9590
  %v10667 = vpop.f32.mrb[0].mxu0
  %v10668 = vadd.f32 0.0, %v10667
  %v10669 = vpop.f32.mrb[0].mxu0
  %10670 = vmatprep.mubr.f32.mxu0 %v9753
  %10671 = vmatmul.mubr.f32.gmra.mrb[0].mxu0 %v9591
  %v10672 = vpop.f32.mrb[0].mxu0
  %v10673 = vadd.f32 0.0, %v10672
  %v10674 = vpop.f32.mrb[0].mxu0
  %10675 = vmatprep.mubr.f32.mxu0 %v10297
  %10676 = vmatmul.mubr.f32.gmra.mrb[0].mxu0 %v9592
  %v10677 = vpop.f32.mrb[0].mxu0
  %v10678 = vadd.f32 0.0, %v10677
  %v10679 = vpop.f32.mrb[0].mxu0
  %10680 = vmatprep.mubr.f32.mxu0 %v10299
  %10681 = vmatmul.mubr.f32.gmra.mrb[0].mxu0 %v9593
  %v10682 = vpop.f32.mrb[0].mxu0
  %v10683 = vadd.f32 0.0, %v10682
  %v10684 = vpop.f32.mrb[0].mxu0
  %10685 = vdwg.mxu0
  %v10686 = vadd.f32 %v10204, %v10368
  %v10687 = vadd.f32 %v10205, %v10373
  %v10688 = vadd.f32 %v10206, %v10378
  %v10689 = vadd.f32 %v10207, %v10383
  %v10690 = vadd.f32 %v10208, %v10388
  %v10691 = vadd.f32 %v10209, %v10393
  %v10692 = vadd.f32 %v10210, %v10398
  %v10693 = vadd.f32 %v10211, %v10403
  %v10694 = vadd.f32 %v10212, %v10408
  %v10695 = vadd.f32 %v10213, %v10413
  %v10696 = vadd.f32 %v10214, %v10418
  %v10697 = vadd.f32 %v10215, %v10423
  %v10698 = vadd.f32 %v10216, %v10428
  %v10699 = vadd.f32 %v10217, %v10433
  %v10700 = vadd.f32 %v10218, %v10438
  %v10701 = vadd.f32 %v10219, %v10443
  %v10702 = vadd.f32 %v10220, %v10448
  %v10703 = vadd.f32 %v10221, %v10453
  %v10704 = vadd.f32 %v10222, %v10458
  %v10705 = vadd.f32 %v10223, %v10463
  %v10706 = vadd.f32 %v10224, %v10468
  %v10707 = vadd.f32 %v10225, %v10473
  %v10708 = vadd.f32 %v10226, %v10478
  %v10709 = vadd.f32 %v10227, %v10483
  %v10710 = vadd.f32 %v10228, %v10488
  %v10711 = vadd.f32 %v10229, %v10493
  %v10712 = vadd.f32 %v10230, %v10498
  %v10713 = vadd.f32 %v10231, %v10503
  %v10714 = vadd.f32 %v10232, %v10508
  %v10715 = vadd.f32 %v10233, %v10513
  %v10716 = vadd.f32 %v10234, %v10518
  %v10717 = vadd.f32 %v10235, %v10523
  %v10718 = vadd.f32 %v10236, %v10528
  %v10719 = vadd.f32 %v10237, %v10533
  %v10720 = vadd.f32 %v10238, %v10538
  %v10721 = vadd.f32 %v10239, %v10543
  %v10722 = vadd.f32 %v10240, %v10548
  %v10723 = vadd.f32 %v10241, %v10553
  %v10724 = vadd.f32 %v10242, %v10558
  %v10725 = vadd.f32 %v10243, %v10563
  %v10726 = vadd.f32 %v10244, %v10568
  %v10727 = vadd.f32 %v10245, %v10573
  %v10728 = vadd.f32 %v10246, %v10578
  %v10729 = vadd.f32 %v10247, %v10583
  %v10730 = vadd.f32 %v10248, %v10588
  %v10731 = vadd.f32 %v10249, %v10593
  %v10732 = vadd.f32 %v10250, %v10598
  %v10733 = vadd.f32 %v10251, %v10603
  %v10734 = vadd.f32 %v10252, %v10608
  %v10735 = vadd.f32 %v10253, %v10613
  %v10736 = vadd.f32 %v10254, %v10618
  %v10737 = vadd.f32 %v10255, %v10623
  %v10738 = vadd.f32 %v10256, %v10628
  %v10739 = vadd.f32 %v10257, %v10633
  %v10740 = vadd.f32 %v10258, %v10638
  %v10741 = vadd.f32 %v10259, %v10643
  %v10742 = vadd.f32 %v10260, %v10648
  %v10743 = vadd.f32 %v10261, %v10653
  %v10744 = vadd.f32 %v10262, %v10658
  %v10745 = vadd.f32 %v10263, %v10663
  %v10746 = vadd.f32 %v10264, %v10668
  %v10747 = vadd.f32 %v10265, %v10673
  %v10748 = vadd.f32 %v10266, %v10678
  %v10749 = vadd.f32 %v10267, %v10683
  %10750 = vst [vmem:[%s12] sm:$0xff] %v10686
  %10751 = vst [vmem:[%s12 + $0x8] sm:$0xff] %v10687
  %10752 = vst [vmem:[%s12 + $0x10] sm:$0xff] %v10688
  %10753 = vst [vmem:[%s12 + $0x18] sm:$0xff] %v10689
  %10754 = vst [vmem:[%s12 + $0x20] sm:$0xff] %v10690
  %10755 = vst [vmem:[%s12 + $0x28] sm:$0xff] %v10691
  %10756 = vst [vmem:[%s12 + $0x30] sm:$0xff] %v10692
  %10757 = vst [vmem:[%s12 + $0x38] sm:$0xff] %v10693
  %10758 = vst [vmem:[%s12 + $0x40] sm:$0xff] %v10694
  %10759 = vst [vmem:[%s12 + $0x48] sm:$0xff] %v10695
  %10760 = vst [vmem:[%s12 + $0x50] sm:$0xff] %v10696
  %10761 = vst [vmem:[%s12 + $0x58] sm:$0xff] %v10697
  %10762 = vst [vmem:[%s12 + $0x60] sm:$0xff] %v10698
  %10763 = vst [vmem:[%s12 + $0x68] sm:$0xff] %v10699
  %10764 = vst [vmem:[%s12 + $0x70] sm:$0xff] %v10700
  %10765 = vst [vmem:[%s12 + $0x78] sm:$0xff] %v10701
  %10766 = vst [vmem:[%s12 + $0x80] sm:$0xff] %v10702
  %10767 = vst [vmem:[%s12 + $0x88] sm:$0xff] %v10703
  %10768 = vst [vmem:[%s12 + $0x90] sm:$0xff] %v10704
  %10769 = vst [vmem:[%s12 + $0x98] sm:$0xff] %v10705
  %10770 = vst [vmem:[%s12 + $0xa0] sm:$0xff] %v10706
  %10771 = vst [vmem:[%s12 + $0xa8] sm:$0xff] %v10707
  %10772 = vst [vmem:[%s12 + $0xb0] sm:$0xff] %v10708
  %10773 = vst [vmem:[%s12 + $0xb8] sm:$0xff] %v10709
  %10774 = vst [vmem:[%s12 + $0xc0] sm:$0xff] %v10710
  %10775 = vst [vmem:[%s12 + $0xc8] sm:$0xff] %v10711
  %10776 = vst [vmem:[%s12 + $0xd0] sm:$0xff] %v10712
  %10777 = vst [vmem:[%s12 + $0xd8] sm:$0xff] %v10713
  %10778 = vst [vmem:[%s12 + $0xe0] sm:$0xff] %v10714
  %10779 = vst [vmem:[%s12 + $0xe8] sm:$0xff] %v10715
  %10780 = vst [vmem:[%s12 + $0xf0] sm:$0xff] %v10716
  %10781 = vst [vmem:[%s12 + $0xf8] sm:$0xff] %v10717
  %10782 = vst [vmem:[%s12 + $0x100] sm:$0xff] %v10718
  %10783 = vst [vmem:[%s12 + $0x108] sm:$0xff] %v10719
  %10784 = vst [vmem:[%s12 + $0x110] sm:$0xff] %v10720
  %10785 = vst [vmem:[%s12 + $0x118] sm:$0xff] %v10721
  %10786 = vst [vmem:[%s12 + $0x120] sm:$0xff] %v10722
  %10787 = vst [vmem:[%s12 + $0x128] sm:$0xff] %v10723
  %10788 = vst [vmem:[%s12 + $0x130] sm:$0xff] %v10724
  %10789 = vst [vmem:[%s12 + $0x138] sm:$0xff] %v10725
  %10790 = vst [vmem:[%s12 + $0x140] sm:$0xff] %v10726
  %10791 = vst [vmem:[%s12 + $0x148] sm:$0xff] %v10727
  %10792 = vst [vmem:[%s12 + $0x150] sm:$0xff] %v10728
  %10793 = vst [vmem:[%s12 + $0x158] sm:$0xff] %v10729
  %10794 = vst [vmem:[%s12 + $0x160] sm:$0xff] %v10730
  %10795 = vst [vmem:[%s12 + $0x168] sm:$0xff] %v10731
  %10796 = vst [vmem:[%s12 + $0x170] sm:$0xff] %v10732
  %10797 = vst [vmem:[%s12 + $0x178] sm:$0xff] %v10733
  %10798 = vst [vmem:[%s12 + $0x180] sm:$0xff] %v10734
  %10799 = vst [vmem:[%s12 + $0x188] sm:$0xff] %v10735
  %10800 = vst [vmem:[%s12 + $0x190] sm:$0xff] %v10736
  %10801 = vst [vmem:[%s12 + $0x198] sm:$0xff] %v10737
  %10802 = vst [vmem:[%s12 + $0x1a0] sm:$0xff] %v10738
  %10803 = vst [vmem:[%s12 + $0x1a8] sm:$0xff] %v10739
  %10804 = vst [vmem:[%s12 + $0x1b0] sm:$0xff] %v10740
  %10805 = vst [vmem:[%s12 + $0x1b8] sm:$0xff] %v10741
  %10806 = vst [vmem:[%s12 + $0x1c0] sm:$0xff] %v10742
  %10807 = vst [vmem:[%s12 + $0x1c8] sm:$0xff] %v10743
  %10808 = vst [vmem:[%s12 + $0x1d0] sm:$0xff] %v10744
  %10809 = vst [vmem:[%s12 + $0x1d8] sm:$0xff] %v10745
  %10810 = vst [vmem:[%s12 + $0x1e0] sm:$0xff] %v10746
  %10811 = vst [vmem:[%s12 + $0x1e8] sm:$0xff] %v10747
  %10812 = vst [vmem:[%s12 + $0x1f0] sm:$0xff] %v10748
  %10813 = vst [vmem:[%s12 + $0x1f8] sm:$0xff] %v10749
  %v10814 = vld [vmem:[%s12] sm:$0xff]
  %v10815 = vld [vmem:[%s12 + $0x8] sm:$0xff]
  %v10816 = vld [vmem:[%s12 + $0x10] sm:$0xff]
  %v10817 = vld [vmem:[%s12 + $0x18] sm:$0xff]
  %v10818 = vld [vmem:[%s12 + $0x20] sm:$0xff]
  %v10819 = vld [vmem:[%s12 + $0x28] sm:$0xff]
  %v10820 = vld [vmem:[%s12 + $0x30] sm:$0xff]
  %v10821 = vld [vmem:[%s12 + $0x38] sm:$0xff]
  %v10822 = vld [vmem:[%s12 + $0x40] sm:$0xff]
  %v10823 = vld [vmem:[%s12 + $0x48] sm:$0xff]
  %v10824 = vld [vmem:[%s12 + $0x50] sm:$0xff]
  %v10825 = vld [vmem:[%s12 + $0x58] sm:$0xff]
  %v10826 = vld [vmem:[%s12 + $0x60] sm:$0xff]
  %v10827 = vld [vmem:[%s12 + $0x68] sm:$0xff]
  %v10828 = vld [vmem:[%s12 + $0x70] sm:$0xff]
  %v10829 = vld [vmem:[%s12 + $0x78] sm:$0xff]
  %v10830 = vld [vmem:[%s12 + $0x80] sm:$0xff]
  %v10831 = vld [vmem:[%s12 + $0x88] sm:$0xff]
  %v10832 = vld [vmem:[%s12 + $0x90] sm:$0xff]
  %v10833 = vld [vmem:[%s12 + $0x98] sm:$0xff]
  %v10834 = vld [vmem:[%s12 + $0xa0] sm:$0xff]
  %v10835 = vld [vmem:[%s12 + $0xa8] sm:$0xff]
  %v10836 = vld [vmem:[%s12 + $0xb0] sm:$0xff]
  %v10837 = vld [vmem:[%s12 + $0xb8] sm:$0xff]
  %v10838 = vld [vmem:[%s12 + $0xc0] sm:$0xff]
  %v10839 = vld [vmem:[%s12 + $0xc8] sm:$0xff]
  %v10840 = vld [vmem:[%s12 + $0xd0] sm:$0xff]
  %v10841 = vld [vmem:[%s12 + $0xd8] sm:$0xff]
  %v10842 = vld [vmem:[%s12 + $0xe0] sm:$0xff]
  %v10843 = vld [vmem:[%s12 + $0xe8] sm:$0xff]
  %v10844 = vld [vmem:[%s12 + $0xf0] sm:$0xff]
  %v10845 = vld [vmem:[%s12 + $0xf8] sm:$0xff]
  %v10846 = vld [vmem:[%s12 + $0x100] sm:$0xff]
  %v10847 = vld [vmem:[%s12 + $0x108] sm:$0xff]
  %v10848 = vld [vmem:[%s12 + $0x110] sm:$0xff]
  %v10849 = vld [vmem:[%s12 + $0x118] sm:$0xff]
  %v10850 = vld [vmem:[%s12 + $0x120] sm:$0xff]
  %v10851 = vld [vmem:[%s12 + $0x128] sm:$0xff]
  %v10852 = vld [vmem:[%s12 + $0x130] sm:$0xff]
  %v10853 = vld [vmem:[%s12 + $0x138] sm:$0xff]
  %v10854 = vld [vmem:[%s12 + $0x140] sm:$0xff]
  %v10855 = vld [vmem:[%s12 + $0x148] sm:$0xff]
  %v10856 = vld [vmem:[%s12 + $0x150] sm:$0xff]
  %v10857 = vld [vmem:[%s12 + $0x158] sm:$0xff]
  %v10858 = vld [vmem:[%s12 + $0x160] sm:$0xff]
  %v10859 = vld [vmem:[%s12 + $0x168] sm:$0xff]
  %v10860 = vld [vmem:[%s12 + $0x170] sm:$0xff]
  %v10861 = vld [vmem:[%s12 + $0x178] sm:$0xff]
  %v10862 = vld [vmem:[%s12 + $0x180] sm:$0xff]
  %v10863 = vld [vmem:[%s12 + $0x188] sm:$0xff]
  %v10864 = vld [vmem:[%s12 + $0x190] sm:$0xff]
  %v10865 = vld [vmem:[%s12 + $0x198] sm:$0xff]
  %v10866 = vld [vmem:[%s12 + $0x1a0] sm:$0xff]
  %v10867 = vld [vmem:[%s12 + $0x1a8] sm:$0xff]
  %v10868 = vld [vmem:[%s12 + $0x1b0] sm:$0xff]
  %v10869 = vld [vmem:[%s12 + $0x1b8] sm:$0xff]
  %v10870 = vld [vmem:[%s12 + $0x1c0] sm:$0xff]
  %v10871 = vld [vmem:[%s12 + $0x1c8] sm:$0xff]
  %v10872 = vld [vmem:[%s12 + $0x1d0] sm:$0xff]
  %v10873 = vld [vmem:[%s12 + $0x1d8] sm:$0xff]
  %v10874 = vld [vmem:[%s12 + $0x1e0] sm:$0xff]
  %v10875 = vld [vmem:[%s12 + $0x1e8] sm:$0xff]
  %v10876 = vld [vmem:[%s12 + $0x1f0] sm:$0xff]
  %v10877 = vld [vmem:[%s12 + $0x1f8] sm:$0xff]
  %s10878 = scalar_lea.vmem %s10, 384
  %v10879 = vld [vmem:[%s10878] sm:$0xff]
  %v10880 = vld [vmem:[%s10878 + $0x8] sm:$0xff]
  %v10881 = vld [vmem:[%s10878 + $0x10] sm:$0xff]
  %v10882 = vld [vmem:[%s10878 + $0x18] sm:$0xff]
  %v10883 = vld [vmem:[%s10878 + $0x20] sm:$0xff]
  %v10884 = vld [vmem:[%s10878 + $0x28] sm:$0xff]
  %v10885 = vld [vmem:[%s10878 + $0x30] sm:$0xff]
  %v10886 = vld [vmem:[%s10878 + $0x38] sm:$0xff]
  %v10887 = vld [vmem:[%s10878 + $0x40] sm:$0xff]
  %v10888 = vld [vmem:[%s10878 + $0x48] sm:$0xff]
  %v10889 = vld [vmem:[%s10878 + $0x50] sm:$0xff]
  %v10890 = vld [vmem:[%s10878 + $0x58] sm:$0xff]
  %v10891 = vld [vmem:[%s10878 + $0x60] sm:$0xff]
  %v10892 = vld [vmem:[%s10878 + $0x68] sm:$0xff]
  %v10893 = vld [vmem:[%s10878 + $0x70] sm:$0xff]
  %v10894 = vld [vmem:[%s10878 + $0x78] sm:$0xff]
  %v10895 = vld [vmem:[%s10878 + $0x80] sm:$0xff]
  %v10896 = vld [vmem:[%s10878 + $0x88] sm:$0xff]
  %v10897 = vld [vmem:[%s10878 + $0x90] sm:$0xff]
  %v10898 = vld [vmem:[%s10878 + $0x98] sm:$0xff]
  %v10899 = vld [vmem:[%s10878 + $0xa0] sm:$0xff]
  %v10900 = vld [vmem:[%s10878 + $0xa8] sm:$0xff]
  %v10901 = vld [vmem:[%s10878 + $0xb0] sm:$0xff]
  %v10902 = vld [vmem:[%s10878 + $0xb8] sm:$0xff]
  %v10903 = vsel %vm151, %v9431, 0
  %v10905 = vsel %vm151, %v9433, 0
  %v10907 = vsel %vm151, %v9521, 0
  %v10909 = vsel %vm151, %v9523, 0
  %10911 = vmatprep.subr.mxu0 0.0
  %10912 = vmatpush1.msra.mxu0 %v10879
  %10913 = vmatprep.subr.mxu0 0.0
  %10914 = vmatpush1.msra.mxu0 %v10880
  %10915 = vmatprep.subr.mxu0 0.0
  %10916 = vmatpush1.msra.mxu0 %v10881
  %10917 = vmatprep.subr.mxu0 0.0
  %10918 = vmatpush1.msra.mxu0 %v10882
  %10919 = vmatprep.subr.mxu0 0.0
  %10920 = vmatpush1.msra.mxu0 %v10883
  %10921 = vmatprep.subr.mxu0 0.0
  %10922 = vmatpush1.msra.mxu0 %v10884
  %10923 = vmatprep.subr.mxu0 0.0
  %10924 = vmatpush1.msra.mxu0 %v10885
  %10925 = vmatprep.subr.mxu0 0.0
  %10926 = vmatpush1.msra.mxu0 %v10886
  %10927 = vmatprep.subr.mxu0 0.0
  %10928 = vmatpush1.msra.mxu0 %v10887
  %10929 = vmatprep.subr.mxu0 0.0
  %10930 = vmatpush1.msra.mxu0 %v10888
  %10931 = vmatprep.subr.mxu0 0.0
  %10932 = vmatpush1.msra.mxu0 %v10889
  %10933 = vmatprep.subr.mxu0 0.0
  %10934 = vmatpush1.msra.mxu0 %v10890
  %10935 = vmatprep.subr.mxu0 0.0
  %10936 = vmatpush1.msra.mxu0 %v10891
  %10937 = vmatprep.subr.mxu0 0.0
  %10938 = vmatpush1.msra.mxu0 %v10892
  %10939 = vmatprep.subr.mxu0 0.0
  %10940 = vmatpush1.msra.mxu0 %v10893
  %10941 = vmatprep.subr.mxu0 0.0
  %10942 = vmatpush1.msra.mxu0 %v10894
  %10943 = vmatprep.subr.mxu0 0.0
  %10944 = vmatpush1.msra.mxu0 %v10895
  %10945 = vmatprep.subr.mxu0 0.0
  %10946 = vmatpush1.msra.mxu0 %v10896
  %10947 = vmatprep.subr.mxu0 0.0
  %10948 = vmatpush1.msra.mxu0 %v10897
  %10949 = vmatprep.subr.mxu0 0.0
  %10950 = vmatpush1.msra.mxu0 %v10898
  %10951 = vmatprep.subr.mxu0 0.0
  %10952 = vmatpush1.msra.mxu0 %v10899
  %10953 = vmatprep.subr.mxu0 0.0
  %10954 = vmatpush1.msra.mxu0 %v10900
  %10955 = vmatprep.subr.mxu0 0.0
  %10956 = vmatpush1.msra.mxu0 %v10901
  %10957 = vmatprep.subr.mxu0 0.0
  %10958 = vmatpush1.msra.mxu0 %v10902
  %10959 = vmatprep.subr.mxu0 0.0
  %10960 = vmatpush1.msra.mxu0 0.0
  %10961 = vmatprep.subr.mxu0 0.0
  %10962 = vmatpush1.msra.mxu0 0.0
  %10963 = vmatprep.subr.mxu0 0.0
  %10964 = vmatpush1.msra.mxu0 0.0
  %10965 = vmatprep.subr.mxu0 0.0
  %10966 = vmatpush1.msra.mxu0 0.0
  %10967 = vmatprep.subr.mxu0 0.0
  %10968 = vmatpush1.msra.mxu0 0.0
  %10969 = vmatprep.subr.mxu0 0.0
  %10970 = vmatpush1.msra.mxu0 0.0
  %10971 = vmatprep.subr.mxu0 0.0
  %10972 = vmatpush1.msra.mxu0 0.0
  %10973 = vmatprep.subr.mxu0 0.0
  %10974 = vmatpush1.msra.mxu0 0.0
  %10975 = vmatprep.mubr.f32.mxu0 %v9635
  %10976 = vmatmul.mubr.f32.gmra.mrb[0].mxu0 %v9528
  %v10977 = vpop.f32.mrb[0].mxu0
  %v10978 = vadd.f32 0.0, %v10977
  %v10979 = vpop.f32.mrb[0].mxu0
  %10980 = vmatprep.mubr.f32.mxu0 %v9637
  %10981 = vmatmul.mubr.f32.gmra.mrb[0].mxu0 %v9529
  %v10982 = vpop.f32.mrb[0].mxu0
  %v10983 = vadd.f32 0.0, %v10982
  %v10984 = vpop.f32.mrb[0].mxu0
  %10985 = vmatprep.mubr.f32.mxu0 %v9639
  %10986 = vmatmul.mubr.f32.gmra.mrb[0].mxu0 %v9530
  %v10987 = vpop.f32.mrb[0].mxu0
  %v10988 = vadd.f32 0.0, %v10987
  %v10989 = vpop.f32.mrb[0].mxu0
  %10990 = vmatprep.mubr.f32.mxu0 %v9641
  %10991 = vmatmul.mubr.f32.gmra.mrb[0].mxu0 %v9531
  %v10992 = vpop.f32.mrb[0].mxu0
  %v10993 = vadd.f32 0.0, %v10992
  %v10994 = vpop.f32.mrb[0].mxu0
  %10995 = vmatprep.mubr.f32.mxu0 %v9643
  %10996 = vmatmul.mubr.f32.gmra.mrb[0].mxu0 %v9532
  %v10997 = vpop.f32.mrb[0].mxu0
  %v10998 = vadd.f32 0.0, %v10997
  %v10999 = vpop.f32.mrb[0].mxu0
  %11000 = vmatprep.mubr.f32.mxu0 %v9645
  %11001 = vmatmul.mubr.f32.gmra.mrb[0].mxu0 %v9533
  %v11002 = vpop.f32.mrb[0].mxu0
  %v11003 = vadd.f32 0.0, %v11002
  %v11004 = vpop.f32.mrb[0].mxu0
  %11005 = vmatprep.mubr.f32.mxu0 %v9647
  %11006 = vmatmul.mubr.f32.gmra.mrb[0].mxu0 %v9534
  %v11007 = vpop.f32.mrb[0].mxu0
  %v11008 = vadd.f32 0.0, %v11007
  %v11009 = vpop.f32.mrb[0].mxu0
  %11010 = vmatprep.mubr.f32.mxu0 %v9649
  %11011 = vmatmul.mubr.f32.gmra.mrb[0].mxu0 %v9535
  %v11012 = vpop.f32.mrb[0].mxu0
  %v11013 = vadd.f32 0.0, %v11012
  %v11014 = vpop.f32.mrb[0].mxu0
  %11015 = vmatprep.mubr.f32.mxu0 %v9651
  %11016 = vmatmul.mubr.f32.gmra.mrb[0].mxu0 %v9536
  %v11017 = vpop.f32.mrb[0].mxu0
  %v11018 = vadd.f32 0.0, %v11017
  %v11019 = vpop.f32.mrb[0].mxu0
  %11020 = vmatprep.mubr.f32.mxu0 %v9653
  %11021 = vmatmul.mubr.f32.gmra.mrb[0].mxu0 %v9537
  %v11022 = vpop.f32.mrb[0].mxu0
  %v11023 = vadd.f32 0.0, %v11022
  %v11024 = vpop.f32.mrb[0].mxu0
  %11025 = vmatprep.mubr.f32.mxu0 %v9655
  %11026 = vmatmul.mubr.f32.gmra.mrb[0].mxu0 %v9538
  %v11027 = vpop.f32.mrb[0].mxu0
  %v11028 = vadd.f32 0.0, %v11027
  %v11029 = vpop.f32.mrb[0].mxu0
  %11030 = vmatprep.mubr.f32.mxu0 %v9657
  %11031 = vmatmul.mubr.f32.gmra.mrb[0].mxu0 %v9539
  %v11032 = vpop.f32.mrb[0].mxu0
  %v11033 = vadd.f32 0.0, %v11032
  %v11034 = vpop.f32.mrb[0].mxu0
  %11035 = vmatprep.mubr.f32.mxu0 %v9659
  %11036 = vmatmul.mubr.f32.gmra.mrb[0].mxu0 %v9540
  %v11037 = vpop.f32.mrb[0].mxu0
  %v11038 = vadd.f32 0.0, %v11037
  %v11039 = vpop.f32.mrb[0].mxu0
  %11040 = vmatprep.mubr.f32.mxu0 %v9661
  %11041 = vmatmul.mubr.f32.gmra.mrb[0].mxu0 %v9541
  %v11042 = vpop.f32.mrb[0].mxu0
  %v11043 = vadd.f32 0.0, %v11042
  %v11044 = vpop.f32.mrb[0].mxu0
  %11045 = vmatprep.mubr.f32.mxu0 %v9663
  %11046 = vmatmul.mubr.f32.gmra.mrb[0].mxu0 %v9542
  %v11047 = vpop.f32.mrb[0].mxu0
  %v11048 = vadd.f32 0.0, %v11047
  %v11049 = vpop.f32.mrb[0].mxu0
  %11050 = vmatprep.mubr.f32.mxu0 %v9665
  %11051 = vmatmul.mubr.f32.gmra.mrb[0].mxu0 %v9543
  %v11052 = vpop.f32.mrb[0].mxu0
  %v11053 = vadd.f32 0.0, %v11052
  %v11054 = vpop.f32.mrb[0].mxu0
  %11055 = vmatprep.mubr.f32.mxu0 %v9667
  %11056 = vmatmul.mubr.f32.gmra.mrb[0].mxu0 %v9544
  %v11057 = vpop.f32.mrb[0].mxu0
  %v11058 = vadd.f32 0.0, %v11057
  %v11059 = vpop.f32.mrb[0].mxu0
  %11060 = vmatprep.mubr.f32.mxu0 %v9669
  %11061 = vmatmul.mubr.f32.gmra.mrb[0].mxu0 %v9545
  %v11062 = vpop.f32.mrb[0].mxu0
  %v11063 = vadd.f32 0.0, %v11062
  %v11064 = vpop.f32.mrb[0].mxu0
  %11065 = vmatprep.mubr.f32.mxu0 %v9671
  %11066 = vmatmul.mubr.f32.gmra.mrb[0].mxu0 %v9546
  %v11067 = vpop.f32.mrb[0].mxu0
  %v11068 = vadd.f32 0.0, %v11067
  %v11069 = vpop.f32.mrb[0].mxu0
  %11070 = vmatprep.mubr.f32.mxu0 %v9673
  %11071 = vmatmul.mubr.f32.gmra.mrb[0].mxu0 %v9547
  %v11072 = vpop.f32.mrb[0].mxu0
  %v11073 = vadd.f32 0.0, %v11072
  %v11074 = vpop.f32.mrb[0].mxu0
  %11075 = vmatprep.mubr.f32.mxu0 %v9675
  %11076 = vmatmul.mubr.f32.gmra.mrb[0].mxu0 %v9548
  %v11077 = vpop.f32.mrb[0].mxu0
  %v11078 = vadd.f32 0.0, %v11077
  %v11079 = vpop.f32.mrb[0].mxu0
  %11080 = vmatprep.mubr.f32.mxu0 %v9677
  %11081 = vmatmul.mubr.f32.gmra.mrb[0].mxu0 %v9549
  %v11082 = vpop.f32.mrb[0].mxu0
  %v11083 = vadd.f32 0.0, %v11082
  %v11084 = vpop.f32.mrb[0].mxu0
  %11085 = vmatprep.mubr.f32.mxu0 %v9679
  %11086 = vmatmul.mubr.f32.gmra.mrb[0].mxu0 %v9550
  %v11087 = vpop.f32.mrb[0].mxu0
  %v11088 = vadd.f32 0.0, %v11087
  %v11089 = vpop.f32.mrb[0].mxu0
  %11090 = vmatprep.mubr.f32.mxu0 %v9681
  %11091 = vmatmul.mubr.f32.gmra.mrb[0].mxu0 %v9551
  %v11092 = vpop.f32.mrb[0].mxu0
  %v11093 = vadd.f32 0.0, %v11092
  %v11094 = vpop.f32.mrb[0].mxu0
  %11095 = vmatprep.mubr.f32.mxu0 %v9683
  %11096 = vmatmul.mubr.f32.gmra.mrb[0].mxu0 %v9552
  %v11097 = vpop.f32.mrb[0].mxu0
  %v11098 = vadd.f32 0.0, %v11097
  %v11099 = vpop.f32.mrb[0].mxu0
  %11100 = vmatprep.mubr.f32.mxu0 %v9685
  %11101 = vmatmul.mubr.f32.gmra.mrb[0].mxu0 %v9553
  %v11102 = vpop.f32.mrb[0].mxu0
  %v11103 = vadd.f32 0.0, %v11102
  %v11104 = vpop.f32.mrb[0].mxu0
  %11105 = vmatprep.mubr.f32.mxu0 %v9687
  %11106 = vmatmul.mubr.f32.gmra.mrb[0].mxu0 %v9554
  %v11107 = vpop.f32.mrb[0].mxu0
  %v11108 = vadd.f32 0.0, %v11107
  %v11109 = vpop.f32.mrb[0].mxu0
  %11110 = vmatprep.mubr.f32.mxu0 %v9689
  %11111 = vmatmul.mubr.f32.gmra.mrb[0].mxu0 %v9555
  %v11112 = vpop.f32.mrb[0].mxu0
  %v11113 = vadd.f32 0.0, %v11112
  %v11114 = vpop.f32.mrb[0].mxu0
  %11115 = vmatprep.mubr.f32.mxu0 %v10293
  %11116 = vmatmul.mubr.f32.gmra.mrb[0].mxu0 %v9556
  %v11117 = vpop.f32.mrb[0].mxu0
  %v11118 = vadd.f32 0.0, %v11117
  %v11119 = vpop.f32.mrb[0].mxu0
  %11120 = vmatprep.mubr.f32.mxu0 %v10295
  %11121 = vmatmul.mubr.f32.gmra.mrb[0].mxu0 %v9557
  %v11122 = vpop.f32.mrb[0].mxu0
  %v11123 = vadd.f32 0.0, %v11122
  %v11124 = vpop.f32.mrb[0].mxu0
  %11125 = vmatprep.mubr.f32.mxu0 %v10903
  %11126 = vmatmul.mubr.f32.gmra.mrb[0].mxu0 %v9558
  %v11127 = vpop.f32.mrb[0].mxu0
  %v11128 = vadd.f32 0.0, %v11127
  %v11129 = vpop.f32.mrb[0].mxu0
  %11130 = vmatprep.mubr.f32.mxu0 %v10905
  %11131 = vmatmul.mubr.f32.gmra.mrb[0].mxu0 %v9559
  %v11132 = vpop.f32.mrb[0].mxu0
  %v11133 = vadd.f32 0.0, %v11132
  %v11134 = vpop.f32.mrb[0].mxu0
  %11135 = vmatprep.mubr.f32.mxu0 %v9699
  %11136 = vmatmul.mubr.f32.gmra.mrb[0].mxu0 %v9564
  %v11137 = vpop.f32.mrb[0].mxu0
  %v11138 = vadd.f32 0.0, %v11137
  %v11139 = vpop.f32.mrb[0].mxu0
  %11140 = vmatprep.mubr.f32.mxu0 %v9701
  %11141 = vmatmul.mubr.f32.gmra.mrb[0].mxu0 %v9565
  %v11142 = vpop.f32.mrb[0].mxu0
  %v11143 = vadd.f32 0.0, %v11142
  %v11144 = vpop.f32.mrb[0].mxu0
  %11145 = vmatprep.mubr.f32.mxu0 %v9703
  %11146 = vmatmul.mubr.f32.gmra.mrb[0].mxu0 %v9566
  %v11147 = vpop.f32.mrb[0].mxu0
  %v11148 = vadd.f32 0.0, %v11147
  %v11149 = vpop.f32.mrb[0].mxu0
  %11150 = vmatprep.mubr.f32.mxu0 %v9705
  %11151 = vmatmul.mubr.f32.gmra.mrb[0].mxu0 %v9567
  %v11152 = vpop.f32.mrb[0].mxu0
  %v11153 = vadd.f32 0.0, %v11152
  %v11154 = vpop.f32.mrb[0].mxu0
  %11155 = vmatprep.mubr.f32.mxu0 %v9707
  %11156 = vmatmul.mubr.f32.gmra.mrb[0].mxu0 %v9568
  %v11157 = vpop.f32.mrb[0].mxu0
  %v11158 = vadd.f32 0.0, %v11157
  %v11159 = vpop.f32.mrb[0].mxu0
  %11160 = vmatprep.mubr.f32.mxu0 %v9709
  %11161 = vmatmul.mubr.f32.gmra.mrb[0].mxu0 %v9569
  %v11162 = vpop.f32.mrb[0].mxu0
  %v11163 = vadd.f32 0.0, %v11162
  %v11164 = vpop.f32.mrb[0].mxu0
  %11165 = vmatprep.mubr.f32.mxu0 %v9711
  %11166 = vmatmul.mubr.f32.gmra.mrb[0].mxu0 %v9570
  %v11167 = vpop.f32.mrb[0].mxu0
  %v11168 = vadd.f32 0.0, %v11167
  %v11169 = vpop.f32.mrb[0].mxu0
  %11170 = vmatprep.mubr.f32.mxu0 %v9713
  %11171 = vmatmul.mubr.f32.gmra.mrb[0].mxu0 %v9571
  %v11172 = vpop.f32.mrb[0].mxu0
  %v11173 = vadd.f32 0.0, %v11172
  %v11174 = vpop.f32.mrb[0].mxu0
  %11175 = vmatprep.mubr.f32.mxu0 %v9715
  %11176 = vmatmul.mubr.f32.gmra.mrb[0].mxu0 %v9572
  %v11177 = vpop.f32.mrb[0].mxu0
  %v11178 = vadd.f32 0.0, %v11177
  %v11179 = vpop.f32.mrb[0].mxu0
  %11180 = vmatprep.mubr.f32.mxu0 %v9717
  %11181 = vmatmul.mubr.f32.gmra.mrb[0].mxu0 %v9573
  %v11182 = vpop.f32.mrb[0].mxu0
  %v11183 = vadd.f32 0.0, %v11182
  %v11184 = vpop.f32.mrb[0].mxu0
  %11185 = vmatprep.mubr.f32.mxu0 %v9719
  %11186 = vmatmul.mubr.f32.gmra.mrb[0].mxu0 %v9574
  %v11187 = vpop.f32.mrb[0].mxu0
  %v11188 = vadd.f32 0.0, %v11187
  %v11189 = vpop.f32.mrb[0].mxu0
  %11190 = vmatprep.mubr.f32.mxu0 %v9721
  %11191 = vmatmul.mubr.f32.gmra.mrb[0].mxu0 %v9575
  %v11192 = vpop.f32.mrb[0].mxu0
  %v11193 = vadd.f32 0.0, %v11192
  %v11194 = vpop.f32.mrb[0].mxu0
  %11195 = vmatprep.mubr.f32.mxu0 %v9723
  %11196 = vmatmul.mubr.f32.gmra.mrb[0].mxu0 %v9576
  %v11197 = vpop.f32.mrb[0].mxu0
  %v11198 = vadd.f32 0.0, %v11197
  %v11199 = vpop.f32.mrb[0].mxu0
  %11200 = vmatprep.mubr.f32.mxu0 %v9725
  %11201 = vmatmul.mubr.f32.gmra.mrb[0].mxu0 %v9577
  %v11202 = vpop.f32.mrb[0].mxu0
  %v11203 = vadd.f32 0.0, %v11202
  %v11204 = vpop.f32.mrb[0].mxu0
  %11205 = vmatprep.mubr.f32.mxu0 %v9727
  %11206 = vmatmul.mubr.f32.gmra.mrb[0].mxu0 %v9578
  %v11207 = vpop.f32.mrb[0].mxu0
  %v11208 = vadd.f32 0.0, %v11207
  %v11209 = vpop.f32.mrb[0].mxu0
  %11210 = vmatprep.mubr.f32.mxu0 %v9729
  %11211 = vmatmul.mubr.f32.gmra.mrb[0].mxu0 %v9579
  %v11212 = vpop.f32.mrb[0].mxu0
  %v11213 = vadd.f32 0.0, %v11212
  %v11214 = vpop.f32.mrb[0].mxu0
  %11215 = vmatprep.mubr.f32.mxu0 %v9731
  %11216 = vmatmul.mubr.f32.gmra.mrb[0].mxu0 %v9580
  %v11217 = vpop.f32.mrb[0].mxu0
  %v11218 = vadd.f32 0.0, %v11217
  %v11219 = vpop.f32.mrb[0].mxu0
  %11220 = vmatprep.mubr.f32.mxu0 %v9733
  %11221 = vmatmul.mubr.f32.gmra.mrb[0].mxu0 %v9581
  %v11222 = vpop.f32.mrb[0].mxu0
  %v11223 = vadd.f32 0.0, %v11222
  %v11224 = vpop.f32.mrb[0].mxu0
  %11225 = vmatprep.mubr.f32.mxu0 %v9735
  %11226 = vmatmul.mubr.f32.gmra.mrb[0].mxu0 %v9582
  %v11227 = vpop.f32.mrb[0].mxu0
  %v11228 = vadd.f32 0.0, %v11227
  %v11229 = vpop.f32.mrb[0].mxu0
  %11230 = vmatprep.mubr.f32.mxu0 %v9737
  %11231 = vmatmul.mubr.f32.gmra.mrb[0].mxu0 %v9583
  %v11232 = vpop.f32.mrb[0].mxu0
  %v11233 = vadd.f32 0.0, %v11232
  %v11234 = vpop.f32.mrb[0].mxu0
  %11235 = vmatprep.mubr.f32.mxu0 %v9739
  %11236 = vmatmul.mubr.f32.gmra.mrb[0].mxu0 %v9584
  %v11237 = vpop.f32.mrb[0].mxu0
  %v11238 = vadd.f32 0.0, %v11237
  %v11239 = vpop.f32.mrb[0].mxu0
  %11240 = vmatprep.mubr.f32.mxu0 %v9741
  %11241 = vmatmul.mubr.f32.gmra.mrb[0].mxu0 %v9585
  %v11242 = vpop.f32.mrb[0].mxu0
  %v11243 = vadd.f32 0.0, %v11242
  %v11244 = vpop.f32.mrb[0].mxu0
  %11245 = vmatprep.mubr.f32.mxu0 %v9743
  %11246 = vmatmul.mubr.f32.gmra.mrb[0].mxu0 %v9586
  %v11247 = vpop.f32.mrb[0].mxu0
  %v11248 = vadd.f32 0.0, %v11247
  %v11249 = vpop.f32.mrb[0].mxu0
  %11250 = vmatprep.mubr.f32.mxu0 %v9745
  %11251 = vmatmul.mubr.f32.gmra.mrb[0].mxu0 %v9587
  %v11252 = vpop.f32.mrb[0].mxu0
  %v11253 = vadd.f32 0.0, %v11252
  %v11254 = vpop.f32.mrb[0].mxu0
  %11255 = vmatprep.mubr.f32.mxu0 %v9747
  %11256 = vmatmul.mubr.f32.gmra.mrb[0].mxu0 %v9588
  %v11257 = vpop.f32.mrb[0].mxu0
  %v11258 = vadd.f32 0.0, %v11257
  %v11259 = vpop.f32.mrb[0].mxu0
  %11260 = vmatprep.mubr.f32.mxu0 %v9749
  %11261 = vmatmul.mubr.f32.gmra.mrb[0].mxu0 %v9589
  %v11262 = vpop.f32.mrb[0].mxu0
  %v11263 = vadd.f32 0.0, %v11262
  %v11264 = vpop.f32.mrb[0].mxu0
  %11265 = vmatprep.mubr.f32.mxu0 %v9751
  %11266 = vmatmul.mubr.f32.gmra.mrb[0].mxu0 %v9590
  %v11267 = vpop.f32.mrb[0].mxu0
  %v11268 = vadd.f32 0.0, %v11267
  %v11269 = vpop.f32.mrb[0].mxu0
  %11270 = vmatprep.mubr.f32.mxu0 %v9753
  %11271 = vmatmul.mubr.f32.gmra.mrb[0].mxu0 %v9591
  %v11272 = vpop.f32.mrb[0].mxu0
  %v11273 = vadd.f32 0.0, %v11272
  %v11274 = vpop.f32.mrb[0].mxu0
  %11275 = vmatprep.mubr.f32.mxu0 %v10297
  %11276 = vmatmul.mubr.f32.gmra.mrb[0].mxu0 %v9592
  %v11277 = vpop.f32.mrb[0].mxu0
  %v11278 = vadd.f32 0.0, %v11277
  %v11279 = vpop.f32.mrb[0].mxu0
  %11280 = vmatprep.mubr.f32.mxu0 %v10299
  %11281 = vmatmul.mubr.f32.gmra.mrb[0].mxu0 %v9593
  %v11282 = vpop.f32.mrb[0].mxu0
  %v11283 = vadd.f32 0.0, %v11282
  %v11284 = vpop.f32.mrb[0].mxu0
  %11285 = vmatprep.mubr.f32.mxu0 %v10907
  %11286 = vmatmul.mubr.f32.gmra.mrb[0].mxu0 %v9594
  %v11287 = vpop.f32.mrb[0].mxu0
  %v11288 = vadd.f32 0.0, %v11287
  %v11289 = vpop.f32.mrb[0].mxu0
  %11290 = vmatprep.mubr.f32.mxu0 %v10909
  %11291 = vmatmul.mubr.f32.gmra.mrb[0].mxu0 %v9595
  %v11292 = vpop.f32.mrb[0].mxu0
  %v11293 = vadd.f32 0.0, %v11292
  %v11294 = vpop.f32.mrb[0].mxu0
  %11295 = vdwg.mxu0
  %v11296 = vadd.f32 %v10814, %v10978
  %v11297 = vadd.f32 %v10815, %v10983
  %v11298 = vadd.f32 %v10816, %v10988
  %v11299 = vadd.f32 %v10817, %v10993
  %v11300 = vadd.f32 %v10818, %v10998
  %v11301 = vadd.f32 %v10819, %v11003
  %v11302 = vadd.f32 %v10820, %v11008
  %v11303 = vadd.f32 %v10821, %v11013
  %v11304 = vadd.f32 %v10822, %v11018
  %v11305 = vadd.f32 %v10823, %v11023
  %v11306 = vadd.f32 %v10824, %v11028
  %v11307 = vadd.f32 %v10825, %v11033
  %v11308 = vadd.f32 %v10826, %v11038
  %v11309 = vadd.f32 %v10827, %v11043
  %v11310 = vadd.f32 %v10828, %v11048
  %v11311 = vadd.f32 %v10829, %v11053
  %v11312 = vadd.f32 %v10830, %v11058
  %v11313 = vadd.f32 %v10831, %v11063
  %v11314 = vadd.f32 %v10832, %v11068
  %v11315 = vadd.f32 %v10833, %v11073
  %v11316 = vadd.f32 %v10834, %v11078
  %v11317 = vadd.f32 %v10835, %v11083
  %v11318 = vadd.f32 %v10836, %v11088
  %v11319 = vadd.f32 %v10837, %v11093
  %v11320 = vadd.f32 %v10838, %v11098
  %v11321 = vadd.f32 %v10839, %v11103
  %v11322 = vadd.f32 %v10840, %v11108
  %v11323 = vadd.f32 %v10841, %v11113
  %v11324 = vadd.f32 %v10842, %v11118
  %v11325 = vadd.f32 %v10843, %v11123
  %v11326 = vadd.f32 %v10844, %v11128
  %v11327 = vadd.f32 %v10845, %v11133
  %v11328 = vadd.f32 %v10846, %v11138
  %v11329 = vadd.f32 %v10847, %v11143
  %v11330 = vadd.f32 %v10848, %v11148
  %v11331 = vadd.f32 %v10849, %v11153
  %v11332 = vadd.f32 %v10850, %v11158
  %v11333 = vadd.f32 %v10851, %v11163
  %v11334 = vadd.f32 %v10852, %v11168
  %v11335 = vadd.f32 %v10853, %v11173
  %v11336 = vadd.f32 %v10854, %v11178
  %v11337 = vadd.f32 %v10855, %v11183
  %v11338 = vadd.f32 %v10856, %v11188
  %v11339 = vadd.f32 %v10857, %v11193
  %v11340 = vadd.f32 %v10858, %v11198
  %v11341 = vadd.f32 %v10859, %v11203
  %v11342 = vadd.f32 %v10860, %v11208
  %v11343 = vadd.f32 %v10861, %v11213
  %v11344 = vadd.f32 %v10862, %v11218
  %v11345 = vadd.f32 %v10863, %v11223
  %v11346 = vadd.f32 %v10864, %v11228
  %v11347 = vadd.f32 %v10865, %v11233
  %v11348 = vadd.f32 %v10866, %v11238
  %v11349 = vadd.f32 %v10867, %v11243
  %v11350 = vadd.f32 %v10868, %v11248
  %v11351 = vadd.f32 %v10869, %v11253
  %v11352 = vadd.f32 %v10870, %v11258
  %v11353 = vadd.f32 %v10871, %v11263
  %v11354 = vadd.f32 %v10872, %v11268
  %v11355 = vadd.f32 %v10873, %v11273
  %v11356 = vadd.f32 %v10874, %v11278
  %v11357 = vadd.f32 %v10875, %v11283
  %v11358 = vadd.f32 %v10876, %v11288
  %v11359 = vadd.f32 %v10877, %v11293
  %11360 = vst [vmem:[%s12] sm:$0xff] %v11296
  %11361 = vst [vmem:[%s12 + $0x8] sm:$0xff] %v11297
  %11362 = vst [vmem:[%s12 + $0x10] sm:$0xff] %v11298
  %11363 = vst [vmem:[%s12 + $0x18] sm:$0xff] %v11299
  %11364 = vst [vmem:[%s12 + $0x20] sm:$0xff] %v11300
  %11365 = vst [vmem:[%s12 + $0x28] sm:$0xff] %v11301
  %11366 = vst [vmem:[%s12 + $0x30] sm:$0xff] %v11302
  %11367 = vst [vmem:[%s12 + $0x38] sm:$0xff] %v11303
  %11368 = vst [vmem:[%s12 + $0x40] sm:$0xff] %v11304
  %11369 = vst [vmem:[%s12 + $0x48] sm:$0xff] %v11305
  %11370 = vst [vmem:[%s12 + $0x50] sm:$0xff] %v11306
  %11371 = vst [vmem:[%s12 + $0x58] sm:$0xff] %v11307
  %11372 = vst [vmem:[%s12 + $0x60] sm:$0xff] %v11308
  %11373 = vst [vmem:[%s12 + $0x68] sm:$0xff] %v11309
  %11374 = vst [vmem:[%s12 + $0x70] sm:$0xff] %v11310
  %11375 = vst [vmem:[%s12 + $0x78] sm:$0xff] %v11311
  %11376 = vst [vmem:[%s12 + $0x80] sm:$0xff] %v11312
  %11377 = vst [vmem:[%s12 + $0x88] sm:$0xff] %v11313
  %11378 = vst [vmem:[%s12 + $0x90] sm:$0xff] %v11314
  %11379 = vst [vmem:[%s12 + $0x98] sm:$0xff] %v11315
  %11380 = vst [vmem:[%s12 + $0xa0] sm:$0xff] %v11316
  %11381 = vst [vmem:[%s12 + $0xa8] sm:$0xff] %v11317
  %11382 = vst [vmem:[%s12 + $0xb0] sm:$0xff] %v11318
  %11383 = vst [vmem:[%s12 + $0xb8] sm:$0xff] %v11319
  %11384 = vst [vmem:[%s12 + $0xc0] sm:$0xff] %v11320
  %11385 = vst [vmem:[%s12 + $0xc8] sm:$0xff] %v11321
  %11386 = vst [vmem:[%s12 + $0xd0] sm:$0xff] %v11322
  %11387 = vst [vmem:[%s12 + $0xd8] sm:$0xff] %v11323
  %11388 = vst [vmem:[%s12 + $0xe0] sm:$0xff] %v11324
  %11389 = vst [vmem:[%s12 + $0xe8] sm:$0xff] %v11325
  %11390 = vst [vmem:[%s12 + $0xf0] sm:$0xff] %v11326
  %11391 = vst [vmem:[%s12 + $0xf8] sm:$0xff] %v11327
  %11392 = vst [vmem:[%s12 + $0x100] sm:$0xff] %v11328
  %11393 = vst [vmem:[%s12 + $0x108] sm:$0xff] %v11329
  %11394 = vst [vmem:[%s12 + $0x110] sm:$0xff] %v11330
  %11395 = vst [vmem:[%s12 + $0x118] sm:$0xff] %v11331
  %11396 = vst [vmem:[%s12 + $0x120] sm:$0xff] %v11332
  %11397 = vst [vmem:[%s12 + $0x128] sm:$0xff] %v11333
  %11398 = vst [vmem:[%s12 + $0x130] sm:$0xff] %v11334
  %11399 = vst [vmem:[%s12 + $0x138] sm:$0xff] %v11335
  %11400 = vst [vmem:[%s12 + $0x140] sm:$0xff] %v11336
  %11401 = vst [vmem:[%s12 + $0x148] sm:$0xff] %v11337
  %11402 = vst [vmem:[%s12 + $0x150] sm:$0xff] %v11338
  %11403 = vst [vmem:[%s12 + $0x158] sm:$0xff] %v11339
  %11404 = vst [vmem:[%s12 + $0x160] sm:$0xff] %v11340
  %11405 = vst [vmem:[%s12 + $0x168] sm:$0xff] %v11341
  %11406 = vst [vmem:[%s12 + $0x170] sm:$0xff] %v11342
  %11407 = vst [vmem:[%s12 + $0x178] sm:$0xff] %v11343
  %11408 = vst [vmem:[%s12 + $0x180] sm:$0xff] %v11344
  %11409 = vst [vmem:[%s12 + $0x188] sm:$0xff] %v11345
  %11410 = vst [vmem:[%s12 + $0x190] sm:$0xff] %v11346
  %11411 = vst [vmem:[%s12 + $0x198] sm:$0xff] %v11347
  %11412 = vst [vmem:[%s12 + $0x1a0] sm:$0xff] %v11348
  %11413 = vst [vmem:[%s12 + $0x1a8] sm:$0xff] %v11349
  %11414 = vst [vmem:[%s12 + $0x1b0] sm:$0xff] %v11350
  %11415 = vst [vmem:[%s12 + $0x1b8] sm:$0xff] %v11351
  %11416 = vst [vmem:[%s12 + $0x1c0] sm:$0xff] %v11352
  %11417 = vst [vmem:[%s12 + $0x1c8] sm:$0xff] %v11353
  %11418 = vst [vmem:[%s12 + $0x1d0] sm:$0xff] %v11354
  %11419 = vst [vmem:[%s12 + $0x1d8] sm:$0xff] %v11355
  %11420 = vst [vmem:[%s12 + $0x1e0] sm:$0xff] %v11356
  %11421 = vst [vmem:[%s12 + $0x1e8] sm:$0xff] %v11357
  %11422 = vst [vmem:[%s12 + $0x1f0] sm:$0xff] %v11358
  %11423 = vst [vmem:[%s12 + $0x1f8] sm:$0xff] %v11359
  // Predicated region
  $region50: #{embedded_block_forward.1} parent=0 // pred_check
    _
  $region51: #{embedded_block_forward.1} parent=0 // pred_check_branch
    %11425 = sbr.rel (0) target = $region53
  $region52: #{embedded_block_forward.1} parent=0 // pred_region
    _
  $region53: #{embedded_block_forward.1} parent=0 // pred_fallthru
    _
  // Predicated region
  $region54: #{embedded_block_forward.1} parent=0 // pred_check
    _
  $region55: #{embedded_block_forward.1} parent=0 // pred_check_branch
    %11427 = sbr.rel (0) target = $region57
  $region56: #{embedded_block_forward.1} parent=0 // pred_region
    _
  $region57: #{embedded_block_forward.1} parent=0 // pred_fallthru
    _

</llo_original>
